<compile_context>
chip_gen: v5e
topology: v5e:2x2
jax: 0.10.0
libtpu: 0.0.40
codegen_flags: <defaults>
</compile_context>

<pallas_src>
import functools

import jax
import jax.numpy as jnp
from jax import lax
from jax.experimental import pallas as pl
from jax.experimental.pallas import tpu as pltpu


def _geometry(H, W):
    """Row-layout constants for the padded activation scratch."""
    Wp = W + 2                                   # W padded by 1 pixel per side
    M = H * Wp                                   # matmul M dimension per image
    # First interior row; multiple of 16 so the big bf16 interior stores are
    # vreg aligned.  P0 >= 1 keeps the (dy=0, dx=0) tap slice in bounds.
    P0 = 16 - (Wp % 16) if (Wp % 16) else 16
    interior = P0 + Wp
    # Last tap slice covers rows [P0 + 2*Wp + 1, P0 + 2*Wp + 1 + M).
    total = -(-(P0 + 2 * Wp + 1 + M) // 16) * 16
    return Wp, M, P0, interior, total


def basic_block_kernel(x_ref, w1_ref, s1_ref, b1_ref, w2_ref, s2_ref, b2_ref,
                       mask_ref, o_ref, pad_ref, patch_ref, *, H, W, Cpad):
    # Per grid step (one image), lane axis = channels padded to Cpad = 128:
    #   x_ref     : (1, M, Cpad) f32     input in padded-W row layout (residual)
    #   w*_ref    : (9*Cpad, Cpad) bf16  per-tap conv weights stacked along K
    #   s*/b*_ref : (1, Cpad) f32        folded BatchNorm scale / bias
    #   mask_ref  : (M, 1) f32           1 on valid W columns, 0 on the W halo
    #   o_ref     : (1, M, Cpad) f32     output (same padded-W row layout)
    #   pad_ref   : VMEM (TOTAL, Cpad) bf16  padded activations (both convs)
    #   patch_ref : VMEM (M, 9*Cpad) bf16    im2col patch (taps folded into K)
    Wp, M, P0, interior, total = _geometry(H, W)
    act_dt = pad_ref.dtype

    # Zero the H-halo / slack rows: two full-width, vreg-aligned stores.  Done
    # every step (cheap) so the kernel stays correct when the parallel batch
    # axis is partitioned across cores; the interior is overwritten below.
    pad_ref[0:interior, :] = jnp.zeros((interior, Cpad), act_dt)
    pad_ref[interior + M:total, :] = jnp.zeros((total - interior - M, Cpad),
                                               act_dt)

    def conv3x3(w_ref):
        # Fold the 9 taps into the contraction axis: 9 shifted row-slices of
        # the padded activations concatenated along lanes (K = 9*Cpad), then
        # ONE MXU matmul per conv.  The tap reduction accumulates inside the
        # MXU, so there is no serial VPU add chain and no per-tap result pops.
        for k in range(9):
            dy, dx = divmod(k, 3)
            s = P0 + dy * Wp + dx - 1            # static sublane/row offset
            patch_ref[:, k * Cpad:(k + 1) * Cpad] = pad_ref[s:s + M, :]
        return jnp.dot(patch_ref[...], w_ref[...],
                       preferred_element_type=jnp.float32)

    # ---- conv1 + bn1 + relu ----
    pad_ref[interior:interior + M, :] = x_ref[0].astype(act_dt)  # one f32->bf16 cast
    h1 = jnp.maximum(conv3x3(w1_ref) * s1_ref[...] + b1_ref[...], 0.0)

    # ---- conv2 + bn2 + residual + relu ----
    # Zero h1's W-halo columns (conv values at pad positions) and hand it back
    # to the SAME padded scratch as conv2's input (single lane-dense store).
    # Elementwise math stays in f32; the residual is read straight from x_ref.
    pad_ref[interior:interior + M, :] = (h1 * mask_ref[...]).astype(act_dt)
    out = conv3x3(w2_ref) * s2_ref[...] + b2_ref[...] + x_ref[0]
    o_ref[0] = jnp.maximum(out, 0.0).astype(o_ref.dtype)


def _pack_taps(w_hwio, cpad, dtype):
    """(3,3,Cin,Cout) HWIO -> (9*cpad, cpad): per-tap matrices, channel padded
    to cpad and stacked along the contraction axis (tap-major) so they match
    the im2col patch lane order."""
    kh, kw, cin, cout = w_hwio.shape
    taps = jnp.zeros((kh * kw, cpad, cpad), w_hwio.dtype)
    taps = taps.at[:, :cin, :cout].set(w_hwio.reshape(kh * kw, cin, cout))
    return taps.reshape(kh * kw * cpad, cpad).astype(dtype)


def _pad_channel_vec(v, cpad):
    return jnp.pad(v.astype(jnp.float32), (0, cpad - v.shape[0]))[None, :]


def basic_block_forward_nhwc(x_nhwc, params, *, mxu_dtype=jnp.bfloat16):
    """BasicBlock forward on NHWC input; returns NHWC.  Preferred for chaining
    (keep activations in the padded lane-dense layout between blocks)."""
    N, H, W, Cin = x_nhwc.shape
    w1_hwio, w2_hwio = params["w1_hwio"], params["w2_hwio"]
    Cout = w1_hwio.shape[-1]
    if Cin != Cout or w2_hwio.shape[-1] != Cout:
        # Identity residual requires inplanes == planes (stride=1, no downsample).
        raise ValueError("kernel implements BasicBlock with identity residual only")

    Cpad = -(-max(Cin, Cout) // 128) * 128       # lane-dense: multiple of 128
    Wp, M, P0, interior, total = _geometry(H, W)

    # Lane-dense layout: channels -> lanes (zero-padded to Cpad), W padded by
    # one pixel per side and folded into the row axis.
    x_pad = jnp.pad(x_nhwc.astype(jnp.float32),
                    ((0, 0), (0, 0), (1, 1), (0, Cpad - Cin)))
    x_rows = x_pad.reshape(N, M, Cpad)

    w1p = _pack_taps(w1_hwio, Cpad, mxu_dtype)
    w2p = _pack_taps(w2_hwio, Cpad, mxu_dtype)
    s1 = _pad_channel_vec(params["scale1"], Cpad)
    b1 = _pad_channel_vec(params["bias1"], Cpad)
    s2 = _pad_channel_vec(params["scale2"], Cpad)
    b2 = _pad_channel_vec(params["bias2"], Cpad)

    col = jnp.arange(Wp)
    colmask = jnp.tile(((col >= 1) & (col <= W)).astype(jnp.float32), H)
    colmask = colmask.reshape(M, 1)

    kernel = functools.partial(basic_block_kernel, H=H, W=W, Cpad=Cpad)

    out_rows = pl.pallas_call(
        kernel,
        out_shape=jax.ShapeDtypeStruct((N, M, Cpad), jnp.float32),
        grid_spec=pltpu.PrefetchScalarGridSpec(
            num_scalar_prefetch=0,
            grid=(N,),
            in_specs=[
                pl.BlockSpec((1, M, Cpad), lambda n: (n, 0, 0)),       # x
                pl.BlockSpec((9 * Cpad, Cpad), lambda n: (0, 0)),      # w1 (const)
                pl.BlockSpec((1, Cpad), lambda n: (0, 0)),             # s1
                pl.BlockSpec((1, Cpad), lambda n: (0, 0)),             # b1
                pl.BlockSpec((9 * Cpad, Cpad), lambda n: (0, 0)),      # w2 (const)
                pl.BlockSpec((1, Cpad), lambda n: (0, 0)),             # s2
                pl.BlockSpec((1, Cpad), lambda n: (0, 0)),             # b2
                pl.BlockSpec((M, 1), lambda n: (0, 0)),                # col mask
            ],
            out_specs=pl.BlockSpec((1, M, Cpad), lambda n: (n, 0, 0)),
            scratch_shapes=[
                pltpu.VMEM((total, Cpad), mxu_dtype),      # padded activations
                pltpu.VMEM((M, 9 * Cpad), mxu_dtype),      # im2col patch
            ],
        ),
        compiler_params=pltpu.CompilerParams(
            dimension_semantics=("parallel",),
            vmem_limit_bytes=32 * 1024 * 1024),
    )(x_rows, w1p, s1, b1, w2p, s2, b2, colmask)

    out = out_rows.reshape(N, H, Wp, Cpad)[:, :, 1:W + 1, :Cout]
    return out.astype(x_nhwc.dtype)


def basic_block_forward(x_nchw, params, *, mxu_dtype=jnp.bfloat16):
    """PyTorch-compatible NCHW boundary.  For chained blocks keep data in NHWC
    (or the padded lane layout) and call basic_block_forward_nhwc directly."""
    x = jnp.transpose(x_nchw, (0, 2, 3, 1))
    y = basic_block_forward_nhwc(x, params, mxu_dtype=mxu_dtype)
    return jnp.transpose(y, (0, 3, 1, 2))


def make_params(key, inplanes, planes, eps=1e-5):
    """Deterministic synthetic parameters (eval-mode BatchNorm folded)."""
    ks = jax.random.split(key, 8)
    w1_hwio = 0.1 * jax.random.normal(ks[0], (3, 3, inplanes, planes), jnp.float32)
    w2_hwio = 0.1 * jax.random.normal(ks[1], (3, 3, planes, planes), jnp.float32)
    gamma1 = 1.0 + 0.1 * jax.random.normal(ks[2], (planes,), jnp.float32)
    beta1 = 0.1 * jax.random.normal(ks[3], (planes,), jnp.float32)
    mean1 = 0.1 * jax.random.normal(ks[4], (planes,), jnp.float32)
    var1 = jnp.abs(jax.random.normal(ks[5], (planes,), jnp.float32)) + 0.5
    gamma2 = 1.0 + 0.1 * jax.random.normal(ks[6], (planes,), jnp.float32)
    beta2 = 0.1 * jax.random.normal(ks[7], (planes,), jnp.float32)
    mean2 = jnp.zeros((planes,), jnp.float32)
    var2 = jnp.ones((planes,), jnp.float32)

    s1 = gamma1 / jnp.sqrt(var1 + eps)
    b1 = beta1 - mean1 * s1
    s2 = gamma2 / jnp.sqrt(var2 + eps)
    b2 = beta2 - mean2 * s2

    # TODO(synk): training-mode BatchNorm (batch statistics) is not modeled;
    # eval-mode (running stats) semantics are used, folded to scale/bias.
    return {"w1_hwio": w1_hwio, "w2_hwio": w2_hwio,
            "scale1": s1, "bias1": b1, "scale2": s2, "bias2": b2}


def reference_forward(x_nchw, params, mxu_dtype=jnp.bfloat16):
    """Pure-JAX reference with matching bf16-operand / f32-accumulate convs."""
    x = jnp.transpose(x_nchw, (0, 2, 3, 1)).astype(jnp.float32)
    dn = ("NHWC", "HWIO", "NHWC")
    h = lax.conv_general_dilated(
        x.astype(mxu_dtype), params["w1_hwio"].astype(mxu_dtype),
        (1, 1), ((1, 1), (1, 1)), dimension_numbers=dn,
        preferred_element_type=jnp.float32)
    h = jnp.maximum(h * params["scale1"] + params["bias1"], 0.0)
    h = lax.conv_general_dilated(
        h.astype(mxu_dtype), params["w2_hwio"].astype(mxu_dtype),
        (1, 1), ((1, 1), (1, 1)), dimension_numbers=dn,
        preferred_element_type=jnp.float32)
    h = h * params["scale2"] + params["bias2"]
    h = jnp.maximum(h + x, 0.0)
    return jnp.transpose(h, (0, 3, 1, 2))


if __name__ == "__main__":
    key = jax.random.PRNGKey(0)
    kx, kp = jax.random.split(key)

    N, C, H, W = 2, 4, 16, 16          # inplanes == planes == 4, stride == 1
    x = jax.random.normal(kx, (N, C, H, W), jnp.float32)
    params = make_params(kp, inplanes=C, planes=C)

    fwd = jax.jit(basic_block_forward)
    out = jax.block_until_ready(fwd(x, params))

    ref = reference_forward(x, params)
    assert out.shape == (N, C, H, W)
    max_err = float(jnp.max(jnp.abs(out - ref)))
    # Both kernel and reference use bf16 MXU operands with f32 accumulation and
    # round at the same points; residual differences come only from
    # accumulation order at the bf16 cast boundary.
    assert jnp.allclose(out, ref, atol=1e-2, rtol=1e-2), max_err

    print("KERNEL_OK")
</pallas_src>

<mosaic_0001>
module attributes {stable_mosaic.version = 11 : i64} {
  func.func @basic_block_kernel(%arg0: i32, %arg1: memref<1x288x128xf32, #tpu.memory_space<vmem>>, %arg2: memref<1152x128xbf16, #tpu.memory_space<vmem>>, %arg3: memref<1x128xf32, #tpu.memory_space<vmem>>, %arg4: memref<1x128xf32, #tpu.memory_space<vmem>>, %arg5: memref<1152x128xbf16, #tpu.memory_space<vmem>>, %arg6: memref<1x128xf32, #tpu.memory_space<vmem>>, %arg7: memref<1x128xf32, #tpu.memory_space<vmem>>, %arg8: memref<288x1xf32, #tpu.memory_space<vmem>>, %arg9: memref<1x288x128xf32, #tpu.memory_space<vmem>>, %arg10: memref<352x128xbf16, #tpu.memory_space<vmem>>, %arg11: memref<288x1152xbf16, #tpu.memory_space<vmem>>) attributes {dimension_semantics = [#tpu.dimension_semantics<parallel>], iteration_bounds = array<i64: 2>, scalar_prefetch = 0 : i64, scratch_operands = 2 : i64, tpu.core_type = #tpu.core_type<tc>, window_params = [{transform_indices = @transform_0, window_bounds = array<i64: 1, 288, 128>}, {pipeline_mode = #tpu.pipeline_mode<synchronous>, transform_indices = @transform_1, window_bounds = array<i64: 1152, 128>}, {pipeline_mode = #tpu.pipeline_mode<synchronous>, transform_indices = @transform_2, window_bounds = array<i64: 1, 128>}, {pipeline_mode = #tpu.pipeline_mode<synchronous>, transform_indices = @transform_3, window_bounds = array<i64: 1, 128>}, {pipeline_mode = #tpu.pipeline_mode<synchronous>, transform_indices = @transform_4, window_bounds = array<i64: 1152, 128>}, {pipeline_mode = #tpu.pipeline_mode<synchronous>, transform_indices = @transform_5, window_bounds = array<i64: 1, 128>}, {pipeline_mode = #tpu.pipeline_mode<synchronous>, transform_indices = @transform_6, window_bounds = array<i64: 1, 128>}, {pipeline_mode = #tpu.pipeline_mode<synchronous>, transform_indices = @transform_7, window_bounds = array<i64: 288, 1>}, {transform_indices = @transform_8, window_bounds = array<i64: 1, 288, 128>}]} {
    %cst = arith.constant 0.000000e+00 : bf16
    %0 = vector.broadcast %cst : bf16 to vector<32x128xbf16>
    %c0 = arith.constant 0 : index
    %c0_0 = arith.constant 0 : index
    %1 = vector.load %arg10[%c0, %c0_0] : memref<352x128xbf16, #tpu.memory_space<vmem>>, vector<32x128xbf16>
    tpu.vector_store %arg10[%c0, %c0_0], %0 {strides = array<i32>} : memref<352x128xbf16, #tpu.memory_space<vmem>>, vector<32x128xbf16>,
    %cst_1 = arith.constant 0.000000e+00 : bf16
    %2 = vector.broadcast %cst_1 : bf16 to vector<32x128xbf16>
    %c320 = arith.constant 320 : index
    %c0_2 = arith.constant 0 : index
    %3 = vector.load %arg10[%c320, %c0_2] : memref<352x128xbf16, #tpu.memory_space<vmem>>, vector<32x128xbf16>
    tpu.vector_store %arg10[%c320, %c0_2], %2 {strides = array<i32>} : memref<352x128xbf16, #tpu.memory_space<vmem>>, vector<32x128xbf16>,
    %c0_3 = arith.constant 0 : index
    %c0_4 = arith.constant 0 : index
    %c0_5 = arith.constant 0 : index
    %4 = vector.load %arg1[%c0_3, %c0_4, %c0_5] : memref<1x288x128xf32, #tpu.memory_space<vmem>>, vector<1x288x128xf32>
    %5 = vector.shape_cast %4 : vector<1x288x128xf32> to vector<288x128xf32>
    %6 = arith.truncf %5 : vector<288x128xf32> to vector<288x128xbf16>
    %c32 = arith.constant 32 : index
    %c0_6 = arith.constant 0 : index
    %7 = vector.load %arg10[%c32, %c0_6] : memref<352x128xbf16, #tpu.memory_space<vmem>>, vector<288x128xbf16>
    tpu.vector_store %arg10[%c32, %c0_6], %6 {strides = array<i32>} : memref<352x128xbf16, #tpu.memory_space<vmem>>, vector<288x128xbf16>,
    %c13 = arith.constant 13 : index
    %c0_7 = arith.constant 0 : index
    %8 = vector.load %arg10[%c13, %c0_7] : memref<352x128xbf16, #tpu.memory_space<vmem>>, vector<288x128xbf16>
    %c0_8 = arith.constant 0 : index
    %c0_9 = arith.constant 0 : index
    %9 = vector.load %arg11[%c0_8, %c0_9] : memref<288x1152xbf16, #tpu.memory_space<vmem>>, vector<288x128xbf16>
    tpu.vector_store %arg11[%c0_8, %c0_9], %8 {strides = array<i32>} : memref<288x1152xbf16, #tpu.memory_space<vmem>>, vector<288x128xbf16>,
    %c14 = arith.constant 14 : index
    %c0_10 = arith.constant 0 : index
    %10 = vector.load %arg10[%c14, %c0_10] : memref<352x128xbf16, #tpu.memory_space<vmem>>, vector<288x128xbf16>
    %c0_11 = arith.constant 0 : index
    %c128 = arith.constant 128 : index
    %11 = vector.load %arg11[%c0_11, %c128] : memref<288x1152xbf16, #tpu.memory_space<vmem>>, vector<288x128xbf16>
    tpu.vector_store %arg11[%c0_11, %c128], %10 {strides = array<i32>} : memref<288x1152xbf16, #tpu.memory_space<vmem>>, vector<288x128xbf16>,
    %c15 = arith.constant 15 : index
    %c0_12 = arith.constant 0 : index
    %12 = vector.load %arg10[%c15, %c0_12] : memref<352x128xbf16, #tpu.memory_space<vmem>>, vector<288x128xbf16>
    %c0_13 = arith.constant 0 : index
    %c256 = arith.constant 256 : index
    %13 = vector.load %arg11[%c0_13, %c256] : memref<288x1152xbf16, #tpu.memory_space<vmem>>, vector<288x128xbf16>
    tpu.vector_store %arg11[%c0_13, %c256], %12 {strides = array<i32>} : memref<288x1152xbf16, #tpu.memory_space<vmem>>, vector<288x128xbf16>,
    %c31 = arith.constant 31 : index
    %c0_14 = arith.constant 0 : index
    %14 = vector.load %arg10[%c31, %c0_14] : memref<352x128xbf16, #tpu.memory_space<vmem>>, vector<288x128xbf16>
    %c0_15 = arith.constant 0 : index
    %c384 = arith.constant 384 : index
    %15 = vector.load %arg11[%c0_15, %c384] : memref<288x1152xbf16, #tpu.memory_space<vmem>>, vector<288x128xbf16>
    tpu.vector_store %arg11[%c0_15, %c384], %14 {strides = array<i32>} : memref<288x1152xbf16, #tpu.memory_space<vmem>>, vector<288x128xbf16>,
    %c32_16 = arith.constant 32 : index
    %c0_17 = arith.constant 0 : index
    %16 = vector.load %arg10[%c32_16, %c0_17] : memref<352x128xbf16, #tpu.memory_space<vmem>>, vector<288x128xbf16>
    %c0_18 = arith.constant 0 : index
    %c512 = arith.constant 512 : index
    %17 = vector.load %arg11[%c0_18, %c512] : memref<288x1152xbf16, #tpu.memory_space<vmem>>, vector<288x128xbf16>
    tpu.vector_store %arg11[%c0_18, %c512], %16 {strides = array<i32>} : memref<288x1152xbf16, #tpu.memory_space<vmem>>, vector<288x128xbf16>,
    %c33 = arith.constant 33 : index
    %c0_19 = arith.constant 0 : index
    %18 = vector.load %arg10[%c33, %c0_19] : memref<352x128xbf16, #tpu.memory_space<vmem>>, vector<288x128xbf16>
    %c0_20 = arith.constant 0 : index
    %c640 = arith.constant 640 : index
    %19 = vector.load %arg11[%c0_20, %c640] : memref<288x1152xbf16, #tpu.memory_space<vmem>>, vector<288x128xbf16>
    tpu.vector_store %arg11[%c0_20, %c640], %18 {strides = array<i32>} : memref<288x1152xbf16, #tpu.memory_space<vmem>>, vector<288x128xbf16>,
    %c49 = arith.constant 49 : index
    %c0_21 = arith.constant 0 : index
    %20 = vector.load %arg10[%c49, %c0_21] : memref<352x128xbf16, #tpu.memory_space<vmem>>, vector<288x128xbf16>
    %c0_22 = arith.constant 0 : index
    %c768 = arith.constant 768 : index
    %21 = vector.load %arg11[%c0_22, %c768] : memref<288x1152xbf16, #tpu.memory_space<vmem>>, vector<288x128xbf16>
    tpu.vector_store %arg11[%c0_22, %c768], %20 {strides = array<i32>} : memref<288x1152xbf16, #tpu.memory_space<vmem>>, vector<288x128xbf16>,
    %c50 = arith.constant 50 : index
    %c0_23 = arith.constant 0 : index
    %22 = vector.load %arg10[%c50, %c0_23] : memref<352x128xbf16, #tpu.memory_space<vmem>>, vector<288x128xbf16>
    %c0_24 = arith.constant 0 : index
    %c896 = arith.constant 896 : index
    %23 = vector.load %arg11[%c0_24, %c896] : memref<288x1152xbf16, #tpu.memory_space<vmem>>, vector<288x128xbf16>
    tpu.vector_store %arg11[%c0_24, %c896], %22 {strides = array<i32>} : memref<288x1152xbf16, #tpu.memory_space<vmem>>, vector<288x128xbf16>,
    %c51 = arith.constant 51 : index
    %c0_25 = arith.constant 0 : index
    %24 = vector.load %arg10[%c51, %c0_25] : memref<352x128xbf16, #tpu.memory_space<vmem>>, vector<288x128xbf16>
    %c0_26 = arith.constant 0 : index
    %c1024 = arith.constant 1024 : index
    %25 = vector.load %arg11[%c0_26, %c1024] : memref<288x1152xbf16, #tpu.memory_space<vmem>>, vector<288x128xbf16>
    tpu.vector_store %arg11[%c0_26, %c1024], %24 {strides = array<i32>} : memref<288x1152xbf16, #tpu.memory_space<vmem>>, vector<288x128xbf16>,
    %c0_27 = arith.constant 0 : index
    %c0_28 = arith.constant 0 : index
    %26 = vector.load %arg11[%c0_27, %c0_28] : memref<288x1152xbf16, #tpu.memory_space<vmem>>, vector<288x1152xbf16>
    %c0_29 = arith.constant 0 : index
    %c0_30 = arith.constant 0 : index
    %27 = vector.load %arg2[%c0_29, %c0_30] : memref<1152x128xbf16, #tpu.memory_space<vmem>>, vector<1152x128xbf16>
    %cst_31 = arith.constant dense<0.000000e+00> : vector<288x128xf32>
    %28 = tpu.matmul %26, %27, %cst_31 {dimension_numbers = #tpu.dot_dimension_numbers<[1], [0], [0], [1], [0, 0, 1, 1], [], []>} : vector<288x1152xbf16>, vector<1152x128xbf16>, vector<288x128xf32> -> vector<288x128xf32>
    %c0_32 = arith.constant 0 : index
    %c0_33 = arith.constant 0 : index
    %29 = vector.load %arg3[%c0_32, %c0_33] : memref<1x128xf32, #tpu.memory_space<vmem>>, vector<1x128xf32>
    %30 = vector.broadcast %29 : vector<1x128xf32> to vector<288x128xf32>
    %31 = arith.mulf %28, %30 : vector<288x128xf32>
    %c0_34 = arith.constant 0 : index
    %c0_35 = arith.constant 0 : index
    %32 = vector.load %arg4[%c0_34, %c0_35] : memref<1x128xf32, #tpu.memory_space<vmem>>, vector<1x128xf32>
    %33 = vector.broadcast %32 : vector<1x128xf32> to vector<288x128xf32>
    %34 = arith.addf %31, %33 : vector<288x128xf32>
    %cst_36 = arith.constant 0.000000e+00 : f32
    %35 = vector.broadcast %cst_36 : f32 to vector<288x128xf32>
    %36 = arith.maximumf %34, %35 : vector<288x128xf32>
    %c0_37 = arith.constant 0 : index
    %c0_38 = arith.constant 0 : index
    %37 = vector.load %arg8[%c0_37, %c0_38] : memref<288x1xf32, #tpu.memory_space<vmem>>, vector<288x1xf32>
    %38 = vector.broadcast %37 : vector<288x1xf32> to vector<288x128xf32>
    %39 = arith.mulf %36, %38 : vector<288x128xf32>
    %40 = arith.truncf %39 : vector<288x128xf32> to vector<288x128xbf16>
    %c32_39 = arith.constant 32 : index
    %c0_40 = arith.constant 0 : index
    %41 = vector.load %arg10[%c32_39, %c0_40] : memref<352x128xbf16, #tpu.memory_space<vmem>>, vector<288x128xbf16>
    tpu.vector_store %arg10[%c32_39, %c0_40], %40 {strides = array<i32>} : memref<352x128xbf16, #tpu.memory_space<vmem>>, vector<288x128xbf16>,
    %c13_41 = arith.constant 13 : index
    %c0_42 = arith.constant 0 : index
    %42 = vector.load %arg10[%c13_41, %c0_42] : memref<352x128xbf16, #tpu.memory_space<vmem>>, vector<288x128xbf16>
    %c0_43 = arith.constant 0 : index
    %c0_44 = arith.constant 0 : index
    %43 = vector.load %arg11[%c0_43, %c0_44] : memref<288x1152xbf16, #tpu.memory_space<vmem>>, vector<288x128xbf16>
    tpu.vector_store %arg11[%c0_43, %c0_44], %42 {strides = array<i32>} : memref<288x1152xbf16, #tpu.memory_space<vmem>>, vector<288x128xbf16>,
    %c14_45 = arith.constant 14 : index
    %c0_46 = arith.constant 0 : index
    %44 = vector.load %arg10[%c14_45, %c0_46] : memref<352x128xbf16, #tpu.memory_space<vmem>>, vector<288x128xbf16>
    %c0_47 = arith.constant 0 : index
    %c128_48 = arith.constant 128 : index
    %45 = vector.load %arg11[%c0_47, %c128_48] : memref<288x1152xbf16, #tpu.memory_space<vmem>>, vector<288x128xbf16>
    tpu.vector_store %arg11[%c0_47, %c128_48], %44 {strides = array<i32>} : memref<288x1152xbf16, #tpu.memory_space<vmem>>, vector<288x128xbf16>,
    %c15_49 = arith.constant 15 : index
    %c0_50 = arith.constant 0 : index
    %46 = vector.load %arg10[%c15_49, %c0_50] : memref<352x128xbf16, #tpu.memory_space<vmem>>, vector<288x128xbf16>
    %c0_51 = arith.constant 0 : index
    %c256_52 = arith.constant 256 : index
    %47 = vector.load %arg11[%c0_51, %c256_52] : memref<288x1152xbf16, #tpu.memory_space<vmem>>, vector<288x128xbf16>
    tpu.vector_store %arg11[%c0_51, %c256_52], %46 {strides = array<i32>} : memref<288x1152xbf16, #tpu.memory_space<vmem>>, vector<288x128xbf16>,
    %c31_53 = arith.constant 31 : index
    %c0_54 = arith.constant 0 : index
    %48 = vector.load %arg10[%c31_53, %c0_54] : memref<352x128xbf16, #tpu.memory_space<vmem>>, vector<288x128xbf16>
    %c0_55 = arith.constant 0 : index
    %c384_56 = arith.constant 384 : index
    %49 = vector.load %arg11[%c0_55, %c384_56] : memref<288x1152xbf16, #tpu.memory_space<vmem>>, vector<288x128xbf16>
    tpu.vector_store %arg11[%c0_55, %c384_56], %48 {strides = array<i32>} : memref<288x1152xbf16, #tpu.memory_space<vmem>>, vector<288x128xbf16>,
    %c32_57 = arith.constant 32 : index
    %c0_58 = arith.constant 0 : index
    %50 = vector.load %arg10[%c32_57, %c0_58] : memref<352x128xbf16, #tpu.memory_space<vmem>>, vector<288x128xbf16>
    %c0_59 = arith.constant 0 : index
    %c512_60 = arith.constant 512 : index
    %51 = vector.load %arg11[%c0_59, %c512_60] : memref<288x1152xbf16, #tpu.memory_space<vmem>>, vector<288x128xbf16>
    tpu.vector_store %arg11[%c0_59, %c512_60], %50 {strides = array<i32>} : memref<288x1152xbf16, #tpu.memory_space<vmem>>, vector<288x128xbf16>,
    %c33_61 = arith.constant 33 : index
    %c0_62 = arith.constant 0 : index
    %52 = vector.load %arg10[%c33_61, %c0_62] : memref<352x128xbf16, #tpu.memory_space<vmem>>, vector<288x128xbf16>
    %c0_63 = arith.constant 0 : index
    %c640_64 = arith.constant 640 : index
    %53 = vector.load %arg11[%c0_63, %c640_64] : memref<288x1152xbf16, #tpu.memory_space<vmem>>, vector<288x128xbf16>
    tpu.vector_store %arg11[%c0_63, %c640_64], %52 {strides = array<i32>} : memref<288x1152xbf16, #tpu.memory_space<vmem>>, vector<288x128xbf16>,
    %c49_65 = arith.constant 49 : index
    %c0_66 = arith.constant 0 : index
    %54 = vector.load %arg10[%c49_65, %c0_66] : memref<352x128xbf16, #tpu.memory_space<vmem>>, vector<288x128xbf16>
    %c0_67 = arith.constant 0 : index
    %c768_68 = arith.constant 768 : index
    %55 = vector.load %arg11[%c0_67, %c768_68] : memref<288x1152xbf16, #tpu.memory_space<vmem>>, vector<288x128xbf16>
    tpu.vector_store %arg11[%c0_67, %c768_68], %54 {strides = array<i32>} : memref<288x1152xbf16, #tpu.memory_space<vmem>>, vector<288x128xbf16>,
    %c50_69 = arith.constant 50 : index
    %c0_70 = arith.constant 0 : index
    %56 = vector.load %arg10[%c50_69, %c0_70] : memref<352x128xbf16, #tpu.memory_space<vmem>>, vector<288x128xbf16>
    %c0_71 = arith.constant 0 : index
    %c896_72 = arith.constant 896 : index
    %57 = vector.load %arg11[%c0_71, %c896_72] : memref<288x1152xbf16, #tpu.memory_space<vmem>>, vector<288x128xbf16>
    tpu.vector_store %arg11[%c0_71, %c896_72], %56 {strides = array<i32>} : memref<288x1152xbf16, #tpu.memory_space<vmem>>, vector<288x128xbf16>,
    %c51_73 = arith.constant 51 : index
    %c0_74 = arith.constant 0 : index
    %58 = vector.load %arg10[%c51_73, %c0_74] : memref<352x128xbf16, #tpu.memory_space<vmem>>, vector<288x128xbf16>
    %c0_75 = arith.constant 0 : index
    %c1024_76 = arith.constant 1024 : index
    %59 = vector.load %arg11[%c0_75, %c1024_76] : memref<288x1152xbf16, #tpu.memory_space<vmem>>, vector<288x128xbf16>
    tpu.vector_store %arg11[%c0_75, %c1024_76], %58 {strides = array<i32>} : memref<288x1152xbf16, #tpu.memory_space<vmem>>, vector<288x128xbf16>,
    %c0_77 = arith.constant 0 : index
    %c0_78 = arith.constant 0 : index
    %60 = vector.load %arg11[%c0_77, %c0_78] : memref<288x1152xbf16, #tpu.memory_space<vmem>>, vector<288x1152xbf16>
    %c0_79 = arith.constant 0 : index
    %c0_80 = arith.constant 0 : index
    %61 = vector.load %arg5[%c0_79, %c0_80] : memref<1152x128xbf16, #tpu.memory_space<vmem>>, vector<1152x128xbf16>
    %cst_81 = arith.constant dense<0.000000e+00> : vector<288x128xf32>
    %62 = tpu.matmul %60, %61, %cst_81 {dimension_numbers = #tpu.dot_dimension_numbers<[1], [0], [0], [1], [0, 0, 1, 1], [], []>} : vector<288x1152xbf16>, vector<1152x128xbf16>, vector<288x128xf32> -> vector<288x128xf32>
    %c0_82 = arith.constant 0 : index
    %c0_83 = arith.constant 0 : index
    %63 = vector.load %arg6[%c0_82, %c0_83] : memref<1x128xf32, #tpu.memory_space<vmem>>, vector<1x128xf32>
    %64 = vector.broadcast %63 : vector<1x128xf32> to vector<288x128xf32>
    %65 = arith.mulf %62, %64 : vector<288x128xf32>
    %c0_84 = arith.constant 0 : index
    %c0_85 = arith.constant 0 : index
    %66 = vector.load %arg7[%c0_84, %c0_85] : memref<1x128xf32, #tpu.memory_space<vmem>>, vector<1x128xf32>
    %67 = vector.broadcast %66 : vector<1x128xf32> to vector<288x128xf32>
    %68 = arith.addf %65, %67 : vector<288x128xf32>
    %c0_86 = arith.constant 0 : index
    %c0_87 = arith.constant 0 : index
    %c0_88 = arith.constant 0 : index
    %69 = vector.load %arg1[%c0_86, %c0_87, %c0_88] : memref<1x288x128xf32, #tpu.memory_space<vmem>>, vector<1x288x128xf32>
    %70 = vector.shape_cast %69 : vector<1x288x128xf32> to vector<288x128xf32>
    %71 = arith.addf %68, %70 : vector<288x128xf32>
    %cst_89 = arith.constant 0.000000e+00 : f32
    %72 = vector.broadcast %cst_89 : f32 to vector<288x128xf32>
    %73 = arith.maximumf %71, %72 : vector<288x128xf32>
    %c0_90 = arith.constant 0 : index
    %c0_91 = arith.constant 0 : index
    %c0_92 = arith.constant 0 : index
    %74 = vector.load %arg9[%c0_90, %c0_91, %c0_92] : memref<1x288x128xf32, #tpu.memory_space<vmem>>, vector<1x288x128xf32>
    %75 = vector.shape_cast %74 : vector<1x288x128xf32> to vector<288x128xf32>
    %76 = vector.shape_cast %73 : vector<288x128xf32> to vector<1x288x128xf32>
    tpu.vector_store %arg9[%c0_90, %c0_91, %c0_92], %76 {strides = array<i32>} : memref<1x288x128xf32, #tpu.memory_space<vmem>>, vector<1x288x128xf32>,
    return
  }
  func.func @transform_0(%arg0: i32) -> (i32, i32, i32) {
    %c0_i32 = arith.constant 0 : i32
    %c0_i32_0 = arith.constant 0 : i32
    %c0_i32_1 = arith.constant 0 : i32
    return %arg0, %c0_i32, %c0_i32_0 : i32, i32, i32
  }
  func.func @transform_1(%arg0: i32) -> (i32, i32) {
    %c0_i32 = arith.constant 0 : i32
    %c0_i32_0 = arith.constant 0 : i32
    %c0_i32_1 = arith.constant 0 : i32
    return %c0_i32, %c0_i32_0 : i32, i32
  }
  func.func @transform_2(%arg0: i32) -> (i32, i32) {
    %c0_i32 = arith.constant 0 : i32
    %c0_i32_0 = arith.constant 0 : i32
    %c0_i32_1 = arith.constant 0 : i32
    return %c0_i32, %c0_i32_0 : i32, i32
  }
  func.func @transform_3(%arg0: i32) -> (i32, i32) {
    %c0_i32 = arith.constant 0 : i32
    %c0_i32_0 = arith.constant 0 : i32
    %c0_i32_1 = arith.constant 0 : i32
    return %c0_i32, %c0_i32_0 : i32, i32
  }
  func.func @transform_4(%arg0: i32) -> (i32, i32) {
    %c0_i32 = arith.constant 0 : i32
    %c0_i32_0 = arith.constant 0 : i32
    %c0_i32_1 = arith.constant 0 : i32
    return %c0_i32, %c0_i32_0 : i32, i32
  }
  func.func @transform_5(%arg0: i32) -> (i32, i32) {
    %c0_i32 = arith.constant 0 : i32
    %c0_i32_0 = arith.constant 0 : i32
    %c0_i32_1 = arith.constant 0 : i32
    return %c0_i32, %c0_i32_0 : i32, i32
  }
  func.func @transform_6(%arg0: i32) -> (i32, i32) {
    %c0_i32 = arith.constant 0 : i32
    %c0_i32_0 = arith.constant 0 : i32
    %c0_i32_1 = arith.constant 0 : i32
    return %c0_i32, %c0_i32_0 : i32, i32
  }
  func.func @transform_7(%arg0: i32) -> (i32, i32) {
    %c0_i32 = arith.constant 0 : i32
    %c0_i32_0 = arith.constant 0 : i32
    %c0_i32_1 = arith.constant 0 : i32
    return %c0_i32, %c0_i32_0 : i32, i32
  }
  func.func @transform_8(%arg0: i32) -> (i32, i32, i32) {
    %c0_i32 = arith.constant 0 : i32
    %c0_i32_0 = arith.constant 0 : i32
    %c0_i32_1 = arith.constant 0 : i32
    return %arg0, %c0_i32, %c0_i32_0 : i32, i32, i32
  }
}

</mosaic_0001>

<llo_original>
// kernel: tile.8
$region0: #{tile.8}
  #allocation0 [shape = 's32[1]{0}', space=sflag, size = 0x4, scoped, tag = 'scoped memory for tile.8']
  %s0 = inlined_call_operand.vmem [shape: f32[18], index: 0, kind: input, shape index: {}]
  %s1 = inlined_call_operand.vmem [shape: f32[16,18], index: 1, kind: output, shape index: {}]
  // Predicated region
  $region2: #{tile.8} parent=0 // pred_check
    _
  $region3: #{tile.8} parent=0 // pred_check_branch
    %3 = sbr.rel (0) target = $region5
  $region4: #{tile.8} parent=0 // pred_region
    _
  $region5: #{tile.8} parent=0 // pred_fallthru
    _
  %v4 = vld [vmem:[%s0] ss:$0 sm:$0xff]
  %5 = vst [vmem:[%s1] sm:$0xff] %v4
  %s6 = scalar_lea.vmem %s1, 8
  %7 = vst [vmem:[%s6] sm:$0xff] %v4

// kernel: tile.0
$region0: #{tile.0}
  %s0 = inlined_call_operand.vmem [shape: f32[16,18], index: 0, kind: input, shape index: {}]
  %s1 = inlined_call_operand.vmem [shape: f32[288,1], index: 1, kind: output, shape index: {}]
  %v2 = vld [vmem:[%s0] sm:$0xff]
  %vm3 = vcmask 7168
  %4 = vst.msk [vmem:[%s1] ss:$18 sm:$0xff] %vm3, %v2
  %s5 = scalar_lea.vmem %s0, 8
  %v6 = vld [vmem:[%s5] sm:$0xff]
  %vm7 = vcmask 7168
  %s8 = scalar_lea.vmem %s1, 144
  %9 = vst.msk [vmem:[%s8] ss:$18 sm:$0xff] %vm7, %v6
  %v10 = vld.sshfl [vmem:[%s0] sm:$0xff pattern:$0xf6d4b290]
  %11 = vrot.lane.b32.xlu0 %v10, 127
  %v12 = vpop.permute.xlu0 %11
  %vm13 = vcmask 7168
  %s14 = scalar_lea.vmem %s1, 1
  %15 = vst.msk [vmem:[%s14] ss:$162 sm:$0x3] %vm13, %v12
  %s16 = scalar_lea.vmem %s1, 4294967009
  %17 = vst.msk [vmem:[%s16] ss:$162 sm:$0xc] %vm13, %v12
  %s18 = scalar_lea.vmem %s1, 4294966721
  %19 = vst.msk [vmem:[%s18] ss:$162 sm:$0x30] %vm13, %v12
  %s20 = scalar_lea.vmem %s1, 4294966433
  %21 = vst.msk [vmem:[%s20] ss:$162 sm:$0xc0] %vm13, %v12
  %s22 = scalar_lea.vmem %s0, 1
  %v23 = vld.sshfl [vmem:[%s22] sm:$0xff pattern:$0x6d4b2907]
  %24 = vrot.lane.b32.xlu0 %v23, 127
  %v25 = vpop.permute.xlu0 %24
  %vm26 = vcmask 7168
  %s27 = scalar_lea.vmem %s1, 145
  %28 = vst.msk [vmem:[%s27] ss:$-126 sm:$0x3] %vm26, %v25
  %s29 = scalar_lea.vmem %s1, 433
  %30 = vst.msk [vmem:[%s29] ss:$-126 sm:$0xc] %vm26, %v25
  %s31 = scalar_lea.vmem %s1, 721
  %32 = vst.msk [vmem:[%s31] ss:$-126 sm:$0x30] %vm26, %v25
  %s33 = scalar_lea.vmem %s1, 1009
  %34 = vst.msk [vmem:[%s33] ss:$-126 sm:$0xc0] %vm26, %v25
  %v35 = vld.sshfl [vmem:[%s0] sm:$0xff pattern:$0x6d4b2907]
  %36 = vrot.lane.b32.xlu0 %v35, 126
  %v37 = vpop.permute.xlu0 %36
  %vm38 = vcmask 7168
  %s39 = scalar_lea.vmem %s1, 128
  %40 = vst.msk [vmem:[%s39] ss:$-126 sm:$0x3] %vm38, %v37
  %s41 = scalar_lea.vmem %s1, 416
  %42 = vst.msk [vmem:[%s41] ss:$-126 sm:$0xc] %vm38, %v37
  %s43 = scalar_lea.vmem %s1, 704
  %44 = vst.msk [vmem:[%s43] ss:$-126 sm:$0x30] %vm38, %v37
  %s45 = scalar_lea.vmem %s1, 992
  %46 = vst.msk [vmem:[%s45] ss:$-126 sm:$0xc0] %vm38, %v37
  %s47 = scalar_lea.vmem %s0, 1
  %v48 = vld.sshfl [vmem:[%s47] sm:$0xff pattern:$0xd4b2907e]
  %49 = vrot.lane.b32.xlu0 %v48, 126
  %v50 = vpop.permute.xlu0 %49
  %vm51 = vcmask 7168
  %s52 = scalar_lea.vmem %s1, 272
  %53 = vst.msk [vmem:[%s52] ss:$-126 sm:$0x7] %vm51, %v50
  %s54 = scalar_lea.vmem %s1, 560
  %55 = vst.msk [vmem:[%s54] ss:$-126 sm:$0x18] %vm51, %v50
  %s56 = scalar_lea.vmem %s1, 848
  %57 = vst.msk [vmem:[%s56] ss:$-126 sm:$0x60] %vm51, %v50
  %s58 = scalar_lea.vmem %s1, 247
  %59 = vst.msk [vmem:[%s58] sm:$0x80] %vm51, %v50
  %v60 = vld.sshfl [vmem:[%s0] sm:$0xff pattern:$0x6d4b2907]
  %61 = vrot.lane.b32.xlu0 %v60, 125
  %v62 = vpop.permute.xlu0 %61
  %vm63 = vcmask 7168
  %s64 = scalar_lea.vmem %s1, 129
  %65 = vst.msk [vmem:[%s64] ss:$-126 sm:$0x3] %vm63, %v62
  %s66 = scalar_lea.vmem %s1, 417
  %67 = vst.msk [vmem:[%s66] ss:$-126 sm:$0xc] %vm63, %v62
  %s68 = scalar_lea.vmem %s1, 705
  %69 = vst.msk [vmem:[%s68] ss:$-126 sm:$0x30] %vm63, %v62
  %s70 = scalar_lea.vmem %s1, 993
  %71 = vst.msk [vmem:[%s70] ss:$-126 sm:$0xc0] %vm63, %v62
  %s72 = scalar_lea.vmem %s0, 1
  %v73 = vld.sshfl [vmem:[%s72] sm:$0xff pattern:$0xd4b2907e]
  %74 = vrot.lane.b32.xlu0 %v73, 125
  %v75 = vpop.permute.xlu0 %74
  %vm76 = vcmask 7168
  %s77 = scalar_lea.vmem %s1, 273
  %78 = vst.msk [vmem:[%s77] ss:$-126 sm:$0x7] %vm76, %v75
  %s79 = scalar_lea.vmem %s1, 561
  %80 = vst.msk [vmem:[%s79] ss:$-126 sm:$0x18] %vm76, %v75
  %s81 = scalar_lea.vmem %s1, 849
  %82 = vst.msk [vmem:[%s81] ss:$-126 sm:$0x60] %vm76, %v75
  %s83 = scalar_lea.vmem %s1, 248
  %84 = vst.msk [vmem:[%s83] sm:$0x80] %vm76, %v75
  %v85 = vld.sshfl [vmem:[%s0] sm:$0xff pattern:$0xd4b2907e]
  %86 = vrot.lane.b32.xlu0 %v85, 124
  %v87 = vpop.permute.xlu0 %86
  %vm88 = vcmask 7168
  %s89 = scalar_lea.vmem %s1, 256
  %90 = vst.msk [vmem:[%s89] ss:$-126 sm:$0x7] %vm88, %v87
  %s91 = scalar_lea.vmem %s1, 544
  %92 = vst.msk [vmem:[%s91] ss:$-126 sm:$0x18] %vm88, %v87
  %s93 = scalar_lea.vmem %s1, 832
  %94 = vst.msk [vmem:[%s93] ss:$-126 sm:$0x60] %vm88, %v87
  %s95 = scalar_lea.vmem %s1, 231
  %96 = vst.msk [vmem:[%s95] sm:$0x80] %vm88, %v87
  %s97 = scalar_lea.vmem %s0, 1
  %v98 = vld.sshfl [vmem:[%s97] sm:$0xff pattern:$0x4b2907e5]
  %99 = vrot.lane.b32.xlu0 %v98, 124
  %v100 = vpop.permute.xlu0 %99
  %vm101 = vcmask 7168
  %s102 = scalar_lea.vmem %s1, 112
  %103 = vst.msk [vmem:[%s102] ss:$162 sm:$0x3] %vm101, %v100
  %s104 = scalar_lea.vmem %s1, 400
  %105 = vst.msk [vmem:[%s104] ss:$-126 sm:$0xc] %vm101, %v100
  %s106 = scalar_lea.vmem %s1, 688
  %107 = vst.msk [vmem:[%s106] ss:$-126 sm:$0x30] %vm101, %v100
  %s108 = scalar_lea.vmem %s1, 976
  %109 = vst.msk [vmem:[%s108] ss:$-126 sm:$0xc0] %vm101, %v100
  %v110 = vld.sshfl [vmem:[%s0] sm:$0xff pattern:$0xd4b2907e]
  %111 = vrot.lane.b32.xlu0 %v110, 123
  %v112 = vpop.permute.xlu0 %111
  %vm113 = vcmask 7168
  %s114 = scalar_lea.vmem %s1, 257
  %115 = vst.msk [vmem:[%s114] ss:$-126 sm:$0x7] %vm113, %v112
  %s116 = scalar_lea.vmem %s1, 545
  %117 = vst.msk [vmem:[%s116] ss:$-126 sm:$0x18] %vm113, %v112
  %s118 = scalar_lea.vmem %s1, 833
  %119 = vst.msk [vmem:[%s118] ss:$-126 sm:$0x60] %vm113, %v112
  %s120 = scalar_lea.vmem %s1, 232
  %121 = vst.msk [vmem:[%s120] sm:$0x80] %vm113, %v112
  %s122 = scalar_lea.vmem %s0, 1
  %v123 = vld.sshfl [vmem:[%s122] sm:$0xff pattern:$0x4b2907e5]
  %124 = vrot.lane.b32.xlu0 %v123, 123
  %v125 = vpop.permute.xlu0 %124
  %vm126 = vcmask 7168
  %s127 = scalar_lea.vmem %s1, 113
  %128 = vst.msk [vmem:[%s127] ss:$162 sm:$0x3] %vm126, %v125
  %s129 = scalar_lea.vmem %s1, 401
  %130 = vst.msk [vmem:[%s129] ss:$-126 sm:$0xc] %vm126, %v125
  %s131 = scalar_lea.vmem %s1, 689
  %132 = vst.msk [vmem:[%s131] ss:$-126 sm:$0x30] %vm126, %v125
  %s133 = scalar_lea.vmem %s1, 977
  %134 = vst.msk [vmem:[%s133] ss:$-126 sm:$0xc0] %vm126, %v125
  %v135 = vld.sshfl [vmem:[%s0] sm:$0xff pattern:$0x4b2907e5]
  %136 = vrot.lane.b32.xlu0 %v135, 122
  %v137 = vpop.permute.xlu0 %136
  %vm138 = vcmask 7168
  %s139 = scalar_lea.vmem %s1, 96
  %140 = vst.msk [vmem:[%s139] ss:$162 sm:$0x3] %vm138, %v137
  %s141 = scalar_lea.vmem %s1, 384
  %142 = vst.msk [vmem:[%s141] ss:$-126 sm:$0xc] %vm138, %v137
  %s143 = scalar_lea.vmem %s1, 672
  %144 = vst.msk [vmem:[%s143] ss:$-126 sm:$0x30] %vm138, %v137
  %s145 = scalar_lea.vmem %s1, 960
  %146 = vst.msk [vmem:[%s145] ss:$-126 sm:$0xc0] %vm138, %v137
  %s147 = scalar_lea.vmem %s0, 1
  %v148 = vld.sshfl [vmem:[%s147] sm:$0xff pattern:$0xb2907e5c]
  %149 = vrot.lane.b32.xlu0 %v148, 122
  %v150 = vpop.permute.xlu0 %149
  %vm151 = vcmask 7168
  %s152 = scalar_lea.vmem %s1, 240
  %153 = vst.msk [vmem:[%s152] ss:$-126 sm:$0x3] %vm151, %v150
  %s154 = scalar_lea.vmem %s1, 528
  %155 = vst.msk [vmem:[%s154] ss:$-126 sm:$0x1c] %vm151, %v150
  %s156 = scalar_lea.vmem %s1, 816
  %157 = vst.msk [vmem:[%s156] ss:$-126 sm:$0x60] %vm151, %v150
  %s158 = scalar_lea.vmem %s1, 215
  %159 = vst.msk [vmem:[%s158] sm:$0x80] %vm151, %v150
  %v160 = vld.sshfl [vmem:[%s0] sm:$0xff pattern:$0x4b2907e5]
  %161 = vrot.lane.b32.xlu0 %v160, 121
  %v162 = vpop.permute.xlu0 %161
  %vm163 = vcmask 7168
  %s164 = scalar_lea.vmem %s1, 97
  %165 = vst.msk [vmem:[%s164] ss:$162 sm:$0x3] %vm163, %v162
  %s166 = scalar_lea.vmem %s1, 385
  %167 = vst.msk [vmem:[%s166] ss:$-126 sm:$0xc] %vm163, %v162
  %s168 = scalar_lea.vmem %s1, 673
  %169 = vst.msk [vmem:[%s168] ss:$-126 sm:$0x30] %vm163, %v162
  %s170 = scalar_lea.vmem %s1, 961
  %171 = vst.msk [vmem:[%s170] ss:$-126 sm:$0xc0] %vm163, %v162
  %s172 = scalar_lea.vmem %s0, 1
  %v173 = vld.sshfl [vmem:[%s172] sm:$0xff pattern:$0xb2907e5c]
  %174 = vrot.lane.b32.xlu0 %v173, 121
  %v175 = vpop.permute.xlu0 %174
  %vm176 = vcmask 7168
  %s177 = scalar_lea.vmem %s1, 241
  %178 = vst.msk [vmem:[%s177] ss:$-126 sm:$0x3] %vm176, %v175
  %s179 = scalar_lea.vmem %s1, 529
  %180 = vst.msk [vmem:[%s179] ss:$-126 sm:$0x1c] %vm176, %v175
  %s181 = scalar_lea.vmem %s1, 817
  %182 = vst.msk [vmem:[%s181] ss:$-126 sm:$0x60] %vm176, %v175
  %s183 = scalar_lea.vmem %s1, 216
  %184 = vst.msk [vmem:[%s183] sm:$0x80] %vm176, %v175
  %v185 = vld.sshfl [vmem:[%s0] sm:$0xff pattern:$0xb2907e5c]
  %186 = vrot.lane.b32.xlu0 %v185, 120
  %v187 = vpop.permute.xlu0 %186
  %vm188 = vcmask 7168
  %s189 = scalar_lea.vmem %s1, 224
  %190 = vst.msk [vmem:[%s189] ss:$-126 sm:$0x3] %vm188, %v187
  %s191 = scalar_lea.vmem %s1, 512
  %192 = vst.msk [vmem:[%s191] ss:$-126 sm:$0x1c] %vm188, %v187
  %s193 = scalar_lea.vmem %s1, 800
  %194 = vst.msk [vmem:[%s193] ss:$-126 sm:$0x60] %vm188, %v187
  %s195 = scalar_lea.vmem %s1, 199
  %196 = vst.msk [vmem:[%s195] sm:$0x80] %vm188, %v187
  %s197 = scalar_lea.vmem %s0, 1
  %v198 = vld.sshfl [vmem:[%s197] sm:$0xff pattern:$0x2907e5c3]
  %199 = vrot.lane.b32.xlu0 %v198, 120
  %v200 = vpop.permute.xlu0 %199
  %vm201 = vcmask 7168
  %s202 = scalar_lea.vmem %s1, 80
  %203 = vst.msk [vmem:[%s202] ss:$162 sm:$0x3] %vm201, %v200
  %s204 = scalar_lea.vmem %s1, 4294967088
  %205 = vst.msk [vmem:[%s204] ss:$162 sm:$0xc] %vm201, %v200
  %s206 = scalar_lea.vmem %s1, 656
  %207 = vst.msk [vmem:[%s206] ss:$-126 sm:$0x30] %vm201, %v200
  %s208 = scalar_lea.vmem %s1, 944
  %209 = vst.msk [vmem:[%s208] ss:$-126 sm:$0xc0] %vm201, %v200
  %v210 = vld.sshfl [vmem:[%s0] sm:$0xff pattern:$0xb2907e5c]
  %211 = vrot.lane.b32.xlu0 %v210, 119
  %v212 = vpop.permute.xlu0 %211
  %vm213 = vcmask 7168
  %s214 = scalar_lea.vmem %s1, 225
  %215 = vst.msk [vmem:[%s214] ss:$-126 sm:$0x3] %vm213, %v212
  %s216 = scalar_lea.vmem %s1, 513
  %217 = vst.msk [vmem:[%s216] ss:$-126 sm:$0x1c] %vm213, %v212
  %s218 = scalar_lea.vmem %s1, 801
  %219 = vst.msk [vmem:[%s218] ss:$-126 sm:$0x60] %vm213, %v212
  %s220 = scalar_lea.vmem %s1, 200
  %221 = vst.msk [vmem:[%s220] sm:$0x80] %vm213, %v212
  %s222 = scalar_lea.vmem %s0, 1
  %v223 = vld.sshfl [vmem:[%s222] sm:$0xff pattern:$0x2907e5c3]
  %224 = vrot.lane.b32.xlu0 %v223, 119
  %v225 = vpop.permute.xlu0 %224
  %vm226 = vcmask 7168
  %s227 = scalar_lea.vmem %s1, 81
  %228 = vst.msk [vmem:[%s227] ss:$162 sm:$0x3] %vm226, %v225
  %s229 = scalar_lea.vmem %s1, 4294967089
  %230 = vst.msk [vmem:[%s229] ss:$162 sm:$0xc] %vm226, %v225
  %s231 = scalar_lea.vmem %s1, 657
  %232 = vst.msk [vmem:[%s231] ss:$-126 sm:$0x30] %vm226, %v225
  %s233 = scalar_lea.vmem %s1, 945
  %234 = vst.msk [vmem:[%s233] ss:$-126 sm:$0xc0] %vm226, %v225
  %v235 = vld.sshfl [vmem:[%s0] sm:$0xff pattern:$0x2907e5c3]
  %236 = vrot.lane.b32.xlu0 %v235, 118
  %v237 = vpop.permute.xlu0 %236
  %vm238 = vcmask 7168
  %s239 = scalar_lea.vmem %s1, 64
  %240 = vst.msk [vmem:[%s239] ss:$162 sm:$0x3] %vm238, %v237
  %s241 = scalar_lea.vmem %s1, 4294967072
  %242 = vst.msk [vmem:[%s241] ss:$162 sm:$0xc] %vm238, %v237
  %s243 = scalar_lea.vmem %s1, 640
  %244 = vst.msk [vmem:[%s243] ss:$-126 sm:$0x30] %vm238, %v237
  %s245 = scalar_lea.vmem %s1, 928
  %246 = vst.msk [vmem:[%s245] ss:$-126 sm:$0xc0] %vm238, %v237
  %s247 = scalar_lea.vmem %s0, 1
  %v248 = vld.sshfl [vmem:[%s247] sm:$0xff pattern:$0x907e5c3a]
  %249 = vrot.lane.b32.xlu0 %v248, 118
  %v250 = vpop.permute.xlu0 %249
  %vm251 = vcmask 7168
  %s252 = scalar_lea.vmem %s1, 208
  %253 = vst.msk [vmem:[%s252] ss:$-126 sm:$0x3] %vm251, %v250
  %s254 = scalar_lea.vmem %s1, 496
  %255 = vst.msk [vmem:[%s254] ss:$-126 sm:$0xc] %vm251, %v250
  %s256 = scalar_lea.vmem %s1, 784
  %257 = vst.msk [vmem:[%s256] ss:$-126 sm:$0x70] %vm251, %v250
  %s258 = scalar_lea.vmem %s1, 183
  %259 = vst.msk [vmem:[%s258] sm:$0x80] %vm251, %v250
  %v260 = vld.sshfl [vmem:[%s0] sm:$0xff pattern:$0x2907e5c3]
  %261 = vrot.lane.b32.xlu0 %v260, 117
  %v262 = vpop.permute.xlu0 %261
  %vm263 = vcmask 7168
  %s264 = scalar_lea.vmem %s1, 65
  %265 = vst.msk [vmem:[%s264] ss:$162 sm:$0x3] %vm263, %v262
  %s266 = scalar_lea.vmem %s1, 4294967073
  %267 = vst.msk [vmem:[%s266] ss:$162 sm:$0xc] %vm263, %v262
  %s268 = scalar_lea.vmem %s1, 641
  %269 = vst.msk [vmem:[%s268] ss:$-126 sm:$0x30] %vm263, %v262
  %s270 = scalar_lea.vmem %s1, 929
  %271 = vst.msk [vmem:[%s270] ss:$-126 sm:$0xc0] %vm263, %v262
  %s272 = scalar_lea.vmem %s0, 1
  %v273 = vld.sshfl [vmem:[%s272] sm:$0xff pattern:$0x907e5c3a]
  %274 = vrot.lane.b32.xlu0 %v273, 117
  %v275 = vpop.permute.xlu0 %274
  %vm276 = vcmask 7168
  %s277 = scalar_lea.vmem %s1, 209
  %278 = vst.msk [vmem:[%s277] ss:$-126 sm:$0x3] %vm276, %v275
  %s279 = scalar_lea.vmem %s1, 497
  %280 = vst.msk [vmem:[%s279] ss:$-126 sm:$0xc] %vm276, %v275
  %s281 = scalar_lea.vmem %s1, 785
  %282 = vst.msk [vmem:[%s281] ss:$-126 sm:$0x70] %vm276, %v275
  %s283 = scalar_lea.vmem %s1, 184
  %284 = vst.msk [vmem:[%s283] sm:$0x80] %vm276, %v275
  %v285 = vld.sshfl [vmem:[%s0] sm:$0xff pattern:$0x907e5c3a]
  %286 = vrot.lane.b32.xlu0 %v285, 116
  %v287 = vpop.permute.xlu0 %286
  %vm288 = vcmask 7168
  %s289 = scalar_lea.vmem %s1, 192
  %290 = vst.msk [vmem:[%s289] ss:$-126 sm:$0x3] %vm288, %v287
  %s291 = scalar_lea.vmem %s1, 480
  %292 = vst.msk [vmem:[%s291] ss:$-126 sm:$0xc] %vm288, %v287
  %s293 = scalar_lea.vmem %s1, 768
  %294 = vst.msk [vmem:[%s293] ss:$-126 sm:$0x70] %vm288, %v287
  %s295 = scalar_lea.vmem %s1, 167
  %296 = vst.msk [vmem:[%s295] sm:$0x80] %vm288, %v287
  %s297 = scalar_lea.vmem %s0, 1
  %v298 = vld.sshfl [vmem:[%s297] sm:$0xff pattern:$0x7e5c3a1]
  %299 = vrot.lane.b32.xlu0 %v298, 116
  %v300 = vpop.permute.xlu0 %299
  %vm301 = vcmask 7168
  %s302 = scalar_lea.vmem %s1, 48
  %303 = vst.msk [vmem:[%s302] ss:$162 sm:$0x3] %vm301, %v300
  %s304 = scalar_lea.vmem %s1, 4294967056
  %305 = vst.msk [vmem:[%s304] ss:$162 sm:$0xc] %vm301, %v300
  %s306 = scalar_lea.vmem %s1, 4294966768
  %307 = vst.msk [vmem:[%s306] ss:$162 sm:$0x30] %vm301, %v300
  %s308 = scalar_lea.vmem %s1, 912
  %309 = vst.msk [vmem:[%s308] ss:$-126 sm:$0xc0] %vm301, %v300
  %v310 = vld.sshfl [vmem:[%s0] sm:$0xff pattern:$0x907e5c3a]
  %311 = vrot.lane.b32.xlu0 %v310, 115
  %v312 = vpop.permute.xlu0 %311
  %vm313 = vcmask 7168
  %s314 = scalar_lea.vmem %s1, 193
  %315 = vst.msk [vmem:[%s314] ss:$-126 sm:$0x3] %vm313, %v312
  %s316 = scalar_lea.vmem %s1, 481
  %317 = vst.msk [vmem:[%s316] ss:$-126 sm:$0xc] %vm313, %v312
  %s318 = scalar_lea.vmem %s1, 769
  %319 = vst.msk [vmem:[%s318] ss:$-126 sm:$0x70] %vm313, %v312
  %s320 = scalar_lea.vmem %s1, 168
  %321 = vst.msk [vmem:[%s320] sm:$0x80] %vm313, %v312
  %s322 = scalar_lea.vmem %s0, 1
  %v323 = vld.sshfl [vmem:[%s322] sm:$0xff pattern:$0x7e5c3a1]
  %324 = vrot.lane.b32.xlu0 %v323, 115
  %v325 = vpop.permute.xlu0 %324
  %vm326 = vcmask 7168
  %s327 = scalar_lea.vmem %s1, 49
  %328 = vst.msk [vmem:[%s327] ss:$162 sm:$0x3] %vm326, %v325
  %s329 = scalar_lea.vmem %s1, 4294967057
  %330 = vst.msk [vmem:[%s329] ss:$162 sm:$0xc] %vm326, %v325
  %s331 = scalar_lea.vmem %s1, 4294966769
  %332 = vst.msk [vmem:[%s331] ss:$162 sm:$0x30] %vm326, %v325
  %s333 = scalar_lea.vmem %s1, 913
  %334 = vst.msk [vmem:[%s333] ss:$-126 sm:$0xc0] %vm326, %v325
  %v335 = vld.sshfl [vmem:[%s0] sm:$0xff pattern:$0x7e5c3a1]
  %336 = vrot.lane.b32.xlu0 %v335, 114
  %v337 = vpop.permute.xlu0 %336
  %vm338 = vcmask 7168
  %s339 = scalar_lea.vmem %s1, 32
  %340 = vst.msk [vmem:[%s339] ss:$162 sm:$0x3] %vm338, %v337
  %s341 = scalar_lea.vmem %s1, 4294967040
  %342 = vst.msk [vmem:[%s341] ss:$162 sm:$0xc] %vm338, %v337
  %s343 = scalar_lea.vmem %s1, 4294966752
  %344 = vst.msk [vmem:[%s343] ss:$162 sm:$0x30] %vm338, %v337
  %s345 = scalar_lea.vmem %s1, 896
  %346 = vst.msk [vmem:[%s345] ss:$-126 sm:$0xc0] %vm338, %v337
  %s347 = scalar_lea.vmem %s0, 2
  %v348 = vld.sshfl [vmem:[%s347] sm:$0xff pattern:$0x6d4b2907]
  %349 = vrot.lane.b32.xlu0 %v348, 114
  %v350 = vpop.permute.xlu0 %349
  %vm351 = vcmask 7168
  %s352 = scalar_lea.vmem %s1, 176
  %353 = vst.msk [vmem:[%s352] ss:$-126 sm:$0x3] %vm351, %v350
  %s354 = scalar_lea.vmem %s1, 464
  %355 = vst.msk [vmem:[%s354] ss:$-126 sm:$0xc] %vm351, %v350
  %s356 = scalar_lea.vmem %s1, 752
  %357 = vst.msk [vmem:[%s356] ss:$-126 sm:$0x30] %vm351, %v350
  %s358 = scalar_lea.vmem %s1, 1040
  %359 = vst.msk [vmem:[%s358] ss:$-126 sm:$0xc0] %vm351, %v350
  %v360 = vld.sshfl [vmem:[%s0] sm:$0xff pattern:$0x7e5c3a1]
  %361 = vrot.lane.b32.xlu0 %v360, 113
  %v362 = vpop.permute.xlu0 %361
  %vm363 = vcmask 7168
  %s364 = scalar_lea.vmem %s1, 33
  %365 = vst.msk [vmem:[%s364] ss:$162 sm:$0x3] %vm363, %v362
  %s366 = scalar_lea.vmem %s1, 4294967041
  %367 = vst.msk [vmem:[%s366] ss:$162 sm:$0xc] %vm363, %v362
  %s368 = scalar_lea.vmem %s1, 4294966753
  %369 = vst.msk [vmem:[%s368] ss:$162 sm:$0x30] %vm363, %v362
  %s370 = scalar_lea.vmem %s1, 897
  %371 = vst.msk [vmem:[%s370] ss:$-126 sm:$0xc0] %vm363, %v362
  %s372 = scalar_lea.vmem %s0, 2
  %v373 = vld.sshfl [vmem:[%s372] sm:$0xff pattern:$0x6d4b2907]
  %374 = vrot.lane.b32.xlu0 %v373, 113
  %v375 = vpop.permute.xlu0 %374
  %vm376 = vcmask 7168
  %s377 = scalar_lea.vmem %s1, 177
  %378 = vst.msk [vmem:[%s377] ss:$-126 sm:$0x3] %vm376, %v375
  %s379 = scalar_lea.vmem %s1, 465
  %380 = vst.msk [vmem:[%s379] ss:$-126 sm:$0xc] %vm376, %v375
  %s381 = scalar_lea.vmem %s1, 753
  %382 = vst.msk [vmem:[%s381] ss:$-126 sm:$0x30] %vm376, %v375
  %s383 = scalar_lea.vmem %s1, 1041
  %384 = vst.msk [vmem:[%s383] ss:$-126 sm:$0xc0] %vm376, %v375
  %s385 = scalar_lea.vmem %s0, 1
  %v386 = vld.sshfl [vmem:[%s385] sm:$0xff pattern:$0x6d4b2907]
  %387 = vrot.lane.b32.xlu0 %v386, 112
  %v388 = vpop.permute.xlu0 %387
  %vm389 = vcmask 7168
  %s390 = scalar_lea.vmem %s1, 160
  %391 = vst.msk [vmem:[%s390] ss:$-126 sm:$0x3] %vm389, %v388
  %s392 = scalar_lea.vmem %s1, 448
  %393 = vst.msk [vmem:[%s392] ss:$-126 sm:$0xc] %vm389, %v388
  %s394 = scalar_lea.vmem %s1, 736
  %395 = vst.msk [vmem:[%s394] ss:$-126 sm:$0x30] %vm389, %v388
  %s396 = scalar_lea.vmem %s1, 1024
  %397 = vst.msk [vmem:[%s396] ss:$-126 sm:$0xc0] %vm389, %v388
  %v398 = vld.sshfl [vmem:[%s0] sm:$0xff pattern:$0xf6d4b290]
  %399 = vrot.lane.b32.xlu0 %v398, 112
  %v400 = vpop.permute.xlu0 %399
  %vm401 = vcmask 7168
  %s402 = scalar_lea.vmem %s1, 16
  %403 = vst.msk [vmem:[%s402] ss:$162 sm:$0x3] %vm401, %v400
  %s404 = scalar_lea.vmem %s1, 4294967024
  %405 = vst.msk [vmem:[%s404] ss:$162 sm:$0xc] %vm401, %v400
  %s406 = scalar_lea.vmem %s1, 4294966736
  %407 = vst.msk [vmem:[%s406] ss:$162 sm:$0x30] %vm401, %v400
  %s408 = scalar_lea.vmem %s1, 4294966448
  %409 = vst.msk [vmem:[%s408] ss:$162 sm:$0xc0] %vm401, %v400
  %s410 = scalar_lea.vmem %s0, 1
  %v411 = vld.sshfl [vmem:[%s410] sm:$0xff pattern:$0x6d4b2907]
  %412 = vrot.lane.b32.xlu0 %v411, 111
  %v413 = vpop.permute.xlu0 %412
  %vm414 = vcmask 7168
  %s415 = scalar_lea.vmem %s1, 161
  %416 = vst.msk [vmem:[%s415] ss:$-126 sm:$0x3] %vm414, %v413
  %s417 = scalar_lea.vmem %s1, 449
  %418 = vst.msk [vmem:[%s417] ss:$-126 sm:$0xc] %vm414, %v413
  %s419 = scalar_lea.vmem %s1, 737
  %420 = vst.msk [vmem:[%s419] ss:$-126 sm:$0x30] %vm414, %v413
  %s421 = scalar_lea.vmem %s1, 1025
  %422 = vst.msk [vmem:[%s421] ss:$-126 sm:$0xc0] %vm414, %v413
  %v423 = vld.sshfl [vmem:[%s0] sm:$0xff pattern:$0xf6d4b290]
  %424 = vrot.lane.b32.xlu0 %v423, 111
  %v425 = vpop.permute.xlu0 %424
  %vm426 = vcmask 7168
  %s427 = scalar_lea.vmem %s1, 17
  %428 = vst.msk [vmem:[%s427] ss:$162 sm:$0x3] %vm426, %v425
  %s429 = scalar_lea.vmem %s1, 4294967025
  %430 = vst.msk [vmem:[%s429] ss:$162 sm:$0xc] %vm426, %v425
  %s431 = scalar_lea.vmem %s1, 4294966737
  %432 = vst.msk [vmem:[%s431] ss:$162 sm:$0x30] %vm426, %v425
  %s433 = scalar_lea.vmem %s1, 4294966449
  %434 = vst.msk [vmem:[%s433] ss:$162 sm:$0xc0] %vm426, %v425

// kernel: basic_block_forward.1
$region0: #{basic_block_forward.1}
  #allocation0 [shape = 'u32[]', space=smem, size = 0x4, offset = 0x4, fixed_abs, tag = 'smem constant byte address 0x4 - core index']
  #allocation1 [shape = 'u32[72,128]{1,0:T(1,128)}', space=vmem, size = 0x9000, scoped, tag = 'internal scratch']
  #allocation2 [shape = 'bf16[352,128]{1,0:T(8,128)(2,1)}', space=vmem, size = 0x16000, scoped, tag = 'scratch operand']
  #allocation3 [shape = 'bf16[288,1152]{1,0:T(8,128)(2,1)}', space=vmem, size = 0xa2000, scoped, tag = 'scratch operand']
  %s0 = inlined_call_operand.vmem [shape: f32[2,288,128], index: 0, kind: input, shape index: {}]
  %s1 = inlined_call_operand.vmem [shape: bf16[1152,128], index: 1, kind: input, shape index: {}]
  %s2 = inlined_call_operand.vmem [shape: f32[1,128], index: 2, kind: input, shape index: {}]
  %s3 = inlined_call_operand.vmem [shape: f32[1,128], index: 3, kind: input, shape index: {}]
  %s4 = inlined_call_operand.vmem [shape: bf16[1152,128], index: 4, kind: input, shape index: {}]
  %s5 = inlined_call_operand.vmem [shape: f32[1,128], index: 5, kind: input, shape index: {}]
  %s6 = inlined_call_operand.vmem [shape: f32[1,128], index: 6, kind: input, shape index: {}]
  %s7 = inlined_call_operand.vmem [shape: f32[288,1], index: 7, kind: input, shape index: {}]
  %s8 = inlined_call_operand.vmem [shape: f32[2,288,128], index: 8, kind: output, shape index: {}]
  %s9 = sld [smem:[#allocation0]]
  $region65: #{basic_block_forward.1} parent=0
    _
  %s11 = ssub.s32 1, %s9
  %s12 = scalar_select 0, %s11, %s9
  loop: start=0, step=1, limit=4
  $region2: #{basic_block_forward.1} parent=0 // loop_pre_header
    _
  $region3: #{basic_block_forward.1} parent=0 // loop_header
    %s14 = sphi 0, %s18
    %p15 = scmp.ge.s32.totalorder %s14, 4
    %s24 = sphi 0, %s26
    %s27 = sphi 0, %s24
    %s28 = sphi 0, %s27
    %s44 = sphi 0, %s28
    %s48 = sphi 0, %s48
    %s50 = sphi 0, %s48
    %s51 = sphi 0, %s50
    %s65 = sphi 0, %s51
    %s69 = sphi 0, %s69
    %s71 = sphi 0, %s69
    %s72 = sphi 0, %s71
    %s86 = sphi 0, %s72
    %s90 = sphi 0, %s90
    %s92 = sphi 0, %s90
    %s93 = sphi 0, %s92
    %s107 = sphi 0, %s93
    %s111 = sphi 0, %s111
    %s113 = sphi 0, %s111
    %s114 = sphi 0, %s113
    %s128 = sphi 0, %s114
    %s132 = sphi 0, %s132
    %s134 = sphi 0, %s132
    %s135 = sphi 0, %s134
    %s149 = sphi 0, %s135
    %s153 = sphi 0, %s153
    %s155 = sphi 0, %s153
    %s156 = sphi 0, %s155
    %s170 = sphi 0, %s156
    %s174 = sphi 0, %s174
    %s176 = sphi 0, %s174
    %s177 = sphi 0, %s176
    %s191 = sphi 0, %s177
    %s197 = sphi 0, %s199
    %s200 = sphi 0, %s197
    %s201 = sphi 0, %s200
    %s217 = sphi 0, %s201
  $region4: #{basic_block_forward.1} parent=0 // loop_header_branch
    %17 = sbr.rel (%p15) target = $region8
  $region5: #{basic_block_forward.1} parent=0 // loop_body
    %s19 = ssub.s32 %s14, 1
    %s20 = ssub.s32 %s14, 2
    %s21 = sadd.s32 %s14, 1
    %s22 = ssub.s32 %s14, %s21
    %p23 = scmp.eq.s32.totalorder %s22, 0
    %s25 = sadd.s32 %s24, 1
    %s26 = scalar_select %p23, %s24, %s25
    %p29 = pneg %p23
    %p30 = scmp.eq.s32.totalorder %s14, 1
    %p31 = por %p29, %p30
    %p32 = scmp.ne.s32.totalorder %s24, %s27
    %p33 = scmp.eq.s32.totalorder %s14, 0
    %p34 = por %p32, %p33
    %p35 = scmp.ne.s32.totalorder %s24, %s27
    %p36 = scmp.eq.s32.totalorder %s19, 1
    %p37 = por %p35, %p36
    %p38 = scmp.ne.s32.totalorder %s27, %s28
    %p39 = scmp.eq.s32.totalorder %s19, 0
    %p40 = por %p38, %p39
    %p41 = scmp.ne.s32.totalorder %s27, %s28
    %p42 = scmp.eq.s32.totalorder %s20, 1
    %p43 = por %p41, %p42
    %p45 = scmp.ne.s32.totalorder %s28, %s44
    %p46 = scmp.eq.s32.totalorder %s20, 0
    %p47 = por %p45, %p46
    %s49 = sadd.s32 %s48, 1
    %p52 = scmp.eq.s32.totalorder %s14, 1
    %p53 = scmp.ne.s32.totalorder %s48, %s50
    %p54 = scmp.eq.s32.totalorder %s14, 0
    %p55 = por %p53, %p54
    %p56 = scmp.ne.s32.totalorder %s48, %s50
    %p57 = scmp.eq.s32.totalorder %s19, 1
    %p58 = por %p56, %p57
    %p59 = scmp.ne.s32.totalorder %s50, %s51
    %p60 = scmp.eq.s32.totalorder %s19, 0
    %p61 = por %p59, %p60
    %p62 = scmp.ne.s32.totalorder %s50, %s51
    %p63 = scmp.eq.s32.totalorder %s20, 1
    %p64 = por %p62, %p63
    %p66 = scmp.ne.s32.totalorder %s51, %s65
    %p67 = scmp.eq.s32.totalorder %s20, 0
    %p68 = por %p66, %p67
    %s70 = sadd.s32 %s69, 1
    %p73 = scmp.eq.s32.totalorder %s14, 1
    %p74 = scmp.ne.s32.totalorder %s69, %s71
    %p75 = scmp.eq.s32.totalorder %s14, 0
    %p76 = por %p74, %p75
    %p77 = scmp.ne.s32.totalorder %s69, %s71
    %p78 = scmp.eq.s32.totalorder %s19, 1
    %p79 = por %p77, %p78
    %p80 = scmp.ne.s32.totalorder %s71, %s72
    %p81 = scmp.eq.s32.totalorder %s19, 0
    %p82 = por %p80, %p81
    %p83 = scmp.ne.s32.totalorder %s71, %s72
    %p84 = scmp.eq.s32.totalorder %s20, 1
    %p85 = por %p83, %p84
    %p87 = scmp.ne.s32.totalorder %s72, %s86
    %p88 = scmp.eq.s32.totalorder %s20, 0
    %p89 = por %p87, %p88
    %s91 = sadd.s32 %s90, 1
    %p94 = scmp.eq.s32.totalorder %s14, 1
    %p95 = scmp.ne.s32.totalorder %s90, %s92
    %p96 = scmp.eq.s32.totalorder %s14, 0
    %p97 = por %p95, %p96
    %p98 = scmp.ne.s32.totalorder %s90, %s92
    %p99 = scmp.eq.s32.totalorder %s19, 1
    %p100 = por %p98, %p99
    %p101 = scmp.ne.s32.totalorder %s92, %s93
    %p102 = scmp.eq.s32.totalorder %s19, 0
    %p103 = por %p101, %p102
    %p104 = scmp.ne.s32.totalorder %s92, %s93
    %p105 = scmp.eq.s32.totalorder %s20, 1
    %p106 = por %p104, %p105
    %p108 = scmp.ne.s32.totalorder %s93, %s107
    %p109 = scmp.eq.s32.totalorder %s20, 0
    %p110 = por %p108, %p109
    %s112 = sadd.s32 %s111, 1
    %p115 = scmp.eq.s32.totalorder %s14, 1
    %p116 = scmp.ne.s32.totalorder %s111, %s113
    %p117 = scmp.eq.s32.totalorder %s14, 0
    %p118 = por %p116, %p117
    %p119 = scmp.ne.s32.totalorder %s111, %s113
    %p120 = scmp.eq.s32.totalorder %s19, 1
    %p121 = por %p119, %p120
    %p122 = scmp.ne.s32.totalorder %s113, %s114
    %p123 = scmp.eq.s32.totalorder %s19, 0
    %p124 = por %p122, %p123
    %p125 = scmp.ne.s32.totalorder %s113, %s114
    %p126 = scmp.eq.s32.totalorder %s20, 1
    %p127 = por %p125, %p126
    %p129 = scmp.ne.s32.totalorder %s114, %s128
    %p130 = scmp.eq.s32.totalorder %s20, 0
    %p131 = por %p129, %p130
    %s133 = sadd.s32 %s132, 1
    %p136 = scmp.eq.s32.totalorder %s14, 1
    %p137 = scmp.ne.s32.totalorder %s132, %s134
    %p138 = scmp.eq.s32.totalorder %s14, 0
    %p139 = por %p137, %p138
    %p140 = scmp.ne.s32.totalorder %s132, %s134
    %p141 = scmp.eq.s32.totalorder %s19, 1
    %p142 = por %p140, %p141
    %p143 = scmp.ne.s32.totalorder %s134, %s135
    %p144 = scmp.eq.s32.totalorder %s19, 0
    %p145 = por %p143, %p144
    %p146 = scmp.ne.s32.totalorder %s134, %s135
    %p147 = scmp.eq.s32.totalorder %s20, 1
    %p148 = por %p146, %p147
    %p150 = scmp.ne.s32.totalorder %s135, %s149
    %p151 = scmp.eq.s32.totalorder %s20, 0
    %p152 = por %p150, %p151
    %s154 = sadd.s32 %s153, 1
    %p157 = scmp.eq.s32.totalorder %s14, 1
    %p158 = scmp.ne.s32.totalorder %s153, %s155
    %p159 = scmp.eq.s32.totalorder %s14, 0
    %p160 = por %p158, %p159
    %p161 = scmp.ne.s32.totalorder %s153, %s155
    %p162 = scmp.eq.s32.totalorder %s19, 1
    %p163 = por %p161, %p162
    %p164 = scmp.ne.s32.totalorder %s155, %s156
    %p165 = scmp.eq.s32.totalorder %s19, 0
    %p166 = por %p164, %p165
    %p167 = scmp.ne.s32.totalorder %s155, %s156
    %p168 = scmp.eq.s32.totalorder %s20, 1
    %p169 = por %p167, %p168
    %p171 = scmp.ne.s32.totalorder %s156, %s170
    %p172 = scmp.eq.s32.totalorder %s20, 0
    %p173 = por %p171, %p172
    %s175 = sadd.s32 %s174, 1
    %p178 = scmp.eq.s32.totalorder %s14, 1
    %p179 = scmp.ne.s32.totalorder %s174, %s176
    %p180 = scmp.eq.s32.totalorder %s14, 0
    %p181 = por %p179, %p180
    %p182 = scmp.ne.s32.totalorder %s174, %s176
    %p183 = scmp.eq.s32.totalorder %s19, 1
    %p184 = por %p182, %p183
    %p185 = scmp.ne.s32.totalorder %s176, %s177
    %p186 = scmp.eq.s32.totalorder %s19, 0
    %p187 = por %p185, %p186
    %p188 = scmp.ne.s32.totalorder %s176, %s177
    %p189 = scmp.eq.s32.totalorder %s20, 1
    %p190 = por %p188, %p189
    %p192 = scmp.ne.s32.totalorder %s177, %s191
    %p193 = scmp.eq.s32.totalorder %s20, 0
    %p194 = por %p192, %p193
    %s195 = ssub.s32 %s14, %s21
    %p196 = scmp.eq.s32.totalorder %s195, 0
    %s198 = sadd.s32 %s197, 1
    %s199 = scalar_select %p196, %s197, %s198
    %p202 = pneg %p196
    %p203 = scmp.eq.s32.totalorder %s14, 1
    %p204 = por %p202, %p203
    %p205 = scmp.ne.s32.totalorder %s197, %s200
    %p206 = scmp.eq.s32.totalorder %s14, 0
    %p207 = por %p205, %p206
    %p208 = scmp.ne.s32.totalorder %s197, %s200
    %p209 = scmp.eq.s32.totalorder %s19, 1
    %p210 = por %p208, %p209
    %p211 = scmp.ne.s32.totalorder %s200, %s201
    %p212 = scmp.eq.s32.totalorder %s19, 0
    %p213 = por %p211, %p212
    %p214 = scmp.ne.s32.totalorder %s200, %s201
    %p215 = scmp.eq.s32.totalorder %s20, 1
    %p216 = por %p214, %p215
    %p218 = scmp.ne.s32.totalorder %s201, %s217
    %p219 = scmp.eq.s32.totalorder %s20, 0
    %p220 = por %p218, %p219
    %p221 = scmp.le.s32.totalorder 1, %s14
    %p222 = scmp.lt.s32.totalorder %s14, 3
    %p223 = pnand %p221, %p222
    %p224 = pneg %p223
    // Predicated region
    $region9: #{basic_block_forward.1} parent=5 // pred_check
      _
    $region10: #{basic_block_forward.1} parent=5 // pred_check_branch
      %226 = sbr.rel (%p223) target = $region12
    $region11: #{basic_block_forward.1} parent=5 // pred_region
      %s227 = ssub.s32 %s14, 1
      // Predicated region
      $region13: #{basic_block_forward.1} parent=11 // pred_check
        %p228 = pneg %p61
      $region14: #{basic_block_forward.1} parent=11 // pred_check_branch
        %230 = sbr.rel (%p228) target = $region16
      $region15: #{basic_block_forward.1} parent=11 // pred_region
        _
      $region16: #{basic_block_forward.1} parent=11 // pred_fallthru
        _
      // Predicated region
      $region17: #{basic_block_forward.1} parent=11 // pred_check
        %p231 = pneg %p82
      $region18: #{basic_block_forward.1} parent=11 // pred_check_branch
        %233 = sbr.rel (%p231) target = $region20
      $region19: #{basic_block_forward.1} parent=11 // pred_region
        _
      $region20: #{basic_block_forward.1} parent=11 // pred_fallthru
        _
      // Predicated region
      $region21: #{basic_block_forward.1} parent=11 // pred_check
        %p234 = pneg %p103
      $region22: #{basic_block_forward.1} parent=11 // pred_check_branch
        %236 = sbr.rel (%p234) target = $region24
      $region23: #{basic_block_forward.1} parent=11 // pred_region
        _
      $region24: #{basic_block_forward.1} parent=11 // pred_fallthru
        _
      // Predicated region
      $region25: #{basic_block_forward.1} parent=11 // pred_check
        %p237 = pneg %p124
      $region26: #{basic_block_forward.1} parent=11 // pred_check_branch
        %239 = sbr.rel (%p237) target = $region28
      $region27: #{basic_block_forward.1} parent=11 // pred_region
        _
      $region28: #{basic_block_forward.1} parent=11 // pred_fallthru
        _
      // Predicated region
      $region29: #{basic_block_forward.1} parent=11 // pred_check
        %p240 = pneg %p145
      $region30: #{basic_block_forward.1} parent=11 // pred_check_branch
        %242 = sbr.rel (%p240) target = $region32
      $region31: #{basic_block_forward.1} parent=11 // pred_region
        _
      $region32: #{basic_block_forward.1} parent=11 // pred_fallthru
        _
      // Predicated region
      $region33: #{basic_block_forward.1} parent=11 // pred_check
        %p243 = pneg %p166
      $region34: #{basic_block_forward.1} parent=11 // pred_check_branch
        %245 = sbr.rel (%p243) target = $region36
      $region35: #{basic_block_forward.1} parent=11 // pred_region
        _
      $region36: #{basic_block_forward.1} parent=11 // pred_fallthru
        _
      // Predicated region
      $region37: #{basic_block_forward.1} parent=11 // pred_check
        %p246 = pneg %p187
      $region38: #{basic_block_forward.1} parent=11 // pred_check_branch
        %248 = sbr.rel (%p246) target = $region40
      $region39: #{basic_block_forward.1} parent=11 // pred_region
        _
      $region40: #{basic_block_forward.1} parent=11 // pred_fallthru
        _
    $region12: #{basic_block_forward.1} parent=5 // pred_fallthru
      _
    %p249 = scmp.lt.s32.totalorder %s14, 2
    // Predicated region
    $region41: #{basic_block_forward.1} parent=5 // pred_check
      %p250 = pneg %p249
    $region42: #{basic_block_forward.1} parent=5 // pred_check_branch
      %252 = sbr.rel (%p250) target = $region44
    $region43: #{basic_block_forward.1} parent=5 // pred_region
      // Predicated region
      $region45: #{basic_block_forward.1} parent=43 // pred_check
        %p253 = pneg %p34
      $region46: #{basic_block_forward.1} parent=43 // pred_check_branch
        %255 = sbr.rel (%p253) target = $region48
      $region47: #{basic_block_forward.1} parent=43 // pred_region
        %p256 = scmp.lt.s32.totalorder %s14, 1
        %s257 = scalar_select %p256, %s14, 1
        %s258 = smul.addr %s257, 36
        %s259 = smul.addr %s258, 8
        %s260 = scalar_lea.vmem %s0, %s259
      $region48: #{basic_block_forward.1} parent=43 // pred_fallthru
        _
    $region44: #{basic_block_forward.1} parent=5 // pred_fallthru
      _
    %p261 = scmp.le.s32.totalorder 1, %s14
    %p262 = scmp.lt.s32.totalorder %s14, 3
    %p263 = pnand %p261, %p262
    %p264 = pneg %p263
    // Predicated region
    $region49: #{basic_block_forward.1} parent=5 // pred_check
      _
    $region50: #{basic_block_forward.1} parent=5 // pred_check_branch
      %266 = sbr.rel (%p263) target = $region52
    $region51: #{basic_block_forward.1} parent=5 // pred_region
      %s267 = ssub.s32 %s14, 1
      %p268 = scmp.lt.s32.totalorder %s19, 1
      %s269 = scalar_select %p268, %s19, 1
      %s270 = smul.addr %s269, 36
      %s271 = smul.addr %s270, 8
      %s272 = scalar_lea.vmem %s0, %s271
      %p273 = pneg %p40
      %p274 = pneg %p37
      %p275 = pneg %p61
      %p276 = pneg %p58
      %p277 = pneg %p82
      %p278 = pneg %p79
      %p279 = pneg %p103
      %p280 = pneg %p100
      %p281 = pneg %p124
      %p282 = pneg %p121
      %p283 = pneg %p145
      %p284 = pneg %p142
      %p285 = pneg %p166
      %p286 = pneg %p163
      %p287 = pneg %p187
      %p288 = pneg %p184
      %p289 = pneg %p213
      %p290 = pneg %p210
      %p291 = scmp.lt.s32.totalorder %s19, 1
      %s292 = scalar_select %p291, %s19, 1
      %s293 = smul.addr %s292, 36
      %s294 = smul.addr %s293, 8
      %s295 = scalar_lea.vmem %s8, %s294
      %p296 = scmp.lt.s32.totalorder %s19, 1
      %s297 = scalar_select %p296, %s19, 1
      %s298 = smul.addr %s297, 36
      %s299 = smul.addr %s298, 8
      %s300 = scalar_lea.vmem %s0, %s299
      %p301 = scmp.lt.s32.totalorder %s19, 1
      %s302 = scalar_select %p301, %s19, 1
      %s303 = smul.addr %s302, 36
      %s304 = smul.addr %s303, 8
      %s305 = scalar_lea.vmem %s8, %s304
      %307 = vst [vmem:[#allocation2] sm:$0xf] 0
      %308 = vst [vmem:[#allocation2 + $0x4] sm:$0xf] 0
      %309 = vst [vmem:[#allocation2 + $0x8] sm:$0xf] 0
      %310 = vst [vmem:[#allocation2 + $0xc] sm:$0xf] 0
      %311 = vst [vmem:[#allocation2 + $0xa0] sm:$0xf] 0
      %312 = vst [vmem:[#allocation2 + $0xa4] sm:$0xf] 0
      %313 = vst [vmem:[#allocation2 + $0xa8] sm:$0xf] 0
      %314 = vst [vmem:[#allocation2 + $0xac] sm:$0xf] 0
      %v315 = vld [vmem:[%s300] sm:$0xff]
      %v316 = vld [vmem:[%s300 + $0x8] sm:$0xff]
      %v317 = vld [vmem:[%s300 + $0x10] sm:$0xff]
      %v318 = vld [vmem:[%s300 + $0x18] sm:$0xff]
      %v319 = vld [vmem:[%s300 + $0x20] sm:$0xff]
      %v320 = vld [vmem:[%s300 + $0x28] sm:$0xff]
      %v321 = vld [vmem:[%s300 + $0x30] sm:$0xff]
      %v322 = vld [vmem:[%s300 + $0x38] sm:$0xff]
      %v323 = vld [vmem:[%s300 + $0x40] sm:$0xff]
      %v324 = vld [vmem:[%s300 + $0x48] sm:$0xff]
      %v325 = vld [vmem:[%s300 + $0x50] sm:$0xff]
      %v326 = vld [vmem:[%s300 + $0x58] sm:$0xff]
      %v327 = vld [vmem:[%s300 + $0x60] sm:$0xff]
      %v328 = vld [vmem:[%s300 + $0x68] sm:$0xff]
      %v329 = vld [vmem:[%s300 + $0x70] sm:$0xff]
      %v330 = vld [vmem:[%s300 + $0x78] sm:$0xff]
      %v331 = vld [vmem:[%s300 + $0x80] sm:$0xff]
      %v332 = vld [vmem:[%s300 + $0x88] sm:$0xff]
      %v333 = vld [vmem:[%s300 + $0x90] sm:$0xff]
      %v334 = vld [vmem:[%s300 + $0x98] sm:$0xff]
      %v335 = vld [vmem:[%s300 + $0xa0] sm:$0xff]
      %v336 = vld [vmem:[%s300 + $0xa8] sm:$0xff]
      %v337 = vld [vmem:[%s300 + $0xb0] sm:$0xff]
      %v338 = vld [vmem:[%s300 + $0xb8] sm:$0xff]
      %v339 = vld [vmem:[%s300 + $0xc0] sm:$0xff]
      %v340 = vld [vmem:[%s300 + $0xc8] sm:$0xff]
      %v341 = vld [vmem:[%s300 + $0xd0] sm:$0xff]
      %v342 = vld [vmem:[%s300 + $0xd8] sm:$0xff]
      %v343 = vld [vmem:[%s300 + $0xe0] sm:$0xff]
      %v344 = vld [vmem:[%s300 + $0xe8] sm:$0xff]
      %v345 = vld [vmem:[%s300 + $0xf0] sm:$0xff]
      %v346 = vld [vmem:[%s300 + $0xf8] sm:$0xff]
      %v347 = vld [vmem:[%s300 + $0x100] sm:$0xff]
      %v348 = vld [vmem:[%s300 + $0x108] sm:$0xff]
      %v349 = vld [vmem:[%s300 + $0x110] sm:$0xff]
      %v350 = vld [vmem:[%s300 + $0x118] sm:$0xff]
      %v351 = vpack.c.bf16 %v315, %v315
      %v352 = vpack.c.bf16 %v316, %v316
      %v353 = vpack.c.bf16 %v317, %v317
      %v354 = vpack.c.bf16 %v318, %v318
      %v355 = vpack.c.bf16 %v319, %v319
      %v356 = vpack.c.bf16 %v320, %v320
      %v357 = vpack.c.bf16 %v321, %v321
      %v358 = vpack.c.bf16 %v322, %v322
      %v359 = vpack.c.bf16 %v323, %v323
      %v360 = vpack.c.bf16 %v324, %v324
      %v361 = vpack.c.bf16 %v325, %v325
      %v362 = vpack.c.bf16 %v326, %v326
      %v363 = vpack.c.bf16 %v327, %v327
      %v364 = vpack.c.bf16 %v328, %v328
      %v365 = vpack.c.bf16 %v329, %v329
      %v366 = vpack.c.bf16 %v330, %v330
      %v367 = vpack.c.bf16 %v331, %v331
      %v368 = vpack.c.bf16 %v332, %v332
      %v369 = vpack.c.bf16 %v333, %v333
      %v370 = vpack.c.bf16 %v334, %v334
      %v371 = vpack.c.bf16 %v335, %v335
      %v372 = vpack.c.bf16 %v336, %v336
      %v373 = vpack.c.bf16 %v337, %v337
      %v374 = vpack.c.bf16 %v338, %v338
      %v375 = vpack.c.bf16 %v339, %v339
      %v376 = vpack.c.bf16 %v340, %v340
      %v377 = vpack.c.bf16 %v341, %v341
      %v378 = vpack.c.bf16 %v342, %v342
      %v379 = vpack.c.bf16 %v343, %v343
      %v380 = vpack.c.bf16 %v344, %v344
      %v381 = vpack.c.bf16 %v345, %v345
      %v382 = vpack.c.bf16 %v346, %v346
      %v383 = vpack.c.bf16 %v347, %v347
      %v384 = vpack.c.bf16 %v348, %v348
      %v385 = vpack.c.bf16 %v349, %v349
      %v386 = vpack.c.bf16 %v350, %v350
      %387 = vst [vmem:[#allocation2 + $0x10] sm:$0xf] %v351
      %388 = vst [vmem:[#allocation2 + $0x14] sm:$0xf] %v352
      %389 = vst [vmem:[#allocation2 + $0x18] sm:$0xf] %v353
      %390 = vst [vmem:[#allocation2 + $0x1c] sm:$0xf] %v354
      %391 = vst [vmem:[#allocation2 + $0x20] sm:$0xf] %v355
      %392 = vst [vmem:[#allocation2 + $0x24] sm:$0xf] %v356
      %393 = vst [vmem:[#allocation2 + $0x28] sm:$0xf] %v357
      %394 = vst [vmem:[#allocation2 + $0x2c] sm:$0xf] %v358
      %395 = vst [vmem:[#allocation2 + $0x30] sm:$0xf] %v359
      %396 = vst [vmem:[#allocation2 + $0x34] sm:$0xf] %v360
      %397 = vst [vmem:[#allocation2 + $0x38] sm:$0xf] %v361
      %398 = vst [vmem:[#allocation2 + $0x3c] sm:$0xf] %v362
      %399 = vst [vmem:[#allocation2 + $0x40] sm:$0xf] %v363
      %400 = vst [vmem:[#allocation2 + $0x44] sm:$0xf] %v364
      %401 = vst [vmem:[#allocation2 + $0x48] sm:$0xf] %v365
      %402 = vst [vmem:[#allocation2 + $0x4c] sm:$0xf] %v366
      %403 = vst [vmem:[#allocation2 + $0x50] sm:$0xf] %v367
      %404 = vst [vmem:[#allocation2 + $0x54] sm:$0xf] %v368
      %405 = vst [vmem:[#allocation2 + $0x58] sm:$0xf] %v369
      %406 = vst [vmem:[#allocation2 + $0x5c] sm:$0xf] %v370
      %407 = vst [vmem:[#allocation2 + $0x60] sm:$0xf] %v371
      %408 = vst [vmem:[#allocation2 + $0x64] sm:$0xf] %v372
      %409 = vst [vmem:[#allocation2 + $0x68] sm:$0xf] %v373
      %410 = vst [vmem:[#allocation2 + $0x6c] sm:$0xf] %v374
      %411 = vst [vmem:[#allocation2 + $0x70] sm:$0xf] %v375
      %412 = vst [vmem:[#allocation2 + $0x74] sm:$0xf] %v376
      %413 = vst [vmem:[#allocation2 + $0x78] sm:$0xf] %v377
      %414 = vst [vmem:[#allocation2 + $0x7c] sm:$0xf] %v378
      %415 = vst [vmem:[#allocation2 + $0x80] sm:$0xf] %v379
      %416 = vst [vmem:[#allocation2 + $0x84] sm:$0xf] %v380
      %417 = vst [vmem:[#allocation2 + $0x88] sm:$0xf] %v381
      %418 = vst [vmem:[#allocation2 + $0x8c] sm:$0xf] %v382
      %419 = vst [vmem:[#allocation2 + $0x90] sm:$0xf] %v383
      %420 = vst [vmem:[#allocation2 + $0x94] sm:$0xf] %v384
      %421 = vst [vmem:[#allocation2 + $0x98] sm:$0xf] %v385
      %422 = vst [vmem:[#allocation2 + $0x9c] sm:$0xf] %v386
      %v423 = vld [vmem:[#allocation2 + $0x4] sm:$0xc]
      %v424 = vld [vmem:[#allocation2 + $0x8] sm:$0xf]
      %v425 = vld [vmem:[#allocation2 + $0xc] sm:$0xf]
      %v426 = vld [vmem:[#allocation2 + $0x10] sm:$0xf]
      %v427 = vld [vmem:[#allocation2 + $0x14] sm:$0xf]
      %v428 = vld [vmem:[#allocation2 + $0x18] sm:$0xf]
      %v429 = vld [vmem:[#allocation2 + $0x1c] sm:$0xf]
      %v430 = vld [vmem:[#allocation2 + $0x20] sm:$0xf]
      %v431 = vld [vmem:[#allocation2 + $0x24] sm:$0xf]
      %v432 = vld [vmem:[#allocation2 + $0x28] sm:$0xf]
      %v433 = vld [vmem:[#allocation2 + $0x2c] sm:$0xf]
      %v434 = vld [vmem:[#allocation2 + $0x30] sm:$0xf]
      %v435 = vld [vmem:[#allocation2 + $0x34] sm:$0xf]
      %v436 = vld [vmem:[#allocation2 + $0x38] sm:$0xf]
      %v437 = vld [vmem:[#allocation2 + $0x3c] sm:$0xf]
      %v438 = vld [vmem:[#allocation2 + $0x40] sm:$0xf]
      %v439 = vld [vmem:[#allocation2 + $0x44] sm:$0xf]
      %v440 = vld [vmem:[#allocation2 + $0x48] sm:$0xf]
      %v441 = vld [vmem:[#allocation2 + $0x4c] sm:$0xf]
      %v442 = vld [vmem:[#allocation2 + $0x50] sm:$0xf]
      %v443 = vld [vmem:[#allocation2 + $0x54] sm:$0xf]
      %v444 = vld [vmem:[#allocation2 + $0x58] sm:$0xf]
      %v445 = vld [vmem:[#allocation2 + $0x5c] sm:$0xf]
      %v446 = vld [vmem:[#allocation2 + $0x60] sm:$0xf]
      %v447 = vld [vmem:[#allocation2 + $0x64] sm:$0xf]
      %v448 = vld [vmem:[#allocation2 + $0x68] sm:$0xf]
      %v449 = vld [vmem:[#allocation2 + $0x6c] sm:$0xf]
      %v450 = vld [vmem:[#allocation2 + $0x70] sm:$0xf]
      %v451 = vld [vmem:[#allocation2 + $0x74] sm:$0xf]
      %v452 = vld [vmem:[#allocation2 + $0x78] sm:$0xf]
      %v453 = vld [vmem:[#allocation2 + $0x7c] sm:$0xf]
      %v454 = vld [vmem:[#allocation2 + $0x80] sm:$0xf]
      %v455 = vld [vmem:[#allocation2 + $0x84] sm:$0xf]
      %v456 = vld [vmem:[#allocation2 + $0x88] sm:$0xf]
      %v457 = vld [vmem:[#allocation2 + $0x8c] sm:$0xf]
      %v458 = vld [vmem:[#allocation2 + $0x90] sm:$0xf]
      %v459 = vld [vmem:[#allocation2 + $0x94] sm:$0x7]
      %vm460 = vsmask.f32 1280
      %vm461 = vsmask.f32 5392
      %vm462 = vmor %vm460, %vm461
      %v464 = vshrl.u32 %v423, 16
      %v466 = vrot.slane %v464, 6
      %v467 = vshll.u32 %v423, 16
      %v469 = vrot.slane %v467, 7
      %v470 = vor.u32 %v466, %v469
      %v471 = vrot.slane %v470, 4
      %v473 = vshrl.u32 %v424, 16
      %v475 = vrot.slane %v473, 6
      %v476 = vshll.u32 %v424, 16
      %v478 = vrot.slane %v476, 7
      %v479 = vor.u32 %v475, %v478
      %v480 = vsel %vm462, %v471, %v479
      %v481 = vrot.slane %v479, 4
      %v483 = vshrl.u32 %v425, 16
      %v485 = vrot.slane %v483, 6
      %v486 = vshll.u32 %v425, 16
      %v488 = vrot.slane %v486, 7
      %v489 = vor.u32 %v485, %v488
      %v490 = vsel %vm462, %v481, %v489
      %v491 = vrot.slane %v489, 4
      %v493 = vshrl.u32 %v426, 16
      %v495 = vrot.slane %v493, 6
      %v496 = vshll.u32 %v426, 16
      %v498 = vrot.slane %v496, 7
      %v499 = vor.u32 %v495, %v498
      %v500 = vsel %vm462, %v491, %v499
      %v501 = vrot.slane %v499, 4
      %v503 = vshrl.u32 %v427, 16
      %v505 = vrot.slane %v503, 6
      %v506 = vshll.u32 %v427, 16
      %v508 = vrot.slane %v506, 7
      %v509 = vor.u32 %v505, %v508
      %v510 = vsel %vm462, %v501, %v509
      %v511 = vrot.slane %v509, 4
      %v513 = vshrl.u32 %v428, 16
      %v515 = vrot.slane %v513, 6
      %v516 = vshll.u32 %v428, 16
      %v518 = vrot.slane %v516, 7
      %v519 = vor.u32 %v515, %v518
      %v520 = vsel %vm462, %v511, %v519
      %v521 = vrot.slane %v519, 4
      %v523 = vshrl.u32 %v429, 16
      %v525 = vrot.slane %v523, 6
      %v526 = vshll.u32 %v429, 16
      %v528 = vrot.slane %v526, 7
      %v529 = vor.u32 %v525, %v528
      %v530 = vsel %vm462, %v521, %v529
      %v531 = vrot.slane %v529, 4
      %v533 = vshrl.u32 %v430, 16
      %v535 = vrot.slane %v533, 6
      %v536 = vshll.u32 %v430, 16
      %v538 = vrot.slane %v536, 7
      %v539 = vor.u32 %v535, %v538
      %v540 = vsel %vm462, %v531, %v539
      %v541 = vrot.slane %v539, 4
      %v543 = vshrl.u32 %v431, 16
      %v545 = vrot.slane %v543, 6
      %v546 = vshll.u32 %v431, 16
      %v548 = vrot.slane %v546, 7
      %v549 = vor.u32 %v545, %v548
      %v550 = vsel %vm462, %v541, %v549
      %v551 = vrot.slane %v549, 4
      %v553 = vshrl.u32 %v432, 16
      %v555 = vrot.slane %v553, 6
      %v556 = vshll.u32 %v432, 16
      %v558 = vrot.slane %v556, 7
      %v559 = vor.u32 %v555, %v558
      %v560 = vsel %vm462, %v551, %v559
      %v561 = vrot.slane %v559, 4
      %v563 = vshrl.u32 %v433, 16
      %v565 = vrot.slane %v563, 6
      %v566 = vshll.u32 %v433, 16
      %v568 = vrot.slane %v566, 7
      %v569 = vor.u32 %v565, %v568
      %v570 = vsel %vm462, %v561, %v569
      %v571 = vrot.slane %v569, 4
      %v573 = vshrl.u32 %v434, 16
      %v575 = vrot.slane %v573, 6
      %v576 = vshll.u32 %v434, 16
      %v578 = vrot.slane %v576, 7
      %v579 = vor.u32 %v575, %v578
      %v580 = vsel %vm462, %v571, %v579
      %v581 = vrot.slane %v579, 4
      %v583 = vshrl.u32 %v435, 16
      %v585 = vrot.slane %v583, 6
      %v586 = vshll.u32 %v435, 16
      %v588 = vrot.slane %v586, 7
      %v589 = vor.u32 %v585, %v588
      %v590 = vsel %vm462, %v581, %v589
      %v591 = vrot.slane %v589, 4
      %v593 = vshrl.u32 %v436, 16
      %v595 = vrot.slane %v593, 6
      %v596 = vshll.u32 %v436, 16
      %v598 = vrot.slane %v596, 7
      %v599 = vor.u32 %v595, %v598
      %v600 = vsel %vm462, %v591, %v599
      %v601 = vrot.slane %v599, 4
      %v603 = vshrl.u32 %v437, 16
      %v605 = vrot.slane %v603, 6
      %v606 = vshll.u32 %v437, 16
      %v608 = vrot.slane %v606, 7
      %v609 = vor.u32 %v605, %v608
      %v610 = vsel %vm462, %v601, %v609
      %v611 = vrot.slane %v609, 4
      %v613 = vshrl.u32 %v438, 16
      %v615 = vrot.slane %v613, 6
      %v616 = vshll.u32 %v438, 16
      %v618 = vrot.slane %v616, 7
      %v619 = vor.u32 %v615, %v618
      %v620 = vsel %vm462, %v611, %v619
      %v621 = vrot.slane %v619, 4
      %v623 = vshrl.u32 %v439, 16
      %v625 = vrot.slane %v623, 6
      %v626 = vshll.u32 %v439, 16
      %v628 = vrot.slane %v626, 7
      %v629 = vor.u32 %v625, %v628
      %v630 = vsel %vm462, %v621, %v629
      %v631 = vrot.slane %v629, 4
      %v633 = vshrl.u32 %v440, 16
      %v635 = vrot.slane %v633, 6
      %v636 = vshll.u32 %v440, 16
      %v638 = vrot.slane %v636, 7
      %v639 = vor.u32 %v635, %v638
      %v640 = vsel %vm462, %v631, %v639
      %v641 = vrot.slane %v639, 4
      %v643 = vshrl.u32 %v441, 16
      %v645 = vrot.slane %v643, 6
      %v646 = vshll.u32 %v441, 16
      %v648 = vrot.slane %v646, 7
      %v649 = vor.u32 %v645, %v648
      %v650 = vsel %vm462, %v641, %v649
      %v651 = vrot.slane %v649, 4
      %v653 = vshrl.u32 %v442, 16
      %v655 = vrot.slane %v653, 6
      %v656 = vshll.u32 %v442, 16
      %v658 = vrot.slane %v656, 7
      %v659 = vor.u32 %v655, %v658
      %v660 = vsel %vm462, %v651, %v659
      %v661 = vrot.slane %v659, 4
      %v663 = vshrl.u32 %v443, 16
      %v665 = vrot.slane %v663, 6
      %v666 = vshll.u32 %v443, 16
      %v668 = vrot.slane %v666, 7
      %v669 = vor.u32 %v665, %v668
      %v670 = vsel %vm462, %v661, %v669
      %v671 = vrot.slane %v669, 4
      %v673 = vshrl.u32 %v444, 16
      %v675 = vrot.slane %v673, 6
      %v676 = vshll.u32 %v444, 16
      %v678 = vrot.slane %v676, 7
      %v679 = vor.u32 %v675, %v678
      %v680 = vsel %vm462, %v671, %v679
      %v681 = vrot.slane %v679, 4
      %v683 = vshrl.u32 %v445, 16
      %v685 = vrot.slane %v683, 6
      %v686 = vshll.u32 %v445, 16
      %v688 = vrot.slane %v686, 7
      %v689 = vor.u32 %v685, %v688
      %v690 = vsel %vm462, %v681, %v689
      %v691 = vrot.slane %v689, 4
      %v693 = vshrl.u32 %v446, 16
      %v695 = vrot.slane %v693, 6
      %v696 = vshll.u32 %v446, 16
      %v698 = vrot.slane %v696, 7
      %v699 = vor.u32 %v695, %v698
      %v700 = vsel %vm462, %v691, %v699
      %v701 = vrot.slane %v699, 4
      %v703 = vshrl.u32 %v447, 16
      %v705 = vrot.slane %v703, 6
      %v706 = vshll.u32 %v447, 16
      %v708 = vrot.slane %v706, 7
      %v709 = vor.u32 %v705, %v708
      %v710 = vsel %vm462, %v701, %v709
      %v711 = vrot.slane %v709, 4
      %v713 = vshrl.u32 %v448, 16
      %v715 = vrot.slane %v713, 6
      %v716 = vshll.u32 %v448, 16
      %v718 = vrot.slane %v716, 7
      %v719 = vor.u32 %v715, %v718
      %v720 = vsel %vm462, %v711, %v719
      %v721 = vrot.slane %v719, 4
      %v723 = vshrl.u32 %v449, 16
      %v725 = vrot.slane %v723, 6
      %v726 = vshll.u32 %v449, 16
      %v728 = vrot.slane %v726, 7
      %v729 = vor.u32 %v725, %v728
      %v730 = vsel %vm462, %v721, %v729
      %v731 = vrot.slane %v729, 4
      %v733 = vshrl.u32 %v450, 16
      %v735 = vrot.slane %v733, 6
      %v736 = vshll.u32 %v450, 16
      %v738 = vrot.slane %v736, 7
      %v739 = vor.u32 %v735, %v738
      %v740 = vsel %vm462, %v731, %v739
      %v741 = vrot.slane %v739, 4
      %v743 = vshrl.u32 %v451, 16
      %v745 = vrot.slane %v743, 6
      %v746 = vshll.u32 %v451, 16
      %v748 = vrot.slane %v746, 7
      %v749 = vor.u32 %v745, %v748
      %v750 = vsel %vm462, %v741, %v749
      %v751 = vrot.slane %v749, 4
      %v753 = vshrl.u32 %v452, 16
      %v755 = vrot.slane %v753, 6
      %v756 = vshll.u32 %v452, 16
      %v758 = vrot.slane %v756, 7
      %v759 = vor.u32 %v755, %v758
      %v760 = vsel %vm462, %v751, %v759
      %v761 = vrot.slane %v759, 4
      %v763 = vshrl.u32 %v453, 16
      %v765 = vrot.slane %v763, 6
      %v766 = vshll.u32 %v453, 16
      %v768 = vrot.slane %v766, 7
      %v769 = vor.u32 %v765, %v768
      %v770 = vsel %vm462, %v761, %v769
      %v771 = vrot.slane %v769, 4
      %v773 = vshrl.u32 %v454, 16
      %v775 = vrot.slane %v773, 6
      %v776 = vshll.u32 %v454, 16
      %v778 = vrot.slane %v776, 7
      %v779 = vor.u32 %v775, %v778
      %v780 = vsel %vm462, %v771, %v779
      %v781 = vrot.slane %v779, 4
      %v783 = vshrl.u32 %v455, 16
      %v785 = vrot.slane %v783, 6
      %v786 = vshll.u32 %v455, 16
      %v788 = vrot.slane %v786, 7
      %v789 = vor.u32 %v785, %v788
      %v790 = vsel %vm462, %v781, %v789
      %v791 = vrot.slane %v789, 4
      %v793 = vshrl.u32 %v456, 16
      %v795 = vrot.slane %v793, 6
      %v796 = vshll.u32 %v456, 16
      %v798 = vrot.slane %v796, 7
      %v799 = vor.u32 %v795, %v798
      %v800 = vsel %vm462, %v791, %v799
      %v801 = vrot.slane %v799, 4
      %v803 = vshrl.u32 %v457, 16
      %v805 = vrot.slane %v803, 6
      %v806 = vshll.u32 %v457, 16
      %v808 = vrot.slane %v806, 7
      %v809 = vor.u32 %v805, %v808
      %v810 = vsel %vm462, %v801, %v809
      %v811 = vrot.slane %v809, 4
      %v813 = vshrl.u32 %v458, 16
      %v815 = vrot.slane %v813, 6
      %v816 = vshll.u32 %v458, 16
      %v818 = vrot.slane %v816, 7
      %v819 = vor.u32 %v815, %v818
      %v820 = vsel %vm462, %v811, %v819
      %v821 = vrot.slane %v819, 4
      %v823 = vshrl.u32 %v459, 16
      %v825 = vrot.slane %v823, 6
      %v826 = vshll.u32 %v459, 16
      %v828 = vrot.slane %v826, 7
      %v829 = vor.u32 %v825, %v828
      %v830 = vsel %vm462, %v821, %v829
      %867 = vst [vmem:[#allocation3] sm:$0xf] %v480
      %868 = vst [vmem:[#allocation3 + $0x24] sm:$0xf] %v490
      %869 = vst [vmem:[#allocation3 + $0x48] sm:$0xf] %v500
      %870 = vst [vmem:[#allocation3 + $0x6c] sm:$0xf] %v510
      %871 = vst [vmem:[#allocation3 + $0x90] sm:$0xf] %v520
      %872 = vst [vmem:[#allocation3 + $0xb4] sm:$0xf] %v530
      %873 = vst [vmem:[#allocation3 + $0xd8] sm:$0xf] %v540
      %874 = vst [vmem:[#allocation3 + $0xfc] sm:$0xf] %v550
      %875 = vst [vmem:[#allocation3 + $0x120] sm:$0xf] %v560
      %876 = vst [vmem:[#allocation3 + $0x144] sm:$0xf] %v570
      %877 = vst [vmem:[#allocation3 + $0x168] sm:$0xf] %v580
      %878 = vst [vmem:[#allocation3 + $0x18c] sm:$0xf] %v590
      %879 = vst [vmem:[#allocation3 + $0x1b0] sm:$0xf] %v600
      %880 = vst [vmem:[#allocation3 + $0x1d4] sm:$0xf] %v610
      %881 = vst [vmem:[#allocation3 + $0x1f8] sm:$0xf] %v620
      %882 = vst [vmem:[#allocation3 + $0x21c] sm:$0xf] %v630
      %883 = vst [vmem:[#allocation3 + $0x240] sm:$0xf] %v640
      %884 = vst [vmem:[#allocation3 + $0x264] sm:$0xf] %v650
      %885 = vst [vmem:[#allocation3 + $0x288] sm:$0xf] %v660
      %886 = vst [vmem:[#allocation3 + $0x2ac] sm:$0xf] %v670
      %887 = vst [vmem:[#allocation3 + $0x2d0] sm:$0xf] %v680
      %888 = vst [vmem:[#allocation3 + $0x2f4] sm:$0xf] %v690
      %889 = vst [vmem:[#allocation3 + $0x318] sm:$0xf] %v700
      %890 = vst [vmem:[#allocation3 + $0x33c] sm:$0xf] %v710
      %891 = vst [vmem:[#allocation3 + $0x360] sm:$0xf] %v720
      %892 = vst [vmem:[#allocation3 + $0x384] sm:$0xf] %v730
      %893 = vst [vmem:[#allocation3 + $0x3a8] sm:$0xf] %v740
      %894 = vst [vmem:[#allocation3 + $0x3cc] sm:$0xf] %v750
      %895 = vst [vmem:[#allocation3 + $0x3f0] sm:$0xf] %v760
      %896 = vst [vmem:[#allocation3 + $0x414] sm:$0xf] %v770
      %897 = vst [vmem:[#allocation3 + $0x438] sm:$0xf] %v780
      %898 = vst [vmem:[#allocation3 + $0x45c] sm:$0xf] %v790
      %899 = vst [vmem:[#allocation3 + $0x480] sm:$0xf] %v800
      %900 = vst [vmem:[#allocation3 + $0x4a4] sm:$0xf] %v810
      %901 = vst [vmem:[#allocation3 + $0x4c8] sm:$0xf] %v820
      %902 = vst [vmem:[#allocation3 + $0x4ec] sm:$0xf] %v830
      %v903 = vld [vmem:[#allocation2 + $0x4] sm:$0x8]
      %v904 = vld [vmem:[#allocation2 + $0x8] sm:$0xf]
      %v905 = vld [vmem:[#allocation2 + $0xc] sm:$0xf]
      %v906 = vld [vmem:[#allocation2 + $0x10] sm:$0xf]
      %v907 = vld [vmem:[#allocation2 + $0x14] sm:$0xf]
      %v908 = vld [vmem:[#allocation2 + $0x18] sm:$0xf]
      %v909 = vld [vmem:[#allocation2 + $0x1c] sm:$0xf]
      %v910 = vld [vmem:[#allocation2 + $0x20] sm:$0xf]
      %v911 = vld [vmem:[#allocation2 + $0x24] sm:$0xf]
      %v912 = vld [vmem:[#allocation2 + $0x28] sm:$0xf]
      %v913 = vld [vmem:[#allocation2 + $0x2c] sm:$0xf]
      %v914 = vld [vmem:[#allocation2 + $0x30] sm:$0xf]
      %v915 = vld [vmem:[#allocation2 + $0x34] sm:$0xf]
      %v916 = vld [vmem:[#allocation2 + $0x38] sm:$0xf]
      %v917 = vld [vmem:[#allocation2 + $0x3c] sm:$0xf]
      %v918 = vld [vmem:[#allocation2 + $0x40] sm:$0xf]
      %v919 = vld [vmem:[#allocation2 + $0x44] sm:$0xf]
      %v920 = vld [vmem:[#allocation2 + $0x48] sm:$0xf]
      %v921 = vld [vmem:[#allocation2 + $0x4c] sm:$0xf]
      %v922 = vld [vmem:[#allocation2 + $0x50] sm:$0xf]
      %v923 = vld [vmem:[#allocation2 + $0x54] sm:$0xf]
      %v924 = vld [vmem:[#allocation2 + $0x58] sm:$0xf]
      %v925 = vld [vmem:[#allocation2 + $0x5c] sm:$0xf]
      %v926 = vld [vmem:[#allocation2 + $0x60] sm:$0xf]
      %v927 = vld [vmem:[#allocation2 + $0x64] sm:$0xf]
      %v928 = vld [vmem:[#allocation2 + $0x68] sm:$0xf]
      %v929 = vld [vmem:[#allocation2 + $0x6c] sm:$0xf]
      %v930 = vld [vmem:[#allocation2 + $0x70] sm:$0xf]
      %v931 = vld [vmem:[#allocation2 + $0x74] sm:$0xf]
      %v932 = vld [vmem:[#allocation2 + $0x78] sm:$0xf]
      %v933 = vld [vmem:[#allocation2 + $0x7c] sm:$0xf]
      %v934 = vld [vmem:[#allocation2 + $0x80] sm:$0xf]
      %v935 = vld [vmem:[#allocation2 + $0x84] sm:$0xf]
      %v936 = vld [vmem:[#allocation2 + $0x88] sm:$0xf]
      %v937 = vld [vmem:[#allocation2 + $0x8c] sm:$0xf]
      %v938 = vld [vmem:[#allocation2 + $0x90] sm:$0xf]
      %v939 = vld [vmem:[#allocation2 + $0x94] sm:$0x7]
      %vm977 = vcmask 1040384
      %vm978 = vcmask 1044484
      %vm979 = vmor %vm977, %vm978
      %v980 = vrot.slane %v903, 7
      %v981 = vrot.slane %v980, 4
      %v982 = vrot.slane %v904, 7
      %v983 = vsel %vm979, %v981, %v982
      %v984 = vrot.slane %v982, 4
      %v985 = vrot.slane %v905, 7
      %v986 = vsel %vm979, %v984, %v985
      %v987 = vrot.slane %v985, 4
      %v988 = vrot.slane %v906, 7
      %v989 = vsel %vm979, %v987, %v988
      %v990 = vrot.slane %v988, 4
      %v991 = vrot.slane %v907, 7
      %v992 = vsel %vm979, %v990, %v991
      %v993 = vrot.slane %v991, 4
      %v994 = vrot.slane %v908, 7
      %v995 = vsel %vm979, %v993, %v994
      %v996 = vrot.slane %v994, 4
      %v997 = vrot.slane %v909, 7
      %v998 = vsel %vm979, %v996, %v997
      %v999 = vrot.slane %v997, 4
      %v1000 = vrot.slane %v910, 7
      %v1001 = vsel %vm979, %v999, %v1000
      %v1002 = vrot.slane %v1000, 4
      %v1003 = vrot.slane %v911, 7
      %v1004 = vsel %vm979, %v1002, %v1003
      %v1005 = vrot.slane %v1003, 4
      %v1006 = vrot.slane %v912, 7
      %v1007 = vsel %vm979, %v1005, %v1006
      %v1008 = vrot.slane %v1006, 4
      %v1009 = vrot.slane %v913, 7
      %v1010 = vsel %vm979, %v1008, %v1009
      %v1011 = vrot.slane %v1009, 4
      %v1012 = vrot.slane %v914, 7
      %v1013 = vsel %vm979, %v1011, %v1012
      %v1014 = vrot.slane %v1012, 4
      %v1015 = vrot.slane %v915, 7
      %v1016 = vsel %vm979, %v1014, %v1015
      %v1017 = vrot.slane %v1015, 4
      %v1018 = vrot.slane %v916, 7
      %v1019 = vsel %vm979, %v1017, %v1018
      %v1020 = vrot.slane %v1018, 4
      %v1021 = vrot.slane %v917, 7
      %v1022 = vsel %vm979, %v1020, %v1021
      %v1023 = vrot.slane %v1021, 4
      %v1024 = vrot.slane %v918, 7
      %v1025 = vsel %vm979, %v1023, %v1024
      %v1026 = vrot.slane %v1024, 4
      %v1027 = vrot.slane %v919, 7
      %v1028 = vsel %vm979, %v1026, %v1027
      %v1029 = vrot.slane %v1027, 4
      %v1030 = vrot.slane %v920, 7
      %v1031 = vsel %vm979, %v1029, %v1030
      %v1032 = vrot.slane %v1030, 4
      %v1033 = vrot.slane %v921, 7
      %v1034 = vsel %vm979, %v1032, %v1033
      %v1035 = vrot.slane %v1033, 4
      %v1036 = vrot.slane %v922, 7
      %v1037 = vsel %vm979, %v1035, %v1036
      %v1038 = vrot.slane %v1036, 4
      %v1039 = vrot.slane %v923, 7
      %v1040 = vsel %vm979, %v1038, %v1039
      %v1041 = vrot.slane %v1039, 4
      %v1042 = vrot.slane %v924, 7
      %v1043 = vsel %vm979, %v1041, %v1042
      %v1044 = vrot.slane %v1042, 4
      %v1045 = vrot.slane %v925, 7
      %v1046 = vsel %vm979, %v1044, %v1045
      %v1047 = vrot.slane %v1045, 4
      %v1048 = vrot.slane %v926, 7
      %v1049 = vsel %vm979, %v1047, %v1048
      %v1050 = vrot.slane %v1048, 4
      %v1051 = vrot.slane %v927, 7
      %v1052 = vsel %vm979, %v1050, %v1051
      %v1053 = vrot.slane %v1051, 4
      %v1054 = vrot.slane %v928, 7
      %v1055 = vsel %vm979, %v1053, %v1054
      %v1056 = vrot.slane %v1054, 4
      %v1057 = vrot.slane %v929, 7
      %v1058 = vsel %vm979, %v1056, %v1057
      %v1059 = vrot.slane %v1057, 4
      %v1060 = vrot.slane %v930, 7
      %v1061 = vsel %vm979, %v1059, %v1060
      %v1062 = vrot.slane %v1060, 4
      %v1063 = vrot.slane %v931, 7
      %v1064 = vsel %vm979, %v1062, %v1063
      %v1065 = vrot.slane %v1063, 4
      %v1066 = vrot.slane %v932, 7
      %v1067 = vsel %vm979, %v1065, %v1066
      %v1068 = vrot.slane %v1066, 4
      %v1069 = vrot.slane %v933, 7
      %v1070 = vsel %vm979, %v1068, %v1069
      %v1071 = vrot.slane %v1069, 4
      %v1072 = vrot.slane %v934, 7
      %v1073 = vsel %vm979, %v1071, %v1072
      %v1074 = vrot.slane %v1072, 4
      %v1075 = vrot.slane %v935, 7
      %v1076 = vsel %vm979, %v1074, %v1075
      %v1077 = vrot.slane %v1075, 4
      %v1078 = vrot.slane %v936, 7
      %v1079 = vsel %vm979, %v1077, %v1078
      %v1080 = vrot.slane %v1078, 4
      %v1081 = vrot.slane %v937, 7
      %v1082 = vsel %vm979, %v1080, %v1081
      %v1083 = vrot.slane %v1081, 4
      %v1084 = vrot.slane %v938, 7
      %v1085 = vsel %vm979, %v1083, %v1084
      %v1086 = vrot.slane %v1084, 4
      %v1087 = vrot.slane %v939, 7
      %v1088 = vsel %vm979, %v1086, %v1087
      %1125 = vst [vmem:[#allocation3 + $0x4] sm:$0xf] %v983
      %1126 = vst [vmem:[#allocation3 + $0x28] sm:$0xf] %v986
      %1127 = vst [vmem:[#allocation3 + $0x4c] sm:$0xf] %v989
      %1128 = vst [vmem:[#allocation3 + $0x70] sm:$0xf] %v992
      %1129 = vst [vmem:[#allocation3 + $0x94] sm:$0xf] %v995
      %1130 = vst [vmem:[#allocation3 + $0xb8] sm:$0xf] %v998
      %1131 = vst [vmem:[#allocation3 + $0xdc] sm:$0xf] %v1001
      %1132 = vst [vmem:[#allocation3 + $0x100] sm:$0xf] %v1004
      %1133 = vst [vmem:[#allocation3 + $0x124] sm:$0xf] %v1007
      %1134 = vst [vmem:[#allocation3 + $0x148] sm:$0xf] %v1010
      %1135 = vst [vmem:[#allocation3 + $0x16c] sm:$0xf] %v1013
      %1136 = vst [vmem:[#allocation3 + $0x190] sm:$0xf] %v1016
      %1137 = vst [vmem:[#allocation3 + $0x1b4] sm:$0xf] %v1019
      %1138 = vst [vmem:[#allocation3 + $0x1d8] sm:$0xf] %v1022
      %1139 = vst [vmem:[#allocation3 + $0x1fc] sm:$0xf] %v1025
      %1140 = vst [vmem:[#allocation3 + $0x220] sm:$0xf] %v1028
      %1141 = vst [vmem:[#allocation3 + $0x244] sm:$0xf] %v1031
      %1142 = vst [vmem:[#allocation3 + $0x268] sm:$0xf] %v1034
      %1143 = vst [vmem:[#allocation3 + $0x28c] sm:$0xf] %v1037
      %1144 = vst [vmem:[#allocation3 + $0x2b0] sm:$0xf] %v1040
      %1145 = vst [vmem:[#allocation3 + $0x2d4] sm:$0xf] %v1043
      %1146 = vst [vmem:[#allocation3 + $0x2f8] sm:$0xf] %v1046
      %1147 = vst [vmem:[#allocation3 + $0x31c] sm:$0xf] %v1049
      %1148 = vst [vmem:[#allocation3 + $0x340] sm:$0xf] %v1052
      %1149 = vst [vmem:[#allocation3 + $0x364] sm:$0xf] %v1055
      %1150 = vst [vmem:[#allocation3 + $0x388] sm:$0xf] %v1058
      %1151 = vst [vmem:[#allocation3 + $0x3ac] sm:$0xf] %v1061
      %1152 = vst [vmem:[#allocation3 + $0x3d0] sm:$0xf] %v1064
      %1153 = vst [vmem:[#allocation3 + $0x3f4] sm:$0xf] %v1067
      %1154 = vst [vmem:[#allocation3 + $0x418] sm:$0xf] %v1070
      %1155 = vst [vmem:[#allocation3 + $0x43c] sm:$0xf] %v1073
      %1156 = vst [vmem:[#allocation3 + $0x460] sm:$0xf] %v1076
      %1157 = vst [vmem:[#allocation3 + $0x484] sm:$0xf] %v1079
      %1158 = vst [vmem:[#allocation3 + $0x4a8] sm:$0xf] %v1082
      %1159 = vst [vmem:[#allocation3 + $0x4cc] sm:$0xf] %v1085
      %1160 = vst [vmem:[#allocation3 + $0x4f0] sm:$0xf] %v1088
      %v1161 = vld [vmem:[#allocation2 + $0x4] sm:$0x8]
      %v1162 = vld [vmem:[#allocation2 + $0x8] sm:$0xf]
      %v1163 = vld [vmem:[#allocation2 + $0xc] sm:$0xf]
      %v1164 = vld [vmem:[#allocation2 + $0x10] sm:$0xf]
      %v1165 = vld [vmem:[#allocation2 + $0x14] sm:$0xf]
      %v1166 = vld [vmem:[#allocation2 + $0x18] sm:$0xf]
      %v1167 = vld [vmem:[#allocation2 + $0x1c] sm:$0xf]
      %v1168 = vld [vmem:[#allocation2 + $0x20] sm:$0xf]
      %v1169 = vld [vmem:[#allocation2 + $0x24] sm:$0xf]
      %v1170 = vld [vmem:[#allocation2 + $0x28] sm:$0xf]
      %v1171 = vld [vmem:[#allocation2 + $0x2c] sm:$0xf]
      %v1172 = vld [vmem:[#allocation2 + $0x30] sm:$0xf]
      %v1173 = vld [vmem:[#allocation2 + $0x34] sm:$0xf]
      %v1174 = vld [vmem:[#allocation2 + $0x38] sm:$0xf]
      %v1175 = vld [vmem:[#allocation2 + $0x3c] sm:$0xf]
      %v1176 = vld [vmem:[#allocation2 + $0x40] sm:$0xf]
      %v1177 = vld [vmem:[#allocation2 + $0x44] sm:$0xf]
      %v1178 = vld [vmem:[#allocation2 + $0x48] sm:$0xf]
      %v1179 = vld [vmem:[#allocation2 + $0x4c] sm:$0xf]
      %v1180 = vld [vmem:[#allocation2 + $0x50] sm:$0xf]
      %v1181 = vld [vmem:[#allocation2 + $0x54] sm:$0xf]
      %v1182 = vld [vmem:[#allocation2 + $0x58] sm:$0xf]
      %v1183 = vld [vmem:[#allocation2 + $0x5c] sm:$0xf]
      %v1184 = vld [vmem:[#allocation2 + $0x60] sm:$0xf]
      %v1185 = vld [vmem:[#allocation2 + $0x64] sm:$0xf]
      %v1186 = vld [vmem:[#allocation2 + $0x68] sm:$0xf]
      %v1187 = vld [vmem:[#allocation2 + $0x6c] sm:$0xf]
      %v1188 = vld [vmem:[#allocation2 + $0x70] sm:$0xf]
      %v1189 = vld [vmem:[#allocation2 + $0x74] sm:$0xf]
      %v1190 = vld [vmem:[#allocation2 + $0x78] sm:$0xf]
      %v1191 = vld [vmem:[#allocation2 + $0x7c] sm:$0xf]
      %v1192 = vld [vmem:[#allocation2 + $0x80] sm:$0xf]
      %v1193 = vld [vmem:[#allocation2 + $0x84] sm:$0xf]
      %v1194 = vld [vmem:[#allocation2 + $0x88] sm:$0xf]
      %v1195 = vld [vmem:[#allocation2 + $0x8c] sm:$0xf]
      %v1196 = vld [vmem:[#allocation2 + $0x90] sm:$0xf]
      %v1197 = vld [vmem:[#allocation2 + $0x94] sm:$0xf]
      %vm1198 = vsmask.f32 256
      %vm1199 = vsmask.f32 4368
      %vm1200 = vmor %vm1198, %vm1199
      %v1202 = vshrl.u32 %v1161, 16
      %v1204 = vrot.slane %v1202, 7
      %v1205 = vrot.slane %v1204, 4
      %v1207 = vshrl.u32 %v1162, 16
      %v1209 = vrot.slane %v1207, 7
      %v1210 = vshll.u32 %v1162, 16
      %v1212 = vor.u32 %v1209, %v1210
      %v1213 = vsel %vm1200, %v1205, %v1212
      %v1214 = vrot.slane %v1209, 4
      %v1216 = vshrl.u32 %v1163, 16
      %v1218 = vrot.slane %v1216, 7
      %v1219 = vshll.u32 %v1163, 16
      %v1221 = vor.u32 %v1218, %v1219
      %v1222 = vsel %vm1200, %v1214, %v1221
      %v1223 = vrot.slane %v1218, 4
      %v1225 = vshrl.u32 %v1164, 16
      %v1227 = vrot.slane %v1225, 7
      %v1228 = vshll.u32 %v1164, 16
      %v1230 = vor.u32 %v1227, %v1228
      %v1231 = vsel %vm1200, %v1223, %v1230
      %v1232 = vrot.slane %v1227, 4
      %v1234 = vshrl.u32 %v1165, 16
      %v1236 = vrot.slane %v1234, 7
      %v1237 = vshll.u32 %v1165, 16
      %v1239 = vor.u32 %v1236, %v1237
      %v1240 = vsel %vm1200, %v1232, %v1239
      %v1241 = vrot.slane %v1236, 4
      %v1243 = vshrl.u32 %v1166, 16
      %v1245 = vrot.slane %v1243, 7
      %v1246 = vshll.u32 %v1166, 16
      %v1248 = vor.u32 %v1245, %v1246
      %v1249 = vsel %vm1200, %v1241, %v1248
      %v1250 = vrot.slane %v1245, 4
      %v1252 = vshrl.u32 %v1167, 16
      %v1254 = vrot.slane %v1252, 7
      %v1255 = vshll.u32 %v1167, 16
      %v1257 = vor.u32 %v1254, %v1255
      %v1258 = vsel %vm1200, %v1250, %v1257
      %v1259 = vrot.slane %v1254, 4
      %v1261 = vshrl.u32 %v1168, 16
      %v1263 = vrot.slane %v1261, 7
      %v1264 = vshll.u32 %v1168, 16
      %v1266 = vor.u32 %v1263, %v1264
      %v1267 = vsel %vm1200, %v1259, %v1266
      %v1268 = vrot.slane %v1263, 4
      %v1270 = vshrl.u32 %v1169, 16
      %v1272 = vrot.slane %v1270, 7
      %v1273 = vshll.u32 %v1169, 16
      %v1275 = vor.u32 %v1272, %v1273
      %v1276 = vsel %vm1200, %v1268, %v1275
      %v1277 = vrot.slane %v1272, 4
      %v1279 = vshrl.u32 %v1170, 16
      %v1281 = vrot.slane %v1279, 7
      %v1282 = vshll.u32 %v1170, 16
      %v1284 = vor.u32 %v1281, %v1282
      %v1285 = vsel %vm1200, %v1277, %v1284
      %v1286 = vrot.slane %v1281, 4
      %v1288 = vshrl.u32 %v1171, 16
      %v1290 = vrot.slane %v1288, 7
      %v1291 = vshll.u32 %v1171, 16
      %v1293 = vor.u32 %v1290, %v1291
      %v1294 = vsel %vm1200, %v1286, %v1293
      %v1295 = vrot.slane %v1290, 4
      %v1297 = vshrl.u32 %v1172, 16
      %v1299 = vrot.slane %v1297, 7
      %v1300 = vshll.u32 %v1172, 16
      %v1302 = vor.u32 %v1299, %v1300
      %v1303 = vsel %vm1200, %v1295, %v1302
      %v1304 = vrot.slane %v1299, 4
      %v1306 = vshrl.u32 %v1173, 16
      %v1308 = vrot.slane %v1306, 7
      %v1309 = vshll.u32 %v1173, 16
      %v1311 = vor.u32 %v1308, %v1309
      %v1312 = vsel %vm1200, %v1304, %v1311
      %v1313 = vrot.slane %v1308, 4
      %v1315 = vshrl.u32 %v1174, 16
      %v1317 = vrot.slane %v1315, 7
      %v1318 = vshll.u32 %v1174, 16
      %v1320 = vor.u32 %v1317, %v1318
      %v1321 = vsel %vm1200, %v1313, %v1320
      %v1322 = vrot.slane %v1317, 4
      %v1324 = vshrl.u32 %v1175, 16
      %v1326 = vrot.slane %v1324, 7
      %v1327 = vshll.u32 %v1175, 16
      %v1329 = vor.u32 %v1326, %v1327
      %v1330 = vsel %vm1200, %v1322, %v1329
      %v1331 = vrot.slane %v1326, 4
      %v1333 = vshrl.u32 %v1176, 16
      %v1335 = vrot.slane %v1333, 7
      %v1336 = vshll.u32 %v1176, 16
      %v1338 = vor.u32 %v1335, %v1336
      %v1339 = vsel %vm1200, %v1331, %v1338
      %v1340 = vrot.slane %v1335, 4
      %v1342 = vshrl.u32 %v1177, 16
      %v1344 = vrot.slane %v1342, 7
      %v1345 = vshll.u32 %v1177, 16
      %v1347 = vor.u32 %v1344, %v1345
      %v1348 = vsel %vm1200, %v1340, %v1347
      %v1349 = vrot.slane %v1344, 4
      %v1351 = vshrl.u32 %v1178, 16
      %v1353 = vrot.slane %v1351, 7
      %v1354 = vshll.u32 %v1178, 16
      %v1356 = vor.u32 %v1353, %v1354
      %v1357 = vsel %vm1200, %v1349, %v1356
      %v1358 = vrot.slane %v1353, 4
      %v1360 = vshrl.u32 %v1179, 16
      %v1362 = vrot.slane %v1360, 7
      %v1363 = vshll.u32 %v1179, 16
      %v1365 = vor.u32 %v1362, %v1363
      %v1366 = vsel %vm1200, %v1358, %v1365
      %v1367 = vrot.slane %v1362, 4
      %v1369 = vshrl.u32 %v1180, 16
      %v1371 = vrot.slane %v1369, 7
      %v1372 = vshll.u32 %v1180, 16
      %v1374 = vor.u32 %v1371, %v1372
      %v1375 = vsel %vm1200, %v1367, %v1374
      %v1376 = vrot.slane %v1371, 4
      %v1378 = vshrl.u32 %v1181, 16
      %v1380 = vrot.slane %v1378, 7
      %v1381 = vshll.u32 %v1181, 16
      %v1383 = vor.u32 %v1380, %v1381
      %v1384 = vsel %vm1200, %v1376, %v1383
      %v1385 = vrot.slane %v1380, 4
      %v1387 = vshrl.u32 %v1182, 16
      %v1389 = vrot.slane %v1387, 7
      %v1390 = vshll.u32 %v1182, 16
      %v1392 = vor.u32 %v1389, %v1390
      %v1393 = vsel %vm1200, %v1385, %v1392
      %v1394 = vrot.slane %v1389, 4
      %v1396 = vshrl.u32 %v1183, 16
      %v1398 = vrot.slane %v1396, 7
      %v1399 = vshll.u32 %v1183, 16
      %v1401 = vor.u32 %v1398, %v1399
      %v1402 = vsel %vm1200, %v1394, %v1401
      %v1403 = vrot.slane %v1398, 4
      %v1405 = vshrl.u32 %v1184, 16
      %v1407 = vrot.slane %v1405, 7
      %v1408 = vshll.u32 %v1184, 16
      %v1410 = vor.u32 %v1407, %v1408
      %v1411 = vsel %vm1200, %v1403, %v1410
      %v1412 = vrot.slane %v1407, 4
      %v1414 = vshrl.u32 %v1185, 16
      %v1416 = vrot.slane %v1414, 7
      %v1417 = vshll.u32 %v1185, 16
      %v1419 = vor.u32 %v1416, %v1417
      %v1420 = vsel %vm1200, %v1412, %v1419
      %v1421 = vrot.slane %v1416, 4
      %v1423 = vshrl.u32 %v1186, 16
      %v1425 = vrot.slane %v1423, 7
      %v1426 = vshll.u32 %v1186, 16
      %v1428 = vor.u32 %v1425, %v1426
      %v1429 = vsel %vm1200, %v1421, %v1428
      %v1430 = vrot.slane %v1425, 4
      %v1432 = vshrl.u32 %v1187, 16
      %v1434 = vrot.slane %v1432, 7
      %v1435 = vshll.u32 %v1187, 16
      %v1437 = vor.u32 %v1434, %v1435
      %v1438 = vsel %vm1200, %v1430, %v1437
      %v1439 = vrot.slane %v1434, 4
      %v1441 = vshrl.u32 %v1188, 16
      %v1443 = vrot.slane %v1441, 7
      %v1444 = vshll.u32 %v1188, 16
      %v1446 = vor.u32 %v1443, %v1444
      %v1447 = vsel %vm1200, %v1439, %v1446
      %v1448 = vrot.slane %v1443, 4
      %v1450 = vshrl.u32 %v1189, 16
      %v1452 = vrot.slane %v1450, 7
      %v1453 = vshll.u32 %v1189, 16
      %v1455 = vor.u32 %v1452, %v1453
      %v1456 = vsel %vm1200, %v1448, %v1455
      %v1457 = vrot.slane %v1452, 4
      %v1459 = vshrl.u32 %v1190, 16
      %v1461 = vrot.slane %v1459, 7
      %v1462 = vshll.u32 %v1190, 16
      %v1464 = vor.u32 %v1461, %v1462
      %v1465 = vsel %vm1200, %v1457, %v1464
      %v1466 = vrot.slane %v1461, 4
      %v1468 = vshrl.u32 %v1191, 16
      %v1470 = vrot.slane %v1468, 7
      %v1471 = vshll.u32 %v1191, 16
      %v1473 = vor.u32 %v1470, %v1471
      %v1474 = vsel %vm1200, %v1466, %v1473
      %v1475 = vrot.slane %v1470, 4
      %v1477 = vshrl.u32 %v1192, 16
      %v1479 = vrot.slane %v1477, 7
      %v1480 = vshll.u32 %v1192, 16
      %v1482 = vor.u32 %v1479, %v1480
      %v1483 = vsel %vm1200, %v1475, %v1482
      %v1484 = vrot.slane %v1479, 4
      %v1486 = vshrl.u32 %v1193, 16
      %v1488 = vrot.slane %v1486, 7
      %v1489 = vshll.u32 %v1193, 16
      %v1491 = vor.u32 %v1488, %v1489
      %v1492 = vsel %vm1200, %v1484, %v1491
      %v1493 = vrot.slane %v1488, 4
      %v1495 = vshrl.u32 %v1194, 16
      %v1497 = vrot.slane %v1495, 7
      %v1498 = vshll.u32 %v1194, 16
      %v1500 = vor.u32 %v1497, %v1498
      %v1501 = vsel %vm1200, %v1493, %v1500
      %v1502 = vrot.slane %v1497, 4
      %v1504 = vshrl.u32 %v1195, 16
      %v1506 = vrot.slane %v1504, 7
      %v1507 = vshll.u32 %v1195, 16
      %v1509 = vor.u32 %v1506, %v1507
      %v1510 = vsel %vm1200, %v1502, %v1509
      %v1511 = vrot.slane %v1506, 4
      %v1513 = vshrl.u32 %v1196, 16
      %v1515 = vrot.slane %v1513, 7
      %v1516 = vshll.u32 %v1196, 16
      %v1518 = vor.u32 %v1515, %v1516
      %v1519 = vsel %vm1200, %v1511, %v1518
      %v1520 = vrot.slane %v1515, 4
      %v1522 = vshrl.u32 %v1197, 16
      %v1524 = vrot.slane %v1522, 7
      %v1525 = vshll.u32 %v1197, 16
      %v1527 = vor.u32 %v1524, %v1525
      %v1528 = vsel %vm1200, %v1520, %v1527
      %1565 = vst [vmem:[#allocation3 + $0x8] sm:$0xf] %v1213
      %1566 = vst [vmem:[#allocation3 + $0x2c] sm:$0xf] %v1222
      %1567 = vst [vmem:[#allocation3 + $0x50] sm:$0xf] %v1231
      %1568 = vst [vmem:[#allocation3 + $0x74] sm:$0xf] %v1240
      %1569 = vst [vmem:[#allocation3 + $0x98] sm:$0xf] %v1249
      %1570 = vst [vmem:[#allocation3 + $0xbc] sm:$0xf] %v1258
      %1571 = vst [vmem:[#allocation3 + $0xe0] sm:$0xf] %v1267
      %1572 = vst [vmem:[#allocation3 + $0x104] sm:$0xf] %v1276
      %1573 = vst [vmem:[#allocation3 + $0x128] sm:$0xf] %v1285
      %1574 = vst [vmem:[#allocation3 + $0x14c] sm:$0xf] %v1294
      %1575 = vst [vmem:[#allocation3 + $0x170] sm:$0xf] %v1303
      %1576 = vst [vmem:[#allocation3 + $0x194] sm:$0xf] %v1312
      %1577 = vst [vmem:[#allocation3 + $0x1b8] sm:$0xf] %v1321
      %1578 = vst [vmem:[#allocation3 + $0x1dc] sm:$0xf] %v1330
      %1579 = vst [vmem:[#allocation3 + $0x200] sm:$0xf] %v1339
      %1580 = vst [vmem:[#allocation3 + $0x224] sm:$0xf] %v1348
      %1581 = vst [vmem:[#allocation3 + $0x248] sm:$0xf] %v1357
      %1582 = vst [vmem:[#allocation3 + $0x26c] sm:$0xf] %v1366
      %1583 = vst [vmem:[#allocation3 + $0x290] sm:$0xf] %v1375
      %1584 = vst [vmem:[#allocation3 + $0x2b4] sm:$0xf] %v1384
      %1585 = vst [vmem:[#allocation3 + $0x2d8] sm:$0xf] %v1393
      %1586 = vst [vmem:[#allocation3 + $0x2fc] sm:$0xf] %v1402
      %1587 = vst [vmem:[#allocation3 + $0x320] sm:$0xf] %v1411
      %1588 = vst [vmem:[#allocation3 + $0x344] sm:$0xf] %v1420
      %1589 = vst [vmem:[#allocation3 + $0x368] sm:$0xf] %v1429
      %1590 = vst [vmem:[#allocation3 + $0x38c] sm:$0xf] %v1438
      %1591 = vst [vmem:[#allocation3 + $0x3b0] sm:$0xf] %v1447
      %1592 = vst [vmem:[#allocation3 + $0x3d4] sm:$0xf] %v1456
      %1593 = vst [vmem:[#allocation3 + $0x3f8] sm:$0xf] %v1465
      %1594 = vst [vmem:[#allocation3 + $0x41c] sm:$0xf] %v1474
      %1595 = vst [vmem:[#allocation3 + $0x440] sm:$0xf] %v1483
      %1596 = vst [vmem:[#allocation3 + $0x464] sm:$0xf] %v1492
      %1597 = vst [vmem:[#allocation3 + $0x488] sm:$0xf] %v1501
      %1598 = vst [vmem:[#allocation3 + $0x4ac] sm:$0xf] %v1510
      %1599 = vst [vmem:[#allocation3 + $0x4d0] sm:$0xf] %v1519
      %1600 = vst [vmem:[#allocation3 + $0x4f4] sm:$0xf] %v1528
      %v1601 = vld [vmem:[#allocation2 + $0xc] sm:$0x8]
      %v1602 = vld [vmem:[#allocation2 + $0x10] sm:$0xf]
      %v1603 = vld [vmem:[#allocation2 + $0x14] sm:$0xf]
      %v1604 = vld [vmem:[#allocation2 + $0x18] sm:$0xf]
      %v1605 = vld [vmem:[#allocation2 + $0x1c] sm:$0xf]
      %v1606 = vld [vmem:[#allocation2 + $0x20] sm:$0xf]
      %v1607 = vld [vmem:[#allocation2 + $0x24] sm:$0xf]
      %v1608 = vld [vmem:[#allocation2 + $0x28] sm:$0xf]
      %v1609 = vld [vmem:[#allocation2 + $0x2c] sm:$0xf]
      %v1610 = vld [vmem:[#allocation2 + $0x30] sm:$0xf]
      %v1611 = vld [vmem:[#allocation2 + $0x34] sm:$0xf]
      %v1612 = vld [vmem:[#allocation2 + $0x38] sm:$0xf]
      %v1613 = vld [vmem:[#allocation2 + $0x3c] sm:$0xf]
      %v1614 = vld [vmem:[#allocation2 + $0x40] sm:$0xf]
      %v1615 = vld [vmem:[#allocation2 + $0x44] sm:$0xf]
      %v1616 = vld [vmem:[#allocation2 + $0x48] sm:$0xf]
      %v1617 = vld [vmem:[#allocation2 + $0x4c] sm:$0xf]
      %v1618 = vld [vmem:[#allocation2 + $0x50] sm:$0xf]
      %v1619 = vld [vmem:[#allocation2 + $0x54] sm:$0xf]
      %v1620 = vld [vmem:[#allocation2 + $0x58] sm:$0xf]
      %v1621 = vld [vmem:[#allocation2 + $0x5c] sm:$0xf]
      %v1622 = vld [vmem:[#allocation2 + $0x60] sm:$0xf]
      %v1623 = vld [vmem:[#allocation2 + $0x64] sm:$0xf]
      %v1624 = vld [vmem:[#allocation2 + $0x68] sm:$0xf]
      %v1625 = vld [vmem:[#allocation2 + $0x6c] sm:$0xf]
      %v1626 = vld [vmem:[#allocation2 + $0x70] sm:$0xf]
      %v1627 = vld [vmem:[#allocation2 + $0x74] sm:$0xf]
      %v1628 = vld [vmem:[#allocation2 + $0x78] sm:$0xf]
      %v1629 = vld [vmem:[#allocation2 + $0x7c] sm:$0xf]
      %v1630 = vld [vmem:[#allocation2 + $0x80] sm:$0xf]
      %v1631 = vld [vmem:[#allocation2 + $0x84] sm:$0xf]
      %v1632 = vld [vmem:[#allocation2 + $0x88] sm:$0xf]
      %v1633 = vld [vmem:[#allocation2 + $0x8c] sm:$0xf]
      %v1634 = vld [vmem:[#allocation2 + $0x90] sm:$0xf]
      %v1635 = vld [vmem:[#allocation2 + $0x94] sm:$0xf]
      %v1636 = vld [vmem:[#allocation2 + $0x98] sm:$0xf]
      %v1637 = vld [vmem:[#allocation2 + $0x9c] sm:$0xf]
      %v1639 = vshrl.u32 %v1601, 16
      %v1641 = vrot.slane %v1639, 7
      %v1642 = vrot.slane %v1641, 4
      %v1644 = vshrl.u32 %v1602, 16
      %v1646 = vrot.slane %v1644, 7
      %v1647 = vshll.u32 %v1602, 16
      %v1649 = vor.u32 %v1646, %v1647
      %v1650 = vsel %vm1200, %v1642, %v1649
      %v1651 = vrot.slane %v1646, 4
      %v1653 = vshrl.u32 %v1603, 16
      %v1655 = vrot.slane %v1653, 7
      %v1656 = vshll.u32 %v1603, 16
      %v1658 = vor.u32 %v1655, %v1656
      %v1659 = vsel %vm1200, %v1651, %v1658
      %v1660 = vrot.slane %v1655, 4
      %v1662 = vshrl.u32 %v1604, 16
      %v1664 = vrot.slane %v1662, 7
      %v1665 = vshll.u32 %v1604, 16
      %v1667 = vor.u32 %v1664, %v1665
      %v1668 = vsel %vm1200, %v1660, %v1667
      %v1669 = vrot.slane %v1664, 4
      %v1671 = vshrl.u32 %v1605, 16
      %v1673 = vrot.slane %v1671, 7
      %v1674 = vshll.u32 %v1605, 16
      %v1676 = vor.u32 %v1673, %v1674
      %v1677 = vsel %vm1200, %v1669, %v1676
      %v1678 = vrot.slane %v1673, 4
      %v1680 = vshrl.u32 %v1606, 16
      %v1682 = vrot.slane %v1680, 7
      %v1683 = vshll.u32 %v1606, 16
      %v1685 = vor.u32 %v1682, %v1683
      %v1686 = vsel %vm1200, %v1678, %v1685
      %v1687 = vrot.slane %v1682, 4
      %v1689 = vshrl.u32 %v1607, 16
      %v1691 = vrot.slane %v1689, 7
      %v1692 = vshll.u32 %v1607, 16
      %v1694 = vor.u32 %v1691, %v1692
      %v1695 = vsel %vm1200, %v1687, %v1694
      %v1696 = vrot.slane %v1691, 4
      %v1698 = vshrl.u32 %v1608, 16
      %v1700 = vrot.slane %v1698, 7
      %v1701 = vshll.u32 %v1608, 16
      %v1703 = vor.u32 %v1700, %v1701
      %v1704 = vsel %vm1200, %v1696, %v1703
      %v1705 = vrot.slane %v1700, 4
      %v1707 = vshrl.u32 %v1609, 16
      %v1709 = vrot.slane %v1707, 7
      %v1710 = vshll.u32 %v1609, 16
      %v1712 = vor.u32 %v1709, %v1710
      %v1713 = vsel %vm1200, %v1705, %v1712
      %v1714 = vrot.slane %v1709, 4
      %v1716 = vshrl.u32 %v1610, 16
      %v1718 = vrot.slane %v1716, 7
      %v1719 = vshll.u32 %v1610, 16
      %v1721 = vor.u32 %v1718, %v1719
      %v1722 = vsel %vm1200, %v1714, %v1721
      %v1723 = vrot.slane %v1718, 4
      %v1725 = vshrl.u32 %v1611, 16
      %v1727 = vrot.slane %v1725, 7
      %v1728 = vshll.u32 %v1611, 16
      %v1730 = vor.u32 %v1727, %v1728
      %v1731 = vsel %vm1200, %v1723, %v1730
      %v1732 = vrot.slane %v1727, 4
      %v1734 = vshrl.u32 %v1612, 16
      %v1736 = vrot.slane %v1734, 7
      %v1737 = vshll.u32 %v1612, 16
      %v1739 = vor.u32 %v1736, %v1737
      %v1740 = vsel %vm1200, %v1732, %v1739
      %v1741 = vrot.slane %v1736, 4
      %v1743 = vshrl.u32 %v1613, 16
      %v1745 = vrot.slane %v1743, 7
      %v1746 = vshll.u32 %v1613, 16
      %v1748 = vor.u32 %v1745, %v1746
      %v1749 = vsel %vm1200, %v1741, %v1748
      %v1750 = vrot.slane %v1745, 4
      %v1752 = vshrl.u32 %v1614, 16
      %v1754 = vrot.slane %v1752, 7
      %v1755 = vshll.u32 %v1614, 16
      %v1757 = vor.u32 %v1754, %v1755
      %v1758 = vsel %vm1200, %v1750, %v1757
      %v1759 = vrot.slane %v1754, 4
      %v1761 = vshrl.u32 %v1615, 16
      %v1763 = vrot.slane %v1761, 7
      %v1764 = vshll.u32 %v1615, 16
      %v1766 = vor.u32 %v1763, %v1764
      %v1767 = vsel %vm1200, %v1759, %v1766
      %v1768 = vrot.slane %v1763, 4
      %v1770 = vshrl.u32 %v1616, 16
      %v1772 = vrot.slane %v1770, 7
      %v1773 = vshll.u32 %v1616, 16
      %v1775 = vor.u32 %v1772, %v1773
      %v1776 = vsel %vm1200, %v1768, %v1775
      %v1777 = vrot.slane %v1772, 4
      %v1779 = vshrl.u32 %v1617, 16
      %v1781 = vrot.slane %v1779, 7
      %v1782 = vshll.u32 %v1617, 16
      %v1784 = vor.u32 %v1781, %v1782
      %v1785 = vsel %vm1200, %v1777, %v1784
      %v1786 = vrot.slane %v1781, 4
      %v1788 = vshrl.u32 %v1618, 16
      %v1790 = vrot.slane %v1788, 7
      %v1791 = vshll.u32 %v1618, 16
      %v1793 = vor.u32 %v1790, %v1791
      %v1794 = vsel %vm1200, %v1786, %v1793
      %v1795 = vrot.slane %v1790, 4
      %v1797 = vshrl.u32 %v1619, 16
      %v1799 = vrot.slane %v1797, 7
      %v1800 = vshll.u32 %v1619, 16
      %v1802 = vor.u32 %v1799, %v1800
      %v1803 = vsel %vm1200, %v1795, %v1802
      %v1804 = vrot.slane %v1799, 4
      %v1806 = vshrl.u32 %v1620, 16
      %v1808 = vrot.slane %v1806, 7
      %v1809 = vshll.u32 %v1620, 16
      %v1811 = vor.u32 %v1808, %v1809
      %v1812 = vsel %vm1200, %v1804, %v1811
      %v1813 = vrot.slane %v1808, 4
      %v1815 = vshrl.u32 %v1621, 16
      %v1817 = vrot.slane %v1815, 7
      %v1818 = vshll.u32 %v1621, 16
      %v1820 = vor.u32 %v1817, %v1818
      %v1821 = vsel %vm1200, %v1813, %v1820
      %v1822 = vrot.slane %v1817, 4
      %v1824 = vshrl.u32 %v1622, 16
      %v1826 = vrot.slane %v1824, 7
      %v1827 = vshll.u32 %v1622, 16
      %v1829 = vor.u32 %v1826, %v1827
      %v1830 = vsel %vm1200, %v1822, %v1829
      %v1831 = vrot.slane %v1826, 4
      %v1833 = vshrl.u32 %v1623, 16
      %v1835 = vrot.slane %v1833, 7
      %v1836 = vshll.u32 %v1623, 16
      %v1838 = vor.u32 %v1835, %v1836
      %v1839 = vsel %vm1200, %v1831, %v1838
      %v1840 = vrot.slane %v1835, 4
      %v1842 = vshrl.u32 %v1624, 16
      %v1844 = vrot.slane %v1842, 7
      %v1845 = vshll.u32 %v1624, 16
      %v1847 = vor.u32 %v1844, %v1845
      %v1848 = vsel %vm1200, %v1840, %v1847
      %v1849 = vrot.slane %v1844, 4
      %v1851 = vshrl.u32 %v1625, 16
      %v1853 = vrot.slane %v1851, 7
      %v1854 = vshll.u32 %v1625, 16
      %v1856 = vor.u32 %v1853, %v1854
      %v1857 = vsel %vm1200, %v1849, %v1856
      %v1858 = vrot.slane %v1853, 4
      %v1860 = vshrl.u32 %v1626, 16
      %v1862 = vrot.slane %v1860, 7
      %v1863 = vshll.u32 %v1626, 16
      %v1865 = vor.u32 %v1862, %v1863
      %v1866 = vsel %vm1200, %v1858, %v1865
      %v1867 = vrot.slane %v1862, 4
      %v1869 = vshrl.u32 %v1627, 16
      %v1871 = vrot.slane %v1869, 7
      %v1872 = vshll.u32 %v1627, 16
      %v1874 = vor.u32 %v1871, %v1872
      %v1875 = vsel %vm1200, %v1867, %v1874
      %v1876 = vrot.slane %v1871, 4
      %v1878 = vshrl.u32 %v1628, 16
      %v1880 = vrot.slane %v1878, 7
      %v1881 = vshll.u32 %v1628, 16
      %v1883 = vor.u32 %v1880, %v1881
      %v1884 = vsel %vm1200, %v1876, %v1883
      %v1885 = vrot.slane %v1880, 4
      %v1887 = vshrl.u32 %v1629, 16
      %v1889 = vrot.slane %v1887, 7
      %v1890 = vshll.u32 %v1629, 16
      %v1892 = vor.u32 %v1889, %v1890
      %v1893 = vsel %vm1200, %v1885, %v1892
      %v1894 = vrot.slane %v1889, 4
      %v1896 = vshrl.u32 %v1630, 16
      %v1898 = vrot.slane %v1896, 7
      %v1899 = vshll.u32 %v1630, 16
      %v1901 = vor.u32 %v1898, %v1899
      %v1902 = vsel %vm1200, %v1894, %v1901
      %v1903 = vrot.slane %v1898, 4
      %v1905 = vshrl.u32 %v1631, 16
      %v1907 = vrot.slane %v1905, 7
      %v1908 = vshll.u32 %v1631, 16
      %v1910 = vor.u32 %v1907, %v1908
      %v1911 = vsel %vm1200, %v1903, %v1910
      %v1912 = vrot.slane %v1907, 4
      %v1914 = vshrl.u32 %v1632, 16
      %v1916 = vrot.slane %v1914, 7
      %v1917 = vshll.u32 %v1632, 16
      %v1919 = vor.u32 %v1916, %v1917
      %v1920 = vsel %vm1200, %v1912, %v1919
      %v1921 = vrot.slane %v1916, 4
      %v1923 = vshrl.u32 %v1633, 16
      %v1925 = vrot.slane %v1923, 7
      %v1926 = vshll.u32 %v1633, 16
      %v1928 = vor.u32 %v1925, %v1926
      %v1929 = vsel %vm1200, %v1921, %v1928
      %v1930 = vrot.slane %v1925, 4
      %v1932 = vshrl.u32 %v1634, 16
      %v1934 = vrot.slane %v1932, 7
      %v1935 = vshll.u32 %v1634, 16
      %v1937 = vor.u32 %v1934, %v1935
      %v1938 = vsel %vm1200, %v1930, %v1937
      %v1939 = vrot.slane %v1934, 4
      %v1941 = vshrl.u32 %v1635, 16
      %v1943 = vrot.slane %v1941, 7
      %v1944 = vshll.u32 %v1635, 16
      %v1946 = vor.u32 %v1943, %v1944
      %v1947 = vsel %vm1200, %v1939, %v1946
      %v1948 = vrot.slane %v1943, 4
      %v1950 = vshrl.u32 %v1636, 16
      %v1952 = vrot.slane %v1950, 7
      %v1953 = vshll.u32 %v1636, 16
      %v1955 = vor.u32 %v1952, %v1953
      %v1956 = vsel %vm1200, %v1948, %v1955
      %v1957 = vrot.slane %v1952, 4
      %v1959 = vshrl.u32 %v1637, 16
      %v1961 = vrot.slane %v1959, 7
      %v1962 = vshll.u32 %v1637, 16
      %v1964 = vor.u32 %v1961, %v1962
      %v1965 = vsel %vm1200, %v1957, %v1964
      %2002 = vst [vmem:[#allocation3 + $0xc] sm:$0xf] %v1650
      %2003 = vst [vmem:[#allocation3 + $0x30] sm:$0xf] %v1659
      %2004 = vst [vmem:[#allocation3 + $0x54] sm:$0xf] %v1668
      %2005 = vst [vmem:[#allocation3 + $0x78] sm:$0xf] %v1677
      %2006 = vst [vmem:[#allocation3 + $0x9c] sm:$0xf] %v1686
      %2007 = vst [vmem:[#allocation3 + $0xc0] sm:$0xf] %v1695
      %2008 = vst [vmem:[#allocation3 + $0xe4] sm:$0xf] %v1704
      %2009 = vst [vmem:[#allocation3 + $0x108] sm:$0xf] %v1713
      %2010 = vst [vmem:[#allocation3 + $0x12c] sm:$0xf] %v1722
      %2011 = vst [vmem:[#allocation3 + $0x150] sm:$0xf] %v1731
      %2012 = vst [vmem:[#allocation3 + $0x174] sm:$0xf] %v1740
      %2013 = vst [vmem:[#allocation3 + $0x198] sm:$0xf] %v1749
      %2014 = vst [vmem:[#allocation3 + $0x1bc] sm:$0xf] %v1758
      %2015 = vst [vmem:[#allocation3 + $0x1e0] sm:$0xf] %v1767
      %2016 = vst [vmem:[#allocation3 + $0x204] sm:$0xf] %v1776
      %2017 = vst [vmem:[#allocation3 + $0x228] sm:$0xf] %v1785
      %2018 = vst [vmem:[#allocation3 + $0x24c] sm:$0xf] %v1794
      %2019 = vst [vmem:[#allocation3 + $0x270] sm:$0xf] %v1803
      %2020 = vst [vmem:[#allocation3 + $0x294] sm:$0xf] %v1812
      %2021 = vst [vmem:[#allocation3 + $0x2b8] sm:$0xf] %v1821
      %2022 = vst [vmem:[#allocation3 + $0x2dc] sm:$0xf] %v1830
      %2023 = vst [vmem:[#allocation3 + $0x300] sm:$0xf] %v1839
      %2024 = vst [vmem:[#allocation3 + $0x324] sm:$0xf] %v1848
      %2025 = vst [vmem:[#allocation3 + $0x348] sm:$0xf] %v1857
      %2026 = vst [vmem:[#allocation3 + $0x36c] sm:$0xf] %v1866
      %2027 = vst [vmem:[#allocation3 + $0x390] sm:$0xf] %v1875
      %2028 = vst [vmem:[#allocation3 + $0x3b4] sm:$0xf] %v1884
      %2029 = vst [vmem:[#allocation3 + $0x3d8] sm:$0xf] %v1893
      %2030 = vst [vmem:[#allocation3 + $0x3fc] sm:$0xf] %v1902
      %2031 = vst [vmem:[#allocation3 + $0x420] sm:$0xf] %v1911
      %2032 = vst [vmem:[#allocation3 + $0x444] sm:$0xf] %v1920
      %2033 = vst [vmem:[#allocation3 + $0x468] sm:$0xf] %v1929
      %2034 = vst [vmem:[#allocation3 + $0x48c] sm:$0xf] %v1938
      %2035 = vst [vmem:[#allocation3 + $0x4b0] sm:$0xf] %v1947
      %2036 = vst [vmem:[#allocation3 + $0x4d4] sm:$0xf] %v1956
      %2037 = vst [vmem:[#allocation3 + $0x4f8] sm:$0xf] %v1965
      %v2038 = vld [vmem:[#allocation2 + $0x10] sm:$0xf]
      %v2039 = vld [vmem:[#allocation2 + $0x14] sm:$0xf]
      %v2040 = vld [vmem:[#allocation2 + $0x18] sm:$0xf]
      %v2041 = vld [vmem:[#allocation2 + $0x1c] sm:$0xf]
      %v2042 = vld [vmem:[#allocation2 + $0x20] sm:$0xf]
      %v2043 = vld [vmem:[#allocation2 + $0x24] sm:$0xf]
      %v2044 = vld [vmem:[#allocation2 + $0x28] sm:$0xf]
      %v2045 = vld [vmem:[#allocation2 + $0x2c] sm:$0xf]
      %v2046 = vld [vmem:[#allocation2 + $0x30] sm:$0xf]
      %v2047 = vld [vmem:[#allocation2 + $0x34] sm:$0xf]
      %v2048 = vld [vmem:[#allocation2 + $0x38] sm:$0xf]
      %v2049 = vld [vmem:[#allocation2 + $0x3c] sm:$0xf]
      %v2050 = vld [vmem:[#allocation2 + $0x40] sm:$0xf]
      %v2051 = vld [vmem:[#allocation2 + $0x44] sm:$0xf]
      %v2052 = vld [vmem:[#allocation2 + $0x48] sm:$0xf]
      %v2053 = vld [vmem:[#allocation2 + $0x4c] sm:$0xf]
      %v2054 = vld [vmem:[#allocation2 + $0x50] sm:$0xf]
      %v2055 = vld [vmem:[#allocation2 + $0x54] sm:$0xf]
      %v2056 = vld [vmem:[#allocation2 + $0x58] sm:$0xf]
      %v2057 = vld [vmem:[#allocation2 + $0x5c] sm:$0xf]
      %v2058 = vld [vmem:[#allocation2 + $0x60] sm:$0xf]
      %v2059 = vld [vmem:[#allocation2 + $0x64] sm:$0xf]
      %v2060 = vld [vmem:[#allocation2 + $0x68] sm:$0xf]
      %v2061 = vld [vmem:[#allocation2 + $0x6c] sm:$0xf]
      %v2062 = vld [vmem:[#allocation2 + $0x70] sm:$0xf]
      %v2063 = vld [vmem:[#allocation2 + $0x74] sm:$0xf]
      %v2064 = vld [vmem:[#allocation2 + $0x78] sm:$0xf]
      %v2065 = vld [vmem:[#allocation2 + $0x7c] sm:$0xf]
      %v2066 = vld [vmem:[#allocation2 + $0x80] sm:$0xf]
      %v2067 = vld [vmem:[#allocation2 + $0x84] sm:$0xf]
      %v2068 = vld [vmem:[#allocation2 + $0x88] sm:$0xf]
      %v2069 = vld [vmem:[#allocation2 + $0x8c] sm:$0xf]
      %v2070 = vld [vmem:[#allocation2 + $0x90] sm:$0xf]
      %v2071 = vld [vmem:[#allocation2 + $0x94] sm:$0xf]
      %v2072 = vld [vmem:[#allocation2 + $0x98] sm:$0xf]
      %v2073 = vld [vmem:[#allocation2 + $0x9c] sm:$0xf]
      %2074 = vst [vmem:[#allocation3 + $0x10] sm:$0xf] %v2038
      %2075 = vst [vmem:[#allocation3 + $0x34] sm:$0xf] %v2039
      %2076 = vst [vmem:[#allocation3 + $0x58] sm:$0xf] %v2040
      %2077 = vst [vmem:[#allocation3 + $0x7c] sm:$0xf] %v2041
      %2078 = vst [vmem:[#allocation3 + $0xa0] sm:$0xf] %v2042
      %2079 = vst [vmem:[#allocation3 + $0xc4] sm:$0xf] %v2043
      %2080 = vst [vmem:[#allocation3 + $0xe8] sm:$0xf] %v2044
      %2081 = vst [vmem:[#allocation3 + $0x10c] sm:$0xf] %v2045
      %2082 = vst [vmem:[#allocation3 + $0x130] sm:$0xf] %v2046
      %2083 = vst [vmem:[#allocation3 + $0x154] sm:$0xf] %v2047
      %2084 = vst [vmem:[#allocation3 + $0x178] sm:$0xf] %v2048
      %2085 = vst [vmem:[#allocation3 + $0x19c] sm:$0xf] %v2049
      %2086 = vst [vmem:[#allocation3 + $0x1c0] sm:$0xf] %v2050
      %2087 = vst [vmem:[#allocation3 + $0x1e4] sm:$0xf] %v2051
      %2088 = vst [vmem:[#allocation3 + $0x208] sm:$0xf] %v2052
      %2089 = vst [vmem:[#allocation3 + $0x22c] sm:$0xf] %v2053
      %2090 = vst [vmem:[#allocation3 + $0x250] sm:$0xf] %v2054
      %2091 = vst [vmem:[#allocation3 + $0x274] sm:$0xf] %v2055
      %2092 = vst [vmem:[#allocation3 + $0x298] sm:$0xf] %v2056
      %2093 = vst [vmem:[#allocation3 + $0x2bc] sm:$0xf] %v2057
      %2094 = vst [vmem:[#allocation3 + $0x2e0] sm:$0xf] %v2058
      %2095 = vst [vmem:[#allocation3 + $0x304] sm:$0xf] %v2059
      %2096 = vst [vmem:[#allocation3 + $0x328] sm:$0xf] %v2060
      %2097 = vst [vmem:[#allocation3 + $0x34c] sm:$0xf] %v2061
      %2098 = vst [vmem:[#allocation3 + $0x370] sm:$0xf] %v2062
      %2099 = vst [vmem:[#allocation3 + $0x394] sm:$0xf] %v2063
      %2100 = vst [vmem:[#allocation3 + $0x3b8] sm:$0xf] %v2064
      %2101 = vst [vmem:[#allocation3 + $0x3dc] sm:$0xf] %v2065
      %2102 = vst [vmem:[#allocation3 + $0x400] sm:$0xf] %v2066
      %2103 = vst [vmem:[#allocation3 + $0x424] sm:$0xf] %v2067
      %2104 = vst [vmem:[#allocation3 + $0x448] sm:$0xf] %v2068
      %2105 = vst [vmem:[#allocation3 + $0x46c] sm:$0xf] %v2069
      %2106 = vst [vmem:[#allocation3 + $0x490] sm:$0xf] %v2070
      %2107 = vst [vmem:[#allocation3 + $0x4b4] sm:$0xf] %v2071
      %2108 = vst [vmem:[#allocation3 + $0x4d8] sm:$0xf] %v2072
      %2109 = vst [vmem:[#allocation3 + $0x4fc] sm:$0xf] %v2073
      %v2110 = vld [vmem:[#allocation2 + $0x10] sm:$0xf]
      %v2111 = vld [vmem:[#allocation2 + $0x14] sm:$0xf]
      %v2112 = vld [vmem:[#allocation2 + $0x18] sm:$0xf]
      %v2113 = vld [vmem:[#allocation2 + $0x1c] sm:$0xf]
      %v2114 = vld [vmem:[#allocation2 + $0x20] sm:$0xf]
      %v2115 = vld [vmem:[#allocation2 + $0x24] sm:$0xf]
      %v2116 = vld [vmem:[#allocation2 + $0x28] sm:$0xf]
      %v2117 = vld [vmem:[#allocation2 + $0x2c] sm:$0xf]
      %v2118 = vld [vmem:[#allocation2 + $0x30] sm:$0xf]
      %v2119 = vld [vmem:[#allocation2 + $0x34] sm:$0xf]
      %v2120 = vld [vmem:[#allocation2 + $0x38] sm:$0xf]
      %v2121 = vld [vmem:[#allocation2 + $0x3c] sm:$0xf]
      %v2122 = vld [vmem:[#allocation2 + $0x40] sm:$0xf]
      %v2123 = vld [vmem:[#allocation2 + $0x44] sm:$0xf]
      %v2124 = vld [vmem:[#allocation2 + $0x48] sm:$0xf]
      %v2125 = vld [vmem:[#allocation2 + $0x4c] sm:$0xf]
      %v2126 = vld [vmem:[#allocation2 + $0x50] sm:$0xf]
      %v2127 = vld [vmem:[#allocation2 + $0x54] sm:$0xf]
      %v2128 = vld [vmem:[#allocation2 + $0x58] sm:$0xf]
      %v2129 = vld [vmem:[#allocation2 + $0x5c] sm:$0xf]
      %v2130 = vld [vmem:[#allocation2 + $0x60] sm:$0xf]
      %v2131 = vld [vmem:[#allocation2 + $0x64] sm:$0xf]
      %v2132 = vld [vmem:[#allocation2 + $0x68] sm:$0xf]
      %v2133 = vld [vmem:[#allocation2 + $0x6c] sm:$0xf]
      %v2134 = vld [vmem:[#allocation2 + $0x70] sm:$0xf]
      %v2135 = vld [vmem:[#allocation2 + $0x74] sm:$0xf]
      %v2136 = vld [vmem:[#allocation2 + $0x78] sm:$0xf]
      %v2137 = vld [vmem:[#allocation2 + $0x7c] sm:$0xf]
      %v2138 = vld [vmem:[#allocation2 + $0x80] sm:$0xf]
      %v2139 = vld [vmem:[#allocation2 + $0x84] sm:$0xf]
      %v2140 = vld [vmem:[#allocation2 + $0x88] sm:$0xf]
      %v2141 = vld [vmem:[#allocation2 + $0x8c] sm:$0xf]
      %v2142 = vld [vmem:[#allocation2 + $0x90] sm:$0xf]
      %v2143 = vld [vmem:[#allocation2 + $0x94] sm:$0xf]
      %v2144 = vld [vmem:[#allocation2 + $0x98] sm:$0xf]
      %v2145 = vld [vmem:[#allocation2 + $0x9c] sm:$0xf]
      %v2146 = vld [vmem:[#allocation2 + $0xa0] sm:$0x1]
      %vm2147 = vsmask.f32 3328
      %vm2148 = vsmask.f32 7440
      %vm2149 = vmor %vm2147, %vm2148
      %v2151 = vshrl.u32 %v2110, 16
      %v2153 = vrot.slane %v2151, 4
      %v2154 = vshll.u32 %v2110, 16
      %v2156 = vrot.slane %v2154, 5
      %v2157 = vor.u32 %v2153, %v2156
      %v2158 = vrot.slane %v2157, 4
      %v2160 = vshll.u32 %v2111, 16
      %v2162 = vrot.slane %v2160, 5
      %v2163 = vsel %vm2149, %v2158, %v2162
      %v2164 = vshrl.u32 %v2111, 16
      %v2166 = vrot.slane %v2164, 4
      %v2167 = vor.u32 %v2166, %v2162
      %v2168 = vrot.slane %v2167, 4
      %v2170 = vshll.u32 %v2112, 16
      %v2172 = vrot.slane %v2170, 5
      %v2173 = vsel %vm2149, %v2168, %v2172
      %v2174 = vshrl.u32 %v2112, 16
      %v2176 = vrot.slane %v2174, 4
      %v2177 = vor.u32 %v2176, %v2172
      %v2178 = vrot.slane %v2177, 4
      %v2180 = vshll.u32 %v2113, 16
      %v2182 = vrot.slane %v2180, 5
      %v2183 = vsel %vm2149, %v2178, %v2182
      %v2184 = vshrl.u32 %v2113, 16
      %v2186 = vrot.slane %v2184, 4
      %v2187 = vor.u32 %v2186, %v2182
      %v2188 = vrot.slane %v2187, 4
      %v2190 = vshll.u32 %v2114, 16
      %v2192 = vrot.slane %v2190, 5
      %v2193 = vsel %vm2149, %v2188, %v2192
      %v2194 = vshrl.u32 %v2114, 16
      %v2196 = vrot.slane %v2194, 4
      %v2197 = vor.u32 %v2196, %v2192
      %v2198 = vrot.slane %v2197, 4
      %v2200 = vshll.u32 %v2115, 16
      %v2202 = vrot.slane %v2200, 5
      %v2203 = vsel %vm2149, %v2198, %v2202
      %v2204 = vshrl.u32 %v2115, 16
      %v2206 = vrot.slane %v2204, 4
      %v2207 = vor.u32 %v2206, %v2202
      %v2208 = vrot.slane %v2207, 4
      %v2210 = vshll.u32 %v2116, 16
      %v2212 = vrot.slane %v2210, 5
      %v2213 = vsel %vm2149, %v2208, %v2212
      %v2214 = vshrl.u32 %v2116, 16
      %v2216 = vrot.slane %v2214, 4
      %v2217 = vor.u32 %v2216, %v2212
      %v2218 = vrot.slane %v2217, 4
      %v2220 = vshll.u32 %v2117, 16
      %v2222 = vrot.slane %v2220, 5
      %v2223 = vsel %vm2149, %v2218, %v2222
      %v2224 = vshrl.u32 %v2117, 16
      %v2226 = vrot.slane %v2224, 4
      %v2227 = vor.u32 %v2226, %v2222
      %v2228 = vrot.slane %v2227, 4
      %v2230 = vshll.u32 %v2118, 16
      %v2232 = vrot.slane %v2230, 5
      %v2233 = vsel %vm2149, %v2228, %v2232
      %v2234 = vshrl.u32 %v2118, 16
      %v2236 = vrot.slane %v2234, 4
      %v2237 = vor.u32 %v2236, %v2232
      %v2238 = vrot.slane %v2237, 4
      %v2240 = vshll.u32 %v2119, 16
      %v2242 = vrot.slane %v2240, 5
      %v2243 = vsel %vm2149, %v2238, %v2242
      %v2244 = vshrl.u32 %v2119, 16
      %v2246 = vrot.slane %v2244, 4
      %v2247 = vor.u32 %v2246, %v2242
      %v2248 = vrot.slane %v2247, 4
      %v2250 = vshll.u32 %v2120, 16
      %v2252 = vrot.slane %v2250, 5
      %v2253 = vsel %vm2149, %v2248, %v2252
      %v2254 = vshrl.u32 %v2120, 16
      %v2256 = vrot.slane %v2254, 4
      %v2257 = vor.u32 %v2256, %v2252
      %v2258 = vrot.slane %v2257, 4
      %v2260 = vshll.u32 %v2121, 16
      %v2262 = vrot.slane %v2260, 5
      %v2263 = vsel %vm2149, %v2258, %v2262
      %v2264 = vshrl.u32 %v2121, 16
      %v2266 = vrot.slane %v2264, 4
      %v2267 = vor.u32 %v2266, %v2262
      %v2268 = vrot.slane %v2267, 4
      %v2270 = vshll.u32 %v2122, 16
      %v2272 = vrot.slane %v2270, 5
      %v2273 = vsel %vm2149, %v2268, %v2272
      %v2274 = vshrl.u32 %v2122, 16
      %v2276 = vrot.slane %v2274, 4
      %v2277 = vor.u32 %v2276, %v2272
      %v2278 = vrot.slane %v2277, 4
      %v2280 = vshll.u32 %v2123, 16
      %v2282 = vrot.slane %v2280, 5
      %v2283 = vsel %vm2149, %v2278, %v2282
      %v2284 = vshrl.u32 %v2123, 16
      %v2286 = vrot.slane %v2284, 4
      %v2287 = vor.u32 %v2286, %v2282
      %v2288 = vrot.slane %v2287, 4
      %v2290 = vshll.u32 %v2124, 16
      %v2292 = vrot.slane %v2290, 5
      %v2293 = vsel %vm2149, %v2288, %v2292
      %v2294 = vshrl.u32 %v2124, 16
      %v2296 = vrot.slane %v2294, 4
      %v2297 = vor.u32 %v2296, %v2292
      %v2298 = vrot.slane %v2297, 4
      %v2300 = vshll.u32 %v2125, 16
      %v2302 = vrot.slane %v2300, 5
      %v2303 = vsel %vm2149, %v2298, %v2302
      %v2304 = vshrl.u32 %v2125, 16
      %v2306 = vrot.slane %v2304, 4
      %v2307 = vor.u32 %v2306, %v2302
      %v2308 = vrot.slane %v2307, 4
      %v2310 = vshll.u32 %v2126, 16
      %v2312 = vrot.slane %v2310, 5
      %v2313 = vsel %vm2149, %v2308, %v2312
      %v2314 = vshrl.u32 %v2126, 16
      %v2316 = vrot.slane %v2314, 4
      %v2317 = vor.u32 %v2316, %v2312
      %v2318 = vrot.slane %v2317, 4
      %v2320 = vshll.u32 %v2127, 16
      %v2322 = vrot.slane %v2320, 5
      %v2323 = vsel %vm2149, %v2318, %v2322
      %v2324 = vshrl.u32 %v2127, 16
      %v2326 = vrot.slane %v2324, 4
      %v2327 = vor.u32 %v2326, %v2322
      %v2328 = vrot.slane %v2327, 4
      %v2330 = vshll.u32 %v2128, 16
      %v2332 = vrot.slane %v2330, 5
      %v2333 = vsel %vm2149, %v2328, %v2332
      %v2334 = vshrl.u32 %v2128, 16
      %v2336 = vrot.slane %v2334, 4
      %v2337 = vor.u32 %v2336, %v2332
      %v2338 = vrot.slane %v2337, 4
      %v2340 = vshll.u32 %v2129, 16
      %v2342 = vrot.slane %v2340, 5
      %v2343 = vsel %vm2149, %v2338, %v2342
      %v2344 = vshrl.u32 %v2129, 16
      %v2346 = vrot.slane %v2344, 4
      %v2347 = vor.u32 %v2346, %v2342
      %v2348 = vrot.slane %v2347, 4
      %v2350 = vshll.u32 %v2130, 16
      %v2352 = vrot.slane %v2350, 5
      %v2353 = vsel %vm2149, %v2348, %v2352
      %v2354 = vshrl.u32 %v2130, 16
      %v2356 = vrot.slane %v2354, 4
      %v2357 = vor.u32 %v2356, %v2352
      %v2358 = vrot.slane %v2357, 4
      %v2360 = vshll.u32 %v2131, 16
      %v2362 = vrot.slane %v2360, 5
      %v2363 = vsel %vm2149, %v2358, %v2362
      %v2364 = vshrl.u32 %v2131, 16
      %v2366 = vrot.slane %v2364, 4
      %v2367 = vor.u32 %v2366, %v2362
      %v2368 = vrot.slane %v2367, 4
      %v2370 = vshll.u32 %v2132, 16
      %v2372 = vrot.slane %v2370, 5
      %v2373 = vsel %vm2149, %v2368, %v2372
      %v2374 = vshrl.u32 %v2132, 16
      %v2376 = vrot.slane %v2374, 4
      %v2377 = vor.u32 %v2376, %v2372
      %v2378 = vrot.slane %v2377, 4
      %v2380 = vshll.u32 %v2133, 16
      %v2382 = vrot.slane %v2380, 5
      %v2383 = vsel %vm2149, %v2378, %v2382
      %v2384 = vshrl.u32 %v2133, 16
      %v2386 = vrot.slane %v2384, 4
      %v2387 = vor.u32 %v2386, %v2382
      %v2388 = vrot.slane %v2387, 4
      %v2390 = vshll.u32 %v2134, 16
      %v2392 = vrot.slane %v2390, 5
      %v2393 = vsel %vm2149, %v2388, %v2392
      %v2394 = vshrl.u32 %v2134, 16
      %v2396 = vrot.slane %v2394, 4
      %v2397 = vor.u32 %v2396, %v2392
      %v2398 = vrot.slane %v2397, 4
      %v2400 = vshll.u32 %v2135, 16
      %v2402 = vrot.slane %v2400, 5
      %v2403 = vsel %vm2149, %v2398, %v2402
      %v2404 = vshrl.u32 %v2135, 16
      %v2406 = vrot.slane %v2404, 4
      %v2407 = vor.u32 %v2406, %v2402
      %v2408 = vrot.slane %v2407, 4
      %v2410 = vshll.u32 %v2136, 16
      %v2412 = vrot.slane %v2410, 5
      %v2413 = vsel %vm2149, %v2408, %v2412
      %v2414 = vshrl.u32 %v2136, 16
      %v2416 = vrot.slane %v2414, 4
      %v2417 = vor.u32 %v2416, %v2412
      %v2418 = vrot.slane %v2417, 4
      %v2420 = vshll.u32 %v2137, 16
      %v2422 = vrot.slane %v2420, 5
      %v2423 = vsel %vm2149, %v2418, %v2422
      %v2424 = vshrl.u32 %v2137, 16
      %v2426 = vrot.slane %v2424, 4
      %v2427 = vor.u32 %v2426, %v2422
      %v2428 = vrot.slane %v2427, 4
      %v2430 = vshll.u32 %v2138, 16
      %v2432 = vrot.slane %v2430, 5
      %v2433 = vsel %vm2149, %v2428, %v2432
      %v2434 = vshrl.u32 %v2138, 16
      %v2436 = vrot.slane %v2434, 4
      %v2437 = vor.u32 %v2436, %v2432
      %v2438 = vrot.slane %v2437, 4
      %v2440 = vshll.u32 %v2139, 16
      %v2442 = vrot.slane %v2440, 5
      %v2443 = vsel %vm2149, %v2438, %v2442
      %v2444 = vshrl.u32 %v2139, 16
      %v2446 = vrot.slane %v2444, 4
      %v2447 = vor.u32 %v2446, %v2442
      %v2448 = vrot.slane %v2447, 4
      %v2450 = vshll.u32 %v2140, 16
      %v2452 = vrot.slane %v2450, 5
      %v2453 = vsel %vm2149, %v2448, %v2452
      %v2454 = vshrl.u32 %v2140, 16
      %v2456 = vrot.slane %v2454, 4
      %v2457 = vor.u32 %v2456, %v2452
      %v2458 = vrot.slane %v2457, 4
      %v2460 = vshll.u32 %v2141, 16
      %v2462 = vrot.slane %v2460, 5
      %v2463 = vsel %vm2149, %v2458, %v2462
      %v2464 = vshrl.u32 %v2141, 16
      %v2466 = vrot.slane %v2464, 4
      %v2467 = vor.u32 %v2466, %v2462
      %v2468 = vrot.slane %v2467, 4
      %v2470 = vshll.u32 %v2142, 16
      %v2472 = vrot.slane %v2470, 5
      %v2473 = vsel %vm2149, %v2468, %v2472
      %v2474 = vshrl.u32 %v2142, 16
      %v2476 = vrot.slane %v2474, 4
      %v2477 = vor.u32 %v2476, %v2472
      %v2478 = vrot.slane %v2477, 4
      %v2480 = vshll.u32 %v2143, 16
      %v2482 = vrot.slane %v2480, 5
      %v2483 = vsel %vm2149, %v2478, %v2482
      %v2484 = vshrl.u32 %v2143, 16
      %v2486 = vrot.slane %v2484, 4
      %v2487 = vor.u32 %v2486, %v2482
      %v2488 = vrot.slane %v2487, 4
      %v2490 = vshll.u32 %v2144, 16
      %v2492 = vrot.slane %v2490, 5
      %v2493 = vsel %vm2149, %v2488, %v2492
      %v2494 = vshrl.u32 %v2144, 16
      %v2496 = vrot.slane %v2494, 4
      %v2497 = vor.u32 %v2496, %v2492
      %v2498 = vrot.slane %v2497, 4
      %v2500 = vshll.u32 %v2145, 16
      %v2502 = vrot.slane %v2500, 5
      %v2503 = vsel %vm2149, %v2498, %v2502
      %v2504 = vshrl.u32 %v2145, 16
      %v2506 = vrot.slane %v2504, 4
      %v2507 = vor.u32 %v2506, %v2502
      %v2508 = vrot.slane %v2507, 4
      %v2510 = vshll.u32 %v2146, 16
      %v2512 = vrot.slane %v2510, 5
      %v2513 = vsel %vm2149, %v2508, %v2512
      %2550 = vst [vmem:[#allocation3 + $0x14] sm:$0xf] %v2163
      %2551 = vst [vmem:[#allocation3 + $0x38] sm:$0xf] %v2173
      %2552 = vst [vmem:[#allocation3 + $0x5c] sm:$0xf] %v2183
      %2553 = vst [vmem:[#allocation3 + $0x80] sm:$0xf] %v2193
      %2554 = vst [vmem:[#allocation3 + $0xa4] sm:$0xf] %v2203
      %2555 = vst [vmem:[#allocation3 + $0xc8] sm:$0xf] %v2213
      %2556 = vst [vmem:[#allocation3 + $0xec] sm:$0xf] %v2223
      %2557 = vst [vmem:[#allocation3 + $0x110] sm:$0xf] %v2233
      %2558 = vst [vmem:[#allocation3 + $0x134] sm:$0xf] %v2243
      %2559 = vst [vmem:[#allocation3 + $0x158] sm:$0xf] %v2253
      %2560 = vst [vmem:[#allocation3 + $0x17c] sm:$0xf] %v2263
      %2561 = vst [vmem:[#allocation3 + $0x1a0] sm:$0xf] %v2273
      %2562 = vst [vmem:[#allocation3 + $0x1c4] sm:$0xf] %v2283
      %2563 = vst [vmem:[#allocation3 + $0x1e8] sm:$0xf] %v2293
      %2564 = vst [vmem:[#allocation3 + $0x20c] sm:$0xf] %v2303
      %2565 = vst [vmem:[#allocation3 + $0x230] sm:$0xf] %v2313
      %2566 = vst [vmem:[#allocation3 + $0x254] sm:$0xf] %v2323
      %2567 = vst [vmem:[#allocation3 + $0x278] sm:$0xf] %v2333
      %2568 = vst [vmem:[#allocation3 + $0x29c] sm:$0xf] %v2343
      %2569 = vst [vmem:[#allocation3 + $0x2c0] sm:$0xf] %v2353
      %2570 = vst [vmem:[#allocation3 + $0x2e4] sm:$0xf] %v2363
      %2571 = vst [vmem:[#allocation3 + $0x308] sm:$0xf] %v2373
      %2572 = vst [vmem:[#allocation3 + $0x32c] sm:$0xf] %v2383
      %2573 = vst [vmem:[#allocation3 + $0x350] sm:$0xf] %v2393
      %2574 = vst [vmem:[#allocation3 + $0x374] sm:$0xf] %v2403
      %2575 = vst [vmem:[#allocation3 + $0x398] sm:$0xf] %v2413
      %2576 = vst [vmem:[#allocation3 + $0x3bc] sm:$0xf] %v2423
      %2577 = vst [vmem:[#allocation3 + $0x3e0] sm:$0xf] %v2433
      %2578 = vst [vmem:[#allocation3 + $0x404] sm:$0xf] %v2443
      %2579 = vst [vmem:[#allocation3 + $0x428] sm:$0xf] %v2453
      %2580 = vst [vmem:[#allocation3 + $0x44c] sm:$0xf] %v2463
      %2581 = vst [vmem:[#allocation3 + $0x470] sm:$0xf] %v2473
      %2582 = vst [vmem:[#allocation3 + $0x494] sm:$0xf] %v2483
      %2583 = vst [vmem:[#allocation3 + $0x4b8] sm:$0xf] %v2493
      %2584 = vst [vmem:[#allocation3 + $0x4dc] sm:$0xf] %v2503
      %2585 = vst [vmem:[#allocation3 + $0x500] sm:$0xf] %v2513
      %v2586 = vld [vmem:[#allocation2 + $0x18] sm:$0xf]
      %v2587 = vld [vmem:[#allocation2 + $0x1c] sm:$0xf]
      %v2588 = vld [vmem:[#allocation2 + $0x20] sm:$0xf]
      %v2589 = vld [vmem:[#allocation2 + $0x24] sm:$0xf]
      %v2590 = vld [vmem:[#allocation2 + $0x28] sm:$0xf]
      %v2591 = vld [vmem:[#allocation2 + $0x2c] sm:$0xf]
      %v2592 = vld [vmem:[#allocation2 + $0x30] sm:$0xf]
      %v2593 = vld [vmem:[#allocation2 + $0x34] sm:$0xf]
      %v2594 = vld [vmem:[#allocation2 + $0x38] sm:$0xf]
      %v2595 = vld [vmem:[#allocation2 + $0x3c] sm:$0xf]
      %v2596 = vld [vmem:[#allocation2 + $0x40] sm:$0xf]
      %v2597 = vld [vmem:[#allocation2 + $0x44] sm:$0xf]
      %v2598 = vld [vmem:[#allocation2 + $0x48] sm:$0xf]
      %v2599 = vld [vmem:[#allocation2 + $0x4c] sm:$0xf]
      %v2600 = vld [vmem:[#allocation2 + $0x50] sm:$0xf]
      %v2601 = vld [vmem:[#allocation2 + $0x54] sm:$0xf]
      %v2602 = vld [vmem:[#allocation2 + $0x58] sm:$0xf]
      %v2603 = vld [vmem:[#allocation2 + $0x5c] sm:$0xf]
      %v2604 = vld [vmem:[#allocation2 + $0x60] sm:$0xf]
      %v2605 = vld [vmem:[#allocation2 + $0x64] sm:$0xf]
      %v2606 = vld [vmem:[#allocation2 + $0x68] sm:$0xf]
      %v2607 = vld [vmem:[#allocation2 + $0x6c] sm:$0xf]
      %v2608 = vld [vmem:[#allocation2 + $0x70] sm:$0xf]
      %v2609 = vld [vmem:[#allocation2 + $0x74] sm:$0xf]
      %v2610 = vld [vmem:[#allocation2 + $0x78] sm:$0xf]
      %v2611 = vld [vmem:[#allocation2 + $0x7c] sm:$0xf]
      %v2612 = vld [vmem:[#allocation2 + $0x80] sm:$0xf]
      %v2613 = vld [vmem:[#allocation2 + $0x84] sm:$0xf]
      %v2614 = vld [vmem:[#allocation2 + $0x88] sm:$0xf]
      %v2615 = vld [vmem:[#allocation2 + $0x8c] sm:$0xf]
      %v2616 = vld [vmem:[#allocation2 + $0x90] sm:$0xf]
      %v2617 = vld [vmem:[#allocation2 + $0x94] sm:$0xf]
      %v2618 = vld [vmem:[#allocation2 + $0x98] sm:$0xf]
      %v2619 = vld [vmem:[#allocation2 + $0x9c] sm:$0xf]
      %v2620 = vld [vmem:[#allocation2 + $0xa0] sm:$0xf]
      %v2621 = vld [vmem:[#allocation2 + $0xa4] sm:$0xf]
      %v2622 = vld [vmem:[#allocation2 + $0xa8] sm:$0x1]
      %v2624 = vshrl.u32 %v2586, 16
      %v2626 = vrot.slane %v2624, 4
      %v2627 = vshll.u32 %v2586, 16
      %v2629 = vrot.slane %v2627, 5
      %v2630 = vor.u32 %v2626, %v2629
      %v2631 = vrot.slane %v2630, 4
      %v2633 = vshll.u32 %v2587, 16
      %v2635 = vrot.slane %v2633, 5
      %v2636 = vsel %vm2149, %v2631, %v2635
      %v2637 = vshrl.u32 %v2587, 16
      %v2639 = vrot.slane %v2637, 4
      %v2640 = vor.u32 %v2639, %v2635
      %v2641 = vrot.slane %v2640, 4
      %v2643 = vshll.u32 %v2588, 16
      %v2645 = vrot.slane %v2643, 5
      %v2646 = vsel %vm2149, %v2641, %v2645
      %v2647 = vshrl.u32 %v2588, 16
      %v2649 = vrot.slane %v2647, 4
      %v2650 = vor.u32 %v2649, %v2645
      %v2651 = vrot.slane %v2650, 4
      %v2653 = vshll.u32 %v2589, 16
      %v2655 = vrot.slane %v2653, 5
      %v2656 = vsel %vm2149, %v2651, %v2655
      %v2657 = vshrl.u32 %v2589, 16
      %v2659 = vrot.slane %v2657, 4
      %v2660 = vor.u32 %v2659, %v2655
      %v2661 = vrot.slane %v2660, 4
      %v2663 = vshll.u32 %v2590, 16
      %v2665 = vrot.slane %v2663, 5
      %v2666 = vsel %vm2149, %v2661, %v2665
      %v2667 = vshrl.u32 %v2590, 16
      %v2669 = vrot.slane %v2667, 4
      %v2670 = vor.u32 %v2669, %v2665
      %v2671 = vrot.slane %v2670, 4
      %v2673 = vshll.u32 %v2591, 16
      %v2675 = vrot.slane %v2673, 5
      %v2676 = vsel %vm2149, %v2671, %v2675
      %v2677 = vshrl.u32 %v2591, 16
      %v2679 = vrot.slane %v2677, 4
      %v2680 = vor.u32 %v2679, %v2675
      %v2681 = vrot.slane %v2680, 4
      %v2683 = vshll.u32 %v2592, 16
      %v2685 = vrot.slane %v2683, 5
      %v2686 = vsel %vm2149, %v2681, %v2685
      %v2687 = vshrl.u32 %v2592, 16
      %v2689 = vrot.slane %v2687, 4
      %v2690 = vor.u32 %v2689, %v2685
      %v2691 = vrot.slane %v2690, 4
      %v2693 = vshll.u32 %v2593, 16
      %v2695 = vrot.slane %v2693, 5
      %v2696 = vsel %vm2149, %v2691, %v2695
      %v2697 = vshrl.u32 %v2593, 16
      %v2699 = vrot.slane %v2697, 4
      %v2700 = vor.u32 %v2699, %v2695
      %v2701 = vrot.slane %v2700, 4
      %v2703 = vshll.u32 %v2594, 16
      %v2705 = vrot.slane %v2703, 5
      %v2706 = vsel %vm2149, %v2701, %v2705
      %v2707 = vshrl.u32 %v2594, 16
      %v2709 = vrot.slane %v2707, 4
      %v2710 = vor.u32 %v2709, %v2705
      %v2711 = vrot.slane %v2710, 4
      %v2713 = vshll.u32 %v2595, 16
      %v2715 = vrot.slane %v2713, 5
      %v2716 = vsel %vm2149, %v2711, %v2715
      %v2717 = vshrl.u32 %v2595, 16
      %v2719 = vrot.slane %v2717, 4
      %v2720 = vor.u32 %v2719, %v2715
      %v2721 = vrot.slane %v2720, 4
      %v2723 = vshll.u32 %v2596, 16
      %v2725 = vrot.slane %v2723, 5
      %v2726 = vsel %vm2149, %v2721, %v2725
      %v2727 = vshrl.u32 %v2596, 16
      %v2729 = vrot.slane %v2727, 4
      %v2730 = vor.u32 %v2729, %v2725
      %v2731 = vrot.slane %v2730, 4
      %v2733 = vshll.u32 %v2597, 16
      %v2735 = vrot.slane %v2733, 5
      %v2736 = vsel %vm2149, %v2731, %v2735
      %v2737 = vshrl.u32 %v2597, 16
      %v2739 = vrot.slane %v2737, 4
      %v2740 = vor.u32 %v2739, %v2735
      %v2741 = vrot.slane %v2740, 4
      %v2743 = vshll.u32 %v2598, 16
      %v2745 = vrot.slane %v2743, 5
      %v2746 = vsel %vm2149, %v2741, %v2745
      %v2747 = vshrl.u32 %v2598, 16
      %v2749 = vrot.slane %v2747, 4
      %v2750 = vor.u32 %v2749, %v2745
      %v2751 = vrot.slane %v2750, 4
      %v2753 = vshll.u32 %v2599, 16
      %v2755 = vrot.slane %v2753, 5
      %v2756 = vsel %vm2149, %v2751, %v2755
      %v2757 = vshrl.u32 %v2599, 16
      %v2759 = vrot.slane %v2757, 4
      %v2760 = vor.u32 %v2759, %v2755
      %v2761 = vrot.slane %v2760, 4
      %v2763 = vshll.u32 %v2600, 16
      %v2765 = vrot.slane %v2763, 5
      %v2766 = vsel %vm2149, %v2761, %v2765
      %v2767 = vshrl.u32 %v2600, 16
      %v2769 = vrot.slane %v2767, 4
      %v2770 = vor.u32 %v2769, %v2765
      %v2771 = vrot.slane %v2770, 4
      %v2773 = vshll.u32 %v2601, 16
      %v2775 = vrot.slane %v2773, 5
      %v2776 = vsel %vm2149, %v2771, %v2775
      %v2777 = vshrl.u32 %v2601, 16
      %v2779 = vrot.slane %v2777, 4
      %v2780 = vor.u32 %v2779, %v2775
      %v2781 = vrot.slane %v2780, 4
      %v2783 = vshll.u32 %v2602, 16
      %v2785 = vrot.slane %v2783, 5
      %v2786 = vsel %vm2149, %v2781, %v2785
      %v2787 = vshrl.u32 %v2602, 16
      %v2789 = vrot.slane %v2787, 4
      %v2790 = vor.u32 %v2789, %v2785
      %v2791 = vrot.slane %v2790, 4
      %v2793 = vshll.u32 %v2603, 16
      %v2795 = vrot.slane %v2793, 5
      %v2796 = vsel %vm2149, %v2791, %v2795
      %v2797 = vshrl.u32 %v2603, 16
      %v2799 = vrot.slane %v2797, 4
      %v2800 = vor.u32 %v2799, %v2795
      %v2801 = vrot.slane %v2800, 4
      %v2803 = vshll.u32 %v2604, 16
      %v2805 = vrot.slane %v2803, 5
      %v2806 = vsel %vm2149, %v2801, %v2805
      %v2807 = vshrl.u32 %v2604, 16
      %v2809 = vrot.slane %v2807, 4
      %v2810 = vor.u32 %v2809, %v2805
      %v2811 = vrot.slane %v2810, 4
      %v2813 = vshll.u32 %v2605, 16
      %v2815 = vrot.slane %v2813, 5
      %v2816 = vsel %vm2149, %v2811, %v2815
      %v2817 = vshrl.u32 %v2605, 16
      %v2819 = vrot.slane %v2817, 4
      %v2820 = vor.u32 %v2819, %v2815
      %v2821 = vrot.slane %v2820, 4
      %v2823 = vshll.u32 %v2606, 16
      %v2825 = vrot.slane %v2823, 5
      %v2826 = vsel %vm2149, %v2821, %v2825
      %v2827 = vshrl.u32 %v2606, 16
      %v2829 = vrot.slane %v2827, 4
      %v2830 = vor.u32 %v2829, %v2825
      %v2831 = vrot.slane %v2830, 4
      %v2833 = vshll.u32 %v2607, 16
      %v2835 = vrot.slane %v2833, 5
      %v2836 = vsel %vm2149, %v2831, %v2835
      %v2837 = vshrl.u32 %v2607, 16
      %v2839 = vrot.slane %v2837, 4
      %v2840 = vor.u32 %v2839, %v2835
      %v2841 = vrot.slane %v2840, 4
      %v2843 = vshll.u32 %v2608, 16
      %v2845 = vrot.slane %v2843, 5
      %v2846 = vsel %vm2149, %v2841, %v2845
      %v2847 = vshrl.u32 %v2608, 16
      %v2849 = vrot.slane %v2847, 4
      %v2850 = vor.u32 %v2849, %v2845
      %v2851 = vrot.slane %v2850, 4
      %v2853 = vshll.u32 %v2609, 16
      %v2855 = vrot.slane %v2853, 5
      %v2856 = vsel %vm2149, %v2851, %v2855
      %v2857 = vshrl.u32 %v2609, 16
      %v2859 = vrot.slane %v2857, 4
      %v2860 = vor.u32 %v2859, %v2855
      %v2861 = vrot.slane %v2860, 4
      %v2863 = vshll.u32 %v2610, 16
      %v2865 = vrot.slane %v2863, 5
      %v2866 = vsel %vm2149, %v2861, %v2865
      %v2867 = vshrl.u32 %v2610, 16
      %v2869 = vrot.slane %v2867, 4
      %v2870 = vor.u32 %v2869, %v2865
      %v2871 = vrot.slane %v2870, 4
      %v2873 = vshll.u32 %v2611, 16
      %v2875 = vrot.slane %v2873, 5
      %v2876 = vsel %vm2149, %v2871, %v2875
      %v2877 = vshrl.u32 %v2611, 16
      %v2879 = vrot.slane %v2877, 4
      %v2880 = vor.u32 %v2879, %v2875
      %v2881 = vrot.slane %v2880, 4
      %v2883 = vshll.u32 %v2612, 16
      %v2885 = vrot.slane %v2883, 5
      %v2886 = vsel %vm2149, %v2881, %v2885
      %v2887 = vshrl.u32 %v2612, 16
      %v2889 = vrot.slane %v2887, 4
      %v2890 = vor.u32 %v2889, %v2885
      %v2891 = vrot.slane %v2890, 4
      %v2893 = vshll.u32 %v2613, 16
      %v2895 = vrot.slane %v2893, 5
      %v2896 = vsel %vm2149, %v2891, %v2895
      %v2897 = vshrl.u32 %v2613, 16
      %v2899 = vrot.slane %v2897, 4
      %v2900 = vor.u32 %v2899, %v2895
      %v2901 = vrot.slane %v2900, 4
      %v2903 = vshll.u32 %v2614, 16
      %v2905 = vrot.slane %v2903, 5
      %v2906 = vsel %vm2149, %v2901, %v2905
      %v2907 = vshrl.u32 %v2614, 16
      %v2909 = vrot.slane %v2907, 4
      %v2910 = vor.u32 %v2909, %v2905
      %v2911 = vrot.slane %v2910, 4
      %v2913 = vshll.u32 %v2615, 16
      %v2915 = vrot.slane %v2913, 5
      %v2916 = vsel %vm2149, %v2911, %v2915
      %v2917 = vshrl.u32 %v2615, 16
      %v2919 = vrot.slane %v2917, 4
      %v2920 = vor.u32 %v2919, %v2915
      %v2921 = vrot.slane %v2920, 4
      %v2923 = vshll.u32 %v2616, 16
      %v2925 = vrot.slane %v2923, 5
      %v2926 = vsel %vm2149, %v2921, %v2925
      %v2927 = vshrl.u32 %v2616, 16
      %v2929 = vrot.slane %v2927, 4
      %v2930 = vor.u32 %v2929, %v2925
      %v2931 = vrot.slane %v2930, 4
      %v2933 = vshll.u32 %v2617, 16
      %v2935 = vrot.slane %v2933, 5
      %v2936 = vsel %vm2149, %v2931, %v2935
      %v2937 = vshrl.u32 %v2617, 16
      %v2939 = vrot.slane %v2937, 4
      %v2940 = vor.u32 %v2939, %v2935
      %v2941 = vrot.slane %v2940, 4
      %v2943 = vshll.u32 %v2618, 16
      %v2945 = vrot.slane %v2943, 5
      %v2946 = vsel %vm2149, %v2941, %v2945
      %v2947 = vshrl.u32 %v2618, 16
      %v2949 = vrot.slane %v2947, 4
      %v2950 = vor.u32 %v2949, %v2945
      %v2951 = vrot.slane %v2950, 4
      %v2953 = vshll.u32 %v2619, 16
      %v2955 = vrot.slane %v2953, 5
      %v2956 = vsel %vm2149, %v2951, %v2955
      %v2957 = vshrl.u32 %v2619, 16
      %v2959 = vrot.slane %v2957, 4
      %v2960 = vor.u32 %v2959, %v2955
      %v2961 = vrot.slane %v2960, 4
      %v2963 = vshll.u32 %v2620, 16
      %v2965 = vrot.slane %v2963, 5
      %v2966 = vsel %vm2149, %v2961, %v2965
      %v2967 = vshrl.u32 %v2620, 16
      %v2969 = vrot.slane %v2967, 4
      %v2970 = vor.u32 %v2969, %v2965
      %v2971 = vrot.slane %v2970, 4
      %v2973 = vshll.u32 %v2621, 16
      %v2975 = vrot.slane %v2973, 5
      %v2976 = vsel %vm2149, %v2971, %v2975
      %v2977 = vshrl.u32 %v2621, 16
      %v2979 = vrot.slane %v2977, 4
      %v2980 = vor.u32 %v2979, %v2975
      %v2981 = vrot.slane %v2980, 4
      %v2983 = vshll.u32 %v2622, 16
      %v2985 = vrot.slane %v2983, 5
      %v2986 = vsel %vm2149, %v2981, %v2985
      %3023 = vst [vmem:[#allocation3 + $0x18] sm:$0xf] %v2636
      %3024 = vst [vmem:[#allocation3 + $0x3c] sm:$0xf] %v2646
      %3025 = vst [vmem:[#allocation3 + $0x60] sm:$0xf] %v2656
      %3026 = vst [vmem:[#allocation3 + $0x84] sm:$0xf] %v2666
      %3027 = vst [vmem:[#allocation3 + $0xa8] sm:$0xf] %v2676
      %3028 = vst [vmem:[#allocation3 + $0xcc] sm:$0xf] %v2686
      %3029 = vst [vmem:[#allocation3 + $0xf0] sm:$0xf] %v2696
      %3030 = vst [vmem:[#allocation3 + $0x114] sm:$0xf] %v2706
      %3031 = vst [vmem:[#allocation3 + $0x138] sm:$0xf] %v2716
      %3032 = vst [vmem:[#allocation3 + $0x15c] sm:$0xf] %v2726
      %3033 = vst [vmem:[#allocation3 + $0x180] sm:$0xf] %v2736
      %3034 = vst [vmem:[#allocation3 + $0x1a4] sm:$0xf] %v2746
      %3035 = vst [vmem:[#allocation3 + $0x1c8] sm:$0xf] %v2756
      %3036 = vst [vmem:[#allocation3 + $0x1ec] sm:$0xf] %v2766
      %3037 = vst [vmem:[#allocation3 + $0x210] sm:$0xf] %v2776
      %3038 = vst [vmem:[#allocation3 + $0x234] sm:$0xf] %v2786
      %3039 = vst [vmem:[#allocation3 + $0x258] sm:$0xf] %v2796
      %3040 = vst [vmem:[#allocation3 + $0x27c] sm:$0xf] %v2806
      %3041 = vst [vmem:[#allocation3 + $0x2a0] sm:$0xf] %v2816
      %3042 = vst [vmem:[#allocation3 + $0x2c4] sm:$0xf] %v2826
      %3043 = vst [vmem:[#allocation3 + $0x2e8] sm:$0xf] %v2836
      %3044 = vst [vmem:[#allocation3 + $0x30c] sm:$0xf] %v2846
      %3045 = vst [vmem:[#allocation3 + $0x330] sm:$0xf] %v2856
      %3046 = vst [vmem:[#allocation3 + $0x354] sm:$0xf] %v2866
      %3047 = vst [vmem:[#allocation3 + $0x378] sm:$0xf] %v2876
      %3048 = vst [vmem:[#allocation3 + $0x39c] sm:$0xf] %v2886
      %3049 = vst [vmem:[#allocation3 + $0x3c0] sm:$0xf] %v2896
      %3050 = vst [vmem:[#allocation3 + $0x3e4] sm:$0xf] %v2906
      %3051 = vst [vmem:[#allocation3 + $0x408] sm:$0xf] %v2916
      %3052 = vst [vmem:[#allocation3 + $0x42c] sm:$0xf] %v2926
      %3053 = vst [vmem:[#allocation3 + $0x450] sm:$0xf] %v2936
      %3054 = vst [vmem:[#allocation3 + $0x474] sm:$0xf] %v2946
      %3055 = vst [vmem:[#allocation3 + $0x498] sm:$0xf] %v2956
      %3056 = vst [vmem:[#allocation3 + $0x4bc] sm:$0xf] %v2966
      %3057 = vst [vmem:[#allocation3 + $0x4e0] sm:$0xf] %v2976
      %3058 = vst [vmem:[#allocation3 + $0x504] sm:$0xf] %v2986
      %v3059 = vld [vmem:[#allocation2 + $0x18] sm:$0xe]
      %v3060 = vld [vmem:[#allocation2 + $0x1c] sm:$0xf]
      %v3061 = vld [vmem:[#allocation2 + $0x20] sm:$0xf]
      %v3062 = vld [vmem:[#allocation2 + $0x24] sm:$0xf]
      %v3063 = vld [vmem:[#allocation2 + $0x28] sm:$0xf]
      %v3064 = vld [vmem:[#allocation2 + $0x2c] sm:$0xf]
      %v3065 = vld [vmem:[#allocation2 + $0x30] sm:$0xf]
      %v3066 = vld [vmem:[#allocation2 + $0x34] sm:$0xf]
      %v3067 = vld [vmem:[#allocation2 + $0x38] sm:$0xf]
      %v3068 = vld [vmem:[#allocation2 + $0x3c] sm:$0xf]
      %v3069 = vld [vmem:[#allocation2 + $0x40] sm:$0xf]
      %v3070 = vld [vmem:[#allocation2 + $0x44] sm:$0xf]
      %v3071 = vld [vmem:[#allocation2 + $0x48] sm:$0xf]
      %v3072 = vld [vmem:[#allocation2 + $0x4c] sm:$0xf]
      %v3073 = vld [vmem:[#allocation2 + $0x50] sm:$0xf]
      %v3074 = vld [vmem:[#allocation2 + $0x54] sm:$0xf]
      %v3075 = vld [vmem:[#allocation2 + $0x58] sm:$0xf]
      %v3076 = vld [vmem:[#allocation2 + $0x5c] sm:$0xf]
      %v3077 = vld [vmem:[#allocation2 + $0x60] sm:$0xf]
      %v3078 = vld [vmem:[#allocation2 + $0x64] sm:$0xf]
      %v3079 = vld [vmem:[#allocation2 + $0x68] sm:$0xf]
      %v3080 = vld [vmem:[#allocation2 + $0x6c] sm:$0xf]
      %v3081 = vld [vmem:[#allocation2 + $0x70] sm:$0xf]
      %v3082 = vld [vmem:[#allocation2 + $0x74] sm:$0xf]
      %v3083 = vld [vmem:[#allocation2 + $0x78] sm:$0xf]
      %v3084 = vld [vmem:[#allocation2 + $0x7c] sm:$0xf]
      %v3085 = vld [vmem:[#allocation2 + $0x80] sm:$0xf]
      %v3086 = vld [vmem:[#allocation2 + $0x84] sm:$0xf]
      %v3087 = vld [vmem:[#allocation2 + $0x88] sm:$0xf]
      %v3088 = vld [vmem:[#allocation2 + $0x8c] sm:$0xf]
      %v3089 = vld [vmem:[#allocation2 + $0x90] sm:$0xf]
      %v3090 = vld [vmem:[#allocation2 + $0x94] sm:$0xf]
      %v3091 = vld [vmem:[#allocation2 + $0x98] sm:$0xf]
      %v3092 = vld [vmem:[#allocation2 + $0x9c] sm:$0xf]
      %v3093 = vld [vmem:[#allocation2 + $0xa0] sm:$0xf]
      %v3094 = vld [vmem:[#allocation2 + $0xa4] sm:$0xf]
      %v3095 = vld [vmem:[#allocation2 + $0xa8] sm:$0x1]
      %vm3133 = vcmask 1042432
      %vm3134 = vcmask 1046532
      %vm3135 = vmor %vm3133, %vm3134
      %v3136 = vrot.slane %v3059, 5
      %v3137 = vrot.slane %v3136, 4
      %v3138 = vrot.slane %v3060, 5
      %v3139 = vsel %vm3135, %v3137, %v3138
      %v3140 = vrot.slane %v3138, 4
      %v3141 = vrot.slane %v3061, 5
      %v3142 = vsel %vm3135, %v3140, %v3141
      %v3143 = vrot.slane %v3141, 4
      %v3144 = vrot.slane %v3062, 5
      %v3145 = vsel %vm3135, %v3143, %v3144
      %v3146 = vrot.slane %v3144, 4
      %v3147 = vrot.slane %v3063, 5
      %v3148 = vsel %vm3135, %v3146, %v3147
      %v3149 = vrot.slane %v3147, 4
      %v3150 = vrot.slane %v3064, 5
      %v3151 = vsel %vm3135, %v3149, %v3150
      %v3152 = vrot.slane %v3150, 4
      %v3153 = vrot.slane %v3065, 5
      %v3154 = vsel %vm3135, %v3152, %v3153
      %v3155 = vrot.slane %v3153, 4
      %v3156 = vrot.slane %v3066, 5
      %v3157 = vsel %vm3135, %v3155, %v3156
      %v3158 = vrot.slane %v3156, 4
      %v3159 = vrot.slane %v3067, 5
      %v3160 = vsel %vm3135, %v3158, %v3159
      %v3161 = vrot.slane %v3159, 4
      %v3162 = vrot.slane %v3068, 5
      %v3163 = vsel %vm3135, %v3161, %v3162
      %v3164 = vrot.slane %v3162, 4
      %v3165 = vrot.slane %v3069, 5
      %v3166 = vsel %vm3135, %v3164, %v3165
      %v3167 = vrot.slane %v3165, 4
      %v3168 = vrot.slane %v3070, 5
      %v3169 = vsel %vm3135, %v3167, %v3168
      %v3170 = vrot.slane %v3168, 4
      %v3171 = vrot.slane %v3071, 5
      %v3172 = vsel %vm3135, %v3170, %v3171
      %v3173 = vrot.slane %v3171, 4
      %v3174 = vrot.slane %v3072, 5
      %v3175 = vsel %vm3135, %v3173, %v3174
      %v3176 = vrot.slane %v3174, 4
      %v3177 = vrot.slane %v3073, 5
      %v3178 = vsel %vm3135, %v3176, %v3177
      %v3179 = vrot.slane %v3177, 4
      %v3180 = vrot.slane %v3074, 5
      %v3181 = vsel %vm3135, %v3179, %v3180
      %v3182 = vrot.slane %v3180, 4
      %v3183 = vrot.slane %v3075, 5
      %v3184 = vsel %vm3135, %v3182, %v3183
      %v3185 = vrot.slane %v3183, 4
      %v3186 = vrot.slane %v3076, 5
      %v3187 = vsel %vm3135, %v3185, %v3186
      %v3188 = vrot.slane %v3186, 4
      %v3189 = vrot.slane %v3077, 5
      %v3190 = vsel %vm3135, %v3188, %v3189
      %v3191 = vrot.slane %v3189, 4
      %v3192 = vrot.slane %v3078, 5
      %v3193 = vsel %vm3135, %v3191, %v3192
      %v3194 = vrot.slane %v3192, 4
      %v3195 = vrot.slane %v3079, 5
      %v3196 = vsel %vm3135, %v3194, %v3195
      %v3197 = vrot.slane %v3195, 4
      %v3198 = vrot.slane %v3080, 5
      %v3199 = vsel %vm3135, %v3197, %v3198
      %v3200 = vrot.slane %v3198, 4
      %v3201 = vrot.slane %v3081, 5
      %v3202 = vsel %vm3135, %v3200, %v3201
      %v3203 = vrot.slane %v3201, 4
      %v3204 = vrot.slane %v3082, 5
      %v3205 = vsel %vm3135, %v3203, %v3204
      %v3206 = vrot.slane %v3204, 4
      %v3207 = vrot.slane %v3083, 5
      %v3208 = vsel %vm3135, %v3206, %v3207
      %v3209 = vrot.slane %v3207, 4
      %v3210 = vrot.slane %v3084, 5
      %v3211 = vsel %vm3135, %v3209, %v3210
      %v3212 = vrot.slane %v3210, 4
      %v3213 = vrot.slane %v3085, 5
      %v3214 = vsel %vm3135, %v3212, %v3213
      %v3215 = vrot.slane %v3213, 4
      %v3216 = vrot.slane %v3086, 5
      %v3217 = vsel %vm3135, %v3215, %v3216
      %v3218 = vrot.slane %v3216, 4
      %v3219 = vrot.slane %v3087, 5
      %v3220 = vsel %vm3135, %v3218, %v3219
      %v3221 = vrot.slane %v3219, 4
      %v3222 = vrot.slane %v3088, 5
      %v3223 = vsel %vm3135, %v3221, %v3222
      %v3224 = vrot.slane %v3222, 4
      %v3225 = vrot.slane %v3089, 5
      %v3226 = vsel %vm3135, %v3224, %v3225
      %v3227 = vrot.slane %v3225, 4
      %v3228 = vrot.slane %v3090, 5
      %v3229 = vsel %vm3135, %v3227, %v3228
      %v3230 = vrot.slane %v3228, 4
      %v3231 = vrot.slane %v3091, 5
      %v3232 = vsel %vm3135, %v3230, %v3231
      %v3233 = vrot.slane %v3231, 4
      %v3234 = vrot.slane %v3092, 5
      %v3235 = vsel %vm3135, %v3233, %v3234
      %v3236 = vrot.slane %v3234, 4
      %v3237 = vrot.slane %v3093, 5
      %v3238 = vsel %vm3135, %v3236, %v3237
      %v3239 = vrot.slane %v3237, 4
      %v3240 = vrot.slane %v3094, 5
      %v3241 = vsel %vm3135, %v3239, %v3240
      %v3242 = vrot.slane %v3240, 4
      %v3243 = vrot.slane %v3095, 5
      %v3244 = vsel %vm3135, %v3242, %v3243
      %3281 = vst [vmem:[#allocation3 + $0x1c] sm:$0xf] %v3139
      %3282 = vst [vmem:[#allocation3 + $0x40] sm:$0xf] %v3142
      %3283 = vst [vmem:[#allocation3 + $0x64] sm:$0xf] %v3145
      %3284 = vst [vmem:[#allocation3 + $0x88] sm:$0xf] %v3148
      %3285 = vst [vmem:[#allocation3 + $0xac] sm:$0xf] %v3151
      %3286 = vst [vmem:[#allocation3 + $0xd0] sm:$0xf] %v3154
      %3287 = vst [vmem:[#allocation3 + $0xf4] sm:$0xf] %v3157
      %3288 = vst [vmem:[#allocation3 + $0x118] sm:$0xf] %v3160
      %3289 = vst [vmem:[#allocation3 + $0x13c] sm:$0xf] %v3163
      %3290 = vst [vmem:[#allocation3 + $0x160] sm:$0xf] %v3166
      %3291 = vst [vmem:[#allocation3 + $0x184] sm:$0xf] %v3169
      %3292 = vst [vmem:[#allocation3 + $0x1a8] sm:$0xf] %v3172
      %3293 = vst [vmem:[#allocation3 + $0x1cc] sm:$0xf] %v3175
      %3294 = vst [vmem:[#allocation3 + $0x1f0] sm:$0xf] %v3178
      %3295 = vst [vmem:[#allocation3 + $0x214] sm:$0xf] %v3181
      %3296 = vst [vmem:[#allocation3 + $0x238] sm:$0xf] %v3184
      %3297 = vst [vmem:[#allocation3 + $0x25c] sm:$0xf] %v3187
      %3298 = vst [vmem:[#allocation3 + $0x280] sm:$0xf] %v3190
      %3299 = vst [vmem:[#allocation3 + $0x2a4] sm:$0xf] %v3193
      %3300 = vst [vmem:[#allocation3 + $0x2c8] sm:$0xf] %v3196
      %3301 = vst [vmem:[#allocation3 + $0x2ec] sm:$0xf] %v3199
      %3302 = vst [vmem:[#allocation3 + $0x310] sm:$0xf] %v3202
      %3303 = vst [vmem:[#allocation3 + $0x334] sm:$0xf] %v3205
      %3304 = vst [vmem:[#allocation3 + $0x358] sm:$0xf] %v3208
      %3305 = vst [vmem:[#allocation3 + $0x37c] sm:$0xf] %v3211
      %3306 = vst [vmem:[#allocation3 + $0x3a0] sm:$0xf] %v3214
      %3307 = vst [vmem:[#allocation3 + $0x3c4] sm:$0xf] %v3217
      %3308 = vst [vmem:[#allocation3 + $0x3e8] sm:$0xf] %v3220
      %3309 = vst [vmem:[#allocation3 + $0x40c] sm:$0xf] %v3223
      %3310 = vst [vmem:[#allocation3 + $0x430] sm:$0xf] %v3226
      %3311 = vst [vmem:[#allocation3 + $0x454] sm:$0xf] %v3229
      %3312 = vst [vmem:[#allocation3 + $0x478] sm:$0xf] %v3232
      %3313 = vst [vmem:[#allocation3 + $0x49c] sm:$0xf] %v3235
      %3314 = vst [vmem:[#allocation3 + $0x4c0] sm:$0xf] %v3238
      %3315 = vst [vmem:[#allocation3 + $0x4e4] sm:$0xf] %v3241
      %3316 = vst [vmem:[#allocation3 + $0x508] sm:$0xf] %v3244
      %v3317 = vld [vmem:[#allocation2 + $0x18] sm:$0xe]
      %v3318 = vld [vmem:[#allocation2 + $0x1c] sm:$0xf]
      %v3319 = vld [vmem:[#allocation2 + $0x20] sm:$0xf]
      %v3320 = vld [vmem:[#allocation2 + $0x24] sm:$0xf]
      %v3321 = vld [vmem:[#allocation2 + $0x28] sm:$0xf]
      %v3322 = vld [vmem:[#allocation2 + $0x2c] sm:$0xf]
      %v3323 = vld [vmem:[#allocation2 + $0x30] sm:$0xf]
      %v3324 = vld [vmem:[#allocation2 + $0x34] sm:$0xf]
      %v3325 = vld [vmem:[#allocation2 + $0x38] sm:$0xf]
      %v3326 = vld [vmem:[#allocation2 + $0x3c] sm:$0xf]
      %v3327 = vld [vmem:[#allocation2 + $0x40] sm:$0xf]
      %v3328 = vld [vmem:[#allocation2 + $0x44] sm:$0xf]
      %v3329 = vld [vmem:[#allocation2 + $0x48] sm:$0xf]
      %v3330 = vld [vmem:[#allocation2 + $0x4c] sm:$0xf]
      %v3331 = vld [vmem:[#allocation2 + $0x50] sm:$0xf]
      %v3332 = vld [vmem:[#allocation2 + $0x54] sm:$0xf]
      %v3333 = vld [vmem:[#allocation2 + $0x58] sm:$0xf]
      %v3334 = vld [vmem:[#allocation2 + $0x5c] sm:$0xf]
      %v3335 = vld [vmem:[#allocation2 + $0x60] sm:$0xf]
      %v3336 = vld [vmem:[#allocation2 + $0x64] sm:$0xf]
      %v3337 = vld [vmem:[#allocation2 + $0x68] sm:$0xf]
      %v3338 = vld [vmem:[#allocation2 + $0x6c] sm:$0xf]
      %v3339 = vld [vmem:[#allocation2 + $0x70] sm:$0xf]
      %v3340 = vld [vmem:[#allocation2 + $0x74] sm:$0xf]
      %v3341 = vld [vmem:[#allocation2 + $0x78] sm:$0xf]
      %v3342 = vld [vmem:[#allocation2 + $0x7c] sm:$0xf]
      %v3343 = vld [vmem:[#allocation2 + $0x80] sm:$0xf]
      %v3344 = vld [vmem:[#allocation2 + $0x84] sm:$0xf]
      %v3345 = vld [vmem:[#allocation2 + $0x88] sm:$0xf]
      %v3346 = vld [vmem:[#allocation2 + $0x8c] sm:$0xf]
      %v3347 = vld [vmem:[#allocation2 + $0x90] sm:$0xf]
      %v3348 = vld [vmem:[#allocation2 + $0x94] sm:$0xf]
      %v3349 = vld [vmem:[#allocation2 + $0x98] sm:$0xf]
      %v3350 = vld [vmem:[#allocation2 + $0x9c] sm:$0xf]
      %v3351 = vld [vmem:[#allocation2 + $0xa0] sm:$0xf]
      %v3352 = vld [vmem:[#allocation2 + $0xa4] sm:$0xf]
      %v3353 = vld [vmem:[#allocation2 + $0xa8] sm:$0x3]
      %vm3354 = vsmask.f32 2304
      %vm3355 = vsmask.f32 6416
      %vm3356 = vmor %vm3354, %vm3355
      %v3358 = vshrl.u32 %v3317, 16
      %v3360 = vrot.slane %v3358, 5
      %v3361 = vshll.u32 %v3317, 16
      %v3363 = vrot.slane %v3361, 6
      %v3364 = vor.u32 %v3360, %v3363
      %v3365 = vrot.slane %v3364, 4
      %v3367 = vshrl.u32 %v3318, 16
      %v3369 = vrot.slane %v3367, 5
      %v3370 = vshll.u32 %v3318, 16
      %v3372 = vrot.slane %v3370, 6
      %v3373 = vor.u32 %v3369, %v3372
      %v3374 = vsel %vm3356, %v3365, %v3373
      %v3375 = vrot.slane %v3373, 4
      %v3377 = vshrl.u32 %v3319, 16
      %v3379 = vrot.slane %v3377, 5
      %v3380 = vshll.u32 %v3319, 16
      %v3382 = vrot.slane %v3380, 6
      %v3383 = vor.u32 %v3379, %v3382
      %v3384 = vsel %vm3356, %v3375, %v3383
      %v3385 = vrot.slane %v3383, 4
      %v3387 = vshrl.u32 %v3320, 16
      %v3389 = vrot.slane %v3387, 5
      %v3390 = vshll.u32 %v3320, 16
      %v3392 = vrot.slane %v3390, 6
      %v3393 = vor.u32 %v3389, %v3392
      %v3394 = vsel %vm3356, %v3385, %v3393
      %v3395 = vrot.slane %v3393, 4
      %v3397 = vshrl.u32 %v3321, 16
      %v3399 = vrot.slane %v3397, 5
      %v3400 = vshll.u32 %v3321, 16
      %v3402 = vrot.slane %v3400, 6
      %v3403 = vor.u32 %v3399, %v3402
      %v3404 = vsel %vm3356, %v3395, %v3403
      %v3405 = vrot.slane %v3403, 4
      %v3407 = vshrl.u32 %v3322, 16
      %v3409 = vrot.slane %v3407, 5
      %v3410 = vshll.u32 %v3322, 16
      %v3412 = vrot.slane %v3410, 6
      %v3413 = vor.u32 %v3409, %v3412
      %v3414 = vsel %vm3356, %v3405, %v3413
      %v3415 = vrot.slane %v3413, 4
      %v3417 = vshrl.u32 %v3323, 16
      %v3419 = vrot.slane %v3417, 5
      %v3420 = vshll.u32 %v3323, 16
      %v3422 = vrot.slane %v3420, 6
      %v3423 = vor.u32 %v3419, %v3422
      %v3424 = vsel %vm3356, %v3415, %v3423
      %v3425 = vrot.slane %v3423, 4
      %v3427 = vshrl.u32 %v3324, 16
      %v3429 = vrot.slane %v3427, 5
      %v3430 = vshll.u32 %v3324, 16
      %v3432 = vrot.slane %v3430, 6
      %v3433 = vor.u32 %v3429, %v3432
      %v3434 = vsel %vm3356, %v3425, %v3433
      %v3435 = vrot.slane %v3433, 4
      %v3437 = vshrl.u32 %v3325, 16
      %v3439 = vrot.slane %v3437, 5
      %v3440 = vshll.u32 %v3325, 16
      %v3442 = vrot.slane %v3440, 6
      %v3443 = vor.u32 %v3439, %v3442
      %v3444 = vsel %vm3356, %v3435, %v3443
      %v3445 = vrot.slane %v3443, 4
      %v3447 = vshrl.u32 %v3326, 16
      %v3449 = vrot.slane %v3447, 5
      %v3450 = vshll.u32 %v3326, 16
      %v3452 = vrot.slane %v3450, 6
      %v3453 = vor.u32 %v3449, %v3452
      %v3454 = vsel %vm3356, %v3445, %v3453
      %v3455 = vrot.slane %v3453, 4
      %v3457 = vshrl.u32 %v3327, 16
      %v3459 = vrot.slane %v3457, 5
      %v3460 = vshll.u32 %v3327, 16
      %v3462 = vrot.slane %v3460, 6
      %v3463 = vor.u32 %v3459, %v3462
      %v3464 = vsel %vm3356, %v3455, %v3463
      %v3465 = vrot.slane %v3463, 4
      %v3467 = vshrl.u32 %v3328, 16
      %v3469 = vrot.slane %v3467, 5
      %v3470 = vshll.u32 %v3328, 16
      %v3472 = vrot.slane %v3470, 6
      %v3473 = vor.u32 %v3469, %v3472
      %v3474 = vsel %vm3356, %v3465, %v3473
      %v3475 = vrot.slane %v3473, 4
      %v3477 = vshrl.u32 %v3329, 16
      %v3479 = vrot.slane %v3477, 5
      %v3480 = vshll.u32 %v3329, 16
      %v3482 = vrot.slane %v3480, 6
      %v3483 = vor.u32 %v3479, %v3482
      %v3484 = vsel %vm3356, %v3475, %v3483
      %v3485 = vrot.slane %v3483, 4
      %v3487 = vshrl.u32 %v3330, 16
      %v3489 = vrot.slane %v3487, 5
      %v3490 = vshll.u32 %v3330, 16
      %v3492 = vrot.slane %v3490, 6
      %v3493 = vor.u32 %v3489, %v3492
      %v3494 = vsel %vm3356, %v3485, %v3493
      %v3495 = vrot.slane %v3493, 4
      %v3497 = vshrl.u32 %v3331, 16
      %v3499 = vrot.slane %v3497, 5
      %v3500 = vshll.u32 %v3331, 16
      %v3502 = vrot.slane %v3500, 6
      %v3503 = vor.u32 %v3499, %v3502
      %v3504 = vsel %vm3356, %v3495, %v3503
      %v3505 = vrot.slane %v3503, 4
      %v3507 = vshrl.u32 %v3332, 16
      %v3509 = vrot.slane %v3507, 5
      %v3510 = vshll.u32 %v3332, 16
      %v3512 = vrot.slane %v3510, 6
      %v3513 = vor.u32 %v3509, %v3512
      %v3514 = vsel %vm3356, %v3505, %v3513
      %v3515 = vrot.slane %v3513, 4
      %v3517 = vshrl.u32 %v3333, 16
      %v3519 = vrot.slane %v3517, 5
      %v3520 = vshll.u32 %v3333, 16
      %v3522 = vrot.slane %v3520, 6
      %v3523 = vor.u32 %v3519, %v3522
      %v3524 = vsel %vm3356, %v3515, %v3523
      %v3525 = vrot.slane %v3523, 4
      %v3527 = vshrl.u32 %v3334, 16
      %v3529 = vrot.slane %v3527, 5
      %v3530 = vshll.u32 %v3334, 16
      %v3532 = vrot.slane %v3530, 6
      %v3533 = vor.u32 %v3529, %v3532
      %v3534 = vsel %vm3356, %v3525, %v3533
      %v3535 = vrot.slane %v3533, 4
      %v3537 = vshrl.u32 %v3335, 16
      %v3539 = vrot.slane %v3537, 5
      %v3540 = vshll.u32 %v3335, 16
      %v3542 = vrot.slane %v3540, 6
      %v3543 = vor.u32 %v3539, %v3542
      %v3544 = vsel %vm3356, %v3535, %v3543
      %v3545 = vrot.slane %v3543, 4
      %v3547 = vshrl.u32 %v3336, 16
      %v3549 = vrot.slane %v3547, 5
      %v3550 = vshll.u32 %v3336, 16
      %v3552 = vrot.slane %v3550, 6
      %v3553 = vor.u32 %v3549, %v3552
      %v3554 = vsel %vm3356, %v3545, %v3553
      %v3555 = vrot.slane %v3553, 4
      %v3557 = vshrl.u32 %v3337, 16
      %v3559 = vrot.slane %v3557, 5
      %v3560 = vshll.u32 %v3337, 16
      %v3562 = vrot.slane %v3560, 6
      %v3563 = vor.u32 %v3559, %v3562
      %v3564 = vsel %vm3356, %v3555, %v3563
      %v3565 = vrot.slane %v3563, 4
      %v3567 = vshrl.u32 %v3338, 16
      %v3569 = vrot.slane %v3567, 5
      %v3570 = vshll.u32 %v3338, 16
      %v3572 = vrot.slane %v3570, 6
      %v3573 = vor.u32 %v3569, %v3572
      %v3574 = vsel %vm3356, %v3565, %v3573
      %v3575 = vrot.slane %v3573, 4
      %v3577 = vshrl.u32 %v3339, 16
      %v3579 = vrot.slane %v3577, 5
      %v3580 = vshll.u32 %v3339, 16
      %v3582 = vrot.slane %v3580, 6
      %v3583 = vor.u32 %v3579, %v3582
      %v3584 = vsel %vm3356, %v3575, %v3583
      %v3585 = vrot.slane %v3583, 4
      %v3587 = vshrl.u32 %v3340, 16
      %v3589 = vrot.slane %v3587, 5
      %v3590 = vshll.u32 %v3340, 16
      %v3592 = vrot.slane %v3590, 6
      %v3593 = vor.u32 %v3589, %v3592
      %v3594 = vsel %vm3356, %v3585, %v3593
      %v3595 = vrot.slane %v3593, 4
      %v3597 = vshrl.u32 %v3341, 16
      %v3599 = vrot.slane %v3597, 5
      %v3600 = vshll.u32 %v3341, 16
      %v3602 = vrot.slane %v3600, 6
      %v3603 = vor.u32 %v3599, %v3602
      %v3604 = vsel %vm3356, %v3595, %v3603
      %v3605 = vrot.slane %v3603, 4
      %v3607 = vshrl.u32 %v3342, 16
      %v3609 = vrot.slane %v3607, 5
      %v3610 = vshll.u32 %v3342, 16
      %v3612 = vrot.slane %v3610, 6
      %v3613 = vor.u32 %v3609, %v3612
      %v3614 = vsel %vm3356, %v3605, %v3613
      %v3615 = vrot.slane %v3613, 4
      %v3617 = vshrl.u32 %v3343, 16
      %v3619 = vrot.slane %v3617, 5
      %v3620 = vshll.u32 %v3343, 16
      %v3622 = vrot.slane %v3620, 6
      %v3623 = vor.u32 %v3619, %v3622
      %v3624 = vsel %vm3356, %v3615, %v3623
      %v3625 = vrot.slane %v3623, 4
      %v3627 = vshrl.u32 %v3344, 16
      %v3629 = vrot.slane %v3627, 5
      %v3630 = vshll.u32 %v3344, 16
      %v3632 = vrot.slane %v3630, 6
      %v3633 = vor.u32 %v3629, %v3632
      %v3634 = vsel %vm3356, %v3625, %v3633
      %v3635 = vrot.slane %v3633, 4
      %v3637 = vshrl.u32 %v3345, 16
      %v3639 = vrot.slane %v3637, 5
      %v3640 = vshll.u32 %v3345, 16
      %v3642 = vrot.slane %v3640, 6
      %v3643 = vor.u32 %v3639, %v3642
      %v3644 = vsel %vm3356, %v3635, %v3643
      %v3645 = vrot.slane %v3643, 4
      %v3647 = vshrl.u32 %v3346, 16
      %v3649 = vrot.slane %v3647, 5
      %v3650 = vshll.u32 %v3346, 16
      %v3652 = vrot.slane %v3650, 6
      %v3653 = vor.u32 %v3649, %v3652
      %v3654 = vsel %vm3356, %v3645, %v3653
      %v3655 = vrot.slane %v3653, 4
      %v3657 = vshrl.u32 %v3347, 16
      %v3659 = vrot.slane %v3657, 5
      %v3660 = vshll.u32 %v3347, 16
      %v3662 = vrot.slane %v3660, 6
      %v3663 = vor.u32 %v3659, %v3662
      %v3664 = vsel %vm3356, %v3655, %v3663
      %v3665 = vrot.slane %v3663, 4
      %v3667 = vshrl.u32 %v3348, 16
      %v3669 = vrot.slane %v3667, 5
      %v3670 = vshll.u32 %v3348, 16
      %v3672 = vrot.slane %v3670, 6
      %v3673 = vor.u32 %v3669, %v3672
      %v3674 = vsel %vm3356, %v3665, %v3673
      %v3675 = vrot.slane %v3673, 4
      %v3677 = vshrl.u32 %v3349, 16
      %v3679 = vrot.slane %v3677, 5
      %v3680 = vshll.u32 %v3349, 16
      %v3682 = vrot.slane %v3680, 6
      %v3683 = vor.u32 %v3679, %v3682
      %v3684 = vsel %vm3356, %v3675, %v3683
      %v3685 = vrot.slane %v3683, 4
      %v3687 = vshrl.u32 %v3350, 16
      %v3689 = vrot.slane %v3687, 5
      %v3690 = vshll.u32 %v3350, 16
      %v3692 = vrot.slane %v3690, 6
      %v3693 = vor.u32 %v3689, %v3692
      %v3694 = vsel %vm3356, %v3685, %v3693
      %v3695 = vrot.slane %v3693, 4
      %v3697 = vshrl.u32 %v3351, 16
      %v3699 = vrot.slane %v3697, 5
      %v3700 = vshll.u32 %v3351, 16
      %v3702 = vrot.slane %v3700, 6
      %v3703 = vor.u32 %v3699, %v3702
      %v3704 = vsel %vm3356, %v3695, %v3703
      %v3705 = vrot.slane %v3703, 4
      %v3707 = vshrl.u32 %v3352, 16
      %v3709 = vrot.slane %v3707, 5
      %v3710 = vshll.u32 %v3352, 16
      %v3712 = vrot.slane %v3710, 6
      %v3713 = vor.u32 %v3709, %v3712
      %v3714 = vsel %vm3356, %v3705, %v3713
      %v3715 = vrot.slane %v3713, 4
      %v3717 = vshrl.u32 %v3353, 16
      %v3719 = vrot.slane %v3717, 5
      %v3720 = vshll.u32 %v3353, 16
      %v3722 = vrot.slane %v3720, 6
      %v3723 = vor.u32 %v3719, %v3722
      %v3724 = vsel %vm3356, %v3715, %v3723
      %3761 = vst [vmem:[#allocation3 + $0x20] sm:$0xf] %v3374
      %3762 = vst [vmem:[#allocation3 + $0x44] sm:$0xf] %v3384
      %3763 = vst [vmem:[#allocation3 + $0x68] sm:$0xf] %v3394
      %3764 = vst [vmem:[#allocation3 + $0x8c] sm:$0xf] %v3404
      %3765 = vst [vmem:[#allocation3 + $0xb0] sm:$0xf] %v3414
      %3766 = vst [vmem:[#allocation3 + $0xd4] sm:$0xf] %v3424
      %3767 = vst [vmem:[#allocation3 + $0xf8] sm:$0xf] %v3434
      %3768 = vst [vmem:[#allocation3 + $0x11c] sm:$0xf] %v3444
      %3769 = vst [vmem:[#allocation3 + $0x140] sm:$0xf] %v3454
      %3770 = vst [vmem:[#allocation3 + $0x164] sm:$0xf] %v3464
      %3771 = vst [vmem:[#allocation3 + $0x188] sm:$0xf] %v3474
      %3772 = vst [vmem:[#allocation3 + $0x1ac] sm:$0xf] %v3484
      %3773 = vst [vmem:[#allocation3 + $0x1d0] sm:$0xf] %v3494
      %3774 = vst [vmem:[#allocation3 + $0x1f4] sm:$0xf] %v3504
      %3775 = vst [vmem:[#allocation3 + $0x218] sm:$0xf] %v3514
      %3776 = vst [vmem:[#allocation3 + $0x23c] sm:$0xf] %v3524
      %3777 = vst [vmem:[#allocation3 + $0x260] sm:$0xf] %v3534
      %3778 = vst [vmem:[#allocation3 + $0x284] sm:$0xf] %v3544
      %3779 = vst [vmem:[#allocation3 + $0x2a8] sm:$0xf] %v3554
      %3780 = vst [vmem:[#allocation3 + $0x2cc] sm:$0xf] %v3564
      %3781 = vst [vmem:[#allocation3 + $0x2f0] sm:$0xf] %v3574
      %3782 = vst [vmem:[#allocation3 + $0x314] sm:$0xf] %v3584
      %3783 = vst [vmem:[#allocation3 + $0x338] sm:$0xf] %v3594
      %3784 = vst [vmem:[#allocation3 + $0x35c] sm:$0xf] %v3604
      %3785 = vst [vmem:[#allocation3 + $0x380] sm:$0xf] %v3614
      %3786 = vst [vmem:[#allocation3 + $0x3a4] sm:$0xf] %v3624
      %3787 = vst [vmem:[#allocation3 + $0x3c8] sm:$0xf] %v3634
      %3788 = vst [vmem:[#allocation3 + $0x3ec] sm:$0xf] %v3644
      %3789 = vst [vmem:[#allocation3 + $0x410] sm:$0xf] %v3654
      %3790 = vst [vmem:[#allocation3 + $0x434] sm:$0xf] %v3664
      %3791 = vst [vmem:[#allocation3 + $0x458] sm:$0xf] %v3674
      %3792 = vst [vmem:[#allocation3 + $0x47c] sm:$0xf] %v3684
      %3793 = vst [vmem:[#allocation3 + $0x4a0] sm:$0xf] %v3694
      %3794 = vst [vmem:[#allocation3 + $0x4c4] sm:$0xf] %v3704
      %3795 = vst [vmem:[#allocation3 + $0x4e8] sm:$0xf] %v3714
      %3796 = vst [vmem:[#allocation3 + $0x50c] sm:$0xf] %v3724
      %v3797 = vld [vmem:[#allocation3] sm:$0xff]
      %v3798 = vld [vmem:[#allocation3 + $0x8] sm:$0xff]
      %v3799 = vld [vmem:[#allocation3 + $0x10] sm:$0xff]
      %v3800 = vld [vmem:[#allocation3 + $0x18] sm:$0xff]
      %v3801 = vld [vmem:[#allocation3 + $0x20] sm:$0xf]
      %v3802 = vld [vmem:[#allocation3 + $0x24] sm:$0xff]
      %v3803 = vld [vmem:[#allocation3 + $0x2c] sm:$0xff]
      %v3804 = vld [vmem:[#allocation3 + $0x34] sm:$0xff]
      %v3805 = vld [vmem:[#allocation3 + $0x3c] sm:$0xff]
      %v3806 = vld [vmem:[#allocation3 + $0x44] sm:$0xf]
      %v3807 = vld [vmem:[#allocation3 + $0x48] sm:$0xff]
      %v3808 = vld [vmem:[#allocation3 + $0x50] sm:$0xff]
      %v3809 = vld [vmem:[#allocation3 + $0x58] sm:$0xff]
      %v3810 = vld [vmem:[#allocation3 + $0x60] sm:$0xff]
      %v3811 = vld [vmem:[#allocation3 + $0x68] sm:$0xf]
      %v3812 = vld [vmem:[#allocation3 + $0x6c] sm:$0xff]
      %v3813 = vld [vmem:[#allocation3 + $0x74] sm:$0xff]
      %v3814 = vld [vmem:[#allocation3 + $0x7c] sm:$0xff]
      %v3815 = vld [vmem:[#allocation3 + $0x84] sm:$0xff]
      %v3816 = vld [vmem:[#allocation3 + $0x8c] sm:$0xf]
      %v3817 = vld [vmem:[#allocation3 + $0x90] sm:$0xff]
      %v3818 = vld [vmem:[#allocation3 + $0x98] sm:$0xff]
      %v3819 = vld [vmem:[#allocation3 + $0xa0] sm:$0xff]
      %v3820 = vld [vmem:[#allocation3 + $0xa8] sm:$0xff]
      %v3821 = vld [vmem:[#allocation3 + $0xb0] sm:$0xf]
      %v3822 = vld [vmem:[#allocation3 + $0xb4] sm:$0xff]
      %v3823 = vld [vmem:[#allocation3 + $0xbc] sm:$0xff]
      %v3824 = vld [vmem:[#allocation3 + $0xc4] sm:$0xff]
      %v3825 = vld [vmem:[#allocation3 + $0xcc] sm:$0xff]
      %v3826 = vld [vmem:[#allocation3 + $0xd4] sm:$0xf]
      %v3827 = vld [vmem:[#allocation3 + $0xd8] sm:$0xff]
      %v3828 = vld [vmem:[#allocation3 + $0xe0] sm:$0xff]
      %v3829 = vld [vmem:[#allocation3 + $0xe8] sm:$0xff]
      %v3830 = vld [vmem:[#allocation3 + $0xf0] sm:$0xff]
      %v3831 = vld [vmem:[#allocation3 + $0xf8] sm:$0xf]
      %v3832 = vld [vmem:[#allocation3 + $0xfc] sm:$0xff]
      %v3833 = vld [vmem:[#allocation3 + $0x104] sm:$0xff]
      %v3834 = vld [vmem:[#allocation3 + $0x10c] sm:$0xff]
      %v3835 = vld [vmem:[#allocation3 + $0x114] sm:$0xff]
      %v3836 = vld [vmem:[#allocation3 + $0x11c] sm:$0xf]
      %v3837 = vld [vmem:[#allocation3 + $0x120] sm:$0xff]
      %v3838 = vld [vmem:[#allocation3 + $0x128] sm:$0xff]
      %v3839 = vld [vmem:[#allocation3 + $0x130] sm:$0xff]
      %v3840 = vld [vmem:[#allocation3 + $0x138] sm:$0xff]
      %v3841 = vld [vmem:[#allocation3 + $0x140] sm:$0xf]
      %v3842 = vld [vmem:[#allocation3 + $0x144] sm:$0xff]
      %v3843 = vld [vmem:[#allocation3 + $0x14c] sm:$0xff]
      %v3844 = vld [vmem:[#allocation3 + $0x154] sm:$0xff]
      %v3845 = vld [vmem:[#allocation3 + $0x15c] sm:$0xff]
      %v3846 = vld [vmem:[#allocation3 + $0x164] sm:$0xf]
      %v3847 = vld [vmem:[#allocation3 + $0x168] sm:$0xff]
      %v3848 = vld [vmem:[#allocation3 + $0x170] sm:$0xff]
      %v3849 = vld [vmem:[#allocation3 + $0x178] sm:$0xff]
      %v3850 = vld [vmem:[#allocation3 + $0x180] sm:$0xff]
      %v3851 = vld [vmem:[#allocation3 + $0x188] sm:$0xf]
      %v3852 = vld [vmem:[#allocation3 + $0x18c] sm:$0xff]
      %v3853 = vld [vmem:[#allocation3 + $0x194] sm:$0xff]
      %v3854 = vld [vmem:[#allocation3 + $0x19c] sm:$0xff]
      %v3855 = vld [vmem:[#allocation3 + $0x1a4] sm:$0xff]
      %v3856 = vld [vmem:[#allocation3 + $0x1ac] sm:$0xf]
      %v3857 = vld [vmem:[#allocation3 + $0x1b0] sm:$0xff]
      %v3858 = vld [vmem:[#allocation3 + $0x1b8] sm:$0xff]
      %v3859 = vld [vmem:[#allocation3 + $0x1c0] sm:$0xff]
      %v3860 = vld [vmem:[#allocation3 + $0x1c8] sm:$0xff]
      %v3861 = vld [vmem:[#allocation3 + $0x1d0] sm:$0xf]
      %v3862 = vld [vmem:[#allocation3 + $0x1d4] sm:$0xff]
      %v3863 = vld [vmem:[#allocation3 + $0x1dc] sm:$0xff]
      %v3864 = vld [vmem:[#allocation3 + $0x1e4] sm:$0xff]
      %v3865 = vld [vmem:[#allocation3 + $0x1ec] sm:$0xff]
      %v3866 = vld [vmem:[#allocation3 + $0x1f4] sm:$0xf]
      %v3867 = vld [vmem:[#allocation3 + $0x1f8] sm:$0xff]
      %v3868 = vld [vmem:[#allocation3 + $0x200] sm:$0xff]
      %v3869 = vld [vmem:[#allocation3 + $0x208] sm:$0xff]
      %v3870 = vld [vmem:[#allocation3 + $0x210] sm:$0xff]
      %v3871 = vld [vmem:[#allocation3 + $0x218] sm:$0xf]
      %v3872 = vld [vmem:[#allocation3 + $0x21c] sm:$0xff]
      %v3873 = vld [vmem:[#allocation3 + $0x224] sm:$0xff]
      %v3874 = vld [vmem:[#allocation3 + $0x22c] sm:$0xff]
      %v3875 = vld [vmem:[#allocation3 + $0x234] sm:$0xff]
      %v3876 = vld [vmem:[#allocation3 + $0x23c] sm:$0xf]
      %v3877 = vld [vmem:[#allocation3 + $0x240] sm:$0xff]
      %v3878 = vld [vmem:[#allocation3 + $0x248] sm:$0xff]
      %v3879 = vld [vmem:[#allocation3 + $0x250] sm:$0xff]
      %v3880 = vld [vmem:[#allocation3 + $0x258] sm:$0xff]
      %v3881 = vld [vmem:[#allocation3 + $0x260] sm:$0xf]
      %v3882 = vld [vmem:[#allocation3 + $0x264] sm:$0xff]
      %v3883 = vld [vmem:[#allocation3 + $0x26c] sm:$0xff]
      %v3884 = vld [vmem:[#allocation3 + $0x274] sm:$0xff]
      %v3885 = vld [vmem:[#allocation3 + $0x27c] sm:$0xff]
      %v3886 = vld [vmem:[#allocation3 + $0x284] sm:$0xf]
      %v3887 = vld [vmem:[#allocation3 + $0x288] sm:$0xff]
      %v3888 = vld [vmem:[#allocation3 + $0x290] sm:$0xff]
      %v3889 = vld [vmem:[#allocation3 + $0x298] sm:$0xff]
      %v3890 = vld [vmem:[#allocation3 + $0x2a0] sm:$0xff]
      %v3891 = vld [vmem:[#allocation3 + $0x2a8] sm:$0xf]
      %v3892 = vld [vmem:[#allocation3 + $0x2ac] sm:$0xff]
      %v3893 = vld [vmem:[#allocation3 + $0x2b4] sm:$0xff]
      %v3894 = vld [vmem:[#allocation3 + $0x2bc] sm:$0xff]
      %v3895 = vld [vmem:[#allocation3 + $0x2c4] sm:$0xff]
      %v3896 = vld [vmem:[#allocation3 + $0x2cc] sm:$0xf]
      %v3897 = vld [vmem:[#allocation3 + $0x2d0] sm:$0xff]
      %v3898 = vld [vmem:[#allocation3 + $0x2d8] sm:$0xff]
      %v3899 = vld [vmem:[#allocation3 + $0x2e0] sm:$0xff]
      %v3900 = vld [vmem:[#allocation3 + $0x2e8] sm:$0xff]
      %v3901 = vld [vmem:[#allocation3 + $0x2f0] sm:$0xf]
      %v3902 = vld [vmem:[#allocation3 + $0x2f4] sm:$0xff]
      %v3903 = vld [vmem:[#allocation3 + $0x2fc] sm:$0xff]
      %v3904 = vld [vmem:[#allocation3 + $0x304] sm:$0xff]
      %v3905 = vld [vmem:[#allocation3 + $0x30c] sm:$0xff]
      %v3906 = vld [vmem:[#allocation3 + $0x314] sm:$0xf]
      %v3907 = vld [vmem:[#allocation3 + $0x318] sm:$0xff]
      %v3908 = vld [vmem:[#allocation3 + $0x320] sm:$0xff]
      %v3909 = vld [vmem:[#allocation3 + $0x328] sm:$0xff]
      %v3910 = vld [vmem:[#allocation3 + $0x330] sm:$0xff]
      %v3911 = vld [vmem:[#allocation3 + $0x338] sm:$0xf]
      %v3912 = vld [vmem:[#allocation3 + $0x33c] sm:$0xff]
      %v3913 = vld [vmem:[#allocation3 + $0x344] sm:$0xff]
      %v3914 = vld [vmem:[#allocation3 + $0x34c] sm:$0xff]
      %v3915 = vld [vmem:[#allocation3 + $0x354] sm:$0xff]
      %v3916 = vld [vmem:[#allocation3 + $0x35c] sm:$0xf]
      %v3917 = vld [vmem:[#allocation3 + $0x360] sm:$0xff]
      %v3918 = vld [vmem:[#allocation3 + $0x368] sm:$0xff]
      %v3919 = vld [vmem:[#allocation3 + $0x370] sm:$0xff]
      %v3920 = vld [vmem:[#allocation3 + $0x378] sm:$0xff]
      %v3921 = vld [vmem:[#allocation3 + $0x380] sm:$0xf]
      %v3922 = vld [vmem:[#allocation3 + $0x384] sm:$0xff]
      %v3923 = vld [vmem:[#allocation3 + $0x38c] sm:$0xff]
      %v3924 = vld [vmem:[#allocation3 + $0x394] sm:$0xff]
      %v3925 = vld [vmem:[#allocation3 + $0x39c] sm:$0xff]
      %v3926 = vld [vmem:[#allocation3 + $0x3a4] sm:$0xf]
      %v3927 = vld [vmem:[#allocation3 + $0x3a8] sm:$0xff]
      %v3928 = vld [vmem:[#allocation3 + $0x3b0] sm:$0xff]
      %v3929 = vld [vmem:[#allocation3 + $0x3b8] sm:$0xff]
      %v3930 = vld [vmem:[#allocation3 + $0x3c0] sm:$0xff]
      %v3931 = vld [vmem:[#allocation3 + $0x3c8] sm:$0xf]
      %v3932 = vld [vmem:[#allocation3 + $0x3cc] sm:$0xff]
      %v3933 = vld [vmem:[#allocation3 + $0x3d4] sm:$0xff]
      %v3934 = vld [vmem:[#allocation3 + $0x3dc] sm:$0xff]
      %v3935 = vld [vmem:[#allocation3 + $0x3e4] sm:$0xff]
      %v3936 = vld [vmem:[#allocation3 + $0x3ec] sm:$0xf]
      %v3937 = vld [vmem:[#allocation3 + $0x3f0] sm:$0xff]
      %v3938 = vld [vmem:[#allocation3 + $0x3f8] sm:$0xff]
      %v3939 = vld [vmem:[#allocation3 + $0x400] sm:$0xff]
      %v3940 = vld [vmem:[#allocation3 + $0x408] sm:$0xff]
      %v3941 = vld [vmem:[#allocation3 + $0x410] sm:$0xf]
      %v3942 = vld [vmem:[#allocation3 + $0x414] sm:$0xff]
      %v3943 = vld [vmem:[#allocation3 + $0x41c] sm:$0xff]
      %v3944 = vld [vmem:[#allocation3 + $0x424] sm:$0xff]
      %v3945 = vld [vmem:[#allocation3 + $0x42c] sm:$0xff]
      %v3946 = vld [vmem:[#allocation3 + $0x434] sm:$0xf]
      %v3947 = vld [vmem:[#allocation3 + $0x438] sm:$0xff]
      %v3948 = vld [vmem:[#allocation3 + $0x440] sm:$0xff]
      %v3949 = vld [vmem:[#allocation3 + $0x448] sm:$0xff]
      %v3950 = vld [vmem:[#allocation3 + $0x450] sm:$0xff]
      %v3951 = vld [vmem:[#allocation3 + $0x458] sm:$0xf]
      %v3952 = vld [vmem:[#allocation3 + $0x45c] sm:$0xff]
      %v3953 = vld [vmem:[#allocation3 + $0x464] sm:$0xff]
      %v3954 = vld [vmem:[#allocation3 + $0x46c] sm:$0xff]
      %v3955 = vld [vmem:[#allocation3 + $0x474] sm:$0xff]
      %v3956 = vld [vmem:[#allocation3 + $0x47c] sm:$0xf]
      %v3957 = vld [vmem:[#allocation3 + $0x480] sm:$0xff]
      %v3958 = vld [vmem:[#allocation3 + $0x488] sm:$0xff]
      %v3959 = vld [vmem:[#allocation3 + $0x490] sm:$0xff]
      %v3960 = vld [vmem:[#allocation3 + $0x498] sm:$0xff]
      %v3961 = vld [vmem:[#allocation3 + $0x4a0] sm:$0xf]
      %v3962 = vld [vmem:[#allocation3 + $0x4a4] sm:$0xff]
      %v3963 = vld [vmem:[#allocation3 + $0x4ac] sm:$0xff]
      %v3964 = vld [vmem:[#allocation3 + $0x4b4] sm:$0xff]
      %v3965 = vld [vmem:[#allocation3 + $0x4bc] sm:$0xff]
      %v3966 = vld [vmem:[#allocation3 + $0x4c4] sm:$0xf]
      %v3967 = vld [vmem:[#allocation3 + $0x4c8] sm:$0xff]
      %v3968 = vld [vmem:[#allocation3 + $0x4d0] sm:$0xff]
      %v3969 = vld [vmem:[#allocation3 + $0x4d8] sm:$0xff]
      %v3970 = vld [vmem:[#allocation3 + $0x4e0] sm:$0xff]
      %v3971 = vld [vmem:[#allocation3 + $0x4e8] sm:$0xf]
      %v3972 = vld [vmem:[#allocation3 + $0x4ec] sm:$0xff]
      %v3973 = vld [vmem:[#allocation3 + $0x4f4] sm:$0xff]
      %v3974 = vld [vmem:[#allocation3 + $0x4fc] sm:$0xff]
      %v3975 = vld [vmem:[#allocation3 + $0x504] sm:$0xff]
      %v3976 = vld [vmem:[#allocation3 + $0x50c] sm:$0xf]
      %v3977 = vld [vmem:[%s1] sm:$0xf]
      %v3978 = vld [vmem:[%s1 + $0x4] sm:$0xf]
      %v3979 = vld [vmem:[%s1 + $0x8] sm:$0xf]
      %v3980 = vld [vmem:[%s1 + $0xc] sm:$0xf]
      %v3981 = vld [vmem:[%s1 + $0x10] sm:$0xf]
      %v3982 = vld [vmem:[%s1 + $0x14] sm:$0xf]
      %v3983 = vld [vmem:[%s1 + $0x18] sm:$0xf]
      %v3984 = vld [vmem:[%s1 + $0x1c] sm:$0xf]
      %v3985 = vld [vmem:[%s1 + $0x20] sm:$0xf]
      %v3986 = vld [vmem:[%s1 + $0x24] sm:$0xf]
      %v3987 = vld [vmem:[%s1 + $0x28] sm:$0xf]
      %v3988 = vld [vmem:[%s1 + $0x2c] sm:$0xf]
      %v3989 = vld [vmem:[%s1 + $0x30] sm:$0xf]
      %v3990 = vld [vmem:[%s1 + $0x34] sm:$0xf]
      %v3991 = vld [vmem:[%s1 + $0x38] sm:$0xf]
      %v3992 = vld [vmem:[%s1 + $0x3c] sm:$0xf]
      %v3993 = vld [vmem:[%s1 + $0x40] sm:$0xf]
      %v3994 = vld [vmem:[%s1 + $0x44] sm:$0xf]
      %v3995 = vld [vmem:[%s1 + $0x48] sm:$0xf]
      %v3996 = vld [vmem:[%s1 + $0x4c] sm:$0xf]
      %v3997 = vld [vmem:[%s1 + $0x50] sm:$0xf]
      %v3998 = vld [vmem:[%s1 + $0x54] sm:$0xf]
      %v3999 = vld [vmem:[%s1 + $0x58] sm:$0xf]
      %v4000 = vld [vmem:[%s1 + $0x5c] sm:$0xf]
      %v4001 = vld [vmem:[%s1 + $0x60] sm:$0xf]
      %v4002 = vld [vmem:[%s1 + $0x64] sm:$0xf]
      %v4003 = vld [vmem:[%s1 + $0x68] sm:$0xf]
      %v4004 = vld [vmem:[%s1 + $0x6c] sm:$0xf]
      %v4005 = vld [vmem:[%s1 + $0x70] sm:$0xf]
      %v4006 = vld [vmem:[%s1 + $0x74] sm:$0xf]
      %v4007 = vld [vmem:[%s1 + $0x78] sm:$0xf]
      %v4008 = vld [vmem:[%s1 + $0x7c] sm:$0xf]
      %v4009 = vld [vmem:[%s1 + $0x80] sm:$0xf]
      %v4010 = vld [vmem:[%s1 + $0x84] sm:$0xf]
      %v4011 = vld [vmem:[%s1 + $0x88] sm:$0xf]
      %v4012 = vld [vmem:[%s1 + $0x8c] sm:$0xf]
      %v4013 = vld [vmem:[%s1 + $0x90] sm:$0xf]
      %v4014 = vld [vmem:[%s1 + $0x94] sm:$0xf]
      %v4015 = vld [vmem:[%s1 + $0x98] sm:$0xf]
      %v4016 = vld [vmem:[%s1 + $0x9c] sm:$0xf]
      %v4017 = vld [vmem:[%s1 + $0xa0] sm:$0xf]
      %v4018 = vld [vmem:[%s1 + $0xa4] sm:$0xf]
      %v4019 = vld [vmem:[%s1 + $0xa8] sm:$0xf]
      %v4020 = vld [vmem:[%s1 + $0xac] sm:$0xf]
      %v4021 = vld [vmem:[%s1 + $0xb0] sm:$0xf]
      %v4022 = vld [vmem:[%s1 + $0xb4] sm:$0xf]
      %v4023 = vld [vmem:[%s1 + $0xb8] sm:$0xf]
      %v4024 = vld [vmem:[%s1 + $0xbc] sm:$0xf]
      %v4025 = vld [vmem:[%s1 + $0xc0] sm:$0xf]
      %v4026 = vld [vmem:[%s1 + $0xc4] sm:$0xf]
      %v4027 = vld [vmem:[%s1 + $0xc8] sm:$0xf]
      %v4028 = vld [vmem:[%s1 + $0xcc] sm:$0xf]
      %v4029 = vld [vmem:[%s1 + $0xd0] sm:$0xf]
      %v4030 = vld [vmem:[%s1 + $0xd4] sm:$0xf]
      %v4031 = vld [vmem:[%s1 + $0xd8] sm:$0xf]
      %v4032 = vld [vmem:[%s1 + $0xdc] sm:$0xf]
      %v4033 = vld [vmem:[%s1 + $0xe0] sm:$0xf]
      %v4034 = vld [vmem:[%s1 + $0xe4] sm:$0xf]
      %v4035 = vld [vmem:[%s1 + $0xe8] sm:$0xf]
      %v4036 = vld [vmem:[%s1 + $0xec] sm:$0xf]
      %v4037 = vld [vmem:[%s1 + $0xf0] sm:$0xf]
      %v4038 = vld [vmem:[%s1 + $0xf4] sm:$0xf]
      %v4039 = vld [vmem:[%s1 + $0xf8] sm:$0xf]
      %v4040 = vld [vmem:[%s1 + $0xfc] sm:$0xf]
      %v4041 = vld [vmem:[%s1 + $0x100] sm:$0xf]
      %v4042 = vld [vmem:[%s1 + $0x104] sm:$0xf]
      %v4043 = vld [vmem:[%s1 + $0x108] sm:$0xf]
      %v4044 = vld [vmem:[%s1 + $0x10c] sm:$0xf]
      %v4045 = vld [vmem:[%s1 + $0x110] sm:$0xf]
      %v4046 = vld [vmem:[%s1 + $0x114] sm:$0xf]
      %v4047 = vld [vmem:[%s1 + $0x118] sm:$0xf]
      %v4048 = vld [vmem:[%s1 + $0x11c] sm:$0xf]
      %v4049 = vld [vmem:[%s1 + $0x120] sm:$0xf]
      %v4050 = vld [vmem:[%s1 + $0x124] sm:$0xf]
      %v4051 = vld [vmem:[%s1 + $0x128] sm:$0xf]
      %v4052 = vld [vmem:[%s1 + $0x12c] sm:$0xf]
      %v4053 = vld [vmem:[%s1 + $0x130] sm:$0xf]
      %v4054 = vld [vmem:[%s1 + $0x134] sm:$0xf]
      %v4055 = vld [vmem:[%s1 + $0x138] sm:$0xf]
      %v4056 = vld [vmem:[%s1 + $0x13c] sm:$0xf]
      %v4057 = vld [vmem:[%s1 + $0x140] sm:$0xf]
      %v4058 = vld [vmem:[%s1 + $0x144] sm:$0xf]
      %v4059 = vld [vmem:[%s1 + $0x148] sm:$0xf]
      %v4060 = vld [vmem:[%s1 + $0x14c] sm:$0xf]
      %v4061 = vld [vmem:[%s1 + $0x150] sm:$0xf]
      %v4062 = vld [vmem:[%s1 + $0x154] sm:$0xf]
      %v4063 = vld [vmem:[%s1 + $0x158] sm:$0xf]
      %v4064 = vld [vmem:[%s1 + $0x15c] sm:$0xf]
      %v4065 = vld [vmem:[%s1 + $0x160] sm:$0xf]
      %v4066 = vld [vmem:[%s1 + $0x164] sm:$0xf]
      %v4067 = vld [vmem:[%s1 + $0x168] sm:$0xf]
      %v4068 = vld [vmem:[%s1 + $0x16c] sm:$0xf]
      %v4069 = vld [vmem:[%s1 + $0x170] sm:$0xf]
      %v4070 = vld [vmem:[%s1 + $0x174] sm:$0xf]
      %v4071 = vld [vmem:[%s1 + $0x178] sm:$0xf]
      %v4072 = vld [vmem:[%s1 + $0x17c] sm:$0xf]
      %v4073 = vld [vmem:[%s1 + $0x180] sm:$0xf]
      %v4074 = vld [vmem:[%s1 + $0x184] sm:$0xf]
      %v4075 = vld [vmem:[%s1 + $0x188] sm:$0xf]
      %v4076 = vld [vmem:[%s1 + $0x18c] sm:$0xf]
      %v4077 = vld [vmem:[%s1 + $0x190] sm:$0xf]
      %v4078 = vld [vmem:[%s1 + $0x194] sm:$0xf]
      %v4079 = vld [vmem:[%s1 + $0x198] sm:$0xf]
      %v4080 = vld [vmem:[%s1 + $0x19c] sm:$0xf]
      %v4081 = vld [vmem:[%s1 + $0x1a0] sm:$0xf]
      %v4082 = vld [vmem:[%s1 + $0x1a4] sm:$0xf]
      %v4083 = vld [vmem:[%s1 + $0x1a8] sm:$0xf]
      %v4084 = vld [vmem:[%s1 + $0x1ac] sm:$0xf]
      %v4085 = vld [vmem:[%s1 + $0x1b0] sm:$0xf]
      %v4086 = vld [vmem:[%s1 + $0x1b4] sm:$0xf]
      %v4087 = vld [vmem:[%s1 + $0x1b8] sm:$0xf]
      %v4088 = vld [vmem:[%s1 + $0x1bc] sm:$0xf]
      %v4089 = vld [vmem:[%s1 + $0x1c0] sm:$0xf]
      %v4090 = vld [vmem:[%s1 + $0x1c4] sm:$0xf]
      %v4091 = vld [vmem:[%s1 + $0x1c8] sm:$0xf]
      %v4092 = vld [vmem:[%s1 + $0x1cc] sm:$0xf]
      %v4093 = vld [vmem:[%s1 + $0x1d0] sm:$0xf]
      %v4094 = vld [vmem:[%s1 + $0x1d4] sm:$0xf]
      %v4095 = vld [vmem:[%s1 + $0x1d8] sm:$0xf]
      %v4096 = vld [vmem:[%s1 + $0x1dc] sm:$0xf]
      %v4097 = vld [vmem:[%s1 + $0x1e0] sm:$0xf]
      %v4098 = vld [vmem:[%s1 + $0x1e4] sm:$0xf]
      %v4099 = vld [vmem:[%s1 + $0x1e8] sm:$0xf]
      %v4100 = vld [vmem:[%s1 + $0x1ec] sm:$0xf]
      %v4101 = vld [vmem:[%s1 + $0x1f0] sm:$0xf]
      %v4102 = vld [vmem:[%s1 + $0x1f4] sm:$0xf]
      %v4103 = vld [vmem:[%s1 + $0x1f8] sm:$0xf]
      %v4104 = vld [vmem:[%s1 + $0x1fc] sm:$0xf]
      %v4105 = vld [vmem:[%s1 + $0x200] sm:$0xf]
      %v4106 = vld [vmem:[%s1 + $0x204] sm:$0xf]
      %v4107 = vld [vmem:[%s1 + $0x208] sm:$0xf]
      %v4108 = vld [vmem:[%s1 + $0x20c] sm:$0xf]
      %v4109 = vld [vmem:[%s1 + $0x210] sm:$0xf]
      %v4110 = vld [vmem:[%s1 + $0x214] sm:$0xf]
      %v4111 = vld [vmem:[%s1 + $0x218] sm:$0xf]
      %v4112 = vld [vmem:[%s1 + $0x21c] sm:$0xf]
      %v4113 = vld [vmem:[%s1 + $0x220] sm:$0xf]
      %v4114 = vld [vmem:[%s1 + $0x224] sm:$0xf]
      %v4115 = vld [vmem:[%s1 + $0x228] sm:$0xf]
      %v4116 = vld [vmem:[%s1 + $0x22c] sm:$0xf]
      %v4117 = vld [vmem:[%s1 + $0x230] sm:$0xf]
      %v4118 = vld [vmem:[%s1 + $0x234] sm:$0xf]
      %v4119 = vld [vmem:[%s1 + $0x238] sm:$0xf]
      %v4120 = vld [vmem:[%s1 + $0x23c] sm:$0xf]
      %v4301 = vunpack.c.l.b16 %v3797
      %v4302 = vunpack.c.h.b16 %v3797
      %v4303 = vunpack.c.l.b16 %v3798
      %v4304 = vunpack.c.h.b16 %v3798
      %v4305 = vunpack.c.l.b16 %v3799
      %v4306 = vunpack.c.h.b16 %v3799
      %v4307 = vunpack.c.l.b16 %v3800
      %v4308 = vunpack.c.h.b16 %v3800
      %v4309 = vunpack.c.l.b16 %v3801
      %v4310 = vunpack.c.l.b16 %v3802
      %v4311 = vunpack.c.h.b16 %v3802
      %v4312 = vunpack.c.l.b16 %v3803
      %v4313 = vunpack.c.h.b16 %v3803
      %v4314 = vunpack.c.l.b16 %v3804
      %v4315 = vunpack.c.h.b16 %v3804
      %v4316 = vunpack.c.l.b16 %v3805
      %v4317 = vunpack.c.h.b16 %v3805
      %v4318 = vunpack.c.l.b16 %v3806
      %v4319 = vunpack.c.l.b16 %v3807
      %v4320 = vunpack.c.h.b16 %v3807
      %v4321 = vunpack.c.l.b16 %v3808
      %v4322 = vunpack.c.h.b16 %v3808
      %v4323 = vunpack.c.l.b16 %v3809
      %v4324 = vunpack.c.h.b16 %v3809
      %v4325 = vunpack.c.l.b16 %v3810
      %v4326 = vunpack.c.h.b16 %v3810
      %v4327 = vunpack.c.l.b16 %v3811
      %v4328 = vunpack.c.l.b16 %v3812
      %v4329 = vunpack.c.h.b16 %v3812
      %v4330 = vunpack.c.l.b16 %v3813
      %v4331 = vunpack.c.h.b16 %v3813
      %v4332 = vunpack.c.l.b16 %v3814
      %v4333 = vunpack.c.h.b16 %v3814
      %v4334 = vunpack.c.l.b16 %v3815
      %v4335 = vunpack.c.h.b16 %v3815
      %v4336 = vunpack.c.l.b16 %v3816
      %v4337 = vunpack.c.l.b16 %v3817
      %v4338 = vunpack.c.h.b16 %v3817
      %v4339 = vunpack.c.l.b16 %v3818
      %v4340 = vunpack.c.h.b16 %v3818
      %v4341 = vunpack.c.l.b16 %v3819
      %v4342 = vunpack.c.h.b16 %v3819
      %v4343 = vunpack.c.l.b16 %v3820
      %v4344 = vunpack.c.h.b16 %v3820
      %v4345 = vunpack.c.l.b16 %v3821
      %v4346 = vunpack.c.l.b16 %v3822
      %v4347 = vunpack.c.h.b16 %v3822
      %v4348 = vunpack.c.l.b16 %v3823
      %v4349 = vunpack.c.h.b16 %v3823
      %v4350 = vunpack.c.l.b16 %v3824
      %v4351 = vunpack.c.h.b16 %v3824
      %v4352 = vunpack.c.l.b16 %v3825
      %v4353 = vunpack.c.h.b16 %v3825
      %v4354 = vunpack.c.l.b16 %v3826
      %v4355 = vunpack.c.l.b16 %v3827
      %v4356 = vunpack.c.h.b16 %v3827
      %v4357 = vunpack.c.l.b16 %v3828
      %v4358 = vunpack.c.h.b16 %v3828
      %v4359 = vunpack.c.l.b16 %v3829
      %v4360 = vunpack.c.h.b16 %v3829
      %v4361 = vunpack.c.l.b16 %v3830
      %v4362 = vunpack.c.h.b16 %v3830
      %v4363 = vunpack.c.l.b16 %v3831
      %v4364 = vunpack.c.l.b16 %v3832
      %v4365 = vunpack.c.h.b16 %v3832
      %v4366 = vunpack.c.l.b16 %v3833
      %v4367 = vunpack.c.h.b16 %v3833
      %v4368 = vunpack.c.l.b16 %v3834
      %v4369 = vunpack.c.h.b16 %v3834
      %v4370 = vunpack.c.l.b16 %v3835
      %v4371 = vunpack.c.h.b16 %v3835
      %v4372 = vunpack.c.l.b16 %v3836
      %v4373 = vunpack.c.l.b16 %v3837
      %v4374 = vunpack.c.h.b16 %v3837
      %v4375 = vunpack.c.l.b16 %v3838
      %v4376 = vunpack.c.h.b16 %v3838
      %v4377 = vunpack.c.l.b16 %v3839
      %v4378 = vunpack.c.h.b16 %v3839
      %v4379 = vunpack.c.l.b16 %v3840
      %v4380 = vunpack.c.h.b16 %v3840
      %v4381 = vunpack.c.l.b16 %v3841
      %v4382 = vunpack.c.l.b16 %v3842
      %v4383 = vunpack.c.h.b16 %v3842
      %v4384 = vunpack.c.l.b16 %v3843
      %v4385 = vunpack.c.h.b16 %v3843
      %v4386 = vunpack.c.l.b16 %v3844
      %v4387 = vunpack.c.h.b16 %v3844
      %v4388 = vunpack.c.l.b16 %v3845
      %v4389 = vunpack.c.h.b16 %v3845
      %v4390 = vunpack.c.l.b16 %v3846
      %v4391 = vunpack.c.l.b16 %v3847
      %v4392 = vunpack.c.h.b16 %v3847
      %v4393 = vunpack.c.l.b16 %v3848
      %v4394 = vunpack.c.h.b16 %v3848
      %v4395 = vunpack.c.l.b16 %v3849
      %v4396 = vunpack.c.h.b16 %v3849
      %v4397 = vunpack.c.l.b16 %v3850
      %v4398 = vunpack.c.h.b16 %v3850
      %v4399 = vunpack.c.l.b16 %v3851
      %v4400 = vunpack.c.l.b16 %v3852
      %v4401 = vunpack.c.h.b16 %v3852
      %v4402 = vunpack.c.l.b16 %v3853
      %v4403 = vunpack.c.h.b16 %v3853
      %v4404 = vunpack.c.l.b16 %v3854
      %v4405 = vunpack.c.h.b16 %v3854
      %v4406 = vunpack.c.l.b16 %v3855
      %v4407 = vunpack.c.h.b16 %v3855
      %v4408 = vunpack.c.l.b16 %v3856
      %v4409 = vunpack.c.l.b16 %v3857
      %v4410 = vunpack.c.h.b16 %v3857
      %v4411 = vunpack.c.l.b16 %v3858
      %v4412 = vunpack.c.h.b16 %v3858
      %v4413 = vunpack.c.l.b16 %v3859
      %v4414 = vunpack.c.h.b16 %v3859
      %v4415 = vunpack.c.l.b16 %v3860
      %v4416 = vunpack.c.h.b16 %v3860
      %v4417 = vunpack.c.l.b16 %v3861
      %v4418 = vunpack.c.l.b16 %v3862
      %v4419 = vunpack.c.h.b16 %v3862
      %v4420 = vunpack.c.l.b16 %v3863
      %v4421 = vunpack.c.h.b16 %v3863
      %v4422 = vunpack.c.l.b16 %v3864
      %v4423 = vunpack.c.h.b16 %v3864
      %v4424 = vunpack.c.l.b16 %v3865
      %v4425 = vunpack.c.h.b16 %v3865
      %v4426 = vunpack.c.l.b16 %v3866
      %v4427 = vunpack.c.l.b16 %v3867
      %v4428 = vunpack.c.h.b16 %v3867
      %v4429 = vunpack.c.l.b16 %v3868
      %v4430 = vunpack.c.h.b16 %v3868
      %v4431 = vunpack.c.l.b16 %v3869
      %v4432 = vunpack.c.h.b16 %v3869
      %v4433 = vunpack.c.l.b16 %v3870
      %v4434 = vunpack.c.h.b16 %v3870
      %v4435 = vunpack.c.l.b16 %v3871
      %v4436 = vunpack.c.l.b16 %v3872
      %v4437 = vunpack.c.h.b16 %v3872
      %v4438 = vunpack.c.l.b16 %v3873
      %v4439 = vunpack.c.h.b16 %v3873
      %v4440 = vunpack.c.l.b16 %v3874
      %v4441 = vunpack.c.h.b16 %v3874
      %v4442 = vunpack.c.l.b16 %v3875
      %v4443 = vunpack.c.h.b16 %v3875
      %v4444 = vunpack.c.l.b16 %v3876
      %v4445 = vunpack.c.l.b16 %v3877
      %v4446 = vunpack.c.h.b16 %v3877
      %v4447 = vunpack.c.l.b16 %v3878
      %v4448 = vunpack.c.h.b16 %v3878
      %v4449 = vunpack.c.l.b16 %v3879
      %v4450 = vunpack.c.h.b16 %v3879
      %v4451 = vunpack.c.l.b16 %v3880
      %v4452 = vunpack.c.h.b16 %v3880
      %v4453 = vunpack.c.l.b16 %v3881
      %v4454 = vunpack.c.l.b16 %v3882
      %v4455 = vunpack.c.h.b16 %v3882
      %v4456 = vunpack.c.l.b16 %v3883
      %v4457 = vunpack.c.h.b16 %v3883
      %v4458 = vunpack.c.l.b16 %v3884
      %v4459 = vunpack.c.h.b16 %v3884
      %v4460 = vunpack.c.l.b16 %v3885
      %v4461 = vunpack.c.h.b16 %v3885
      %v4462 = vunpack.c.l.b16 %v3886
      %v4463 = vunpack.c.l.b16 %v3887
      %v4464 = vunpack.c.h.b16 %v3887
      %v4465 = vunpack.c.l.b16 %v3888
      %v4466 = vunpack.c.h.b16 %v3888
      %v4467 = vunpack.c.l.b16 %v3889
      %v4468 = vunpack.c.h.b16 %v3889
      %v4469 = vunpack.c.l.b16 %v3890
      %v4470 = vunpack.c.h.b16 %v3890
      %v4471 = vunpack.c.l.b16 %v3891
      %v4472 = vunpack.c.l.b16 %v3892
      %v4473 = vunpack.c.h.b16 %v3892
      %v4474 = vunpack.c.l.b16 %v3893
      %v4475 = vunpack.c.h.b16 %v3893
      %v4476 = vunpack.c.l.b16 %v3894
      %v4477 = vunpack.c.h.b16 %v3894
      %v4478 = vunpack.c.l.b16 %v3895
      %v4479 = vunpack.c.h.b16 %v3895
      %v4480 = vunpack.c.l.b16 %v3896
      %v4481 = vunpack.c.l.b16 %v3897
      %v4482 = vunpack.c.h.b16 %v3897
      %v4483 = vunpack.c.l.b16 %v3898
      %v4484 = vunpack.c.h.b16 %v3898
      %v4485 = vunpack.c.l.b16 %v3899
      %v4486 = vunpack.c.h.b16 %v3899
      %v4487 = vunpack.c.l.b16 %v3900
      %v4488 = vunpack.c.h.b16 %v3900
      %v4489 = vunpack.c.l.b16 %v3901
      %v4490 = vunpack.c.l.b16 %v3902
      %v4491 = vunpack.c.h.b16 %v3902
      %v4492 = vunpack.c.l.b16 %v3903
      %v4493 = vunpack.c.h.b16 %v3903
      %v4494 = vunpack.c.l.b16 %v3904
      %v4495 = vunpack.c.h.b16 %v3904
      %v4496 = vunpack.c.l.b16 %v3905
      %v4497 = vunpack.c.h.b16 %v3905
      %v4498 = vunpack.c.l.b16 %v3906
      %v4499 = vunpack.c.l.b16 %v3907
      %v4500 = vunpack.c.h.b16 %v3907
      %v4501 = vunpack.c.l.b16 %v3908
      %v4502 = vunpack.c.h.b16 %v3908
      %v4503 = vunpack.c.l.b16 %v3909
      %v4504 = vunpack.c.h.b16 %v3909
      %v4505 = vunpack.c.l.b16 %v3910
      %v4506 = vunpack.c.h.b16 %v3910
      %v4507 = vunpack.c.l.b16 %v3911
      %v4508 = vunpack.c.l.b16 %v3912
      %v4509 = vunpack.c.h.b16 %v3912
      %v4510 = vunpack.c.l.b16 %v3913
      %v4511 = vunpack.c.h.b16 %v3913
      %v4512 = vunpack.c.l.b16 %v3914
      %v4513 = vunpack.c.h.b16 %v3914
      %v4514 = vunpack.c.l.b16 %v3915
      %v4515 = vunpack.c.h.b16 %v3915
      %v4516 = vunpack.c.l.b16 %v3916
      %v4517 = vunpack.c.l.b16 %v3917
      %v4518 = vunpack.c.h.b16 %v3917
      %v4519 = vunpack.c.l.b16 %v3918
      %v4520 = vunpack.c.h.b16 %v3918
      %v4521 = vunpack.c.l.b16 %v3919
      %v4522 = vunpack.c.h.b16 %v3919
      %v4523 = vunpack.c.l.b16 %v3920
      %v4524 = vunpack.c.h.b16 %v3920
      %v4525 = vunpack.c.l.b16 %v3921
      %v4526 = vunpack.c.l.b16 %v3922
      %v4527 = vunpack.c.h.b16 %v3922
      %v4528 = vunpack.c.l.b16 %v3923
      %v4529 = vunpack.c.h.b16 %v3923
      %v4530 = vunpack.c.l.b16 %v3924
      %v4531 = vunpack.c.h.b16 %v3924
      %v4532 = vunpack.c.l.b16 %v3925
      %v4533 = vunpack.c.h.b16 %v3925
      %v4534 = vunpack.c.l.b16 %v3926
      %v4535 = vunpack.c.l.b16 %v3927
      %v4536 = vunpack.c.h.b16 %v3927
      %v4537 = vunpack.c.l.b16 %v3928
      %v4538 = vunpack.c.h.b16 %v3928
      %v4539 = vunpack.c.l.b16 %v3929
      %v4540 = vunpack.c.h.b16 %v3929
      %v4541 = vunpack.c.l.b16 %v3930
      %v4542 = vunpack.c.h.b16 %v3930
      %v4543 = vunpack.c.l.b16 %v3931
      %v4544 = vunpack.c.l.b16 %v3932
      %v4545 = vunpack.c.h.b16 %v3932
      %v4546 = vunpack.c.l.b16 %v3933
      %v4547 = vunpack.c.h.b16 %v3933
      %v4548 = vunpack.c.l.b16 %v3934
      %v4549 = vunpack.c.h.b16 %v3934
      %v4550 = vunpack.c.l.b16 %v3935
      %v4551 = vunpack.c.h.b16 %v3935
      %v4552 = vunpack.c.l.b16 %v3936
      %v4553 = vunpack.c.l.b16 %v3937
      %v4554 = vunpack.c.h.b16 %v3937
      %v4555 = vunpack.c.l.b16 %v3938
      %v4556 = vunpack.c.h.b16 %v3938
      %v4557 = vunpack.c.l.b16 %v3939
      %v4558 = vunpack.c.h.b16 %v3939
      %v4559 = vunpack.c.l.b16 %v3940
      %v4560 = vunpack.c.h.b16 %v3940
      %v4561 = vunpack.c.l.b16 %v3941
      %v4562 = vunpack.c.l.b16 %v3942
      %v4563 = vunpack.c.h.b16 %v3942
      %v4564 = vunpack.c.l.b16 %v3943
      %v4565 = vunpack.c.h.b16 %v3943
      %v4566 = vunpack.c.l.b16 %v3944
      %v4567 = vunpack.c.h.b16 %v3944
      %v4568 = vunpack.c.l.b16 %v3945
      %v4569 = vunpack.c.h.b16 %v3945
      %v4570 = vunpack.c.l.b16 %v3946
      %v4571 = vunpack.c.l.b16 %v3947
      %v4572 = vunpack.c.h.b16 %v3947
      %v4573 = vunpack.c.l.b16 %v3948
      %v4574 = vunpack.c.h.b16 %v3948
      %v4575 = vunpack.c.l.b16 %v3949
      %v4576 = vunpack.c.h.b16 %v3949
      %v4577 = vunpack.c.l.b16 %v3950
      %v4578 = vunpack.c.h.b16 %v3950
      %v4579 = vunpack.c.l.b16 %v3951
      %v4580 = vunpack.c.l.b16 %v3952
      %v4581 = vunpack.c.h.b16 %v3952
      %v4582 = vunpack.c.l.b16 %v3953
      %v4583 = vunpack.c.h.b16 %v3953
      %v4584 = vunpack.c.l.b16 %v3954
      %v4585 = vunpack.c.h.b16 %v3954
      %v4586 = vunpack.c.l.b16 %v3955
      %v4587 = vunpack.c.h.b16 %v3955
      %v4588 = vunpack.c.l.b16 %v3956
      %v4589 = vunpack.c.l.b16 %v3957
      %v4590 = vunpack.c.h.b16 %v3957
      %v4591 = vunpack.c.l.b16 %v3958
      %v4592 = vunpack.c.h.b16 %v3958
      %v4593 = vunpack.c.l.b16 %v3959
      %v4594 = vunpack.c.h.b16 %v3959
      %v4595 = vunpack.c.l.b16 %v3960
      %v4596 = vunpack.c.h.b16 %v3960
      %v4597 = vunpack.c.l.b16 %v3961
      %v4598 = vunpack.c.l.b16 %v3962
      %v4599 = vunpack.c.h.b16 %v3962
      %v4600 = vunpack.c.l.b16 %v3963
      %v4601 = vunpack.c.h.b16 %v3963
      %v4602 = vunpack.c.l.b16 %v3964
      %v4603 = vunpack.c.h.b16 %v3964
      %v4604 = vunpack.c.l.b16 %v3965
      %v4605 = vunpack.c.h.b16 %v3965
      %v4606 = vunpack.c.l.b16 %v3966
      %v4607 = vunpack.c.l.b16 %v3967
      %v4608 = vunpack.c.h.b16 %v3967
      %v4609 = vunpack.c.l.b16 %v3968
      %v4610 = vunpack.c.h.b16 %v3968
      %v4611 = vunpack.c.l.b16 %v3969
      %v4612 = vunpack.c.h.b16 %v3969
      %v4613 = vunpack.c.l.b16 %v3970
      %v4614 = vunpack.c.h.b16 %v3970
      %v4615 = vunpack.c.l.b16 %v3971
      %v4616 = vunpack.c.l.b16 %v3972
      %v4617 = vunpack.c.h.b16 %v3972
      %v4618 = vunpack.c.l.b16 %v3973
      %v4619 = vunpack.c.h.b16 %v3973
      %v4620 = vunpack.c.l.b16 %v3974
      %v4621 = vunpack.c.h.b16 %v3974
      %v4622 = vunpack.c.l.b16 %v3975
      %v4623 = vunpack.c.h.b16 %v3975
      %v4624 = vunpack.c.l.b16 %v3976
      %v4625 = vpack.c.b16 %v4310, %v4301
      %v4626 = vpack.c.b16 %v4311, %v4302
      %v4627 = vpack.c.b16 %v4312, %v4303
      %v4628 = vpack.c.b16 %v4313, %v4304
      %v4629 = vpack.c.b16 %v4314, %v4305
      %v4630 = vpack.c.b16 %v4315, %v4306
      %v4631 = vpack.c.b16 %v4316, %v4307
      %v4632 = vpack.c.b16 %v4317, %v4308
      %v4633 = vpack.c.b16 %v4318, %v4309
      %v4634 = vpack.c.b16 %v4328, %v4319
      %v4635 = vpack.c.b16 %v4329, %v4320
      %v4636 = vpack.c.b16 %v4330, %v4321
      %v4637 = vpack.c.b16 %v4331, %v4322
      %v4638 = vpack.c.b16 %v4332, %v4323
      %v4639 = vpack.c.b16 %v4333, %v4324
      %v4640 = vpack.c.b16 %v4334, %v4325
      %v4641 = vpack.c.b16 %v4335, %v4326
      %v4642 = vpack.c.b16 %v4336, %v4327
      %v4643 = vpack.c.b16 %v4346, %v4337
      %v4644 = vpack.c.b16 %v4347, %v4338
      %v4645 = vpack.c.b16 %v4348, %v4339
      %v4646 = vpack.c.b16 %v4349, %v4340
      %v4647 = vpack.c.b16 %v4350, %v4341
      %v4648 = vpack.c.b16 %v4351, %v4342
      %v4649 = vpack.c.b16 %v4352, %v4343
      %v4650 = vpack.c.b16 %v4353, %v4344
      %v4651 = vpack.c.b16 %v4354, %v4345
      %v4652 = vpack.c.b16 %v4364, %v4355
      %v4653 = vpack.c.b16 %v4365, %v4356
      %v4654 = vpack.c.b16 %v4366, %v4357
      %v4655 = vpack.c.b16 %v4367, %v4358
      %v4656 = vpack.c.b16 %v4368, %v4359
      %v4657 = vpack.c.b16 %v4369, %v4360
      %v4658 = vpack.c.b16 %v4370, %v4361
      %v4659 = vpack.c.b16 %v4371, %v4362
      %v4660 = vpack.c.b16 %v4372, %v4363
      %v4661 = vpack.c.b16 %v4382, %v4373
      %v4662 = vpack.c.b16 %v4383, %v4374
      %v4663 = vpack.c.b16 %v4384, %v4375
      %v4664 = vpack.c.b16 %v4385, %v4376
      %v4665 = vpack.c.b16 %v4386, %v4377
      %v4666 = vpack.c.b16 %v4387, %v4378
      %v4667 = vpack.c.b16 %v4388, %v4379
      %v4668 = vpack.c.b16 %v4389, %v4380
      %v4669 = vpack.c.b16 %v4390, %v4381
      %v4670 = vpack.c.b16 %v4400, %v4391
      %v4671 = vpack.c.b16 %v4401, %v4392
      %v4672 = vpack.c.b16 %v4402, %v4393
      %v4673 = vpack.c.b16 %v4403, %v4394
      %v4674 = vpack.c.b16 %v4404, %v4395
      %v4675 = vpack.c.b16 %v4405, %v4396
      %v4676 = vpack.c.b16 %v4406, %v4397
      %v4677 = vpack.c.b16 %v4407, %v4398
      %v4678 = vpack.c.b16 %v4408, %v4399
      %v4679 = vpack.c.b16 %v4418, %v4409
      %v4680 = vpack.c.b16 %v4419, %v4410
      %v4681 = vpack.c.b16 %v4420, %v4411
      %v4682 = vpack.c.b16 %v4421, %v4412
      %v4683 = vpack.c.b16 %v4422, %v4413
      %v4684 = vpack.c.b16 %v4423, %v4414
      %v4685 = vpack.c.b16 %v4424, %v4415
      %v4686 = vpack.c.b16 %v4425, %v4416
      %v4687 = vpack.c.b16 %v4426, %v4417
      %v4688 = vpack.c.b16 %v4436, %v4427
      %v4689 = vpack.c.b16 %v4437, %v4428
      %v4690 = vpack.c.b16 %v4438, %v4429
      %v4691 = vpack.c.b16 %v4439, %v4430
      %v4692 = vpack.c.b16 %v4440, %v4431
      %v4693 = vpack.c.b16 %v4441, %v4432
      %v4694 = vpack.c.b16 %v4442, %v4433
      %v4695 = vpack.c.b16 %v4443, %v4434
      %v4696 = vpack.c.b16 %v4444, %v4435
      %v4697 = vpack.c.b16 %v4454, %v4445
      %v4698 = vpack.c.b16 %v4455, %v4446
      %v4699 = vpack.c.b16 %v4456, %v4447
      %v4700 = vpack.c.b16 %v4457, %v4448
      %v4701 = vpack.c.b16 %v4458, %v4449
      %v4702 = vpack.c.b16 %v4459, %v4450
      %v4703 = vpack.c.b16 %v4460, %v4451
      %v4704 = vpack.c.b16 %v4461, %v4452
      %v4705 = vpack.c.b16 %v4462, %v4453
      %v4706 = vpack.c.b16 %v4472, %v4463
      %v4707 = vpack.c.b16 %v4473, %v4464
      %v4708 = vpack.c.b16 %v4474, %v4465
      %v4709 = vpack.c.b16 %v4475, %v4466
      %v4710 = vpack.c.b16 %v4476, %v4467
      %v4711 = vpack.c.b16 %v4477, %v4468
      %v4712 = vpack.c.b16 %v4478, %v4469
      %v4713 = vpack.c.b16 %v4479, %v4470
      %v4714 = vpack.c.b16 %v4480, %v4471
      %v4715 = vpack.c.b16 %v4490, %v4481
      %v4716 = vpack.c.b16 %v4491, %v4482
      %v4717 = vpack.c.b16 %v4492, %v4483
      %v4718 = vpack.c.b16 %v4493, %v4484
      %v4719 = vpack.c.b16 %v4494, %v4485
      %v4720 = vpack.c.b16 %v4495, %v4486
      %v4721 = vpack.c.b16 %v4496, %v4487
      %v4722 = vpack.c.b16 %v4497, %v4488
      %v4723 = vpack.c.b16 %v4498, %v4489
      %v4724 = vpack.c.b16 %v4508, %v4499
      %v4725 = vpack.c.b16 %v4509, %v4500
      %v4726 = vpack.c.b16 %v4510, %v4501
      %v4727 = vpack.c.b16 %v4511, %v4502
      %v4728 = vpack.c.b16 %v4512, %v4503
      %v4729 = vpack.c.b16 %v4513, %v4504
      %v4730 = vpack.c.b16 %v4514, %v4505
      %v4731 = vpack.c.b16 %v4515, %v4506
      %v4732 = vpack.c.b16 %v4516, %v4507
      %v4733 = vpack.c.b16 %v4526, %v4517
      %v4734 = vpack.c.b16 %v4527, %v4518
      %v4735 = vpack.c.b16 %v4528, %v4519
      %v4736 = vpack.c.b16 %v4529, %v4520
      %v4737 = vpack.c.b16 %v4530, %v4521
      %v4738 = vpack.c.b16 %v4531, %v4522
      %v4739 = vpack.c.b16 %v4532, %v4523
      %v4740 = vpack.c.b16 %v4533, %v4524
      %v4741 = vpack.c.b16 %v4534, %v4525
      %v4742 = vpack.c.b16 %v4544, %v4535
      %v4743 = vpack.c.b16 %v4545, %v4536
      %v4744 = vpack.c.b16 %v4546, %v4537
      %v4745 = vpack.c.b16 %v4547, %v4538
      %v4746 = vpack.c.b16 %v4548, %v4539
      %v4747 = vpack.c.b16 %v4549, %v4540
      %v4748 = vpack.c.b16 %v4550, %v4541
      %v4749 = vpack.c.b16 %v4551, %v4542
      %v4750 = vpack.c.b16 %v4552, %v4543
      %v4751 = vpack.c.b16 %v4562, %v4553
      %v4752 = vpack.c.b16 %v4563, %v4554
      %v4753 = vpack.c.b16 %v4564, %v4555
      %v4754 = vpack.c.b16 %v4565, %v4556
      %v4755 = vpack.c.b16 %v4566, %v4557
      %v4756 = vpack.c.b16 %v4567, %v4558
      %v4757 = vpack.c.b16 %v4568, %v4559
      %v4758 = vpack.c.b16 %v4569, %v4560
      %v4759 = vpack.c.b16 %v4570, %v4561
      %v4760 = vpack.c.b16 %v4580, %v4571
      %v4761 = vpack.c.b16 %v4581, %v4572
      %v4762 = vpack.c.b16 %v4582, %v4573
      %v4763 = vpack.c.b16 %v4583, %v4574
      %v4764 = vpack.c.b16 %v4584, %v4575
      %v4765 = vpack.c.b16 %v4585, %v4576
      %v4766 = vpack.c.b16 %v4586, %v4577
      %v4767 = vpack.c.b16 %v4587, %v4578
      %v4768 = vpack.c.b16 %v4588, %v4579
      %v4769 = vpack.c.b16 %v4598, %v4589
      %v4770 = vpack.c.b16 %v4599, %v4590
      %v4771 = vpack.c.b16 %v4600, %v4591
      %v4772 = vpack.c.b16 %v4601, %v4592
      %v4773 = vpack.c.b16 %v4602, %v4593
      %v4774 = vpack.c.b16 %v4603, %v4594
      %v4775 = vpack.c.b16 %v4604, %v4595
      %v4776 = vpack.c.b16 %v4605, %v4596
      %v4777 = vpack.c.b16 %v4606, %v4597
      %v4778 = vpack.c.b16 %v4616, %v4607
      %v4779 = vpack.c.b16 %v4617, %v4608
      %v4780 = vpack.c.b16 %v4618, %v4609
      %v4781 = vpack.c.b16 %v4619, %v4610
      %v4782 = vpack.c.b16 %v4620, %v4611
      %v4783 = vpack.c.b16 %v4621, %v4612
      %v4784 = vpack.c.b16 %v4622, %v4613
      %v4785 = vpack.c.b16 %v4623, %v4614
      %v4786 = vpack.c.b16 %v4624, %v4615
      %v5093 = vunpack.c.l.b16 %v3977
      %v5094 = vunpack.c.l.b16 %v3978
      %v5095 = vunpack.c.l.b16 %v3979
      %v5096 = vunpack.c.l.b16 %v3980
      %v5097 = vunpack.c.l.b16 %v3981
      %v5098 = vunpack.c.l.b16 %v3982
      %v5099 = vunpack.c.l.b16 %v3983
      %v5100 = vunpack.c.l.b16 %v3984
      %v5101 = vunpack.c.l.b16 %v3985
      %v5102 = vunpack.c.l.b16 %v3986
      %v5103 = vunpack.c.l.b16 %v3987
      %v5104 = vunpack.c.l.b16 %v3988
      %v5105 = vunpack.c.l.b16 %v3989
      %v5106 = vunpack.c.l.b16 %v3990
      %v5107 = vunpack.c.l.b16 %v3991
      %v5108 = vunpack.c.l.b16 %v3992
      %v5109 = vunpack.c.l.b16 %v3993
      %v5110 = vunpack.c.l.b16 %v3994
      %v5111 = vunpack.c.l.b16 %v3995
      %v5112 = vunpack.c.l.b16 %v3996
      %v5113 = vunpack.c.l.b16 %v3997
      %v5114 = vunpack.c.l.b16 %v3998
      %v5115 = vunpack.c.l.b16 %v3999
      %v5116 = vunpack.c.l.b16 %v4000
      %v5117 = vunpack.c.l.b16 %v4001
      %v5118 = vunpack.c.l.b16 %v4002
      %v5119 = vunpack.c.l.b16 %v4003
      %v5120 = vunpack.c.l.b16 %v4004
      %v5121 = vunpack.c.l.b16 %v4005
      %v5122 = vunpack.c.l.b16 %v4006
      %v5123 = vunpack.c.l.b16 %v4007
      %v5124 = vunpack.c.l.b16 %v4008
      %v5125 = vunpack.c.l.b16 %v4009
      %v5126 = vunpack.c.l.b16 %v4010
      %v5127 = vunpack.c.l.b16 %v4011
      %v5128 = vunpack.c.l.b16 %v4012
      %v5129 = vunpack.c.l.b16 %v4013
      %v5130 = vunpack.c.l.b16 %v4014
      %v5131 = vunpack.c.l.b16 %v4015
      %v5132 = vunpack.c.l.b16 %v4016
      %v5133 = vunpack.c.l.b16 %v4017
      %v5134 = vunpack.c.l.b16 %v4018
      %v5135 = vunpack.c.l.b16 %v4019
      %v5136 = vunpack.c.l.b16 %v4020
      %v5137 = vunpack.c.l.b16 %v4021
      %v5138 = vunpack.c.l.b16 %v4022
      %v5139 = vunpack.c.l.b16 %v4023
      %v5140 = vunpack.c.l.b16 %v4024
      %v5141 = vunpack.c.l.b16 %v4025
      %v5142 = vunpack.c.l.b16 %v4026
      %v5143 = vunpack.c.l.b16 %v4027
      %v5144 = vunpack.c.l.b16 %v4028
      %v5145 = vunpack.c.l.b16 %v4029
      %v5146 = vunpack.c.l.b16 %v4030
      %v5147 = vunpack.c.l.b16 %v4031
      %v5148 = vunpack.c.l.b16 %v4032
      %v5149 = vunpack.c.l.b16 %v4033
      %v5150 = vunpack.c.l.b16 %v4034
      %v5151 = vunpack.c.l.b16 %v4035
      %v5152 = vunpack.c.l.b16 %v4036
      %v5153 = vunpack.c.l.b16 %v4037
      %v5154 = vunpack.c.l.b16 %v4038
      %v5155 = vunpack.c.l.b16 %v4039
      %v5156 = vunpack.c.l.b16 %v4040
      %v5157 = vunpack.c.l.b16 %v4041
      %v5158 = vunpack.c.l.b16 %v4042
      %v5159 = vunpack.c.l.b16 %v4043
      %v5160 = vunpack.c.l.b16 %v4044
      %v5161 = vunpack.c.l.b16 %v4045
      %v5162 = vunpack.c.l.b16 %v4046
      %v5163 = vunpack.c.l.b16 %v4047
      %v5164 = vunpack.c.l.b16 %v4048
      %v5165 = vunpack.c.l.b16 %v4049
      %v5166 = vunpack.c.l.b16 %v4050
      %v5167 = vunpack.c.l.b16 %v4051
      %v5168 = vunpack.c.l.b16 %v4052
      %v5169 = vunpack.c.l.b16 %v4053
      %v5170 = vunpack.c.l.b16 %v4054
      %v5171 = vunpack.c.l.b16 %v4055
      %v5172 = vunpack.c.l.b16 %v4056
      %v5173 = vunpack.c.l.b16 %v4057
      %v5174 = vunpack.c.l.b16 %v4058
      %v5175 = vunpack.c.l.b16 %v4059
      %v5176 = vunpack.c.l.b16 %v4060
      %v5177 = vunpack.c.l.b16 %v4061
      %v5178 = vunpack.c.l.b16 %v4062
      %v5179 = vunpack.c.l.b16 %v4063
      %v5180 = vunpack.c.l.b16 %v4064
      %v5181 = vunpack.c.l.b16 %v4065
      %v5182 = vunpack.c.l.b16 %v4066
      %v5183 = vunpack.c.l.b16 %v4067
      %v5184 = vunpack.c.l.b16 %v4068
      %v5185 = vunpack.c.l.b16 %v4069
      %v5186 = vunpack.c.l.b16 %v4070
      %v5187 = vunpack.c.l.b16 %v4071
      %v5188 = vunpack.c.l.b16 %v4072
      %v5189 = vunpack.c.l.b16 %v4073
      %v5190 = vunpack.c.l.b16 %v4074
      %v5191 = vunpack.c.l.b16 %v4075
      %v5192 = vunpack.c.l.b16 %v4076
      %v5193 = vunpack.c.l.b16 %v4077
      %v5194 = vunpack.c.l.b16 %v4078
      %v5195 = vunpack.c.l.b16 %v4079
      %v5196 = vunpack.c.l.b16 %v4080
      %v5197 = vunpack.c.l.b16 %v4081
      %v5198 = vunpack.c.l.b16 %v4082
      %v5199 = vunpack.c.l.b16 %v4083
      %v5200 = vunpack.c.l.b16 %v4084
      %v5201 = vunpack.c.l.b16 %v4085
      %v5202 = vunpack.c.l.b16 %v4086
      %v5203 = vunpack.c.l.b16 %v4087
      %v5204 = vunpack.c.l.b16 %v4088
      %v5205 = vunpack.c.l.b16 %v4089
      %v5206 = vunpack.c.l.b16 %v4090
      %v5207 = vunpack.c.l.b16 %v4091
      %v5208 = vunpack.c.l.b16 %v4092
      %v5209 = vunpack.c.l.b16 %v4093
      %v5210 = vunpack.c.l.b16 %v4094
      %v5211 = vunpack.c.l.b16 %v4095
      %v5212 = vunpack.c.l.b16 %v4096
      %v5213 = vunpack.c.l.b16 %v4097
      %v5214 = vunpack.c.l.b16 %v4098
      %v5215 = vunpack.c.l.b16 %v4099
      %v5216 = vunpack.c.l.b16 %v4100
      %v5217 = vunpack.c.l.b16 %v4101
      %v5218 = vunpack.c.l.b16 %v4102
      %v5219 = vunpack.c.l.b16 %v4103
      %v5220 = vunpack.c.l.b16 %v4104
      %v5221 = vunpack.c.l.b16 %v4105
      %v5222 = vunpack.c.l.b16 %v4106
      %v5223 = vunpack.c.l.b16 %v4107
      %v5224 = vunpack.c.l.b16 %v4108
      %v5225 = vunpack.c.l.b16 %v4109
      %v5226 = vunpack.c.l.b16 %v4110
      %v5227 = vunpack.c.l.b16 %v4111
      %v5228 = vunpack.c.l.b16 %v4112
      %v5229 = vunpack.c.l.b16 %v4113
      %v5230 = vunpack.c.l.b16 %v4114
      %v5231 = vunpack.c.l.b16 %v4115
      %v5232 = vunpack.c.l.b16 %v4116
      %v5233 = vunpack.c.l.b16 %v4117
      %v5234 = vunpack.c.l.b16 %v4118
      %v5235 = vunpack.c.l.b16 %v4119
      %v5236 = vunpack.c.l.b16 %v4120
      %v5237 = vpack.c.b16 %v5094, %v5093
      %v5238 = vpack.c.b16 %v5096, %v5095
      %v5239 = vpack.c.b16 %v5098, %v5097
      %v5240 = vpack.c.b16 %v5100, %v5099
      %v5241 = vpack.c.b16 %v5102, %v5101
      %v5242 = vpack.c.b16 %v5104, %v5103
      %v5243 = vpack.c.b16 %v5106, %v5105
      %v5244 = vpack.c.b16 %v5108, %v5107
      %v5245 = vpack.c.b16 %v5110, %v5109
      %v5246 = vpack.c.b16 %v5112, %v5111
      %v5247 = vpack.c.b16 %v5114, %v5113
      %v5248 = vpack.c.b16 %v5116, %v5115
      %v5249 = vpack.c.b16 %v5118, %v5117
      %v5250 = vpack.c.b16 %v5120, %v5119
      %v5251 = vpack.c.b16 %v5122, %v5121
      %v5252 = vpack.c.b16 %v5124, %v5123
      %v5253 = vpack.c.b16 %v5126, %v5125
      %v5254 = vpack.c.b16 %v5128, %v5127
      %v5255 = vpack.c.b16 %v5130, %v5129
      %v5256 = vpack.c.b16 %v5132, %v5131
      %v5257 = vpack.c.b16 %v5134, %v5133
      %v5258 = vpack.c.b16 %v5136, %v5135
      %v5259 = vpack.c.b16 %v5138, %v5137
      %v5260 = vpack.c.b16 %v5140, %v5139
      %v5261 = vpack.c.b16 %v5142, %v5141
      %v5262 = vpack.c.b16 %v5144, %v5143
      %v5263 = vpack.c.b16 %v5146, %v5145
      %v5264 = vpack.c.b16 %v5148, %v5147
      %v5265 = vpack.c.b16 %v5150, %v5149
      %v5266 = vpack.c.b16 %v5152, %v5151
      %v5267 = vpack.c.b16 %v5154, %v5153
      %v5268 = vpack.c.b16 %v5156, %v5155
      %v5269 = vpack.c.b16 %v5158, %v5157
      %v5270 = vpack.c.b16 %v5160, %v5159
      %v5271 = vpack.c.b16 %v5162, %v5161
      %v5272 = vpack.c.b16 %v5164, %v5163
      %v5273 = vpack.c.b16 %v5166, %v5165
      %v5274 = vpack.c.b16 %v5168, %v5167
      %v5275 = vpack.c.b16 %v5170, %v5169
      %v5276 = vpack.c.b16 %v5172, %v5171
      %v5277 = vpack.c.b16 %v5174, %v5173
      %v5278 = vpack.c.b16 %v5176, %v5175
      %v5279 = vpack.c.b16 %v5178, %v5177
      %v5280 = vpack.c.b16 %v5180, %v5179
      %v5281 = vpack.c.b16 %v5182, %v5181
      %v5282 = vpack.c.b16 %v5184, %v5183
      %v5283 = vpack.c.b16 %v5186, %v5185
      %v5284 = vpack.c.b16 %v5188, %v5187
      %v5285 = vpack.c.b16 %v5190, %v5189
      %v5286 = vpack.c.b16 %v5192, %v5191
      %v5287 = vpack.c.b16 %v5194, %v5193
      %v5288 = vpack.c.b16 %v5196, %v5195
      %v5289 = vpack.c.b16 %v5198, %v5197
      %v5290 = vpack.c.b16 %v5200, %v5199
      %v5291 = vpack.c.b16 %v5202, %v5201
      %v5292 = vpack.c.b16 %v5204, %v5203
      %v5293 = vpack.c.b16 %v5206, %v5205
      %v5294 = vpack.c.b16 %v5208, %v5207
      %v5295 = vpack.c.b16 %v5210, %v5209
      %v5296 = vpack.c.b16 %v5212, %v5211
      %v5297 = vpack.c.b16 %v5214, %v5213
      %v5298 = vpack.c.b16 %v5216, %v5215
      %v5299 = vpack.c.b16 %v5218, %v5217
      %v5300 = vpack.c.b16 %v5220, %v5219
      %v5301 = vpack.c.b16 %v5222, %v5221
      %v5302 = vpack.c.b16 %v5224, %v5223
      %v5303 = vpack.c.b16 %v5226, %v5225
      %v5304 = vpack.c.b16 %v5228, %v5227
      %v5305 = vpack.c.b16 %v5230, %v5229
      %v5306 = vpack.c.b16 %v5232, %v5231
      %v5307 = vpack.c.b16 %v5234, %v5233
      %v5308 = vpack.c.b16 %v5236, %v5235
      %5381 = vmatpush.bf16.msra.mxu0 %v5244
      %5382 = vmatpush.bf16.msra.mxu0 %v5243
      %5383 = vmatpush.bf16.msra.mxu0 %v5242
      %5384 = vmatpush.bf16.msra.mxu0 %v5241
      %5385 = vmatpush.bf16.msra.mxu0 %v5240
      %5386 = vmatpush.bf16.msra.mxu0 %v5239
      %5387 = vmatpush.bf16.msra.mxu0 %v5238
      %5388 = vmatpush.bf16.msra.mxu0 %v5237
      %5389 = vmatmul.bf16.gmra.mxu0 %v4625
      %v5390 = vpop.f32.mrf.mxu0
      %v5391 = vadd.f32 0.0, %v5390
      %v5392 = vpop.f32.mrf.mxu0
      %v5393 = vadd.f32 0.0, %v5392
      %5394 = vmatmul.bf16.gmra.mxu0 %v4634
      %v5395 = vpop.f32.mrf.mxu0
      %v5396 = vadd.f32 0.0, %v5395
      %v5397 = vpop.f32.mrf.mxu0
      %v5398 = vadd.f32 0.0, %v5397
      %5399 = vmatmul.bf16.gmra.mxu0 %v4643
      %v5400 = vpop.f32.mrf.mxu0
      %v5401 = vadd.f32 0.0, %v5400
      %v5402 = vpop.f32.mrf.mxu0
      %v5403 = vadd.f32 0.0, %v5402
      %5404 = vmatmul.bf16.gmra.mxu0 %v4652
      %v5405 = vpop.f32.mrf.mxu0
      %v5406 = vadd.f32 0.0, %v5405
      %v5407 = vpop.f32.mrf.mxu0
      %v5408 = vadd.f32 0.0, %v5407
      %5409 = vmatmul.bf16.gmra.mxu0 %v4661
      %v5410 = vpop.f32.mrf.mxu0
      %v5411 = vadd.f32 0.0, %v5410
      %v5412 = vpop.f32.mrf.mxu0
      %v5413 = vadd.f32 0.0, %v5412
      %5414 = vmatmul.bf16.gmra.mxu0 %v4670
      %v5415 = vpop.f32.mrf.mxu0
      %v5416 = vadd.f32 0.0, %v5415
      %v5417 = vpop.f32.mrf.mxu0
      %v5418 = vadd.f32 0.0, %v5417
      %5419 = vmatmul.bf16.gmra.mxu0 %v4679
      %v5420 = vpop.f32.mrf.mxu0
      %v5421 = vadd.f32 0.0, %v5420
      %v5422 = vpop.f32.mrf.mxu0
      %v5423 = vadd.f32 0.0, %v5422
      %5424 = vmatmul.bf16.gmra.mxu0 %v4688
      %v5425 = vpop.f32.mrf.mxu0
      %v5426 = vadd.f32 0.0, %v5425
      %v5427 = vpop.f32.mrf.mxu0
      %v5428 = vadd.f32 0.0, %v5427
      %5429 = vmatmul.bf16.gmra.mxu0 %v4697
      %v5430 = vpop.f32.mrf.mxu0
      %v5431 = vadd.f32 0.0, %v5430
      %v5432 = vpop.f32.mrf.mxu0
      %v5433 = vadd.f32 0.0, %v5432
      %5434 = vmatmul.bf16.gmra.mxu0 %v4706
      %v5435 = vpop.f32.mrf.mxu0
      %v5436 = vadd.f32 0.0, %v5435
      %v5437 = vpop.f32.mrf.mxu0
      %v5438 = vadd.f32 0.0, %v5437
      %5439 = vmatmul.bf16.gmra.mxu0 %v4715
      %v5440 = vpop.f32.mrf.mxu0
      %v5441 = vadd.f32 0.0, %v5440
      %v5442 = vpop.f32.mrf.mxu0
      %v5443 = vadd.f32 0.0, %v5442
      %5444 = vmatmul.bf16.gmra.mxu0 %v4724
      %v5445 = vpop.f32.mrf.mxu0
      %v5446 = vadd.f32 0.0, %v5445
      %v5447 = vpop.f32.mrf.mxu0
      %v5448 = vadd.f32 0.0, %v5447
      %5449 = vmatmul.bf16.gmra.mxu0 %v4733
      %v5450 = vpop.f32.mrf.mxu0
      %v5451 = vadd.f32 0.0, %v5450
      %v5452 = vpop.f32.mrf.mxu0
      %v5453 = vadd.f32 0.0, %v5452
      %5454 = vmatmul.bf16.gmra.mxu0 %v4742
      %v5455 = vpop.f32.mrf.mxu0
      %v5456 = vadd.f32 0.0, %v5455
      %v5457 = vpop.f32.mrf.mxu0
      %v5458 = vadd.f32 0.0, %v5457
      %5459 = vmatmul.bf16.gmra.mxu0 %v4751
      %v5460 = vpop.f32.mrf.mxu0
      %v5461 = vadd.f32 0.0, %v5460
      %v5462 = vpop.f32.mrf.mxu0
      %v5463 = vadd.f32 0.0, %v5462
      %5464 = vmatmul.bf16.gmra.mxu0 %v4760
      %v5465 = vpop.f32.mrf.mxu0
      %v5466 = vadd.f32 0.0, %v5465
      %v5467 = vpop.f32.mrf.mxu0
      %v5468 = vadd.f32 0.0, %v5467
      %5469 = vmatmul.bf16.gmra.mxu0 %v4769
      %v5470 = vpop.f32.mrf.mxu0
      %v5471 = vadd.f32 0.0, %v5470
      %v5472 = vpop.f32.mrf.mxu0
      %v5473 = vadd.f32 0.0, %v5472
      %5474 = vmatmul.bf16.gmra.mxu0 %v4778
      %v5475 = vpop.f32.mrf.mxu0
      %v5476 = vadd.f32 0.0, %v5475
      %v5477 = vpop.f32.mrf.mxu0
      %v5478 = vadd.f32 0.0, %v5477
      %5479 = vdwg.mxu0
      %5480 = vmatpush.bf16.msra.mxu0 %v5252
      %5481 = vmatpush.bf16.msra.mxu0 %v5251
      %5482 = vmatpush.bf16.msra.mxu0 %v5250
      %5483 = vmatpush.bf16.msra.mxu0 %v5249
      %5484 = vmatpush.bf16.msra.mxu0 %v5248
      %5485 = vmatpush.bf16.msra.mxu0 %v5247
      %5486 = vmatpush.bf16.msra.mxu0 %v5246
      %5487 = vmatpush.bf16.msra.mxu0 %v5245
      %5488 = vmatmul.bf16.gmra.mxu0 %v4626
      %v5489 = vpop.f32.mrf.mxu0
      %v5490 = vadd.f32 %v5391, %v5489
      %v5491 = vpop.f32.mrf.mxu0
      %v5492 = vadd.f32 %v5393, %v5491
      %5493 = vmatmul.bf16.gmra.mxu0 %v4635
      %v5494 = vpop.f32.mrf.mxu0
      %v5495 = vadd.f32 %v5396, %v5494
      %v5496 = vpop.f32.mrf.mxu0
      %v5497 = vadd.f32 %v5398, %v5496
      %5498 = vmatmul.bf16.gmra.mxu0 %v4644
      %v5499 = vpop.f32.mrf.mxu0
      %v5500 = vadd.f32 %v5401, %v5499
      %v5501 = vpop.f32.mrf.mxu0
      %v5502 = vadd.f32 %v5403, %v5501
      %5503 = vmatmul.bf16.gmra.mxu0 %v4653
      %v5504 = vpop.f32.mrf.mxu0
      %v5505 = vadd.f32 %v5406, %v5504
      %v5506 = vpop.f32.mrf.mxu0
      %v5507 = vadd.f32 %v5408, %v5506
      %5508 = vmatmul.bf16.gmra.mxu0 %v4662
      %v5509 = vpop.f32.mrf.mxu0
      %v5510 = vadd.f32 %v5411, %v5509
      %v5511 = vpop.f32.mrf.mxu0
      %v5512 = vadd.f32 %v5413, %v5511
      %5513 = vmatmul.bf16.gmra.mxu0 %v4671
      %v5514 = vpop.f32.mrf.mxu0
      %v5515 = vadd.f32 %v5416, %v5514
      %v5516 = vpop.f32.mrf.mxu0
      %v5517 = vadd.f32 %v5418, %v5516
      %5518 = vmatmul.bf16.gmra.mxu0 %v4680
      %v5519 = vpop.f32.mrf.mxu0
      %v5520 = vadd.f32 %v5421, %v5519
      %v5521 = vpop.f32.mrf.mxu0
      %v5522 = vadd.f32 %v5423, %v5521
      %5523 = vmatmul.bf16.gmra.mxu0 %v4689
      %v5524 = vpop.f32.mrf.mxu0
      %v5525 = vadd.f32 %v5426, %v5524
      %v5526 = vpop.f32.mrf.mxu0
      %v5527 = vadd.f32 %v5428, %v5526
      %5528 = vmatmul.bf16.gmra.mxu0 %v4698
      %v5529 = vpop.f32.mrf.mxu0
      %v5530 = vadd.f32 %v5431, %v5529
      %v5531 = vpop.f32.mrf.mxu0
      %v5532 = vadd.f32 %v5433, %v5531
      %5533 = vmatmul.bf16.gmra.mxu0 %v4707
      %v5534 = vpop.f32.mrf.mxu0
      %v5535 = vadd.f32 %v5436, %v5534
      %v5536 = vpop.f32.mrf.mxu0
      %v5537 = vadd.f32 %v5438, %v5536
      %5538 = vmatmul.bf16.gmra.mxu0 %v4716
      %v5539 = vpop.f32.mrf.mxu0
      %v5540 = vadd.f32 %v5441, %v5539
      %v5541 = vpop.f32.mrf.mxu0
      %v5542 = vadd.f32 %v5443, %v5541
      %5543 = vmatmul.bf16.gmra.mxu0 %v4725
      %v5544 = vpop.f32.mrf.mxu0
      %v5545 = vadd.f32 %v5446, %v5544
      %v5546 = vpop.f32.mrf.mxu0
      %v5547 = vadd.f32 %v5448, %v5546
      %5548 = vmatmul.bf16.gmra.mxu0 %v4734
      %v5549 = vpop.f32.mrf.mxu0
      %v5550 = vadd.f32 %v5451, %v5549
      %v5551 = vpop.f32.mrf.mxu0
      %v5552 = vadd.f32 %v5453, %v5551
      %5553 = vmatmul.bf16.gmra.mxu0 %v4743
      %v5554 = vpop.f32.mrf.mxu0
      %v5555 = vadd.f32 %v5456, %v5554
      %v5556 = vpop.f32.mrf.mxu0
      %v5557 = vadd.f32 %v5458, %v5556
      %5558 = vmatmul.bf16.gmra.mxu0 %v4752
      %v5559 = vpop.f32.mrf.mxu0
      %v5560 = vadd.f32 %v5461, %v5559
      %v5561 = vpop.f32.mrf.mxu0
      %v5562 = vadd.f32 %v5463, %v5561
      %5563 = vmatmul.bf16.gmra.mxu0 %v4761
      %v5564 = vpop.f32.mrf.mxu0
      %v5565 = vadd.f32 %v5466, %v5564
      %v5566 = vpop.f32.mrf.mxu0
      %v5567 = vadd.f32 %v5468, %v5566
      %5568 = vmatmul.bf16.gmra.mxu0 %v4770
      %v5569 = vpop.f32.mrf.mxu0
      %v5570 = vadd.f32 %v5471, %v5569
      %v5571 = vpop.f32.mrf.mxu0
      %v5572 = vadd.f32 %v5473, %v5571
      %5573 = vmatmul.bf16.gmra.mxu0 %v4779
      %v5574 = vpop.f32.mrf.mxu0
      %v5575 = vadd.f32 %v5476, %v5574
      %v5576 = vpop.f32.mrf.mxu0
      %v5577 = vadd.f32 %v5478, %v5576
      %5578 = vdwg.mxu0
      %5579 = vmatpush.bf16.msra.mxu0 %v5260
      %5580 = vmatpush.bf16.msra.mxu0 %v5259
      %5581 = vmatpush.bf16.msra.mxu0 %v5258
      %5582 = vmatpush.bf16.msra.mxu0 %v5257
      %5583 = vmatpush.bf16.msra.mxu0 %v5256
      %5584 = vmatpush.bf16.msra.mxu0 %v5255
      %5585 = vmatpush.bf16.msra.mxu0 %v5254
      %5586 = vmatpush.bf16.msra.mxu0 %v5253
      %5587 = vmatmul.bf16.gmra.mxu0 %v4627
      %v5588 = vpop.f32.mrf.mxu0
      %v5589 = vadd.f32 %v5490, %v5588
      %v5590 = vpop.f32.mrf.mxu0
      %v5591 = vadd.f32 %v5492, %v5590
      %5592 = vmatmul.bf16.gmra.mxu0 %v4636
      %v5593 = vpop.f32.mrf.mxu0
      %v5594 = vadd.f32 %v5495, %v5593
      %v5595 = vpop.f32.mrf.mxu0
      %v5596 = vadd.f32 %v5497, %v5595
      %5597 = vmatmul.bf16.gmra.mxu0 %v4645
      %v5598 = vpop.f32.mrf.mxu0
      %v5599 = vadd.f32 %v5500, %v5598
      %v5600 = vpop.f32.mrf.mxu0
      %v5601 = vadd.f32 %v5502, %v5600
      %5602 = vmatmul.bf16.gmra.mxu0 %v4654
      %v5603 = vpop.f32.mrf.mxu0
      %v5604 = vadd.f32 %v5505, %v5603
      %v5605 = vpop.f32.mrf.mxu0
      %v5606 = vadd.f32 %v5507, %v5605
      %5607 = vmatmul.bf16.gmra.mxu0 %v4663
      %v5608 = vpop.f32.mrf.mxu0
      %v5609 = vadd.f32 %v5510, %v5608
      %v5610 = vpop.f32.mrf.mxu0
      %v5611 = vadd.f32 %v5512, %v5610
      %5612 = vmatmul.bf16.gmra.mxu0 %v4672
      %v5613 = vpop.f32.mrf.mxu0
      %v5614 = vadd.f32 %v5515, %v5613
      %v5615 = vpop.f32.mrf.mxu0
      %v5616 = vadd.f32 %v5517, %v5615
      %5617 = vmatmul.bf16.gmra.mxu0 %v4681
      %v5618 = vpop.f32.mrf.mxu0
      %v5619 = vadd.f32 %v5520, %v5618
      %v5620 = vpop.f32.mrf.mxu0
      %v5621 = vadd.f32 %v5522, %v5620
      %5622 = vmatmul.bf16.gmra.mxu0 %v4690
      %v5623 = vpop.f32.mrf.mxu0
      %v5624 = vadd.f32 %v5525, %v5623
      %v5625 = vpop.f32.mrf.mxu0
      %v5626 = vadd.f32 %v5527, %v5625
      %5627 = vmatmul.bf16.gmra.mxu0 %v4699
      %v5628 = vpop.f32.mrf.mxu0
      %v5629 = vadd.f32 %v5530, %v5628
      %v5630 = vpop.f32.mrf.mxu0
      %v5631 = vadd.f32 %v5532, %v5630
      %5632 = vmatmul.bf16.gmra.mxu0 %v4708
      %v5633 = vpop.f32.mrf.mxu0
      %v5634 = vadd.f32 %v5535, %v5633
      %v5635 = vpop.f32.mrf.mxu0
      %v5636 = vadd.f32 %v5537, %v5635
      %5637 = vmatmul.bf16.gmra.mxu0 %v4717
      %v5638 = vpop.f32.mrf.mxu0
      %v5639 = vadd.f32 %v5540, %v5638
      %v5640 = vpop.f32.mrf.mxu0
      %v5641 = vadd.f32 %v5542, %v5640
      %5642 = vmatmul.bf16.gmra.mxu0 %v4726
      %v5643 = vpop.f32.mrf.mxu0
      %v5644 = vadd.f32 %v5545, %v5643
      %v5645 = vpop.f32.mrf.mxu0
      %v5646 = vadd.f32 %v5547, %v5645
      %5647 = vmatmul.bf16.gmra.mxu0 %v4735
      %v5648 = vpop.f32.mrf.mxu0
      %v5649 = vadd.f32 %v5550, %v5648
      %v5650 = vpop.f32.mrf.mxu0
      %v5651 = vadd.f32 %v5552, %v5650
      %5652 = vmatmul.bf16.gmra.mxu0 %v4744
      %v5653 = vpop.f32.mrf.mxu0
      %v5654 = vadd.f32 %v5555, %v5653
      %v5655 = vpop.f32.mrf.mxu0
      %v5656 = vadd.f32 %v5557, %v5655
      %5657 = vmatmul.bf16.gmra.mxu0 %v4753
      %v5658 = vpop.f32.mrf.mxu0
      %v5659 = vadd.f32 %v5560, %v5658
      %v5660 = vpop.f32.mrf.mxu0
      %v5661 = vadd.f32 %v5562, %v5660
      %5662 = vmatmul.bf16.gmra.mxu0 %v4762
      %v5663 = vpop.f32.mrf.mxu0
      %v5664 = vadd.f32 %v5565, %v5663
      %v5665 = vpop.f32.mrf.mxu0
      %v5666 = vadd.f32 %v5567, %v5665
      %5667 = vmatmul.bf16.gmra.mxu0 %v4771
      %v5668 = vpop.f32.mrf.mxu0
      %v5669 = vadd.f32 %v5570, %v5668
      %v5670 = vpop.f32.mrf.mxu0
      %v5671 = vadd.f32 %v5572, %v5670
      %5672 = vmatmul.bf16.gmra.mxu0 %v4780
      %v5673 = vpop.f32.mrf.mxu0
      %v5674 = vadd.f32 %v5575, %v5673
      %v5675 = vpop.f32.mrf.mxu0
      %v5676 = vadd.f32 %v5577, %v5675
      %5677 = vdwg.mxu0
      %5678 = vmatpush.bf16.msra.mxu0 %v5268
      %5679 = vmatpush.bf16.msra.mxu0 %v5267
      %5680 = vmatpush.bf16.msra.mxu0 %v5266
      %5681 = vmatpush.bf16.msra.mxu0 %v5265
      %5682 = vmatpush.bf16.msra.mxu0 %v5264
      %5683 = vmatpush.bf16.msra.mxu0 %v5263
      %5684 = vmatpush.bf16.msra.mxu0 %v5262
      %5685 = vmatpush.bf16.msra.mxu0 %v5261
      %5686 = vmatmul.bf16.gmra.mxu0 %v4628
      %v5687 = vpop.f32.mrf.mxu0
      %v5688 = vadd.f32 %v5589, %v5687
      %v5689 = vpop.f32.mrf.mxu0
      %v5690 = vadd.f32 %v5591, %v5689
      %5691 = vmatmul.bf16.gmra.mxu0 %v4637
      %v5692 = vpop.f32.mrf.mxu0
      %v5693 = vadd.f32 %v5594, %v5692
      %v5694 = vpop.f32.mrf.mxu0
      %v5695 = vadd.f32 %v5596, %v5694
      %5696 = vmatmul.bf16.gmra.mxu0 %v4646
      %v5697 = vpop.f32.mrf.mxu0
      %v5698 = vadd.f32 %v5599, %v5697
      %v5699 = vpop.f32.mrf.mxu0
      %v5700 = vadd.f32 %v5601, %v5699
      %5701 = vmatmul.bf16.gmra.mxu0 %v4655
      %v5702 = vpop.f32.mrf.mxu0
      %v5703 = vadd.f32 %v5604, %v5702
      %v5704 = vpop.f32.mrf.mxu0
      %v5705 = vadd.f32 %v5606, %v5704
      %5706 = vmatmul.bf16.gmra.mxu0 %v4664
      %v5707 = vpop.f32.mrf.mxu0
      %v5708 = vadd.f32 %v5609, %v5707
      %v5709 = vpop.f32.mrf.mxu0
      %v5710 = vadd.f32 %v5611, %v5709
      %5711 = vmatmul.bf16.gmra.mxu0 %v4673
      %v5712 = vpop.f32.mrf.mxu0
      %v5713 = vadd.f32 %v5614, %v5712
      %v5714 = vpop.f32.mrf.mxu0
      %v5715 = vadd.f32 %v5616, %v5714
      %5716 = vmatmul.bf16.gmra.mxu0 %v4682
      %v5717 = vpop.f32.mrf.mxu0
      %v5718 = vadd.f32 %v5619, %v5717
      %v5719 = vpop.f32.mrf.mxu0
      %v5720 = vadd.f32 %v5621, %v5719
      %5721 = vmatmul.bf16.gmra.mxu0 %v4691
      %v5722 = vpop.f32.mrf.mxu0
      %v5723 = vadd.f32 %v5624, %v5722
      %v5724 = vpop.f32.mrf.mxu0
      %v5725 = vadd.f32 %v5626, %v5724
      %5726 = vmatmul.bf16.gmra.mxu0 %v4700
      %v5727 = vpop.f32.mrf.mxu0
      %v5728 = vadd.f32 %v5629, %v5727
      %v5729 = vpop.f32.mrf.mxu0
      %v5730 = vadd.f32 %v5631, %v5729
      %5731 = vmatmul.bf16.gmra.mxu0 %v4709
      %v5732 = vpop.f32.mrf.mxu0
      %v5733 = vadd.f32 %v5634, %v5732
      %v5734 = vpop.f32.mrf.mxu0
      %v5735 = vadd.f32 %v5636, %v5734
      %5736 = vmatmul.bf16.gmra.mxu0 %v4718
      %v5737 = vpop.f32.mrf.mxu0
      %v5738 = vadd.f32 %v5639, %v5737
      %v5739 = vpop.f32.mrf.mxu0
      %v5740 = vadd.f32 %v5641, %v5739
      %5741 = vmatmul.bf16.gmra.mxu0 %v4727
      %v5742 = vpop.f32.mrf.mxu0
      %v5743 = vadd.f32 %v5644, %v5742
      %v5744 = vpop.f32.mrf.mxu0
      %v5745 = vadd.f32 %v5646, %v5744
      %5746 = vmatmul.bf16.gmra.mxu0 %v4736
      %v5747 = vpop.f32.mrf.mxu0
      %v5748 = vadd.f32 %v5649, %v5747
      %v5749 = vpop.f32.mrf.mxu0
      %v5750 = vadd.f32 %v5651, %v5749
      %5751 = vmatmul.bf16.gmra.mxu0 %v4745
      %v5752 = vpop.f32.mrf.mxu0
      %v5753 = vadd.f32 %v5654, %v5752
      %v5754 = vpop.f32.mrf.mxu0
      %v5755 = vadd.f32 %v5656, %v5754
      %5756 = vmatmul.bf16.gmra.mxu0 %v4754
      %v5757 = vpop.f32.mrf.mxu0
      %v5758 = vadd.f32 %v5659, %v5757
      %v5759 = vpop.f32.mrf.mxu0
      %v5760 = vadd.f32 %v5661, %v5759
      %5761 = vmatmul.bf16.gmra.mxu0 %v4763
      %v5762 = vpop.f32.mrf.mxu0
      %v5763 = vadd.f32 %v5664, %v5762
      %v5764 = vpop.f32.mrf.mxu0
      %v5765 = vadd.f32 %v5666, %v5764
      %5766 = vmatmul.bf16.gmra.mxu0 %v4772
      %v5767 = vpop.f32.mrf.mxu0
      %v5768 = vadd.f32 %v5669, %v5767
      %v5769 = vpop.f32.mrf.mxu0
      %v5770 = vadd.f32 %v5671, %v5769
      %5771 = vmatmul.bf16.gmra.mxu0 %v4781
      %v5772 = vpop.f32.mrf.mxu0
      %v5773 = vadd.f32 %v5674, %v5772
      %v5774 = vpop.f32.mrf.mxu0
      %v5775 = vadd.f32 %v5676, %v5774
      %5776 = vdwg.mxu0
      %5777 = vmatpush.bf16.msra.mxu0 %v5276
      %5778 = vmatpush.bf16.msra.mxu0 %v5275
      %5779 = vmatpush.bf16.msra.mxu0 %v5274
      %5780 = vmatpush.bf16.msra.mxu0 %v5273
      %5781 = vmatpush.bf16.msra.mxu0 %v5272
      %5782 = vmatpush.bf16.msra.mxu0 %v5271
      %5783 = vmatpush.bf16.msra.mxu0 %v5270
      %5784 = vmatpush.bf16.msra.mxu0 %v5269
      %5785 = vmatmul.bf16.gmra.mxu0 %v4629
      %v5786 = vpop.f32.mrf.mxu0
      %v5787 = vadd.f32 %v5688, %v5786
      %v5788 = vpop.f32.mrf.mxu0
      %v5789 = vadd.f32 %v5690, %v5788
      %5790 = vmatmul.bf16.gmra.mxu0 %v4638
      %v5791 = vpop.f32.mrf.mxu0
      %v5792 = vadd.f32 %v5693, %v5791
      %v5793 = vpop.f32.mrf.mxu0
      %v5794 = vadd.f32 %v5695, %v5793
      %5795 = vmatmul.bf16.gmra.mxu0 %v4647
      %v5796 = vpop.f32.mrf.mxu0
      %v5797 = vadd.f32 %v5698, %v5796
      %v5798 = vpop.f32.mrf.mxu0
      %v5799 = vadd.f32 %v5700, %v5798
      %5800 = vmatmul.bf16.gmra.mxu0 %v4656
      %v5801 = vpop.f32.mrf.mxu0
      %v5802 = vadd.f32 %v5703, %v5801
      %v5803 = vpop.f32.mrf.mxu0
      %v5804 = vadd.f32 %v5705, %v5803
      %5805 = vmatmul.bf16.gmra.mxu0 %v4665
      %v5806 = vpop.f32.mrf.mxu0
      %v5807 = vadd.f32 %v5708, %v5806
      %v5808 = vpop.f32.mrf.mxu0
      %v5809 = vadd.f32 %v5710, %v5808
      %5810 = vmatmul.bf16.gmra.mxu0 %v4674
      %v5811 = vpop.f32.mrf.mxu0
      %v5812 = vadd.f32 %v5713, %v5811
      %v5813 = vpop.f32.mrf.mxu0
      %v5814 = vadd.f32 %v5715, %v5813
      %5815 = vmatmul.bf16.gmra.mxu0 %v4683
      %v5816 = vpop.f32.mrf.mxu0
      %v5817 = vadd.f32 %v5718, %v5816
      %v5818 = vpop.f32.mrf.mxu0
      %v5819 = vadd.f32 %v5720, %v5818
      %5820 = vmatmul.bf16.gmra.mxu0 %v4692
      %v5821 = vpop.f32.mrf.mxu0
      %v5822 = vadd.f32 %v5723, %v5821
      %v5823 = vpop.f32.mrf.mxu0
      %v5824 = vadd.f32 %v5725, %v5823
      %5825 = vmatmul.bf16.gmra.mxu0 %v4701
      %v5826 = vpop.f32.mrf.mxu0
      %v5827 = vadd.f32 %v5728, %v5826
      %v5828 = vpop.f32.mrf.mxu0
      %v5829 = vadd.f32 %v5730, %v5828
      %5830 = vmatmul.bf16.gmra.mxu0 %v4710
      %v5831 = vpop.f32.mrf.mxu0
      %v5832 = vadd.f32 %v5733, %v5831
      %v5833 = vpop.f32.mrf.mxu0
      %v5834 = vadd.f32 %v5735, %v5833
      %5835 = vmatmul.bf16.gmra.mxu0 %v4719
      %v5836 = vpop.f32.mrf.mxu0
      %v5837 = vadd.f32 %v5738, %v5836
      %v5838 = vpop.f32.mrf.mxu0
      %v5839 = vadd.f32 %v5740, %v5838
      %5840 = vmatmul.bf16.gmra.mxu0 %v4728
      %v5841 = vpop.f32.mrf.mxu0
      %v5842 = vadd.f32 %v5743, %v5841
      %v5843 = vpop.f32.mrf.mxu0
      %v5844 = vadd.f32 %v5745, %v5843
      %5845 = vmatmul.bf16.gmra.mxu0 %v4737
      %v5846 = vpop.f32.mrf.mxu0
      %v5847 = vadd.f32 %v5748, %v5846
      %v5848 = vpop.f32.mrf.mxu0
      %v5849 = vadd.f32 %v5750, %v5848
      %5850 = vmatmul.bf16.gmra.mxu0 %v4746
      %v5851 = vpop.f32.mrf.mxu0
      %v5852 = vadd.f32 %v5753, %v5851
      %v5853 = vpop.f32.mrf.mxu0
      %v5854 = vadd.f32 %v5755, %v5853
      %5855 = vmatmul.bf16.gmra.mxu0 %v4755
      %v5856 = vpop.f32.mrf.mxu0
      %v5857 = vadd.f32 %v5758, %v5856
      %v5858 = vpop.f32.mrf.mxu0
      %v5859 = vadd.f32 %v5760, %v5858
      %5860 = vmatmul.bf16.gmra.mxu0 %v4764
      %v5861 = vpop.f32.mrf.mxu0
      %v5862 = vadd.f32 %v5763, %v5861
      %v5863 = vpop.f32.mrf.mxu0
      %v5864 = vadd.f32 %v5765, %v5863
      %5865 = vmatmul.bf16.gmra.mxu0 %v4773
      %v5866 = vpop.f32.mrf.mxu0
      %v5867 = vadd.f32 %v5768, %v5866
      %v5868 = vpop.f32.mrf.mxu0
      %v5869 = vadd.f32 %v5770, %v5868
      %5870 = vmatmul.bf16.gmra.mxu0 %v4782
      %v5871 = vpop.f32.mrf.mxu0
      %v5872 = vadd.f32 %v5773, %v5871
      %v5873 = vpop.f32.mrf.mxu0
      %v5874 = vadd.f32 %v5775, %v5873
      %5875 = vdwg.mxu0
      %5876 = vmatpush.bf16.msra.mxu0 %v5284
      %5877 = vmatpush.bf16.msra.mxu0 %v5283
      %5878 = vmatpush.bf16.msra.mxu0 %v5282
      %5879 = vmatpush.bf16.msra.mxu0 %v5281
      %5880 = vmatpush.bf16.msra.mxu0 %v5280
      %5881 = vmatpush.bf16.msra.mxu0 %v5279
      %5882 = vmatpush.bf16.msra.mxu0 %v5278
      %5883 = vmatpush.bf16.msra.mxu0 %v5277
      %5884 = vmatmul.bf16.gmra.mxu0 %v4630
      %v5885 = vpop.f32.mrf.mxu0
      %v5886 = vadd.f32 %v5787, %v5885
      %v5887 = vpop.f32.mrf.mxu0
      %v5888 = vadd.f32 %v5789, %v5887
      %5889 = vmatmul.bf16.gmra.mxu0 %v4639
      %v5890 = vpop.f32.mrf.mxu0
      %v5891 = vadd.f32 %v5792, %v5890
      %v5892 = vpop.f32.mrf.mxu0
      %v5893 = vadd.f32 %v5794, %v5892
      %5894 = vmatmul.bf16.gmra.mxu0 %v4648
      %v5895 = vpop.f32.mrf.mxu0
      %v5896 = vadd.f32 %v5797, %v5895
      %v5897 = vpop.f32.mrf.mxu0
      %v5898 = vadd.f32 %v5799, %v5897
      %5899 = vmatmul.bf16.gmra.mxu0 %v4657
      %v5900 = vpop.f32.mrf.mxu0
      %v5901 = vadd.f32 %v5802, %v5900
      %v5902 = vpop.f32.mrf.mxu0
      %v5903 = vadd.f32 %v5804, %v5902
      %5904 = vmatmul.bf16.gmra.mxu0 %v4666
      %v5905 = vpop.f32.mrf.mxu0
      %v5906 = vadd.f32 %v5807, %v5905
      %v5907 = vpop.f32.mrf.mxu0
      %v5908 = vadd.f32 %v5809, %v5907
      %5909 = vmatmul.bf16.gmra.mxu0 %v4675
      %v5910 = vpop.f32.mrf.mxu0
      %v5911 = vadd.f32 %v5812, %v5910
      %v5912 = vpop.f32.mrf.mxu0
      %v5913 = vadd.f32 %v5814, %v5912
      %5914 = vmatmul.bf16.gmra.mxu0 %v4684
      %v5915 = vpop.f32.mrf.mxu0
      %v5916 = vadd.f32 %v5817, %v5915
      %v5917 = vpop.f32.mrf.mxu0
      %v5918 = vadd.f32 %v5819, %v5917
      %5919 = vmatmul.bf16.gmra.mxu0 %v4693
      %v5920 = vpop.f32.mrf.mxu0
      %v5921 = vadd.f32 %v5822, %v5920
      %v5922 = vpop.f32.mrf.mxu0
      %v5923 = vadd.f32 %v5824, %v5922
      %5924 = vmatmul.bf16.gmra.mxu0 %v4702
      %v5925 = vpop.f32.mrf.mxu0
      %v5926 = vadd.f32 %v5827, %v5925
      %v5927 = vpop.f32.mrf.mxu0
      %v5928 = vadd.f32 %v5829, %v5927
      %5929 = vmatmul.bf16.gmra.mxu0 %v4711
      %v5930 = vpop.f32.mrf.mxu0
      %v5931 = vadd.f32 %v5832, %v5930
      %v5932 = vpop.f32.mrf.mxu0
      %v5933 = vadd.f32 %v5834, %v5932
      %5934 = vmatmul.bf16.gmra.mxu0 %v4720
      %v5935 = vpop.f32.mrf.mxu0
      %v5936 = vadd.f32 %v5837, %v5935
      %v5937 = vpop.f32.mrf.mxu0
      %v5938 = vadd.f32 %v5839, %v5937
      %5939 = vmatmul.bf16.gmra.mxu0 %v4729
      %v5940 = vpop.f32.mrf.mxu0
      %v5941 = vadd.f32 %v5842, %v5940
      %v5942 = vpop.f32.mrf.mxu0
      %v5943 = vadd.f32 %v5844, %v5942
      %5944 = vmatmul.bf16.gmra.mxu0 %v4738
      %v5945 = vpop.f32.mrf.mxu0
      %v5946 = vadd.f32 %v5847, %v5945
      %v5947 = vpop.f32.mrf.mxu0
      %v5948 = vadd.f32 %v5849, %v5947
      %5949 = vmatmul.bf16.gmra.mxu0 %v4747
      %v5950 = vpop.f32.mrf.mxu0
      %v5951 = vadd.f32 %v5852, %v5950
      %v5952 = vpop.f32.mrf.mxu0
      %v5953 = vadd.f32 %v5854, %v5952
      %5954 = vmatmul.bf16.gmra.mxu0 %v4756
      %v5955 = vpop.f32.mrf.mxu0
      %v5956 = vadd.f32 %v5857, %v5955
      %v5957 = vpop.f32.mrf.mxu0
      %v5958 = vadd.f32 %v5859, %v5957
      %5959 = vmatmul.bf16.gmra.mxu0 %v4765
      %v5960 = vpop.f32.mrf.mxu0
      %v5961 = vadd.f32 %v5862, %v5960
      %v5962 = vpop.f32.mrf.mxu0
      %v5963 = vadd.f32 %v5864, %v5962
      %5964 = vmatmul.bf16.gmra.mxu0 %v4774
      %v5965 = vpop.f32.mrf.mxu0
      %v5966 = vadd.f32 %v5867, %v5965
      %v5967 = vpop.f32.mrf.mxu0
      %v5968 = vadd.f32 %v5869, %v5967
      %5969 = vmatmul.bf16.gmra.mxu0 %v4783
      %v5970 = vpop.f32.mrf.mxu0
      %v5971 = vadd.f32 %v5872, %v5970
      %v5972 = vpop.f32.mrf.mxu0
      %v5973 = vadd.f32 %v5874, %v5972
      %5974 = vdwg.mxu0
      %5975 = vmatpush.bf16.msra.mxu0 %v5292
      %5976 = vmatpush.bf16.msra.mxu0 %v5291
      %5977 = vmatpush.bf16.msra.mxu0 %v5290
      %5978 = vmatpush.bf16.msra.mxu0 %v5289
      %5979 = vmatpush.bf16.msra.mxu0 %v5288
      %5980 = vmatpush.bf16.msra.mxu0 %v5287
      %5981 = vmatpush.bf16.msra.mxu0 %v5286
      %5982 = vmatpush.bf16.msra.mxu0 %v5285
      %5983 = vmatmul.bf16.gmra.mxu0 %v4631
      %v5984 = vpop.f32.mrf.mxu0
      %v5985 = vadd.f32 %v5886, %v5984
      %v5986 = vpop.f32.mrf.mxu0
      %v5987 = vadd.f32 %v5888, %v5986
      %5988 = vmatmul.bf16.gmra.mxu0 %v4640
      %v5989 = vpop.f32.mrf.mxu0
      %v5990 = vadd.f32 %v5891, %v5989
      %v5991 = vpop.f32.mrf.mxu0
      %v5992 = vadd.f32 %v5893, %v5991
      %5993 = vmatmul.bf16.gmra.mxu0 %v4649
      %v5994 = vpop.f32.mrf.mxu0
      %v5995 = vadd.f32 %v5896, %v5994
      %v5996 = vpop.f32.mrf.mxu0
      %v5997 = vadd.f32 %v5898, %v5996
      %5998 = vmatmul.bf16.gmra.mxu0 %v4658
      %v5999 = vpop.f32.mrf.mxu0
      %v6000 = vadd.f32 %v5901, %v5999
      %v6001 = vpop.f32.mrf.mxu0
      %v6002 = vadd.f32 %v5903, %v6001
      %6003 = vmatmul.bf16.gmra.mxu0 %v4667
      %v6004 = vpop.f32.mrf.mxu0
      %v6005 = vadd.f32 %v5906, %v6004
      %v6006 = vpop.f32.mrf.mxu0
      %v6007 = vadd.f32 %v5908, %v6006
      %6008 = vmatmul.bf16.gmra.mxu0 %v4676
      %v6009 = vpop.f32.mrf.mxu0
      %v6010 = vadd.f32 %v5911, %v6009
      %v6011 = vpop.f32.mrf.mxu0
      %v6012 = vadd.f32 %v5913, %v6011
      %6013 = vmatmul.bf16.gmra.mxu0 %v4685
      %v6014 = vpop.f32.mrf.mxu0
      %v6015 = vadd.f32 %v5916, %v6014
      %v6016 = vpop.f32.mrf.mxu0
      %v6017 = vadd.f32 %v5918, %v6016
      %6018 = vmatmul.bf16.gmra.mxu0 %v4694
      %v6019 = vpop.f32.mrf.mxu0
      %v6020 = vadd.f32 %v5921, %v6019
      %v6021 = vpop.f32.mrf.mxu0
      %v6022 = vadd.f32 %v5923, %v6021
      %6023 = vmatmul.bf16.gmra.mxu0 %v4703
      %v6024 = vpop.f32.mrf.mxu0
      %v6025 = vadd.f32 %v5926, %v6024
      %v6026 = vpop.f32.mrf.mxu0
      %v6027 = vadd.f32 %v5928, %v6026
      %6028 = vmatmul.bf16.gmra.mxu0 %v4712
      %v6029 = vpop.f32.mrf.mxu0
      %v6030 = vadd.f32 %v5931, %v6029
      %v6031 = vpop.f32.mrf.mxu0
      %v6032 = vadd.f32 %v5933, %v6031
      %6033 = vmatmul.bf16.gmra.mxu0 %v4721
      %v6034 = vpop.f32.mrf.mxu0
      %v6035 = vadd.f32 %v5936, %v6034
      %v6036 = vpop.f32.mrf.mxu0
      %v6037 = vadd.f32 %v5938, %v6036
      %6038 = vmatmul.bf16.gmra.mxu0 %v4730
      %v6039 = vpop.f32.mrf.mxu0
      %v6040 = vadd.f32 %v5941, %v6039
      %v6041 = vpop.f32.mrf.mxu0
      %v6042 = vadd.f32 %v5943, %v6041
      %6043 = vmatmul.bf16.gmra.mxu0 %v4739
      %v6044 = vpop.f32.mrf.mxu0
      %v6045 = vadd.f32 %v5946, %v6044
      %v6046 = vpop.f32.mrf.mxu0
      %v6047 = vadd.f32 %v5948, %v6046
      %6048 = vmatmul.bf16.gmra.mxu0 %v4748
      %v6049 = vpop.f32.mrf.mxu0
      %v6050 = vadd.f32 %v5951, %v6049
      %v6051 = vpop.f32.mrf.mxu0
      %v6052 = vadd.f32 %v5953, %v6051
      %6053 = vmatmul.bf16.gmra.mxu0 %v4757
      %v6054 = vpop.f32.mrf.mxu0
      %v6055 = vadd.f32 %v5956, %v6054
      %v6056 = vpop.f32.mrf.mxu0
      %v6057 = vadd.f32 %v5958, %v6056
      %6058 = vmatmul.bf16.gmra.mxu0 %v4766
      %v6059 = vpop.f32.mrf.mxu0
      %v6060 = vadd.f32 %v5961, %v6059
      %v6061 = vpop.f32.mrf.mxu0
      %v6062 = vadd.f32 %v5963, %v6061
      %6063 = vmatmul.bf16.gmra.mxu0 %v4775
      %v6064 = vpop.f32.mrf.mxu0
      %v6065 = vadd.f32 %v5966, %v6064
      %v6066 = vpop.f32.mrf.mxu0
      %v6067 = vadd.f32 %v5968, %v6066
      %6068 = vmatmul.bf16.gmra.mxu0 %v4784
      %v6069 = vpop.f32.mrf.mxu0
      %v6070 = vadd.f32 %v5971, %v6069
      %v6071 = vpop.f32.mrf.mxu0
      %v6072 = vadd.f32 %v5973, %v6071
      %6073 = vdwg.mxu0
      %6074 = vmatpush.bf16.msra.mxu0 %v5300
      %6075 = vmatpush.bf16.msra.mxu0 %v5299
      %6076 = vmatpush.bf16.msra.mxu0 %v5298
      %6077 = vmatpush.bf16.msra.mxu0 %v5297
      %6078 = vmatpush.bf16.msra.mxu0 %v5296
      %6079 = vmatpush.bf16.msra.mxu0 %v5295
      %6080 = vmatpush.bf16.msra.mxu0 %v5294
      %6081 = vmatpush.bf16.msra.mxu0 %v5293
      %6082 = vmatmul.bf16.gmra.mxu0 %v4632
      %v6083 = vpop.f32.mrf.mxu0
      %v6084 = vadd.f32 %v5985, %v6083
      %v6085 = vpop.f32.mrf.mxu0
      %v6086 = vadd.f32 %v5987, %v6085
      %6087 = vmatmul.bf16.gmra.mxu0 %v4641
      %v6088 = vpop.f32.mrf.mxu0
      %v6089 = vadd.f32 %v5990, %v6088
      %v6090 = vpop.f32.mrf.mxu0
      %v6091 = vadd.f32 %v5992, %v6090
      %6092 = vmatmul.bf16.gmra.mxu0 %v4650
      %v6093 = vpop.f32.mrf.mxu0
      %v6094 = vadd.f32 %v5995, %v6093
      %v6095 = vpop.f32.mrf.mxu0
      %v6096 = vadd.f32 %v5997, %v6095
      %6097 = vmatmul.bf16.gmra.mxu0 %v4659
      %v6098 = vpop.f32.mrf.mxu0
      %v6099 = vadd.f32 %v6000, %v6098
      %v6100 = vpop.f32.mrf.mxu0
      %v6101 = vadd.f32 %v6002, %v6100
      %6102 = vmatmul.bf16.gmra.mxu0 %v4668
      %v6103 = vpop.f32.mrf.mxu0
      %v6104 = vadd.f32 %v6005, %v6103
      %v6105 = vpop.f32.mrf.mxu0
      %v6106 = vadd.f32 %v6007, %v6105
      %6107 = vmatmul.bf16.gmra.mxu0 %v4677
      %v6108 = vpop.f32.mrf.mxu0
      %v6109 = vadd.f32 %v6010, %v6108
      %v6110 = vpop.f32.mrf.mxu0
      %v6111 = vadd.f32 %v6012, %v6110
      %6112 = vmatmul.bf16.gmra.mxu0 %v4686
      %v6113 = vpop.f32.mrf.mxu0
      %v6114 = vadd.f32 %v6015, %v6113
      %v6115 = vpop.f32.mrf.mxu0
      %v6116 = vadd.f32 %v6017, %v6115
      %6117 = vmatmul.bf16.gmra.mxu0 %v4695
      %v6118 = vpop.f32.mrf.mxu0
      %v6119 = vadd.f32 %v6020, %v6118
      %v6120 = vpop.f32.mrf.mxu0
      %v6121 = vadd.f32 %v6022, %v6120
      %6122 = vmatmul.bf16.gmra.mxu0 %v4704
      %v6123 = vpop.f32.mrf.mxu0
      %v6124 = vadd.f32 %v6025, %v6123
      %v6125 = vpop.f32.mrf.mxu0
      %v6126 = vadd.f32 %v6027, %v6125
      %6127 = vmatmul.bf16.gmra.mxu0 %v4713
      %v6128 = vpop.f32.mrf.mxu0
      %v6129 = vadd.f32 %v6030, %v6128
      %v6130 = vpop.f32.mrf.mxu0
      %v6131 = vadd.f32 %v6032, %v6130
      %6132 = vmatmul.bf16.gmra.mxu0 %v4722
      %v6133 = vpop.f32.mrf.mxu0
      %v6134 = vadd.f32 %v6035, %v6133
      %v6135 = vpop.f32.mrf.mxu0
      %v6136 = vadd.f32 %v6037, %v6135
      %6137 = vmatmul.bf16.gmra.mxu0 %v4731
      %v6138 = vpop.f32.mrf.mxu0
      %v6139 = vadd.f32 %v6040, %v6138
      %v6140 = vpop.f32.mrf.mxu0
      %v6141 = vadd.f32 %v6042, %v6140
      %6142 = vmatmul.bf16.gmra.mxu0 %v4740
      %v6143 = vpop.f32.mrf.mxu0
      %v6144 = vadd.f32 %v6045, %v6143
      %v6145 = vpop.f32.mrf.mxu0
      %v6146 = vadd.f32 %v6047, %v6145
      %6147 = vmatmul.bf16.gmra.mxu0 %v4749
      %v6148 = vpop.f32.mrf.mxu0
      %v6149 = vadd.f32 %v6050, %v6148
      %v6150 = vpop.f32.mrf.mxu0
      %v6151 = vadd.f32 %v6052, %v6150
      %6152 = vmatmul.bf16.gmra.mxu0 %v4758
      %v6153 = vpop.f32.mrf.mxu0
      %v6154 = vadd.f32 %v6055, %v6153
      %v6155 = vpop.f32.mrf.mxu0
      %v6156 = vadd.f32 %v6057, %v6155
      %6157 = vmatmul.bf16.gmra.mxu0 %v4767
      %v6158 = vpop.f32.mrf.mxu0
      %v6159 = vadd.f32 %v6060, %v6158
      %v6160 = vpop.f32.mrf.mxu0
      %v6161 = vadd.f32 %v6062, %v6160
      %6162 = vmatmul.bf16.gmra.mxu0 %v4776
      %v6163 = vpop.f32.mrf.mxu0
      %v6164 = vadd.f32 %v6065, %v6163
      %v6165 = vpop.f32.mrf.mxu0
      %v6166 = vadd.f32 %v6067, %v6165
      %6167 = vmatmul.bf16.gmra.mxu0 %v4785
      %v6168 = vpop.f32.mrf.mxu0
      %v6169 = vadd.f32 %v6070, %v6168
      %v6170 = vpop.f32.mrf.mxu0
      %v6171 = vadd.f32 %v6072, %v6170
      %6172 = vdwg.mxu0
      %6173 = vmatpush.bf16.msra.mxu0 %v5308
      %6174 = vmatpush.bf16.msra.mxu0 %v5307
      %6175 = vmatpush.bf16.msra.mxu0 %v5306
      %6176 = vmatpush.bf16.msra.mxu0 %v5305
      %6177 = vmatpush.bf16.msra.mxu0 %v5304
      %6178 = vmatpush.bf16.msra.mxu0 %v5303
      %6179 = vmatpush.bf16.msra.mxu0 %v5302
      %6180 = vmatpush.bf16.msra.mxu0 %v5301
      %6181 = vmatmul.bf16.gmra.mxu0 %v4633
      %v6182 = vpop.f32.mrf.mxu0
      %v6183 = vadd.f32 %v6084, %v6182
      %v6184 = vpop.f32.mrf.mxu0
      %v6185 = vadd.f32 %v6086, %v6184
      %6186 = vmatmul.bf16.gmra.mxu0 %v4642
      %v6187 = vpop.f32.mrf.mxu0
      %v6188 = vadd.f32 %v6089, %v6187
      %v6189 = vpop.f32.mrf.mxu0
      %v6190 = vadd.f32 %v6091, %v6189
      %6191 = vmatmul.bf16.gmra.mxu0 %v4651
      %v6192 = vpop.f32.mrf.mxu0
      %v6193 = vadd.f32 %v6094, %v6192
      %v6194 = vpop.f32.mrf.mxu0
      %v6195 = vadd.f32 %v6096, %v6194
      %6196 = vmatmul.bf16.gmra.mxu0 %v4660
      %v6197 = vpop.f32.mrf.mxu0
      %v6198 = vadd.f32 %v6099, %v6197
      %v6199 = vpop.f32.mrf.mxu0
      %v6200 = vadd.f32 %v6101, %v6199
      %6201 = vmatmul.bf16.gmra.mxu0 %v4669
      %v6202 = vpop.f32.mrf.mxu0
      %v6203 = vadd.f32 %v6104, %v6202
      %v6204 = vpop.f32.mrf.mxu0
      %v6205 = vadd.f32 %v6106, %v6204
      %6206 = vmatmul.bf16.gmra.mxu0 %v4678
      %v6207 = vpop.f32.mrf.mxu0
      %v6208 = vadd.f32 %v6109, %v6207
      %v6209 = vpop.f32.mrf.mxu0
      %v6210 = vadd.f32 %v6111, %v6209
      %6211 = vmatmul.bf16.gmra.mxu0 %v4687
      %v6212 = vpop.f32.mrf.mxu0
      %v6213 = vadd.f32 %v6114, %v6212
      %v6214 = vpop.f32.mrf.mxu0
      %v6215 = vadd.f32 %v6116, %v6214
      %6216 = vmatmul.bf16.gmra.mxu0 %v4696
      %v6217 = vpop.f32.mrf.mxu0
      %v6218 = vadd.f32 %v6119, %v6217
      %v6219 = vpop.f32.mrf.mxu0
      %v6220 = vadd.f32 %v6121, %v6219
      %6221 = vmatmul.bf16.gmra.mxu0 %v4705
      %v6222 = vpop.f32.mrf.mxu0
      %v6223 = vadd.f32 %v6124, %v6222
      %v6224 = vpop.f32.mrf.mxu0
      %v6225 = vadd.f32 %v6126, %v6224
      %6226 = vmatmul.bf16.gmra.mxu0 %v4714
      %v6227 = vpop.f32.mrf.mxu0
      %v6228 = vadd.f32 %v6129, %v6227
      %v6229 = vpop.f32.mrf.mxu0
      %v6230 = vadd.f32 %v6131, %v6229
      %6231 = vmatmul.bf16.gmra.mxu0 %v4723
      %v6232 = vpop.f32.mrf.mxu0
      %v6233 = vadd.f32 %v6134, %v6232
      %v6234 = vpop.f32.mrf.mxu0
      %v6235 = vadd.f32 %v6136, %v6234
      %6236 = vmatmul.bf16.gmra.mxu0 %v4732
      %v6237 = vpop.f32.mrf.mxu0
      %v6238 = vadd.f32 %v6139, %v6237
      %v6239 = vpop.f32.mrf.mxu0
      %v6240 = vadd.f32 %v6141, %v6239
      %6241 = vmatmul.bf16.gmra.mxu0 %v4741
      %v6242 = vpop.f32.mrf.mxu0
      %v6243 = vadd.f32 %v6144, %v6242
      %v6244 = vpop.f32.mrf.mxu0
      %v6245 = vadd.f32 %v6146, %v6244
      %6246 = vmatmul.bf16.gmra.mxu0 %v4750
      %v6247 = vpop.f32.mrf.mxu0
      %v6248 = vadd.f32 %v6149, %v6247
      %v6249 = vpop.f32.mrf.mxu0
      %v6250 = vadd.f32 %v6151, %v6249
      %6251 = vmatmul.bf16.gmra.mxu0 %v4759
      %v6252 = vpop.f32.mrf.mxu0
      %v6253 = vadd.f32 %v6154, %v6252
      %v6254 = vpop.f32.mrf.mxu0
      %v6255 = vadd.f32 %v6156, %v6254
      %6256 = vmatmul.bf16.gmra.mxu0 %v4768
      %v6257 = vpop.f32.mrf.mxu0
      %v6258 = vadd.f32 %v6159, %v6257
      %v6259 = vpop.f32.mrf.mxu0
      %v6260 = vadd.f32 %v6161, %v6259
      %6261 = vmatmul.bf16.gmra.mxu0 %v4777
      %v6262 = vpop.f32.mrf.mxu0
      %v6263 = vadd.f32 %v6164, %v6262
      %v6264 = vpop.f32.mrf.mxu0
      %v6265 = vadd.f32 %v6166, %v6264
      %6266 = vmatmul.bf16.gmra.mxu0 %v4786
      %v6267 = vpop.f32.mrf.mxu0
      %v6268 = vadd.f32 %v6169, %v6267
      %v6269 = vpop.f32.mrf.mxu0
      %v6270 = vadd.f32 %v6171, %v6269
      %6271 = vdwg.mxu0
      %v6272 = vld [vmem:[%s2] sm:$0x1]
      %v6274 = vperm.slane %v6272, 0
      %v6276 = vmul.f32 %v6183, %v6274
      %v6277 = vmul.f32 %v6185, %v6274
      %v6278 = vmul.f32 %v6188, %v6274
      %v6279 = vmul.f32 %v6190, %v6274
      %v6280 = vmul.f32 %v6193, %v6274
      %v6281 = vmul.f32 %v6195, %v6274
      %v6282 = vmul.f32 %v6198, %v6274
      %v6283 = vmul.f32 %v6200, %v6274
      %v6284 = vmul.f32 %v6203, %v6274
      %v6285 = vmul.f32 %v6205, %v6274
      %v6286 = vmul.f32 %v6208, %v6274
      %v6287 = vmul.f32 %v6210, %v6274
      %v6288 = vmul.f32 %v6213, %v6274
      %v6289 = vmul.f32 %v6215, %v6274
      %v6290 = vmul.f32 %v6218, %v6274
      %v6291 = vmul.f32 %v6220, %v6274
      %v6292 = vmul.f32 %v6223, %v6274
      %v6293 = vmul.f32 %v6225, %v6274
      %v6294 = vmul.f32 %v6228, %v6274
      %v6295 = vmul.f32 %v6230, %v6274
      %v6296 = vmul.f32 %v6233, %v6274
      %v6297 = vmul.f32 %v6235, %v6274
      %v6298 = vmul.f32 %v6238, %v6274
      %v6299 = vmul.f32 %v6240, %v6274
      %v6300 = vmul.f32 %v6243, %v6274
      %v6301 = vmul.f32 %v6245, %v6274
      %v6302 = vmul.f32 %v6248, %v6274
      %v6303 = vmul.f32 %v6250, %v6274
      %v6304 = vmul.f32 %v6253, %v6274
      %v6305 = vmul.f32 %v6255, %v6274
      %v6306 = vmul.f32 %v6258, %v6274
      %v6307 = vmul.f32 %v6260, %v6274
      %v6308 = vmul.f32 %v6263, %v6274
      %v6309 = vmul.f32 %v6265, %v6274
      %v6310 = vmul.f32 %v6268, %v6274
      %v6311 = vmul.f32 %v6270, %v6274
      %v6312 = vld [vmem:[%s3] sm:$0x1]
      %v6314 = vperm.slane %v6312, 0
      %v6316 = vadd.f32 %v6276, %v6314
      %v6317 = vadd.f32 %v6277, %v6314
      %v6318 = vadd.f32 %v6278, %v6314
      %v6319 = vadd.f32 %v6279, %v6314
      %v6320 = vadd.f32 %v6280, %v6314
      %v6321 = vadd.f32 %v6281, %v6314
      %v6322 = vadd.f32 %v6282, %v6314
      %v6323 = vadd.f32 %v6283, %v6314
      %v6324 = vadd.f32 %v6284, %v6314
      %v6325 = vadd.f32 %v6285, %v6314
      %v6326 = vadd.f32 %v6286, %v6314
      %v6327 = vadd.f32 %v6287, %v6314
      %v6328 = vadd.f32 %v6288, %v6314
      %v6329 = vadd.f32 %v6289, %v6314
      %v6330 = vadd.f32 %v6290, %v6314
      %v6331 = vadd.f32 %v6291, %v6314
      %v6332 = vadd.f32 %v6292, %v6314
      %v6333 = vadd.f32 %v6293, %v6314
      %v6334 = vadd.f32 %v6294, %v6314
      %v6335 = vadd.f32 %v6295, %v6314
      %v6336 = vadd.f32 %v6296, %v6314
      %v6337 = vadd.f32 %v6297, %v6314
      %v6338 = vadd.f32 %v6298, %v6314
      %v6339 = vadd.f32 %v6299, %v6314
      %v6340 = vadd.f32 %v6300, %v6314
      %v6341 = vadd.f32 %v6301, %v6314
      %v6342 = vadd.f32 %v6302, %v6314
      %v6343 = vadd.f32 %v6303, %v6314
      %v6344 = vadd.f32 %v6304, %v6314
      %v6345 = vadd.f32 %v6305, %v6314
      %v6346 = vadd.f32 %v6306, %v6314
      %v6347 = vadd.f32 %v6307, %v6314
      %v6348 = vadd.f32 %v6308, %v6314
      %v6349 = vadd.f32 %v6309, %v6314
      %v6350 = vadd.f32 %v6310, %v6314
      %v6351 = vadd.f32 %v6311, %v6314
      %v6352 = vmax.f32 %v6316, 0.0
      %v6353 = vmax.f32 %v6317, 0.0
      %v6354 = vmax.f32 %v6318, 0.0
      %v6355 = vmax.f32 %v6319, 0.0
      %v6356 = vmax.f32 %v6320, 0.0
      %v6357 = vmax.f32 %v6321, 0.0
      %v6358 = vmax.f32 %v6322, 0.0
      %v6359 = vmax.f32 %v6323, 0.0
      %v6360 = vmax.f32 %v6324, 0.0
      %v6361 = vmax.f32 %v6325, 0.0
      %v6362 = vmax.f32 %v6326, 0.0
      %v6363 = vmax.f32 %v6327, 0.0
      %v6364 = vmax.f32 %v6328, 0.0
      %v6365 = vmax.f32 %v6329, 0.0
      %v6366 = vmax.f32 %v6330, 0.0
      %v6367 = vmax.f32 %v6331, 0.0
      %v6368 = vmax.f32 %v6332, 0.0
      %v6369 = vmax.f32 %v6333, 0.0
      %v6370 = vmax.f32 %v6334, 0.0
      %v6371 = vmax.f32 %v6335, 0.0
      %v6372 = vmax.f32 %v6336, 0.0
      %v6373 = vmax.f32 %v6337, 0.0
      %v6374 = vmax.f32 %v6338, 0.0
      %v6375 = vmax.f32 %v6339, 0.0
      %v6376 = vmax.f32 %v6340, 0.0
      %v6377 = vmax.f32 %v6341, 0.0
      %v6378 = vmax.f32 %v6342, 0.0
      %v6379 = vmax.f32 %v6343, 0.0
      %v6380 = vmax.f32 %v6344, 0.0
      %v6381 = vmax.f32 %v6345, 0.0
      %v6382 = vmax.f32 %v6346, 0.0
      %v6383 = vmax.f32 %v6347, 0.0
      %v6384 = vmax.f32 %v6348, 0.0
      %v6385 = vmax.f32 %v6349, 0.0
      %v6386 = vmax.f32 %v6350, 0.0
      %v6387 = vmax.f32 %v6351, 0.0
      %v6388 = vld [vmem:[%s7] sm:$0xff]
      %v6389 = vld [vmem:[%s7 + $0x8] sm:$0xff]
      %v6390 = vld [vmem:[%s7 + $0x10] sm:$0xff]
      %v6391 = vld [vmem:[%s7 + $0x18] sm:$0xff]
      %v6392 = vld [vmem:[%s7 + $0x20] sm:$0xff]
      %v6393 = vld [vmem:[%s7 + $0x28] sm:$0xff]
      %v6394 = vld [vmem:[%s7 + $0x30] sm:$0xff]
      %v6395 = vld [vmem:[%s7 + $0x38] sm:$0xff]
      %v6396 = vld [vmem:[%s7 + $0x40] sm:$0xff]
      %v6397 = vld [vmem:[%s7 + $0x48] sm:$0xff]
      %v6398 = vld [vmem:[%s7 + $0x50] sm:$0xff]
      %v6399 = vld [vmem:[%s7 + $0x58] sm:$0xff]
      %v6400 = vld [vmem:[%s7 + $0x60] sm:$0xff]
      %v6401 = vld [vmem:[%s7 + $0x68] sm:$0xff]
      %v6402 = vld [vmem:[%s7 + $0x70] sm:$0xff]
      %v6403 = vld [vmem:[%s7 + $0x78] sm:$0xff]
      %v6404 = vld [vmem:[%s7 + $0x80] sm:$0xff]
      %v6405 = vld [vmem:[%s7 + $0x88] sm:$0xff]
      %v6406 = vld [vmem:[%s7 + $0x90] sm:$0xff]
      %v6407 = vld [vmem:[%s7 + $0x98] sm:$0xff]
      %v6408 = vld [vmem:[%s7 + $0xa0] sm:$0xff]
      %v6409 = vld [vmem:[%s7 + $0xa8] sm:$0xff]
      %v6410 = vld [vmem:[%s7 + $0xb0] sm:$0xff]
      %v6411 = vld [vmem:[%s7 + $0xb8] sm:$0xff]
      %v6412 = vld [vmem:[%s7 + $0xc0] sm:$0xff]
      %v6413 = vld [vmem:[%s7 + $0xc8] sm:$0xff]
      %v6414 = vld [vmem:[%s7 + $0xd0] sm:$0xff]
      %v6415 = vld [vmem:[%s7 + $0xd8] sm:$0xff]
      %v6416 = vld [vmem:[%s7 + $0xe0] sm:$0xff]
      %v6417 = vld [vmem:[%s7 + $0xe8] sm:$0xff]
      %v6418 = vld [vmem:[%s7 + $0xf0] sm:$0xff]
      %v6419 = vld [vmem:[%s7 + $0xf8] sm:$0xff]
      %v6420 = vld [vmem:[%s7 + $0x100] sm:$0xff]
      %v6421 = vld [vmem:[%s7 + $0x108] sm:$0xff]
      %v6422 = vld [vmem:[%s7 + $0x110] sm:$0xff]
      %v6423 = vld [vmem:[%s7 + $0x118] sm:$0xff]
      %6425 = vset.pattern.permute.xlu0 0
      %6426 = vperm.xlu0 %6425, %v6388
      %v6427 = vpop.permute.xlu0 %6426
      %6430 = vset.pattern.permute.xlu0 0
      %6431 = vperm.xlu0 %6430, %v6389
      %v6432 = vpop.permute.xlu0 %6431
      %6435 = vset.pattern.permute.xlu0 0
      %6436 = vperm.xlu0 %6435, %v6390
      %v6437 = vpop.permute.xlu0 %6436
      %6440 = vset.pattern.permute.xlu0 0
      %6441 = vperm.xlu0 %6440, %v6391
      %v6442 = vpop.permute.xlu0 %6441
      %6445 = vset.pattern.permute.xlu0 0
      %6446 = vperm.xlu0 %6445, %v6392
      %v6447 = vpop.permute.xlu0 %6446
      %6450 = vset.pattern.permute.xlu0 0
      %6451 = vperm.xlu0 %6450, %v6393
      %v6452 = vpop.permute.xlu0 %6451
      %6455 = vset.pattern.permute.xlu0 0
      %6456 = vperm.xlu0 %6455, %v6394
      %v6457 = vpop.permute.xlu0 %6456
      %6460 = vset.pattern.permute.xlu0 0
      %6461 = vperm.xlu0 %6460, %v6395
      %v6462 = vpop.permute.xlu0 %6461
      %6465 = vset.pattern.permute.xlu0 0
      %6466 = vperm.xlu0 %6465, %v6396
      %v6467 = vpop.permute.xlu0 %6466
      %6470 = vset.pattern.permute.xlu0 0
      %6471 = vperm.xlu0 %6470, %v6397
      %v6472 = vpop.permute.xlu0 %6471
      %6475 = vset.pattern.permute.xlu0 0
      %6476 = vperm.xlu0 %6475, %v6398
      %v6477 = vpop.permute.xlu0 %6476
      %6480 = vset.pattern.permute.xlu0 0
      %6481 = vperm.xlu0 %6480, %v6399
      %v6482 = vpop.permute.xlu0 %6481
      %6485 = vset.pattern.permute.xlu0 0
      %6486 = vperm.xlu0 %6485, %v6400
      %v6487 = vpop.permute.xlu0 %6486
      %6490 = vset.pattern.permute.xlu0 0
      %6491 = vperm.xlu0 %6490, %v6401
      %v6492 = vpop.permute.xlu0 %6491
      %6495 = vset.pattern.permute.xlu0 0
      %6496 = vperm.xlu0 %6495, %v6402
      %v6497 = vpop.permute.xlu0 %6496
      %6500 = vset.pattern.permute.xlu0 0
      %6501 = vperm.xlu0 %6500, %v6403
      %v6502 = vpop.permute.xlu0 %6501
      %6505 = vset.pattern.permute.xlu0 0
      %6506 = vperm.xlu0 %6505, %v6404
      %v6507 = vpop.permute.xlu0 %6506
      %6510 = vset.pattern.permute.xlu0 0
      %6511 = vperm.xlu0 %6510, %v6405
      %v6512 = vpop.permute.xlu0 %6511
      %6515 = vset.pattern.permute.xlu0 0
      %6516 = vperm.xlu0 %6515, %v6406
      %v6517 = vpop.permute.xlu0 %6516
      %6520 = vset.pattern.permute.xlu0 0
      %6521 = vperm.xlu0 %6520, %v6407
      %v6522 = vpop.permute.xlu0 %6521
      %6525 = vset.pattern.permute.xlu0 0
      %6526 = vperm.xlu0 %6525, %v6408
      %v6527 = vpop.permute.xlu0 %6526
      %6530 = vset.pattern.permute.xlu0 0
      %6531 = vperm.xlu0 %6530, %v6409
      %v6532 = vpop.permute.xlu0 %6531
      %6535 = vset.pattern.permute.xlu0 0
      %6536 = vperm.xlu0 %6535, %v6410
      %v6537 = vpop.permute.xlu0 %6536
      %6540 = vset.pattern.permute.xlu0 0
      %6541 = vperm.xlu0 %6540, %v6411
      %v6542 = vpop.permute.xlu0 %6541
      %6545 = vset.pattern.permute.xlu0 0
      %6546 = vperm.xlu0 %6545, %v6412
      %v6547 = vpop.permute.xlu0 %6546
      %6550 = vset.pattern.permute.xlu0 0
      %6551 = vperm.xlu0 %6550, %v6413
      %v6552 = vpop.permute.xlu0 %6551
      %6555 = vset.pattern.permute.xlu0 0
      %6556 = vperm.xlu0 %6555, %v6414
      %v6557 = vpop.permute.xlu0 %6556
      %6560 = vset.pattern.permute.xlu0 0
      %6561 = vperm.xlu0 %6560, %v6415
      %v6562 = vpop.permute.xlu0 %6561
      %6565 = vset.pattern.permute.xlu0 0
      %6566 = vperm.xlu0 %6565, %v6416
      %v6567 = vpop.permute.xlu0 %6566
      %6570 = vset.pattern.permute.xlu0 0
      %6571 = vperm.xlu0 %6570, %v6417
      %v6572 = vpop.permute.xlu0 %6571
      %6575 = vset.pattern.permute.xlu0 0
      %6576 = vperm.xlu0 %6575, %v6418
      %v6577 = vpop.permute.xlu0 %6576
      %6580 = vset.pattern.permute.xlu0 0
      %6581 = vperm.xlu0 %6580, %v6419
      %v6582 = vpop.permute.xlu0 %6581
      %6585 = vset.pattern.permute.xlu0 0
      %6586 = vperm.xlu0 %6585, %v6420
      %v6587 = vpop.permute.xlu0 %6586
      %6590 = vset.pattern.permute.xlu0 0
      %6591 = vperm.xlu0 %6590, %v6421
      %v6592 = vpop.permute.xlu0 %6591
      %6595 = vset.pattern.permute.xlu0 0
      %6596 = vperm.xlu0 %6595, %v6422
      %v6597 = vpop.permute.xlu0 %6596
      %6600 = vset.pattern.permute.xlu0 0
      %6601 = vperm.xlu0 %6600, %v6423
      %v6602 = vpop.permute.xlu0 %6601
      %v6604 = vmul.f32 %v6352, %v6427
      %v6605 = vmul.f32 %v6353, %v6432
      %v6606 = vmul.f32 %v6354, %v6437
      %v6607 = vmul.f32 %v6355, %v6442
      %v6608 = vmul.f32 %v6356, %v6447
      %v6609 = vmul.f32 %v6357, %v6452
      %v6610 = vmul.f32 %v6358, %v6457
      %v6611 = vmul.f32 %v6359, %v6462
      %v6612 = vmul.f32 %v6360, %v6467
      %v6613 = vmul.f32 %v6361, %v6472
      %v6614 = vmul.f32 %v6362, %v6477
      %v6615 = vmul.f32 %v6363, %v6482
      %v6616 = vmul.f32 %v6364, %v6487
      %v6617 = vmul.f32 %v6365, %v6492
      %v6618 = vmul.f32 %v6366, %v6497
      %v6619 = vmul.f32 %v6367, %v6502
      %v6620 = vmul.f32 %v6368, %v6507
      %v6621 = vmul.f32 %v6369, %v6512
      %v6622 = vmul.f32 %v6370, %v6517
      %v6623 = vmul.f32 %v6371, %v6522
      %v6624 = vmul.f32 %v6372, %v6527
      %v6625 = vmul.f32 %v6373, %v6532
      %v6626 = vmul.f32 %v6374, %v6537
      %v6627 = vmul.f32 %v6375, %v6542
      %v6628 = vmul.f32 %v6376, %v6547
      %v6629 = vmul.f32 %v6377, %v6552
      %v6630 = vmul.f32 %v6378, %v6557
      %v6631 = vmul.f32 %v6379, %v6562
      %v6632 = vmul.f32 %v6380, %v6567
      %v6633 = vmul.f32 %v6381, %v6572
      %v6634 = vmul.f32 %v6382, %v6577
      %v6635 = vmul.f32 %v6383, %v6582
      %v6636 = vmul.f32 %v6384, %v6587
      %v6637 = vmul.f32 %v6385, %v6592
      %v6638 = vmul.f32 %v6386, %v6597
      %v6639 = vmul.f32 %v6387, %v6602
      %v6640 = vpack.c.bf16 %v6604, %v6604
      %v6641 = vpack.c.bf16 %v6605, %v6605
      %v6642 = vpack.c.bf16 %v6606, %v6606
      %v6643 = vpack.c.bf16 %v6607, %v6607
      %v6644 = vpack.c.bf16 %v6608, %v6608
      %v6645 = vpack.c.bf16 %v6609, %v6609
      %v6646 = vpack.c.bf16 %v6610, %v6610
      %v6647 = vpack.c.bf16 %v6611, %v6611
      %v6648 = vpack.c.bf16 %v6612, %v6612
      %v6649 = vpack.c.bf16 %v6613, %v6613
      %v6650 = vpack.c.bf16 %v6614, %v6614
      %v6651 = vpack.c.bf16 %v6615, %v6615
      %v6652 = vpack.c.bf16 %v6616, %v6616
      %v6653 = vpack.c.bf16 %v6617, %v6617
      %v6654 = vpack.c.bf16 %v6618, %v6618
      %v6655 = vpack.c.bf16 %v6619, %v6619
      %v6656 = vpack.c.bf16 %v6620, %v6620
      %v6657 = vpack.c.bf16 %v6621, %v6621
      %v6658 = vpack.c.bf16 %v6622, %v6622
      %v6659 = vpack.c.bf16 %v6623, %v6623
      %v6660 = vpack.c.bf16 %v6624, %v6624
      %v6661 = vpack.c.bf16 %v6625, %v6625
      %v6662 = vpack.c.bf16 %v6626, %v6626
      %v6663 = vpack.c.bf16 %v6627, %v6627
      %v6664 = vpack.c.bf16 %v6628, %v6628
      %v6665 = vpack.c.bf16 %v6629, %v6629
      %v6666 = vpack.c.bf16 %v6630, %v6630
      %v6667 = vpack.c.bf16 %v6631, %v6631
      %v6668 = vpack.c.bf16 %v6632, %v6632
      %v6669 = vpack.c.bf16 %v6633, %v6633
      %v6670 = vpack.c.bf16 %v6634, %v6634
      %v6671 = vpack.c.bf16 %v6635, %v6635
      %v6672 = vpack.c.bf16 %v6636, %v6636
      %v6673 = vpack.c.bf16 %v6637, %v6637
      %v6674 = vpack.c.bf16 %v6638, %v6638
      %v6675 = vpack.c.bf16 %v6639, %v6639
      %6676 = vst [vmem:[#allocation2 + $0x10] sm:$0xf] %v6640
      %6677 = vst [vmem:[#allocation2 + $0x14] sm:$0xf] %v6641
      %6678 = vst [vmem:[#allocation2 + $0x18] sm:$0xf] %v6642
      %6679 = vst [vmem:[#allocation2 + $0x1c] sm:$0xf] %v6643
      %6680 = vst [vmem:[#allocation2 + $0x20] sm:$0xf] %v6644
      %6681 = vst [vmem:[#allocation2 + $0x24] sm:$0xf] %v6645
      %6682 = vst [vmem:[#allocation2 + $0x28] sm:$0xf] %v6646
      %6683 = vst [vmem:[#allocation2 + $0x2c] sm:$0xf] %v6647
      %6684 = vst [vmem:[#allocation2 + $0x30] sm:$0xf] %v6648
      %6685 = vst [vmem:[#allocation2 + $0x34] sm:$0xf] %v6649
      %6686 = vst [vmem:[#allocation2 + $0x38] sm:$0xf] %v6650
      %6687 = vst [vmem:[#allocation2 + $0x3c] sm:$0xf] %v6651
      %6688 = vst [vmem:[#allocation2 + $0x40] sm:$0xf] %v6652
      %6689 = vst [vmem:[#allocation2 + $0x44] sm:$0xf] %v6653
      %6690 = vst [vmem:[#allocation2 + $0x48] sm:$0xf] %v6654
      %6691 = vst [vmem:[#allocation2 + $0x4c] sm:$0xf] %v6655
      %6692 = vst [vmem:[#allocation2 + $0x50] sm:$0xf] %v6656
      %6693 = vst [vmem:[#allocation2 + $0x54] sm:$0xf] %v6657
      %6694 = vst [vmem:[#allocation2 + $0x58] sm:$0xf] %v6658
      %6695 = vst [vmem:[#allocation2 + $0x5c] sm:$0xf] %v6659
      %6696 = vst [vmem:[#allocation2 + $0x60] sm:$0xf] %v6660
      %6697 = vst [vmem:[#allocation2 + $0x64] sm:$0xf] %v6661
      %6698 = vst [vmem:[#allocation2 + $0x68] sm:$0xf] %v6662
      %6699 = vst [vmem:[#allocation2 + $0x6c] sm:$0xf] %v6663
      %6700 = vst [vmem:[#allocation2 + $0x70] sm:$0xf] %v6664
      %6701 = vst [vmem:[#allocation2 + $0x74] sm:$0xf] %v6665
      %6702 = vst [vmem:[#allocation2 + $0x78] sm:$0xf] %v6666
      %6703 = vst [vmem:[#allocation2 + $0x7c] sm:$0xf] %v6667
      %6704 = vst [vmem:[#allocation2 + $0x80] sm:$0xf] %v6668
      %6705 = vst [vmem:[#allocation2 + $0x84] sm:$0xf] %v6669
      %6706 = vst [vmem:[#allocation2 + $0x88] sm:$0xf] %v6670
      %6707 = vst [vmem:[#allocation2 + $0x8c] sm:$0xf] %v6671
      %6708 = vst [vmem:[#allocation2 + $0x90] sm:$0xf] %v6672
      %6709 = vst [vmem:[#allocation2 + $0x94] sm:$0xf] %v6673
      %6710 = vst [vmem:[#allocation2 + $0x98] sm:$0xf] %v6674
      %6711 = vst [vmem:[#allocation2 + $0x9c] sm:$0xf] %v6675
      %v6712 = vld [vmem:[#allocation2 + $0x4] sm:$0xc]
      %v6713 = vld [vmem:[#allocation2 + $0x8] sm:$0xf]
      %v6714 = vld [vmem:[#allocation2 + $0xc] sm:$0xf]
      %v6715 = vld [vmem:[#allocation2 + $0x10] sm:$0xf]
      %v6716 = vld [vmem:[#allocation2 + $0x14] sm:$0xf]
      %v6717 = vld [vmem:[#allocation2 + $0x18] sm:$0xf]
      %v6718 = vld [vmem:[#allocation2 + $0x1c] sm:$0xf]
      %v6719 = vld [vmem:[#allocation2 + $0x20] sm:$0xf]
      %v6720 = vld [vmem:[#allocation2 + $0x24] sm:$0xf]
      %v6721 = vld [vmem:[#allocation2 + $0x28] sm:$0xf]
      %v6722 = vld [vmem:[#allocation2 + $0x2c] sm:$0xf]
      %v6723 = vld [vmem:[#allocation2 + $0x30] sm:$0xf]
      %v6724 = vld [vmem:[#allocation2 + $0x34] sm:$0xf]
      %v6725 = vld [vmem:[#allocation2 + $0x38] sm:$0xf]
      %v6726 = vld [vmem:[#allocation2 + $0x3c] sm:$0xf]
      %v6727 = vld [vmem:[#allocation2 + $0x40] sm:$0xf]
      %v6728 = vld [vmem:[#allocation2 + $0x44] sm:$0xf]
      %v6729 = vld [vmem:[#allocation2 + $0x48] sm:$0xf]
      %v6730 = vld [vmem:[#allocation2 + $0x4c] sm:$0xf]
      %v6731 = vld [vmem:[#allocation2 + $0x50] sm:$0xf]
      %v6732 = vld [vmem:[#allocation2 + $0x54] sm:$0xf]
      %v6733 = vld [vmem:[#allocation2 + $0x58] sm:$0xf]
      %v6734 = vld [vmem:[#allocation2 + $0x5c] sm:$0xf]
      %v6735 = vld [vmem:[#allocation2 + $0x60] sm:$0xf]
      %v6736 = vld [vmem:[#allocation2 + $0x64] sm:$0xf]
      %v6737 = vld [vmem:[#allocation2 + $0x68] sm:$0xf]
      %v6738 = vld [vmem:[#allocation2 + $0x6c] sm:$0xf]
      %v6739 = vld [vmem:[#allocation2 + $0x70] sm:$0xf]
      %v6740 = vld [vmem:[#allocation2 + $0x74] sm:$0xf]
      %v6741 = vld [vmem:[#allocation2 + $0x78] sm:$0xf]
      %v6742 = vld [vmem:[#allocation2 + $0x7c] sm:$0xf]
      %v6743 = vld [vmem:[#allocation2 + $0x80] sm:$0xf]
      %v6744 = vld [vmem:[#allocation2 + $0x84] sm:$0xf]
      %v6745 = vld [vmem:[#allocation2 + $0x88] sm:$0xf]
      %v6746 = vld [vmem:[#allocation2 + $0x8c] sm:$0xf]
      %v6747 = vld [vmem:[#allocation2 + $0x90] sm:$0xf]
      %v6748 = vld [vmem:[#allocation2 + $0x94] sm:$0x7]
      %v6750 = vshrl.u32 %v6712, 16
      %v6752 = vrot.slane %v6750, 6
      %v6753 = vshll.u32 %v6712, 16
      %v6755 = vrot.slane %v6753, 7
      %v6756 = vor.u32 %v6752, %v6755
      %v6757 = vrot.slane %v6756, 4
      %v6759 = vshrl.u32 %v6713, 16
      %v6761 = vrot.slane %v6759, 6
      %v6762 = vshll.u32 %v6713, 16
      %v6764 = vrot.slane %v6762, 7
      %v6765 = vor.u32 %v6761, %v6764
      %v6766 = vsel %vm462, %v6757, %v6765
      %v6767 = vrot.slane %v6765, 4
      %v6769 = vshrl.u32 %v6714, 16
      %v6771 = vrot.slane %v6769, 6
      %v6772 = vshll.u32 %v6714, 16
      %v6774 = vrot.slane %v6772, 7
      %v6775 = vor.u32 %v6771, %v6774
      %v6776 = vsel %vm462, %v6767, %v6775
      %v6777 = vrot.slane %v6775, 4
      %v6779 = vshrl.u32 %v6715, 16
      %v6781 = vrot.slane %v6779, 6
      %v6782 = vshll.u32 %v6715, 16
      %v6784 = vrot.slane %v6782, 7
      %v6785 = vor.u32 %v6781, %v6784
      %v6786 = vsel %vm462, %v6777, %v6785
      %v6787 = vrot.slane %v6785, 4
      %v6789 = vshrl.u32 %v6716, 16
      %v6791 = vrot.slane %v6789, 6
      %v6792 = vshll.u32 %v6716, 16
      %v6794 = vrot.slane %v6792, 7
      %v6795 = vor.u32 %v6791, %v6794
      %v6796 = vsel %vm462, %v6787, %v6795
      %v6797 = vrot.slane %v6795, 4
      %v6799 = vshrl.u32 %v6717, 16
      %v6801 = vrot.slane %v6799, 6
      %v6802 = vshll.u32 %v6717, 16
      %v6804 = vrot.slane %v6802, 7
      %v6805 = vor.u32 %v6801, %v6804
      %v6806 = vsel %vm462, %v6797, %v6805
      %v6807 = vrot.slane %v6805, 4
      %v6809 = vshrl.u32 %v6718, 16
      %v6811 = vrot.slane %v6809, 6
      %v6812 = vshll.u32 %v6718, 16
      %v6814 = vrot.slane %v6812, 7
      %v6815 = vor.u32 %v6811, %v6814
      %v6816 = vsel %vm462, %v6807, %v6815
      %v6817 = vrot.slane %v6815, 4
      %v6819 = vshrl.u32 %v6719, 16
      %v6821 = vrot.slane %v6819, 6
      %v6822 = vshll.u32 %v6719, 16
      %v6824 = vrot.slane %v6822, 7
      %v6825 = vor.u32 %v6821, %v6824
      %v6826 = vsel %vm462, %v6817, %v6825
      %v6827 = vrot.slane %v6825, 4
      %v6829 = vshrl.u32 %v6720, 16
      %v6831 = vrot.slane %v6829, 6
      %v6832 = vshll.u32 %v6720, 16
      %v6834 = vrot.slane %v6832, 7
      %v6835 = vor.u32 %v6831, %v6834
      %v6836 = vsel %vm462, %v6827, %v6835
      %v6837 = vrot.slane %v6835, 4
      %v6839 = vshrl.u32 %v6721, 16
      %v6841 = vrot.slane %v6839, 6
      %v6842 = vshll.u32 %v6721, 16
      %v6844 = vrot.slane %v6842, 7
      %v6845 = vor.u32 %v6841, %v6844
      %v6846 = vsel %vm462, %v6837, %v6845
      %v6847 = vrot.slane %v6845, 4
      %v6849 = vshrl.u32 %v6722, 16
      %v6851 = vrot.slane %v6849, 6
      %v6852 = vshll.u32 %v6722, 16
      %v6854 = vrot.slane %v6852, 7
      %v6855 = vor.u32 %v6851, %v6854
      %v6856 = vsel %vm462, %v6847, %v6855
      %v6857 = vrot.slane %v6855, 4
      %v6859 = vshrl.u32 %v6723, 16
      %v6861 = vrot.slane %v6859, 6
      %v6862 = vshll.u32 %v6723, 16
      %v6864 = vrot.slane %v6862, 7
      %v6865 = vor.u32 %v6861, %v6864
      %v6866 = vsel %vm462, %v6857, %v6865
      %v6867 = vrot.slane %v6865, 4
      %v6869 = vshrl.u32 %v6724, 16
      %v6871 = vrot.slane %v6869, 6
      %v6872 = vshll.u32 %v6724, 16
      %v6874 = vrot.slane %v6872, 7
      %v6875 = vor.u32 %v6871, %v6874
      %v6876 = vsel %vm462, %v6867, %v6875
      %v6877 = vrot.slane %v6875, 4
      %v6879 = vshrl.u32 %v6725, 16
      %v6881 = vrot.slane %v6879, 6
      %v6882 = vshll.u32 %v6725, 16
      %v6884 = vrot.slane %v6882, 7
      %v6885 = vor.u32 %v6881, %v6884
      %v6886 = vsel %vm462, %v6877, %v6885
      %v6887 = vrot.slane %v6885, 4
      %v6889 = vshrl.u32 %v6726, 16
      %v6891 = vrot.slane %v6889, 6
      %v6892 = vshll.u32 %v6726, 16
      %v6894 = vrot.slane %v6892, 7
      %v6895 = vor.u32 %v6891, %v6894
      %v6896 = vsel %vm462, %v6887, %v6895
      %v6897 = vrot.slane %v6895, 4
      %v6899 = vshrl.u32 %v6727, 16
      %v6901 = vrot.slane %v6899, 6
      %v6902 = vshll.u32 %v6727, 16
      %v6904 = vrot.slane %v6902, 7
      %v6905 = vor.u32 %v6901, %v6904
      %v6906 = vsel %vm462, %v6897, %v6905
      %v6907 = vrot.slane %v6905, 4
      %v6909 = vshrl.u32 %v6728, 16
      %v6911 = vrot.slane %v6909, 6
      %v6912 = vshll.u32 %v6728, 16
      %v6914 = vrot.slane %v6912, 7
      %v6915 = vor.u32 %v6911, %v6914
      %v6916 = vsel %vm462, %v6907, %v6915
      %v6917 = vrot.slane %v6915, 4
      %v6919 = vshrl.u32 %v6729, 16
      %v6921 = vrot.slane %v6919, 6
      %v6922 = vshll.u32 %v6729, 16
      %v6924 = vrot.slane %v6922, 7
      %v6925 = vor.u32 %v6921, %v6924
      %v6926 = vsel %vm462, %v6917, %v6925
      %v6927 = vrot.slane %v6925, 4
      %v6929 = vshrl.u32 %v6730, 16
      %v6931 = vrot.slane %v6929, 6
      %v6932 = vshll.u32 %v6730, 16
      %v6934 = vrot.slane %v6932, 7
      %v6935 = vor.u32 %v6931, %v6934
      %v6936 = vsel %vm462, %v6927, %v6935
      %v6937 = vrot.slane %v6935, 4
      %v6939 = vshrl.u32 %v6731, 16
      %v6941 = vrot.slane %v6939, 6
      %v6942 = vshll.u32 %v6731, 16
      %v6944 = vrot.slane %v6942, 7
      %v6945 = vor.u32 %v6941, %v6944
      %v6946 = vsel %vm462, %v6937, %v6945
      %v6947 = vrot.slane %v6945, 4
      %v6949 = vshrl.u32 %v6732, 16
      %v6951 = vrot.slane %v6949, 6
      %v6952 = vshll.u32 %v6732, 16
      %v6954 = vrot.slane %v6952, 7
      %v6955 = vor.u32 %v6951, %v6954
      %v6956 = vsel %vm462, %v6947, %v6955
      %v6957 = vrot.slane %v6955, 4
      %v6959 = vshrl.u32 %v6733, 16
      %v6961 = vrot.slane %v6959, 6
      %v6962 = vshll.u32 %v6733, 16
      %v6964 = vrot.slane %v6962, 7
      %v6965 = vor.u32 %v6961, %v6964
      %v6966 = vsel %vm462, %v6957, %v6965
      %v6967 = vrot.slane %v6965, 4
      %v6969 = vshrl.u32 %v6734, 16
      %v6971 = vrot.slane %v6969, 6
      %v6972 = vshll.u32 %v6734, 16
      %v6974 = vrot.slane %v6972, 7
      %v6975 = vor.u32 %v6971, %v6974
      %v6976 = vsel %vm462, %v6967, %v6975
      %v6977 = vrot.slane %v6975, 4
      %v6979 = vshrl.u32 %v6735, 16
      %v6981 = vrot.slane %v6979, 6
      %v6982 = vshll.u32 %v6735, 16
      %v6984 = vrot.slane %v6982, 7
      %v6985 = vor.u32 %v6981, %v6984
      %v6986 = vsel %vm462, %v6977, %v6985
      %v6987 = vrot.slane %v6985, 4
      %v6989 = vshrl.u32 %v6736, 16
      %v6991 = vrot.slane %v6989, 6
      %v6992 = vshll.u32 %v6736, 16
      %v6994 = vrot.slane %v6992, 7
      %v6995 = vor.u32 %v6991, %v6994
      %v6996 = vsel %vm462, %v6987, %v6995
      %v6997 = vrot.slane %v6995, 4
      %v6999 = vshrl.u32 %v6737, 16
      %v7001 = vrot.slane %v6999, 6
      %v7002 = vshll.u32 %v6737, 16
      %v7004 = vrot.slane %v7002, 7
      %v7005 = vor.u32 %v7001, %v7004
      %v7006 = vsel %vm462, %v6997, %v7005
      %v7007 = vrot.slane %v7005, 4
      %v7009 = vshrl.u32 %v6738, 16
      %v7011 = vrot.slane %v7009, 6
      %v7012 = vshll.u32 %v6738, 16
      %v7014 = vrot.slane %v7012, 7
      %v7015 = vor.u32 %v7011, %v7014
      %v7016 = vsel %vm462, %v7007, %v7015
      %v7017 = vrot.slane %v7015, 4
      %v7019 = vshrl.u32 %v6739, 16
      %v7021 = vrot.slane %v7019, 6
      %v7022 = vshll.u32 %v6739, 16
      %v7024 = vrot.slane %v7022, 7
      %v7025 = vor.u32 %v7021, %v7024
      %v7026 = vsel %vm462, %v7017, %v7025
      %v7027 = vrot.slane %v7025, 4
      %v7029 = vshrl.u32 %v6740, 16
      %v7031 = vrot.slane %v7029, 6
      %v7032 = vshll.u32 %v6740, 16
      %v7034 = vrot.slane %v7032, 7
      %v7035 = vor.u32 %v7031, %v7034
      %v7036 = vsel %vm462, %v7027, %v7035
      %v7037 = vrot.slane %v7035, 4
      %v7039 = vshrl.u32 %v6741, 16
      %v7041 = vrot.slane %v7039, 6
      %v7042 = vshll.u32 %v6741, 16
      %v7044 = vrot.slane %v7042, 7
      %v7045 = vor.u32 %v7041, %v7044
      %v7046 = vsel %vm462, %v7037, %v7045
      %v7047 = vrot.slane %v7045, 4
      %v7049 = vshrl.u32 %v6742, 16
      %v7051 = vrot.slane %v7049, 6
      %v7052 = vshll.u32 %v6742, 16
      %v7054 = vrot.slane %v7052, 7
      %v7055 = vor.u32 %v7051, %v7054
      %v7056 = vsel %vm462, %v7047, %v7055
      %v7057 = vrot.slane %v7055, 4
      %v7059 = vshrl.u32 %v6743, 16
      %v7061 = vrot.slane %v7059, 6
      %v7062 = vshll.u32 %v6743, 16
      %v7064 = vrot.slane %v7062, 7
      %v7065 = vor.u32 %v7061, %v7064
      %v7066 = vsel %vm462, %v7057, %v7065
      %v7067 = vrot.slane %v7065, 4
      %v7069 = vshrl.u32 %v6744, 16
      %v7071 = vrot.slane %v7069, 6
      %v7072 = vshll.u32 %v6744, 16
      %v7074 = vrot.slane %v7072, 7
      %v7075 = vor.u32 %v7071, %v7074
      %v7076 = vsel %vm462, %v7067, %v7075
      %v7077 = vrot.slane %v7075, 4
      %v7079 = vshrl.u32 %v6745, 16
      %v7081 = vrot.slane %v7079, 6
      %v7082 = vshll.u32 %v6745, 16
      %v7084 = vrot.slane %v7082, 7
      %v7085 = vor.u32 %v7081, %v7084
      %v7086 = vsel %vm462, %v7077, %v7085
      %v7087 = vrot.slane %v7085, 4
      %v7089 = vshrl.u32 %v6746, 16
      %v7091 = vrot.slane %v7089, 6
      %v7092 = vshll.u32 %v6746, 16
      %v7094 = vrot.slane %v7092, 7
      %v7095 = vor.u32 %v7091, %v7094
      %v7096 = vsel %vm462, %v7087, %v7095
      %v7097 = vrot.slane %v7095, 4
      %v7099 = vshrl.u32 %v6747, 16
      %v7101 = vrot.slane %v7099, 6
      %v7102 = vshll.u32 %v6747, 16
      %v7104 = vrot.slane %v7102, 7
      %v7105 = vor.u32 %v7101, %v7104
      %v7106 = vsel %vm462, %v7097, %v7105
      %v7107 = vrot.slane %v7105, 4
      %v7109 = vshrl.u32 %v6748, 16
      %v7111 = vrot.slane %v7109, 6
      %v7112 = vshll.u32 %v6748, 16
      %v7114 = vrot.slane %v7112, 7
      %v7115 = vor.u32 %v7111, %v7114
      %v7116 = vsel %vm462, %v7107, %v7115
      %7153 = vst [vmem:[#allocation3] sm:$0xf] %v6766
      %7154 = vst [vmem:[#allocation3 + $0x24] sm:$0xf] %v6776
      %7155 = vst [vmem:[#allocation3 + $0x48] sm:$0xf] %v6786
      %7156 = vst [vmem:[#allocation3 + $0x6c] sm:$0xf] %v6796
      %7157 = vst [vmem:[#allocation3 + $0x90] sm:$0xf] %v6806
      %7158 = vst [vmem:[#allocation3 + $0xb4] sm:$0xf] %v6816
      %7159 = vst [vmem:[#allocation3 + $0xd8] sm:$0xf] %v6826
      %7160 = vst [vmem:[#allocation3 + $0xfc] sm:$0xf] %v6836
      %7161 = vst [vmem:[#allocation3 + $0x120] sm:$0xf] %v6846
      %7162 = vst [vmem:[#allocation3 + $0x144] sm:$0xf] %v6856
      %7163 = vst [vmem:[#allocation3 + $0x168] sm:$0xf] %v6866
      %7164 = vst [vmem:[#allocation3 + $0x18c] sm:$0xf] %v6876
      %7165 = vst [vmem:[#allocation3 + $0x1b0] sm:$0xf] %v6886
      %7166 = vst [vmem:[#allocation3 + $0x1d4] sm:$0xf] %v6896
      %7167 = vst [vmem:[#allocation3 + $0x1f8] sm:$0xf] %v6906
      %7168 = vst [vmem:[#allocation3 + $0x21c] sm:$0xf] %v6916
      %7169 = vst [vmem:[#allocation3 + $0x240] sm:$0xf] %v6926
      %7170 = vst [vmem:[#allocation3 + $0x264] sm:$0xf] %v6936
      %7171 = vst [vmem:[#allocation3 + $0x288] sm:$0xf] %v6946
      %7172 = vst [vmem:[#allocation3 + $0x2ac] sm:$0xf] %v6956
      %7173 = vst [vmem:[#allocation3 + $0x2d0] sm:$0xf] %v6966
      %7174 = vst [vmem:[#allocation3 + $0x2f4] sm:$0xf] %v6976
      %7175 = vst [vmem:[#allocation3 + $0x318] sm:$0xf] %v6986
      %7176 = vst [vmem:[#allocation3 + $0x33c] sm:$0xf] %v6996
      %7177 = vst [vmem:[#allocation3 + $0x360] sm:$0xf] %v7006
      %7178 = vst [vmem:[#allocation3 + $0x384] sm:$0xf] %v7016
      %7179 = vst [vmem:[#allocation3 + $0x3a8] sm:$0xf] %v7026
      %7180 = vst [vmem:[#allocation3 + $0x3cc] sm:$0xf] %v7036
      %7181 = vst [vmem:[#allocation3 + $0x3f0] sm:$0xf] %v7046
      %7182 = vst [vmem:[#allocation3 + $0x414] sm:$0xf] %v7056
      %7183 = vst [vmem:[#allocation3 + $0x438] sm:$0xf] %v7066
      %7184 = vst [vmem:[#allocation3 + $0x45c] sm:$0xf] %v7076
      %7185 = vst [vmem:[#allocation3 + $0x480] sm:$0xf] %v7086
      %7186 = vst [vmem:[#allocation3 + $0x4a4] sm:$0xf] %v7096
      %7187 = vst [vmem:[#allocation3 + $0x4c8] sm:$0xf] %v7106
      %7188 = vst [vmem:[#allocation3 + $0x4ec] sm:$0xf] %v7116
      %v7189 = vld [vmem:[#allocation2 + $0x4] sm:$0x8]
      %v7190 = vld [vmem:[#allocation2 + $0x8] sm:$0xf]
      %v7191 = vld [vmem:[#allocation2 + $0xc] sm:$0xf]
      %v7192 = vld [vmem:[#allocation2 + $0x10] sm:$0xf]
      %v7193 = vld [vmem:[#allocation2 + $0x14] sm:$0xf]
      %v7194 = vld [vmem:[#allocation2 + $0x18] sm:$0xf]
      %v7195 = vld [vmem:[#allocation2 + $0x1c] sm:$0xf]
      %v7196 = vld [vmem:[#allocation2 + $0x20] sm:$0xf]
      %v7197 = vld [vmem:[#allocation2 + $0x24] sm:$0xf]
      %v7198 = vld [vmem:[#allocation2 + $0x28] sm:$0xf]
      %v7199 = vld [vmem:[#allocation2 + $0x2c] sm:$0xf]
      %v7200 = vld [vmem:[#allocation2 + $0x30] sm:$0xf]
      %v7201 = vld [vmem:[#allocation2 + $0x34] sm:$0xf]
      %v7202 = vld [vmem:[#allocation2 + $0x38] sm:$0xf]
      %v7203 = vld [vmem:[#allocation2 + $0x3c] sm:$0xf]
      %v7204 = vld [vmem:[#allocation2 + $0x40] sm:$0xf]
      %v7205 = vld [vmem:[#allocation2 + $0x44] sm:$0xf]
      %v7206 = vld [vmem:[#allocation2 + $0x48] sm:$0xf]
      %v7207 = vld [vmem:[#allocation2 + $0x4c] sm:$0xf]
      %v7208 = vld [vmem:[#allocation2 + $0x50] sm:$0xf]
      %v7209 = vld [vmem:[#allocation2 + $0x54] sm:$0xf]
      %v7210 = vld [vmem:[#allocation2 + $0x58] sm:$0xf]
      %v7211 = vld [vmem:[#allocation2 + $0x5c] sm:$0xf]
      %v7212 = vld [vmem:[#allocation2 + $0x60] sm:$0xf]
      %v7213 = vld [vmem:[#allocation2 + $0x64] sm:$0xf]
      %v7214 = vld [vmem:[#allocation2 + $0x68] sm:$0xf]
      %v7215 = vld [vmem:[#allocation2 + $0x6c] sm:$0xf]
      %v7216 = vld [vmem:[#allocation2 + $0x70] sm:$0xf]
      %v7217 = vld [vmem:[#allocation2 + $0x74] sm:$0xf]
      %v7218 = vld [vmem:[#allocation2 + $0x78] sm:$0xf]
      %v7219 = vld [vmem:[#allocation2 + $0x7c] sm:$0xf]
      %v7220 = vld [vmem:[#allocation2 + $0x80] sm:$0xf]
      %v7221 = vld [vmem:[#allocation2 + $0x84] sm:$0xf]
      %v7222 = vld [vmem:[#allocation2 + $0x88] sm:$0xf]
      %v7223 = vld [vmem:[#allocation2 + $0x8c] sm:$0xf]
      %v7224 = vld [vmem:[#allocation2 + $0x90] sm:$0xf]
      %v7225 = vld [vmem:[#allocation2 + $0x94] sm:$0x7]
      %v7263 = vrot.slane %v7189, 7
      %v7264 = vrot.slane %v7263, 4
      %v7265 = vrot.slane %v7190, 7
      %v7266 = vsel %vm979, %v7264, %v7265
      %v7267 = vrot.slane %v7265, 4
      %v7268 = vrot.slane %v7191, 7
      %v7269 = vsel %vm979, %v7267, %v7268
      %v7270 = vrot.slane %v7268, 4
      %v7271 = vrot.slane %v7192, 7
      %v7272 = vsel %vm979, %v7270, %v7271
      %v7273 = vrot.slane %v7271, 4
      %v7274 = vrot.slane %v7193, 7
      %v7275 = vsel %vm979, %v7273, %v7274
      %v7276 = vrot.slane %v7274, 4
      %v7277 = vrot.slane %v7194, 7
      %v7278 = vsel %vm979, %v7276, %v7277
      %v7279 = vrot.slane %v7277, 4
      %v7280 = vrot.slane %v7195, 7
      %v7281 = vsel %vm979, %v7279, %v7280
      %v7282 = vrot.slane %v7280, 4
      %v7283 = vrot.slane %v7196, 7
      %v7284 = vsel %vm979, %v7282, %v7283
      %v7285 = vrot.slane %v7283, 4
      %v7286 = vrot.slane %v7197, 7
      %v7287 = vsel %vm979, %v7285, %v7286
      %v7288 = vrot.slane %v7286, 4
      %v7289 = vrot.slane %v7198, 7
      %v7290 = vsel %vm979, %v7288, %v7289
      %v7291 = vrot.slane %v7289, 4
      %v7292 = vrot.slane %v7199, 7
      %v7293 = vsel %vm979, %v7291, %v7292
      %v7294 = vrot.slane %v7292, 4
      %v7295 = vrot.slane %v7200, 7
      %v7296 = vsel %vm979, %v7294, %v7295
      %v7297 = vrot.slane %v7295, 4
      %v7298 = vrot.slane %v7201, 7
      %v7299 = vsel %vm979, %v7297, %v7298
      %v7300 = vrot.slane %v7298, 4
      %v7301 = vrot.slane %v7202, 7
      %v7302 = vsel %vm979, %v7300, %v7301
      %v7303 = vrot.slane %v7301, 4
      %v7304 = vrot.slane %v7203, 7
      %v7305 = vsel %vm979, %v7303, %v7304
      %v7306 = vrot.slane %v7304, 4
      %v7307 = vrot.slane %v7204, 7
      %v7308 = vsel %vm979, %v7306, %v7307
      %v7309 = vrot.slane %v7307, 4
      %v7310 = vrot.slane %v7205, 7
      %v7311 = vsel %vm979, %v7309, %v7310
      %v7312 = vrot.slane %v7310, 4
      %v7313 = vrot.slane %v7206, 7
      %v7314 = vsel %vm979, %v7312, %v7313
      %v7315 = vrot.slane %v7313, 4
      %v7316 = vrot.slane %v7207, 7
      %v7317 = vsel %vm979, %v7315, %v7316
      %v7318 = vrot.slane %v7316, 4
      %v7319 = vrot.slane %v7208, 7
      %v7320 = vsel %vm979, %v7318, %v7319
      %v7321 = vrot.slane %v7319, 4
      %v7322 = vrot.slane %v7209, 7
      %v7323 = vsel %vm979, %v7321, %v7322
      %v7324 = vrot.slane %v7322, 4
      %v7325 = vrot.slane %v7210, 7
      %v7326 = vsel %vm979, %v7324, %v7325
      %v7327 = vrot.slane %v7325, 4
      %v7328 = vrot.slane %v7211, 7
      %v7329 = vsel %vm979, %v7327, %v7328
      %v7330 = vrot.slane %v7328, 4
      %v7331 = vrot.slane %v7212, 7
      %v7332 = vsel %vm979, %v7330, %v7331
      %v7333 = vrot.slane %v7331, 4
      %v7334 = vrot.slane %v7213, 7
      %v7335 = vsel %vm979, %v7333, %v7334
      %v7336 = vrot.slane %v7334, 4
      %v7337 = vrot.slane %v7214, 7
      %v7338 = vsel %vm979, %v7336, %v7337
      %v7339 = vrot.slane %v7337, 4
      %v7340 = vrot.slane %v7215, 7
      %v7341 = vsel %vm979, %v7339, %v7340
      %v7342 = vrot.slane %v7340, 4
      %v7343 = vrot.slane %v7216, 7
      %v7344 = vsel %vm979, %v7342, %v7343
      %v7345 = vrot.slane %v7343, 4
      %v7346 = vrot.slane %v7217, 7
      %v7347 = vsel %vm979, %v7345, %v7346
      %v7348 = vrot.slane %v7346, 4
      %v7349 = vrot.slane %v7218, 7
      %v7350 = vsel %vm979, %v7348, %v7349
      %v7351 = vrot.slane %v7349, 4
      %v7352 = vrot.slane %v7219, 7
      %v7353 = vsel %vm979, %v7351, %v7352
      %v7354 = vrot.slane %v7352, 4
      %v7355 = vrot.slane %v7220, 7
      %v7356 = vsel %vm979, %v7354, %v7355
      %v7357 = vrot.slane %v7355, 4
      %v7358 = vrot.slane %v7221, 7
      %v7359 = vsel %vm979, %v7357, %v7358
      %v7360 = vrot.slane %v7358, 4
      %v7361 = vrot.slane %v7222, 7
      %v7362 = vsel %vm979, %v7360, %v7361
      %v7363 = vrot.slane %v7361, 4
      %v7364 = vrot.slane %v7223, 7
      %v7365 = vsel %vm979, %v7363, %v7364
      %v7366 = vrot.slane %v7364, 4
      %v7367 = vrot.slane %v7224, 7
      %v7368 = vsel %vm979, %v7366, %v7367
      %v7369 = vrot.slane %v7367, 4
      %v7370 = vrot.slane %v7225, 7
      %v7371 = vsel %vm979, %v7369, %v7370
      %7408 = vst [vmem:[#allocation3 + $0x4] sm:$0xf] %v7266
      %7409 = vst [vmem:[#allocation3 + $0x28] sm:$0xf] %v7269
      %7410 = vst [vmem:[#allocation3 + $0x4c] sm:$0xf] %v7272
      %7411 = vst [vmem:[#allocation3 + $0x70] sm:$0xf] %v7275
      %7412 = vst [vmem:[#allocation3 + $0x94] sm:$0xf] %v7278
      %7413 = vst [vmem:[#allocation3 + $0xb8] sm:$0xf] %v7281
      %7414 = vst [vmem:[#allocation3 + $0xdc] sm:$0xf] %v7284
      %7415 = vst [vmem:[#allocation3 + $0x100] sm:$0xf] %v7287
      %7416 = vst [vmem:[#allocation3 + $0x124] sm:$0xf] %v7290
      %7417 = vst [vmem:[#allocation3 + $0x148] sm:$0xf] %v7293
      %7418 = vst [vmem:[#allocation3 + $0x16c] sm:$0xf] %v7296
      %7419 = vst [vmem:[#allocation3 + $0x190] sm:$0xf] %v7299
      %7420 = vst [vmem:[#allocation3 + $0x1b4] sm:$0xf] %v7302
      %7421 = vst [vmem:[#allocation3 + $0x1d8] sm:$0xf] %v7305
      %7422 = vst [vmem:[#allocation3 + $0x1fc] sm:$0xf] %v7308
      %7423 = vst [vmem:[#allocation3 + $0x220] sm:$0xf] %v7311
      %7424 = vst [vmem:[#allocation3 + $0x244] sm:$0xf] %v7314
      %7425 = vst [vmem:[#allocation3 + $0x268] sm:$0xf] %v7317
      %7426 = vst [vmem:[#allocation3 + $0x28c] sm:$0xf] %v7320
      %7427 = vst [vmem:[#allocation3 + $0x2b0] sm:$0xf] %v7323
      %7428 = vst [vmem:[#allocation3 + $0x2d4] sm:$0xf] %v7326
      %7429 = vst [vmem:[#allocation3 + $0x2f8] sm:$0xf] %v7329
      %7430 = vst [vmem:[#allocation3 + $0x31c] sm:$0xf] %v7332
      %7431 = vst [vmem:[#allocation3 + $0x340] sm:$0xf] %v7335
      %7432 = vst [vmem:[#allocation3 + $0x364] sm:$0xf] %v7338
      %7433 = vst [vmem:[#allocation3 + $0x388] sm:$0xf] %v7341
      %7434 = vst [vmem:[#allocation3 + $0x3ac] sm:$0xf] %v7344
      %7435 = vst [vmem:[#allocation3 + $0x3d0] sm:$0xf] %v7347
      %7436 = vst [vmem:[#allocation3 + $0x3f4] sm:$0xf] %v7350
      %7437 = vst [vmem:[#allocation3 + $0x418] sm:$0xf] %v7353
      %7438 = vst [vmem:[#allocation3 + $0x43c] sm:$0xf] %v7356
      %7439 = vst [vmem:[#allocation3 + $0x460] sm:$0xf] %v7359
      %7440 = vst [vmem:[#allocation3 + $0x484] sm:$0xf] %v7362
      %7441 = vst [vmem:[#allocation3 + $0x4a8] sm:$0xf] %v7365
      %7442 = vst [vmem:[#allocation3 + $0x4cc] sm:$0xf] %v7368
      %7443 = vst [vmem:[#allocation3 + $0x4f0] sm:$0xf] %v7371
      %v7444 = vld [vmem:[#allocation2 + $0x4] sm:$0x8]
      %v7445 = vld [vmem:[#allocation2 + $0x8] sm:$0xf]
      %v7446 = vld [vmem:[#allocation2 + $0xc] sm:$0xf]
      %v7447 = vld [vmem:[#allocation2 + $0x10] sm:$0xf]
      %v7448 = vld [vmem:[#allocation2 + $0x14] sm:$0xf]
      %v7449 = vld [vmem:[#allocation2 + $0x18] sm:$0xf]
      %v7450 = vld [vmem:[#allocation2 + $0x1c] sm:$0xf]
      %v7451 = vld [vmem:[#allocation2 + $0x20] sm:$0xf]
      %v7452 = vld [vmem:[#allocation2 + $0x24] sm:$0xf]
      %v7453 = vld [vmem:[#allocation2 + $0x28] sm:$0xf]
      %v7454 = vld [vmem:[#allocation2 + $0x2c] sm:$0xf]
      %v7455 = vld [vmem:[#allocation2 + $0x30] sm:$0xf]
      %v7456 = vld [vmem:[#allocation2 + $0x34] sm:$0xf]
      %v7457 = vld [vmem:[#allocation2 + $0x38] sm:$0xf]
      %v7458 = vld [vmem:[#allocation2 + $0x3c] sm:$0xf]
      %v7459 = vld [vmem:[#allocation2 + $0x40] sm:$0xf]
      %v7460 = vld [vmem:[#allocation2 + $0x44] sm:$0xf]
      %v7461 = vld [vmem:[#allocation2 + $0x48] sm:$0xf]
      %v7462 = vld [vmem:[#allocation2 + $0x4c] sm:$0xf]
      %v7463 = vld [vmem:[#allocation2 + $0x50] sm:$0xf]
      %v7464 = vld [vmem:[#allocation2 + $0x54] sm:$0xf]
      %v7465 = vld [vmem:[#allocation2 + $0x58] sm:$0xf]
      %v7466 = vld [vmem:[#allocation2 + $0x5c] sm:$0xf]
      %v7467 = vld [vmem:[#allocation2 + $0x60] sm:$0xf]
      %v7468 = vld [vmem:[#allocation2 + $0x64] sm:$0xf]
      %v7469 = vld [vmem:[#allocation2 + $0x68] sm:$0xf]
      %v7470 = vld [vmem:[#allocation2 + $0x6c] sm:$0xf]
      %v7471 = vld [vmem:[#allocation2 + $0x70] sm:$0xf]
      %v7472 = vld [vmem:[#allocation2 + $0x74] sm:$0xf]
      %v7473 = vld [vmem:[#allocation2 + $0x78] sm:$0xf]
      %v7474 = vld [vmem:[#allocation2 + $0x7c] sm:$0xf]
      %v7475 = vld [vmem:[#allocation2 + $0x80] sm:$0xf]
      %v7476 = vld [vmem:[#allocation2 + $0x84] sm:$0xf]
      %v7477 = vld [vmem:[#allocation2 + $0x88] sm:$0xf]
      %v7478 = vld [vmem:[#allocation2 + $0x8c] sm:$0xf]
      %v7479 = vld [vmem:[#allocation2 + $0x90] sm:$0xf]
      %v7480 = vld [vmem:[#allocation2 + $0x94] sm:$0xf]
      %v7482 = vshrl.u32 %v7444, 16
      %v7484 = vrot.slane %v7482, 7
      %v7485 = vrot.slane %v7484, 4
      %v7487 = vshrl.u32 %v7445, 16
      %v7489 = vrot.slane %v7487, 7
      %v7490 = vshll.u32 %v7445, 16
      %v7492 = vor.u32 %v7489, %v7490
      %v7493 = vsel %vm1200, %v7485, %v7492
      %v7494 = vrot.slane %v7489, 4
      %v7496 = vshrl.u32 %v7446, 16
      %v7498 = vrot.slane %v7496, 7
      %v7499 = vshll.u32 %v7446, 16
      %v7501 = vor.u32 %v7498, %v7499
      %v7502 = vsel %vm1200, %v7494, %v7501
      %v7503 = vrot.slane %v7498, 4
      %v7505 = vshrl.u32 %v7447, 16
      %v7507 = vrot.slane %v7505, 7
      %v7508 = vshll.u32 %v7447, 16
      %v7510 = vor.u32 %v7507, %v7508
      %v7511 = vsel %vm1200, %v7503, %v7510
      %v7512 = vrot.slane %v7507, 4
      %v7514 = vshrl.u32 %v7448, 16
      %v7516 = vrot.slane %v7514, 7
      %v7517 = vshll.u32 %v7448, 16
      %v7519 = vor.u32 %v7516, %v7517
      %v7520 = vsel %vm1200, %v7512, %v7519
      %v7521 = vrot.slane %v7516, 4
      %v7523 = vshrl.u32 %v7449, 16
      %v7525 = vrot.slane %v7523, 7
      %v7526 = vshll.u32 %v7449, 16
      %v7528 = vor.u32 %v7525, %v7526
      %v7529 = vsel %vm1200, %v7521, %v7528
      %v7530 = vrot.slane %v7525, 4
      %v7532 = vshrl.u32 %v7450, 16
      %v7534 = vrot.slane %v7532, 7
      %v7535 = vshll.u32 %v7450, 16
      %v7537 = vor.u32 %v7534, %v7535
      %v7538 = vsel %vm1200, %v7530, %v7537
      %v7539 = vrot.slane %v7534, 4
      %v7541 = vshrl.u32 %v7451, 16
      %v7543 = vrot.slane %v7541, 7
      %v7544 = vshll.u32 %v7451, 16
      %v7546 = vor.u32 %v7543, %v7544
      %v7547 = vsel %vm1200, %v7539, %v7546
      %v7548 = vrot.slane %v7543, 4
      %v7550 = vshrl.u32 %v7452, 16
      %v7552 = vrot.slane %v7550, 7
      %v7553 = vshll.u32 %v7452, 16
      %v7555 = vor.u32 %v7552, %v7553
      %v7556 = vsel %vm1200, %v7548, %v7555
      %v7557 = vrot.slane %v7552, 4
      %v7559 = vshrl.u32 %v7453, 16
      %v7561 = vrot.slane %v7559, 7
      %v7562 = vshll.u32 %v7453, 16
      %v7564 = vor.u32 %v7561, %v7562
      %v7565 = vsel %vm1200, %v7557, %v7564
      %v7566 = vrot.slane %v7561, 4
      %v7568 = vshrl.u32 %v7454, 16
      %v7570 = vrot.slane %v7568, 7
      %v7571 = vshll.u32 %v7454, 16
      %v7573 = vor.u32 %v7570, %v7571
      %v7574 = vsel %vm1200, %v7566, %v7573
      %v7575 = vrot.slane %v7570, 4
      %v7577 = vshrl.u32 %v7455, 16
      %v7579 = vrot.slane %v7577, 7
      %v7580 = vshll.u32 %v7455, 16
      %v7582 = vor.u32 %v7579, %v7580
      %v7583 = vsel %vm1200, %v7575, %v7582
      %v7584 = vrot.slane %v7579, 4
      %v7586 = vshrl.u32 %v7456, 16
      %v7588 = vrot.slane %v7586, 7
      %v7589 = vshll.u32 %v7456, 16
      %v7591 = vor.u32 %v7588, %v7589
      %v7592 = vsel %vm1200, %v7584, %v7591
      %v7593 = vrot.slane %v7588, 4
      %v7595 = vshrl.u32 %v7457, 16
      %v7597 = vrot.slane %v7595, 7
      %v7598 = vshll.u32 %v7457, 16
      %v7600 = vor.u32 %v7597, %v7598
      %v7601 = vsel %vm1200, %v7593, %v7600
      %v7602 = vrot.slane %v7597, 4
      %v7604 = vshrl.u32 %v7458, 16
      %v7606 = vrot.slane %v7604, 7
      %v7607 = vshll.u32 %v7458, 16
      %v7609 = vor.u32 %v7606, %v7607
      %v7610 = vsel %vm1200, %v7602, %v7609
      %v7611 = vrot.slane %v7606, 4
      %v7613 = vshrl.u32 %v7459, 16
      %v7615 = vrot.slane %v7613, 7
      %v7616 = vshll.u32 %v7459, 16
      %v7618 = vor.u32 %v7615, %v7616
      %v7619 = vsel %vm1200, %v7611, %v7618
      %v7620 = vrot.slane %v7615, 4
      %v7622 = vshrl.u32 %v7460, 16
      %v7624 = vrot.slane %v7622, 7
      %v7625 = vshll.u32 %v7460, 16
      %v7627 = vor.u32 %v7624, %v7625
      %v7628 = vsel %vm1200, %v7620, %v7627
      %v7629 = vrot.slane %v7624, 4
      %v7631 = vshrl.u32 %v7461, 16
      %v7633 = vrot.slane %v7631, 7
      %v7634 = vshll.u32 %v7461, 16
      %v7636 = vor.u32 %v7633, %v7634
      %v7637 = vsel %vm1200, %v7629, %v7636
      %v7638 = vrot.slane %v7633, 4
      %v7640 = vshrl.u32 %v7462, 16
      %v7642 = vrot.slane %v7640, 7
      %v7643 = vshll.u32 %v7462, 16
      %v7645 = vor.u32 %v7642, %v7643
      %v7646 = vsel %vm1200, %v7638, %v7645
      %v7647 = vrot.slane %v7642, 4
      %v7649 = vshrl.u32 %v7463, 16
      %v7651 = vrot.slane %v7649, 7
      %v7652 = vshll.u32 %v7463, 16
      %v7654 = vor.u32 %v7651, %v7652
      %v7655 = vsel %vm1200, %v7647, %v7654
      %v7656 = vrot.slane %v7651, 4
      %v7658 = vshrl.u32 %v7464, 16
      %v7660 = vrot.slane %v7658, 7
      %v7661 = vshll.u32 %v7464, 16
      %v7663 = vor.u32 %v7660, %v7661
      %v7664 = vsel %vm1200, %v7656, %v7663
      %v7665 = vrot.slane %v7660, 4
      %v7667 = vshrl.u32 %v7465, 16
      %v7669 = vrot.slane %v7667, 7
      %v7670 = vshll.u32 %v7465, 16
      %v7672 = vor.u32 %v7669, %v7670
      %v7673 = vsel %vm1200, %v7665, %v7672
      %v7674 = vrot.slane %v7669, 4
      %v7676 = vshrl.u32 %v7466, 16
      %v7678 = vrot.slane %v7676, 7
      %v7679 = vshll.u32 %v7466, 16
      %v7681 = vor.u32 %v7678, %v7679
      %v7682 = vsel %vm1200, %v7674, %v7681
      %v7683 = vrot.slane %v7678, 4
      %v7685 = vshrl.u32 %v7467, 16
      %v7687 = vrot.slane %v7685, 7
      %v7688 = vshll.u32 %v7467, 16
      %v7690 = vor.u32 %v7687, %v7688
      %v7691 = vsel %vm1200, %v7683, %v7690
      %v7692 = vrot.slane %v7687, 4
      %v7694 = vshrl.u32 %v7468, 16
      %v7696 = vrot.slane %v7694, 7
      %v7697 = vshll.u32 %v7468, 16
      %v7699 = vor.u32 %v7696, %v7697
      %v7700 = vsel %vm1200, %v7692, %v7699
      %v7701 = vrot.slane %v7696, 4
      %v7703 = vshrl.u32 %v7469, 16
      %v7705 = vrot.slane %v7703, 7
      %v7706 = vshll.u32 %v7469, 16
      %v7708 = vor.u32 %v7705, %v7706
      %v7709 = vsel %vm1200, %v7701, %v7708
      %v7710 = vrot.slane %v7705, 4
      %v7712 = vshrl.u32 %v7470, 16
      %v7714 = vrot.slane %v7712, 7
      %v7715 = vshll.u32 %v7470, 16
      %v7717 = vor.u32 %v7714, %v7715
      %v7718 = vsel %vm1200, %v7710, %v7717
      %v7719 = vrot.slane %v7714, 4
      %v7721 = vshrl.u32 %v7471, 16
      %v7723 = vrot.slane %v7721, 7
      %v7724 = vshll.u32 %v7471, 16
      %v7726 = vor.u32 %v7723, %v7724
      %v7727 = vsel %vm1200, %v7719, %v7726
      %v7728 = vrot.slane %v7723, 4
      %v7730 = vshrl.u32 %v7472, 16
      %v7732 = vrot.slane %v7730, 7
      %v7733 = vshll.u32 %v7472, 16
      %v7735 = vor.u32 %v7732, %v7733
      %v7736 = vsel %vm1200, %v7728, %v7735
      %v7737 = vrot.slane %v7732, 4
      %v7739 = vshrl.u32 %v7473, 16
      %v7741 = vrot.slane %v7739, 7
      %v7742 = vshll.u32 %v7473, 16
      %v7744 = vor.u32 %v7741, %v7742
      %v7745 = vsel %vm1200, %v7737, %v7744
      %v7746 = vrot.slane %v7741, 4
      %v7748 = vshrl.u32 %v7474, 16
      %v7750 = vrot.slane %v7748, 7
      %v7751 = vshll.u32 %v7474, 16
      %v7753 = vor.u32 %v7750, %v7751
      %v7754 = vsel %vm1200, %v7746, %v7753
      %v7755 = vrot.slane %v7750, 4
      %v7757 = vshrl.u32 %v7475, 16
      %v7759 = vrot.slane %v7757, 7
      %v7760 = vshll.u32 %v7475, 16
      %v7762 = vor.u32 %v7759, %v7760
      %v7763 = vsel %vm1200, %v7755, %v7762
      %v7764 = vrot.slane %v7759, 4
      %v7766 = vshrl.u32 %v7476, 16
      %v7768 = vrot.slane %v7766, 7
      %v7769 = vshll.u32 %v7476, 16
      %v7771 = vor.u32 %v7768, %v7769
      %v7772 = vsel %vm1200, %v7764, %v7771
      %v7773 = vrot.slane %v7768, 4
      %v7775 = vshrl.u32 %v7477, 16
      %v7777 = vrot.slane %v7775, 7
      %v7778 = vshll.u32 %v7477, 16
      %v7780 = vor.u32 %v7777, %v7778
      %v7781 = vsel %vm1200, %v7773, %v7780
      %v7782 = vrot.slane %v7777, 4
      %v7784 = vshrl.u32 %v7478, 16
      %v7786 = vrot.slane %v7784, 7
      %v7787 = vshll.u32 %v7478, 16
      %v7789 = vor.u32 %v7786, %v7787
      %v7790 = vsel %vm1200, %v7782, %v7789
      %v7791 = vrot.slane %v7786, 4
      %v7793 = vshrl.u32 %v7479, 16
      %v7795 = vrot.slane %v7793, 7
      %v7796 = vshll.u32 %v7479, 16
      %v7798 = vor.u32 %v7795, %v7796
      %v7799 = vsel %vm1200, %v7791, %v7798
      %v7800 = vrot.slane %v7795, 4
      %v7802 = vshrl.u32 %v7480, 16
      %v7804 = vrot.slane %v7802, 7
      %v7805 = vshll.u32 %v7480, 16
      %v7807 = vor.u32 %v7804, %v7805
      %v7808 = vsel %vm1200, %v7800, %v7807
      %7845 = vst [vmem:[#allocation3 + $0x8] sm:$0xf] %v7493
      %7846 = vst [vmem:[#allocation3 + $0x2c] sm:$0xf] %v7502
      %7847 = vst [vmem:[#allocation3 + $0x50] sm:$0xf] %v7511
      %7848 = vst [vmem:[#allocation3 + $0x74] sm:$0xf] %v7520
      %7849 = vst [vmem:[#allocation3 + $0x98] sm:$0xf] %v7529
      %7850 = vst [vmem:[#allocation3 + $0xbc] sm:$0xf] %v7538
      %7851 = vst [vmem:[#allocation3 + $0xe0] sm:$0xf] %v7547
      %7852 = vst [vmem:[#allocation3 + $0x104] sm:$0xf] %v7556
      %7853 = vst [vmem:[#allocation3 + $0x128] sm:$0xf] %v7565
      %7854 = vst [vmem:[#allocation3 + $0x14c] sm:$0xf] %v7574
      %7855 = vst [vmem:[#allocation3 + $0x170] sm:$0xf] %v7583
      %7856 = vst [vmem:[#allocation3 + $0x194] sm:$0xf] %v7592
      %7857 = vst [vmem:[#allocation3 + $0x1b8] sm:$0xf] %v7601
      %7858 = vst [vmem:[#allocation3 + $0x1dc] sm:$0xf] %v7610
      %7859 = vst [vmem:[#allocation3 + $0x200] sm:$0xf] %v7619
      %7860 = vst [vmem:[#allocation3 + $0x224] sm:$0xf] %v7628
      %7861 = vst [vmem:[#allocation3 + $0x248] sm:$0xf] %v7637
      %7862 = vst [vmem:[#allocation3 + $0x26c] sm:$0xf] %v7646
      %7863 = vst [vmem:[#allocation3 + $0x290] sm:$0xf] %v7655
      %7864 = vst [vmem:[#allocation3 + $0x2b4] sm:$0xf] %v7664
      %7865 = vst [vmem:[#allocation3 + $0x2d8] sm:$0xf] %v7673
      %7866 = vst [vmem:[#allocation3 + $0x2fc] sm:$0xf] %v7682
      %7867 = vst [vmem:[#allocation3 + $0x320] sm:$0xf] %v7691
      %7868 = vst [vmem:[#allocation3 + $0x344] sm:$0xf] %v7700
      %7869 = vst [vmem:[#allocation3 + $0x368] sm:$0xf] %v7709
      %7870 = vst [vmem:[#allocation3 + $0x38c] sm:$0xf] %v7718
      %7871 = vst [vmem:[#allocation3 + $0x3b0] sm:$0xf] %v7727
      %7872 = vst [vmem:[#allocation3 + $0x3d4] sm:$0xf] %v7736
      %7873 = vst [vmem:[#allocation3 + $0x3f8] sm:$0xf] %v7745
      %7874 = vst [vmem:[#allocation3 + $0x41c] sm:$0xf] %v7754
      %7875 = vst [vmem:[#allocation3 + $0x440] sm:$0xf] %v7763
      %7876 = vst [vmem:[#allocation3 + $0x464] sm:$0xf] %v7772
      %7877 = vst [vmem:[#allocation3 + $0x488] sm:$0xf] %v7781
      %7878 = vst [vmem:[#allocation3 + $0x4ac] sm:$0xf] %v7790
      %7879 = vst [vmem:[#allocation3 + $0x4d0] sm:$0xf] %v7799
      %7880 = vst [vmem:[#allocation3 + $0x4f4] sm:$0xf] %v7808
      %v7881 = vld [vmem:[#allocation2 + $0xc] sm:$0x8]
      %v7882 = vld [vmem:[#allocation2 + $0x10] sm:$0xf]
      %v7883 = vld [vmem:[#allocation2 + $0x14] sm:$0xf]
      %v7884 = vld [vmem:[#allocation2 + $0x18] sm:$0xf]
      %v7885 = vld [vmem:[#allocation2 + $0x1c] sm:$0xf]
      %v7886 = vld [vmem:[#allocation2 + $0x20] sm:$0xf]
      %v7887 = vld [vmem:[#allocation2 + $0x24] sm:$0xf]
      %v7888 = vld [vmem:[#allocation2 + $0x28] sm:$0xf]
      %v7889 = vld [vmem:[#allocation2 + $0x2c] sm:$0xf]
      %v7890 = vld [vmem:[#allocation2 + $0x30] sm:$0xf]
      %v7891 = vld [vmem:[#allocation2 + $0x34] sm:$0xf]
      %v7892 = vld [vmem:[#allocation2 + $0x38] sm:$0xf]
      %v7893 = vld [vmem:[#allocation2 + $0x3c] sm:$0xf]
      %v7894 = vld [vmem:[#allocation2 + $0x40] sm:$0xf]
      %v7895 = vld [vmem:[#allocation2 + $0x44] sm:$0xf]
      %v7896 = vld [vmem:[#allocation2 + $0x48] sm:$0xf]
      %v7897 = vld [vmem:[#allocation2 + $0x4c] sm:$0xf]
      %v7898 = vld [vmem:[#allocation2 + $0x50] sm:$0xf]
      %v7899 = vld [vmem:[#allocation2 + $0x54] sm:$0xf]
      %v7900 = vld [vmem:[#allocation2 + $0x58] sm:$0xf]
      %v7901 = vld [vmem:[#allocation2 + $0x5c] sm:$0xf]
      %v7902 = vld [vmem:[#allocation2 + $0x60] sm:$0xf]
      %v7903 = vld [vmem:[#allocation2 + $0x64] sm:$0xf]
      %v7904 = vld [vmem:[#allocation2 + $0x68] sm:$0xf]
      %v7905 = vld [vmem:[#allocation2 + $0x6c] sm:$0xf]
      %v7906 = vld [vmem:[#allocation2 + $0x70] sm:$0xf]
      %v7907 = vld [vmem:[#allocation2 + $0x74] sm:$0xf]
      %v7908 = vld [vmem:[#allocation2 + $0x78] sm:$0xf]
      %v7909 = vld [vmem:[#allocation2 + $0x7c] sm:$0xf]
      %v7910 = vld [vmem:[#allocation2 + $0x80] sm:$0xf]
      %v7911 = vld [vmem:[#allocation2 + $0x84] sm:$0xf]
      %v7912 = vld [vmem:[#allocation2 + $0x88] sm:$0xf]
      %v7913 = vld [vmem:[#allocation2 + $0x8c] sm:$0xf]
      %v7914 = vld [vmem:[#allocation2 + $0x90] sm:$0xf]
      %v7915 = vld [vmem:[#allocation2 + $0x94] sm:$0xf]
      %v7916 = vld [vmem:[#allocation2 + $0x98] sm:$0xf]
      %v7917 = vld [vmem:[#allocation2 + $0x9c] sm:$0xf]
      %v7919 = vshrl.u32 %v7881, 16
      %v7921 = vrot.slane %v7919, 7
      %v7922 = vrot.slane %v7921, 4
      %v7924 = vshrl.u32 %v7882, 16
      %v7926 = vrot.slane %v7924, 7
      %v7927 = vshll.u32 %v7882, 16
      %v7929 = vor.u32 %v7926, %v7927
      %v7930 = vsel %vm1200, %v7922, %v7929
      %v7931 = vrot.slane %v7926, 4
      %v7933 = vshrl.u32 %v7883, 16
      %v7935 = vrot.slane %v7933, 7
      %v7936 = vshll.u32 %v7883, 16
      %v7938 = vor.u32 %v7935, %v7936
      %v7939 = vsel %vm1200, %v7931, %v7938
      %v7940 = vrot.slane %v7935, 4
      %v7942 = vshrl.u32 %v7884, 16
      %v7944 = vrot.slane %v7942, 7
      %v7945 = vshll.u32 %v7884, 16
      %v7947 = vor.u32 %v7944, %v7945
      %v7948 = vsel %vm1200, %v7940, %v7947
      %v7949 = vrot.slane %v7944, 4
      %v7951 = vshrl.u32 %v7885, 16
      %v7953 = vrot.slane %v7951, 7
      %v7954 = vshll.u32 %v7885, 16
      %v7956 = vor.u32 %v7953, %v7954
      %v7957 = vsel %vm1200, %v7949, %v7956
      %v7958 = vrot.slane %v7953, 4
      %v7960 = vshrl.u32 %v7886, 16
      %v7962 = vrot.slane %v7960, 7
      %v7963 = vshll.u32 %v7886, 16
      %v7965 = vor.u32 %v7962, %v7963
      %v7966 = vsel %vm1200, %v7958, %v7965
      %v7967 = vrot.slane %v7962, 4
      %v7969 = vshrl.u32 %v7887, 16
      %v7971 = vrot.slane %v7969, 7
      %v7972 = vshll.u32 %v7887, 16
      %v7974 = vor.u32 %v7971, %v7972
      %v7975 = vsel %vm1200, %v7967, %v7974
      %v7976 = vrot.slane %v7971, 4
      %v7978 = vshrl.u32 %v7888, 16
      %v7980 = vrot.slane %v7978, 7
      %v7981 = vshll.u32 %v7888, 16
      %v7983 = vor.u32 %v7980, %v7981
      %v7984 = vsel %vm1200, %v7976, %v7983
      %v7985 = vrot.slane %v7980, 4
      %v7987 = vshrl.u32 %v7889, 16
      %v7989 = vrot.slane %v7987, 7
      %v7990 = vshll.u32 %v7889, 16
      %v7992 = vor.u32 %v7989, %v7990
      %v7993 = vsel %vm1200, %v7985, %v7992
      %v7994 = vrot.slane %v7989, 4
      %v7996 = vshrl.u32 %v7890, 16
      %v7998 = vrot.slane %v7996, 7
      %v7999 = vshll.u32 %v7890, 16
      %v8001 = vor.u32 %v7998, %v7999
      %v8002 = vsel %vm1200, %v7994, %v8001
      %v8003 = vrot.slane %v7998, 4
      %v8005 = vshrl.u32 %v7891, 16
      %v8007 = vrot.slane %v8005, 7
      %v8008 = vshll.u32 %v7891, 16
      %v8010 = vor.u32 %v8007, %v8008
      %v8011 = vsel %vm1200, %v8003, %v8010
      %v8012 = vrot.slane %v8007, 4
      %v8014 = vshrl.u32 %v7892, 16
      %v8016 = vrot.slane %v8014, 7
      %v8017 = vshll.u32 %v7892, 16
      %v8019 = vor.u32 %v8016, %v8017
      %v8020 = vsel %vm1200, %v8012, %v8019
      %v8021 = vrot.slane %v8016, 4
      %v8023 = vshrl.u32 %v7893, 16
      %v8025 = vrot.slane %v8023, 7
      %v8026 = vshll.u32 %v7893, 16
      %v8028 = vor.u32 %v8025, %v8026
      %v8029 = vsel %vm1200, %v8021, %v8028
      %v8030 = vrot.slane %v8025, 4
      %v8032 = vshrl.u32 %v7894, 16
      %v8034 = vrot.slane %v8032, 7
      %v8035 = vshll.u32 %v7894, 16
      %v8037 = vor.u32 %v8034, %v8035
      %v8038 = vsel %vm1200, %v8030, %v8037
      %v8039 = vrot.slane %v8034, 4
      %v8041 = vshrl.u32 %v7895, 16
      %v8043 = vrot.slane %v8041, 7
      %v8044 = vshll.u32 %v7895, 16
      %v8046 = vor.u32 %v8043, %v8044
      %v8047 = vsel %vm1200, %v8039, %v8046
      %v8048 = vrot.slane %v8043, 4
      %v8050 = vshrl.u32 %v7896, 16
      %v8052 = vrot.slane %v8050, 7
      %v8053 = vshll.u32 %v7896, 16
      %v8055 = vor.u32 %v8052, %v8053
      %v8056 = vsel %vm1200, %v8048, %v8055
      %v8057 = vrot.slane %v8052, 4
      %v8059 = vshrl.u32 %v7897, 16
      %v8061 = vrot.slane %v8059, 7
      %v8062 = vshll.u32 %v7897, 16
      %v8064 = vor.u32 %v8061, %v8062
      %v8065 = vsel %vm1200, %v8057, %v8064
      %v8066 = vrot.slane %v8061, 4
      %v8068 = vshrl.u32 %v7898, 16
      %v8070 = vrot.slane %v8068, 7
      %v8071 = vshll.u32 %v7898, 16
      %v8073 = vor.u32 %v8070, %v8071
      %v8074 = vsel %vm1200, %v8066, %v8073
      %v8075 = vrot.slane %v8070, 4
      %v8077 = vshrl.u32 %v7899, 16
      %v8079 = vrot.slane %v8077, 7
      %v8080 = vshll.u32 %v7899, 16
      %v8082 = vor.u32 %v8079, %v8080
      %v8083 = vsel %vm1200, %v8075, %v8082
      %v8084 = vrot.slane %v8079, 4
      %v8086 = vshrl.u32 %v7900, 16
      %v8088 = vrot.slane %v8086, 7
      %v8089 = vshll.u32 %v7900, 16
      %v8091 = vor.u32 %v8088, %v8089
      %v8092 = vsel %vm1200, %v8084, %v8091
      %v8093 = vrot.slane %v8088, 4
      %v8095 = vshrl.u32 %v7901, 16
      %v8097 = vrot.slane %v8095, 7
      %v8098 = vshll.u32 %v7901, 16
      %v8100 = vor.u32 %v8097, %v8098
      %v8101 = vsel %vm1200, %v8093, %v8100
      %v8102 = vrot.slane %v8097, 4
      %v8104 = vshrl.u32 %v7902, 16
      %v8106 = vrot.slane %v8104, 7
      %v8107 = vshll.u32 %v7902, 16
      %v8109 = vor.u32 %v8106, %v8107
      %v8110 = vsel %vm1200, %v8102, %v8109
      %v8111 = vrot.slane %v8106, 4
      %v8113 = vshrl.u32 %v7903, 16
      %v8115 = vrot.slane %v8113, 7
      %v8116 = vshll.u32 %v7903, 16
      %v8118 = vor.u32 %v8115, %v8116
      %v8119 = vsel %vm1200, %v8111, %v8118
      %v8120 = vrot.slane %v8115, 4
      %v8122 = vshrl.u32 %v7904, 16
      %v8124 = vrot.slane %v8122, 7
      %v8125 = vshll.u32 %v7904, 16
      %v8127 = vor.u32 %v8124, %v8125
      %v8128 = vsel %vm1200, %v8120, %v8127
      %v8129 = vrot.slane %v8124, 4
      %v8131 = vshrl.u32 %v7905, 16
      %v8133 = vrot.slane %v8131, 7
      %v8134 = vshll.u32 %v7905, 16
      %v8136 = vor.u32 %v8133, %v8134
      %v8137 = vsel %vm1200, %v8129, %v8136
      %v8138 = vrot.slane %v8133, 4
      %v8140 = vshrl.u32 %v7906, 16
      %v8142 = vrot.slane %v8140, 7
      %v8143 = vshll.u32 %v7906, 16
      %v8145 = vor.u32 %v8142, %v8143
      %v8146 = vsel %vm1200, %v8138, %v8145
      %v8147 = vrot.slane %v8142, 4
      %v8149 = vshrl.u32 %v7907, 16
      %v8151 = vrot.slane %v8149, 7
      %v8152 = vshll.u32 %v7907, 16
      %v8154 = vor.u32 %v8151, %v8152
      %v8155 = vsel %vm1200, %v8147, %v8154
      %v8156 = vrot.slane %v8151, 4
      %v8158 = vshrl.u32 %v7908, 16
      %v8160 = vrot.slane %v8158, 7
      %v8161 = vshll.u32 %v7908, 16
      %v8163 = vor.u32 %v8160, %v8161
      %v8164 = vsel %vm1200, %v8156, %v8163
      %v8165 = vrot.slane %v8160, 4
      %v8167 = vshrl.u32 %v7909, 16
      %v8169 = vrot.slane %v8167, 7
      %v8170 = vshll.u32 %v7909, 16
      %v8172 = vor.u32 %v8169, %v8170
      %v8173 = vsel %vm1200, %v8165, %v8172
      %v8174 = vrot.slane %v8169, 4
      %v8176 = vshrl.u32 %v7910, 16
      %v8178 = vrot.slane %v8176, 7
      %v8179 = vshll.u32 %v7910, 16
      %v8181 = vor.u32 %v8178, %v8179
      %v8182 = vsel %vm1200, %v8174, %v8181
      %v8183 = vrot.slane %v8178, 4
      %v8185 = vshrl.u32 %v7911, 16
      %v8187 = vrot.slane %v8185, 7
      %v8188 = vshll.u32 %v7911, 16
      %v8190 = vor.u32 %v8187, %v8188
      %v8191 = vsel %vm1200, %v8183, %v8190
      %v8192 = vrot.slane %v8187, 4
      %v8194 = vshrl.u32 %v7912, 16
      %v8196 = vrot.slane %v8194, 7
      %v8197 = vshll.u32 %v7912, 16
      %v8199 = vor.u32 %v8196, %v8197
      %v8200 = vsel %vm1200, %v8192, %v8199
      %v8201 = vrot.slane %v8196, 4
      %v8203 = vshrl.u32 %v7913, 16
      %v8205 = vrot.slane %v8203, 7
      %v8206 = vshll.u32 %v7913, 16
      %v8208 = vor.u32 %v8205, %v8206
      %v8209 = vsel %vm1200, %v8201, %v8208
      %v8210 = vrot.slane %v8205, 4
      %v8212 = vshrl.u32 %v7914, 16
      %v8214 = vrot.slane %v8212, 7
      %v8215 = vshll.u32 %v7914, 16
      %v8217 = vor.u32 %v8214, %v8215
      %v8218 = vsel %vm1200, %v8210, %v8217
      %v8219 = vrot.slane %v8214, 4
      %v8221 = vshrl.u32 %v7915, 16
      %v8223 = vrot.slane %v8221, 7
      %v8224 = vshll.u32 %v7915, 16
      %v8226 = vor.u32 %v8223, %v8224
      %v8227 = vsel %vm1200, %v8219, %v8226
      %v8228 = vrot.slane %v8223, 4
      %v8230 = vshrl.u32 %v7916, 16
      %v8232 = vrot.slane %v8230, 7
      %v8233 = vshll.u32 %v7916, 16
      %v8235 = vor.u32 %v8232, %v8233
      %v8236 = vsel %vm1200, %v8228, %v8235
      %v8237 = vrot.slane %v8232, 4
      %v8239 = vshrl.u32 %v7917, 16
      %v8241 = vrot.slane %v8239, 7
      %v8242 = vshll.u32 %v7917, 16
      %v8244 = vor.u32 %v8241, %v8242
      %v8245 = vsel %vm1200, %v8237, %v8244
      %8282 = vst [vmem:[#allocation3 + $0xc] sm:$0xf] %v7930
      %8283 = vst [vmem:[#allocation3 + $0x30] sm:$0xf] %v7939
      %8284 = vst [vmem:[#allocation3 + $0x54] sm:$0xf] %v7948
      %8285 = vst [vmem:[#allocation3 + $0x78] sm:$0xf] %v7957
      %8286 = vst [vmem:[#allocation3 + $0x9c] sm:$0xf] %v7966
      %8287 = vst [vmem:[#allocation3 + $0xc0] sm:$0xf] %v7975
      %8288 = vst [vmem:[#allocation3 + $0xe4] sm:$0xf] %v7984
      %8289 = vst [vmem:[#allocation3 + $0x108] sm:$0xf] %v7993
      %8290 = vst [vmem:[#allocation3 + $0x12c] sm:$0xf] %v8002
      %8291 = vst [vmem:[#allocation3 + $0x150] sm:$0xf] %v8011
      %8292 = vst [vmem:[#allocation3 + $0x174] sm:$0xf] %v8020
      %8293 = vst [vmem:[#allocation3 + $0x198] sm:$0xf] %v8029
      %8294 = vst [vmem:[#allocation3 + $0x1bc] sm:$0xf] %v8038
      %8295 = vst [vmem:[#allocation3 + $0x1e0] sm:$0xf] %v8047
      %8296 = vst [vmem:[#allocation3 + $0x204] sm:$0xf] %v8056
      %8297 = vst [vmem:[#allocation3 + $0x228] sm:$0xf] %v8065
      %8298 = vst [vmem:[#allocation3 + $0x24c] sm:$0xf] %v8074
      %8299 = vst [vmem:[#allocation3 + $0x270] sm:$0xf] %v8083
      %8300 = vst [vmem:[#allocation3 + $0x294] sm:$0xf] %v8092
      %8301 = vst [vmem:[#allocation3 + $0x2b8] sm:$0xf] %v8101
      %8302 = vst [vmem:[#allocation3 + $0x2dc] sm:$0xf] %v8110
      %8303 = vst [vmem:[#allocation3 + $0x300] sm:$0xf] %v8119
      %8304 = vst [vmem:[#allocation3 + $0x324] sm:$0xf] %v8128
      %8305 = vst [vmem:[#allocation3 + $0x348] sm:$0xf] %v8137
      %8306 = vst [vmem:[#allocation3 + $0x36c] sm:$0xf] %v8146
      %8307 = vst [vmem:[#allocation3 + $0x390] sm:$0xf] %v8155
      %8308 = vst [vmem:[#allocation3 + $0x3b4] sm:$0xf] %v8164
      %8309 = vst [vmem:[#allocation3 + $0x3d8] sm:$0xf] %v8173
      %8310 = vst [vmem:[#allocation3 + $0x3fc] sm:$0xf] %v8182
      %8311 = vst [vmem:[#allocation3 + $0x420] sm:$0xf] %v8191
      %8312 = vst [vmem:[#allocation3 + $0x444] sm:$0xf] %v8200
      %8313 = vst [vmem:[#allocation3 + $0x468] sm:$0xf] %v8209
      %8314 = vst [vmem:[#allocation3 + $0x48c] sm:$0xf] %v8218
      %8315 = vst [vmem:[#allocation3 + $0x4b0] sm:$0xf] %v8227
      %8316 = vst [vmem:[#allocation3 + $0x4d4] sm:$0xf] %v8236
      %8317 = vst [vmem:[#allocation3 + $0x4f8] sm:$0xf] %v8245
      %v8318 = vld [vmem:[#allocation2 + $0x10] sm:$0xf]
      %v8319 = vld [vmem:[#allocation2 + $0x14] sm:$0xf]
      %v8320 = vld [vmem:[#allocation2 + $0x18] sm:$0xf]
      %v8321 = vld [vmem:[#allocation2 + $0x1c] sm:$0xf]
      %v8322 = vld [vmem:[#allocation2 + $0x20] sm:$0xf]
      %v8323 = vld [vmem:[#allocation2 + $0x24] sm:$0xf]
      %v8324 = vld [vmem:[#allocation2 + $0x28] sm:$0xf]
      %v8325 = vld [vmem:[#allocation2 + $0x2c] sm:$0xf]
      %v8326 = vld [vmem:[#allocation2 + $0x30] sm:$0xf]
      %v8327 = vld [vmem:[#allocation2 + $0x34] sm:$0xf]
      %v8328 = vld [vmem:[#allocation2 + $0x38] sm:$0xf]
      %v8329 = vld [vmem:[#allocation2 + $0x3c] sm:$0xf]
      %v8330 = vld [vmem:[#allocation2 + $0x40] sm:$0xf]
      %v8331 = vld [vmem:[#allocation2 + $0x44] sm:$0xf]
      %v8332 = vld [vmem:[#allocation2 + $0x48] sm:$0xf]
      %v8333 = vld [vmem:[#allocation2 + $0x4c] sm:$0xf]
      %v8334 = vld [vmem:[#allocation2 + $0x50] sm:$0xf]
      %v8335 = vld [vmem:[#allocation2 + $0x54] sm:$0xf]
      %v8336 = vld [vmem:[#allocation2 + $0x58] sm:$0xf]
      %v8337 = vld [vmem:[#allocation2 + $0x5c] sm:$0xf]
      %v8338 = vld [vmem:[#allocation2 + $0x60] sm:$0xf]
      %v8339 = vld [vmem:[#allocation2 + $0x64] sm:$0xf]
      %v8340 = vld [vmem:[#allocation2 + $0x68] sm:$0xf]
      %v8341 = vld [vmem:[#allocation2 + $0x6c] sm:$0xf]
      %v8342 = vld [vmem:[#allocation2 + $0x70] sm:$0xf]
      %v8343 = vld [vmem:[#allocation2 + $0x74] sm:$0xf]
      %v8344 = vld [vmem:[#allocation2 + $0x78] sm:$0xf]
      %v8345 = vld [vmem:[#allocation2 + $0x7c] sm:$0xf]
      %v8346 = vld [vmem:[#allocation2 + $0x80] sm:$0xf]
      %v8347 = vld [vmem:[#allocation2 + $0x84] sm:$0xf]
      %v8348 = vld [vmem:[#allocation2 + $0x88] sm:$0xf]
      %v8349 = vld [vmem:[#allocation2 + $0x8c] sm:$0xf]
      %v8350 = vld [vmem:[#allocation2 + $0x90] sm:$0xf]
      %v8351 = vld [vmem:[#allocation2 + $0x94] sm:$0xf]
      %v8352 = vld [vmem:[#allocation2 + $0x98] sm:$0xf]
      %v8353 = vld [vmem:[#allocation2 + $0x9c] sm:$0xf]
      %8354 = vst [vmem:[#allocation3 + $0x10] sm:$0xf] %v8318
      %8355 = vst [vmem:[#allocation3 + $0x34] sm:$0xf] %v8319
      %8356 = vst [vmem:[#allocation3 + $0x58] sm:$0xf] %v8320
      %8357 = vst [vmem:[#allocation3 + $0x7c] sm:$0xf] %v8321
      %8358 = vst [vmem:[#allocation3 + $0xa0] sm:$0xf] %v8322
      %8359 = vst [vmem:[#allocation3 + $0xc4] sm:$0xf] %v8323
      %8360 = vst [vmem:[#allocation3 + $0xe8] sm:$0xf] %v8324
      %8361 = vst [vmem:[#allocation3 + $0x10c] sm:$0xf] %v8325
      %8362 = vst [vmem:[#allocation3 + $0x130] sm:$0xf] %v8326
      %8363 = vst [vmem:[#allocation3 + $0x154] sm:$0xf] %v8327
      %8364 = vst [vmem:[#allocation3 + $0x178] sm:$0xf] %v8328
      %8365 = vst [vmem:[#allocation3 + $0x19c] sm:$0xf] %v8329
      %8366 = vst [vmem:[#allocation3 + $0x1c0] sm:$0xf] %v8330
      %8367 = vst [vmem:[#allocation3 + $0x1e4] sm:$0xf] %v8331
      %8368 = vst [vmem:[#allocation3 + $0x208] sm:$0xf] %v8332
      %8369 = vst [vmem:[#allocation3 + $0x22c] sm:$0xf] %v8333
      %8370 = vst [vmem:[#allocation3 + $0x250] sm:$0xf] %v8334
      %8371 = vst [vmem:[#allocation3 + $0x274] sm:$0xf] %v8335
      %8372 = vst [vmem:[#allocation3 + $0x298] sm:$0xf] %v8336
      %8373 = vst [vmem:[#allocation3 + $0x2bc] sm:$0xf] %v8337
      %8374 = vst [vmem:[#allocation3 + $0x2e0] sm:$0xf] %v8338
      %8375 = vst [vmem:[#allocation3 + $0x304] sm:$0xf] %v8339
      %8376 = vst [vmem:[#allocation3 + $0x328] sm:$0xf] %v8340
      %8377 = vst [vmem:[#allocation3 + $0x34c] sm:$0xf] %v8341
      %8378 = vst [vmem:[#allocation3 + $0x370] sm:$0xf] %v8342
      %8379 = vst [vmem:[#allocation3 + $0x394] sm:$0xf] %v8343
      %8380 = vst [vmem:[#allocation3 + $0x3b8] sm:$0xf] %v8344
      %8381 = vst [vmem:[#allocation3 + $0x3dc] sm:$0xf] %v8345
      %8382 = vst [vmem:[#allocation3 + $0x400] sm:$0xf] %v8346
      %8383 = vst [vmem:[#allocation3 + $0x424] sm:$0xf] %v8347
      %8384 = vst [vmem:[#allocation3 + $0x448] sm:$0xf] %v8348
      %8385 = vst [vmem:[#allocation3 + $0x46c] sm:$0xf] %v8349
      %8386 = vst [vmem:[#allocation3 + $0x490] sm:$0xf] %v8350
      %8387 = vst [vmem:[#allocation3 + $0x4b4] sm:$0xf] %v8351
      %8388 = vst [vmem:[#allocation3 + $0x4d8] sm:$0xf] %v8352
      %8389 = vst [vmem:[#allocation3 + $0x4fc] sm:$0xf] %v8353
      %v8390 = vld [vmem:[#allocation2 + $0x10] sm:$0xf]
      %v8391 = vld [vmem:[#allocation2 + $0x14] sm:$0xf]
      %v8392 = vld [vmem:[#allocation2 + $0x18] sm:$0xf]
      %v8393 = vld [vmem:[#allocation2 + $0x1c] sm:$0xf]
      %v8394 = vld [vmem:[#allocation2 + $0x20] sm:$0xf]
      %v8395 = vld [vmem:[#allocation2 + $0x24] sm:$0xf]
      %v8396 = vld [vmem:[#allocation2 + $0x28] sm:$0xf]
      %v8397 = vld [vmem:[#allocation2 + $0x2c] sm:$0xf]
      %v8398 = vld [vmem:[#allocation2 + $0x30] sm:$0xf]
      %v8399 = vld [vmem:[#allocation2 + $0x34] sm:$0xf]
      %v8400 = vld [vmem:[#allocation2 + $0x38] sm:$0xf]
      %v8401 = vld [vmem:[#allocation2 + $0x3c] sm:$0xf]
      %v8402 = vld [vmem:[#allocation2 + $0x40] sm:$0xf]
      %v8403 = vld [vmem:[#allocation2 + $0x44] sm:$0xf]
      %v8404 = vld [vmem:[#allocation2 + $0x48] sm:$0xf]
      %v8405 = vld [vmem:[#allocation2 + $0x4c] sm:$0xf]
      %v8406 = vld [vmem:[#allocation2 + $0x50] sm:$0xf]
      %v8407 = vld [vmem:[#allocation2 + $0x54] sm:$0xf]
      %v8408 = vld [vmem:[#allocation2 + $0x58] sm:$0xf]
      %v8409 = vld [vmem:[#allocation2 + $0x5c] sm:$0xf]
      %v8410 = vld [vmem:[#allocation2 + $0x60] sm:$0xf]
      %v8411 = vld [vmem:[#allocation2 + $0x64] sm:$0xf]
      %v8412 = vld [vmem:[#allocation2 + $0x68] sm:$0xf]
      %v8413 = vld [vmem:[#allocation2 + $0x6c] sm:$0xf]
      %v8414 = vld [vmem:[#allocation2 + $0x70] sm:$0xf]
      %v8415 = vld [vmem:[#allocation2 + $0x74] sm:$0xf]
      %v8416 = vld [vmem:[#allocation2 + $0x78] sm:$0xf]
      %v8417 = vld [vmem:[#allocation2 + $0x7c] sm:$0xf]
      %v8418 = vld [vmem:[#allocation2 + $0x80] sm:$0xf]
      %v8419 = vld [vmem:[#allocation2 + $0x84] sm:$0xf]
      %v8420 = vld [vmem:[#allocation2 + $0x88] sm:$0xf]
      %v8421 = vld [vmem:[#allocation2 + $0x8c] sm:$0xf]
      %v8422 = vld [vmem:[#allocation2 + $0x90] sm:$0xf]
      %v8423 = vld [vmem:[#allocation2 + $0x94] sm:$0xf]
      %v8424 = vld [vmem:[#allocation2 + $0x98] sm:$0xf]
      %v8425 = vld [vmem:[#allocation2 + $0x9c] sm:$0xf]
      %v8426 = vld [vmem:[#allocation2 + $0xa0] sm:$0x1]
      %v8428 = vshrl.u32 %v8390, 16
      %v8430 = vrot.slane %v8428, 4
      %v8431 = vshll.u32 %v8390, 16
      %v8433 = vrot.slane %v8431, 5
      %v8434 = vor.u32 %v8430, %v8433
      %v8435 = vrot.slane %v8434, 4
      %v8437 = vshll.u32 %v8391, 16
      %v8439 = vrot.slane %v8437, 5
      %v8440 = vsel %vm2149, %v8435, %v8439
      %v8441 = vshrl.u32 %v8391, 16
      %v8443 = vrot.slane %v8441, 4
      %v8444 = vor.u32 %v8443, %v8439
      %v8445 = vrot.slane %v8444, 4
      %v8447 = vshll.u32 %v8392, 16
      %v8449 = vrot.slane %v8447, 5
      %v8450 = vsel %vm2149, %v8445, %v8449
      %v8451 = vshrl.u32 %v8392, 16
      %v8453 = vrot.slane %v8451, 4
      %v8454 = vor.u32 %v8453, %v8449
      %v8455 = vrot.slane %v8454, 4
      %v8457 = vshll.u32 %v8393, 16
      %v8459 = vrot.slane %v8457, 5
      %v8460 = vsel %vm2149, %v8455, %v8459
      %v8461 = vshrl.u32 %v8393, 16
      %v8463 = vrot.slane %v8461, 4
      %v8464 = vor.u32 %v8463, %v8459
      %v8465 = vrot.slane %v8464, 4
      %v8467 = vshll.u32 %v8394, 16
      %v8469 = vrot.slane %v8467, 5
      %v8470 = vsel %vm2149, %v8465, %v8469
      %v8471 = vshrl.u32 %v8394, 16
      %v8473 = vrot.slane %v8471, 4
      %v8474 = vor.u32 %v8473, %v8469
      %v8475 = vrot.slane %v8474, 4
      %v8477 = vshll.u32 %v8395, 16
      %v8479 = vrot.slane %v8477, 5
      %v8480 = vsel %vm2149, %v8475, %v8479
      %v8481 = vshrl.u32 %v8395, 16
      %v8483 = vrot.slane %v8481, 4
      %v8484 = vor.u32 %v8483, %v8479
      %v8485 = vrot.slane %v8484, 4
      %v8487 = vshll.u32 %v8396, 16
      %v8489 = vrot.slane %v8487, 5
      %v8490 = vsel %vm2149, %v8485, %v8489
      %v8491 = vshrl.u32 %v8396, 16
      %v8493 = vrot.slane %v8491, 4
      %v8494 = vor.u32 %v8493, %v8489
      %v8495 = vrot.slane %v8494, 4
      %v8497 = vshll.u32 %v8397, 16
      %v8499 = vrot.slane %v8497, 5
      %v8500 = vsel %vm2149, %v8495, %v8499
      %v8501 = vshrl.u32 %v8397, 16
      %v8503 = vrot.slane %v8501, 4
      %v8504 = vor.u32 %v8503, %v8499
      %v8505 = vrot.slane %v8504, 4
      %v8507 = vshll.u32 %v8398, 16
      %v8509 = vrot.slane %v8507, 5
      %v8510 = vsel %vm2149, %v8505, %v8509
      %v8511 = vshrl.u32 %v8398, 16
      %v8513 = vrot.slane %v8511, 4
      %v8514 = vor.u32 %v8513, %v8509
      %v8515 = vrot.slane %v8514, 4
      %v8517 = vshll.u32 %v8399, 16
      %v8519 = vrot.slane %v8517, 5
      %v8520 = vsel %vm2149, %v8515, %v8519
      %v8521 = vshrl.u32 %v8399, 16
      %v8523 = vrot.slane %v8521, 4
      %v8524 = vor.u32 %v8523, %v8519
      %v8525 = vrot.slane %v8524, 4
      %v8527 = vshll.u32 %v8400, 16
      %v8529 = vrot.slane %v8527, 5
      %v8530 = vsel %vm2149, %v8525, %v8529
      %v8531 = vshrl.u32 %v8400, 16
      %v8533 = vrot.slane %v8531, 4
      %v8534 = vor.u32 %v8533, %v8529
      %v8535 = vrot.slane %v8534, 4
      %v8537 = vshll.u32 %v8401, 16
      %v8539 = vrot.slane %v8537, 5
      %v8540 = vsel %vm2149, %v8535, %v8539
      %v8541 = vshrl.u32 %v8401, 16
      %v8543 = vrot.slane %v8541, 4
      %v8544 = vor.u32 %v8543, %v8539
      %v8545 = vrot.slane %v8544, 4
      %v8547 = vshll.u32 %v8402, 16
      %v8549 = vrot.slane %v8547, 5
      %v8550 = vsel %vm2149, %v8545, %v8549
      %v8551 = vshrl.u32 %v8402, 16
      %v8553 = vrot.slane %v8551, 4
      %v8554 = vor.u32 %v8553, %v8549
      %v8555 = vrot.slane %v8554, 4
      %v8557 = vshll.u32 %v8403, 16
      %v8559 = vrot.slane %v8557, 5
      %v8560 = vsel %vm2149, %v8555, %v8559
      %v8561 = vshrl.u32 %v8403, 16
      %v8563 = vrot.slane %v8561, 4
      %v8564 = vor.u32 %v8563, %v8559
      %v8565 = vrot.slane %v8564, 4
      %v8567 = vshll.u32 %v8404, 16
      %v8569 = vrot.slane %v8567, 5
      %v8570 = vsel %vm2149, %v8565, %v8569
      %v8571 = vshrl.u32 %v8404, 16
      %v8573 = vrot.slane %v8571, 4
      %v8574 = vor.u32 %v8573, %v8569
      %v8575 = vrot.slane %v8574, 4
      %v8577 = vshll.u32 %v8405, 16
      %v8579 = vrot.slane %v8577, 5
      %v8580 = vsel %vm2149, %v8575, %v8579
      %v8581 = vshrl.u32 %v8405, 16
      %v8583 = vrot.slane %v8581, 4
      %v8584 = vor.u32 %v8583, %v8579
      %v8585 = vrot.slane %v8584, 4
      %v8587 = vshll.u32 %v8406, 16
      %v8589 = vrot.slane %v8587, 5
      %v8590 = vsel %vm2149, %v8585, %v8589
      %v8591 = vshrl.u32 %v8406, 16
      %v8593 = vrot.slane %v8591, 4
      %v8594 = vor.u32 %v8593, %v8589
      %v8595 = vrot.slane %v8594, 4
      %v8597 = vshll.u32 %v8407, 16
      %v8599 = vrot.slane %v8597, 5
      %v8600 = vsel %vm2149, %v8595, %v8599
      %v8601 = vshrl.u32 %v8407, 16
      %v8603 = vrot.slane %v8601, 4
      %v8604 = vor.u32 %v8603, %v8599
      %v8605 = vrot.slane %v8604, 4
      %v8607 = vshll.u32 %v8408, 16
      %v8609 = vrot.slane %v8607, 5
      %v8610 = vsel %vm2149, %v8605, %v8609
      %v8611 = vshrl.u32 %v8408, 16
      %v8613 = vrot.slane %v8611, 4
      %v8614 = vor.u32 %v8613, %v8609
      %v8615 = vrot.slane %v8614, 4
      %v8617 = vshll.u32 %v8409, 16
      %v8619 = vrot.slane %v8617, 5
      %v8620 = vsel %vm2149, %v8615, %v8619
      %v8621 = vshrl.u32 %v8409, 16
      %v8623 = vrot.slane %v8621, 4
      %v8624 = vor.u32 %v8623, %v8619
      %v8625 = vrot.slane %v8624, 4
      %v8627 = vshll.u32 %v8410, 16
      %v8629 = vrot.slane %v8627, 5
      %v8630 = vsel %vm2149, %v8625, %v8629
      %v8631 = vshrl.u32 %v8410, 16
      %v8633 = vrot.slane %v8631, 4
      %v8634 = vor.u32 %v8633, %v8629
      %v8635 = vrot.slane %v8634, 4
      %v8637 = vshll.u32 %v8411, 16
      %v8639 = vrot.slane %v8637, 5
      %v8640 = vsel %vm2149, %v8635, %v8639
      %v8641 = vshrl.u32 %v8411, 16
      %v8643 = vrot.slane %v8641, 4
      %v8644 = vor.u32 %v8643, %v8639
      %v8645 = vrot.slane %v8644, 4
      %v8647 = vshll.u32 %v8412, 16
      %v8649 = vrot.slane %v8647, 5
      %v8650 = vsel %vm2149, %v8645, %v8649
      %v8651 = vshrl.u32 %v8412, 16
      %v8653 = vrot.slane %v8651, 4
      %v8654 = vor.u32 %v8653, %v8649
      %v8655 = vrot.slane %v8654, 4
      %v8657 = vshll.u32 %v8413, 16
      %v8659 = vrot.slane %v8657, 5
      %v8660 = vsel %vm2149, %v8655, %v8659
      %v8661 = vshrl.u32 %v8413, 16
      %v8663 = vrot.slane %v8661, 4
      %v8664 = vor.u32 %v8663, %v8659
      %v8665 = vrot.slane %v8664, 4
      %v8667 = vshll.u32 %v8414, 16
      %v8669 = vrot.slane %v8667, 5
      %v8670 = vsel %vm2149, %v8665, %v8669
      %v8671 = vshrl.u32 %v8414, 16
      %v8673 = vrot.slane %v8671, 4
      %v8674 = vor.u32 %v8673, %v8669
      %v8675 = vrot.slane %v8674, 4
      %v8677 = vshll.u32 %v8415, 16
      %v8679 = vrot.slane %v8677, 5
      %v8680 = vsel %vm2149, %v8675, %v8679
      %v8681 = vshrl.u32 %v8415, 16
      %v8683 = vrot.slane %v8681, 4
      %v8684 = vor.u32 %v8683, %v8679
      %v8685 = vrot.slane %v8684, 4
      %v8687 = vshll.u32 %v8416, 16
      %v8689 = vrot.slane %v8687, 5
      %v8690 = vsel %vm2149, %v8685, %v8689
      %v8691 = vshrl.u32 %v8416, 16
      %v8693 = vrot.slane %v8691, 4
      %v8694 = vor.u32 %v8693, %v8689
      %v8695 = vrot.slane %v8694, 4
      %v8697 = vshll.u32 %v8417, 16
      %v8699 = vrot.slane %v8697, 5
      %v8700 = vsel %vm2149, %v8695, %v8699
      %v8701 = vshrl.u32 %v8417, 16
      %v8703 = vrot.slane %v8701, 4
      %v8704 = vor.u32 %v8703, %v8699
      %v8705 = vrot.slane %v8704, 4
      %v8707 = vshll.u32 %v8418, 16
      %v8709 = vrot.slane %v8707, 5
      %v8710 = vsel %vm2149, %v8705, %v8709
      %v8711 = vshrl.u32 %v8418, 16
      %v8713 = vrot.slane %v8711, 4
      %v8714 = vor.u32 %v8713, %v8709
      %v8715 = vrot.slane %v8714, 4
      %v8717 = vshll.u32 %v8419, 16
      %v8719 = vrot.slane %v8717, 5
      %v8720 = vsel %vm2149, %v8715, %v8719
      %v8721 = vshrl.u32 %v8419, 16
      %v8723 = vrot.slane %v8721, 4
      %v8724 = vor.u32 %v8723, %v8719
      %v8725 = vrot.slane %v8724, 4
      %v8727 = vshll.u32 %v8420, 16
      %v8729 = vrot.slane %v8727, 5
      %v8730 = vsel %vm2149, %v8725, %v8729
      %v8731 = vshrl.u32 %v8420, 16
      %v8733 = vrot.slane %v8731, 4
      %v8734 = vor.u32 %v8733, %v8729
      %v8735 = vrot.slane %v8734, 4
      %v8737 = vshll.u32 %v8421, 16
      %v8739 = vrot.slane %v8737, 5
      %v8740 = vsel %vm2149, %v8735, %v8739
      %v8741 = vshrl.u32 %v8421, 16
      %v8743 = vrot.slane %v8741, 4
      %v8744 = vor.u32 %v8743, %v8739
      %v8745 = vrot.slane %v8744, 4
      %v8747 = vshll.u32 %v8422, 16
      %v8749 = vrot.slane %v8747, 5
      %v8750 = vsel %vm2149, %v8745, %v8749
      %v8751 = vshrl.u32 %v8422, 16
      %v8753 = vrot.slane %v8751, 4
      %v8754 = vor.u32 %v8753, %v8749
      %v8755 = vrot.slane %v8754, 4
      %v8757 = vshll.u32 %v8423, 16
      %v8759 = vrot.slane %v8757, 5
      %v8760 = vsel %vm2149, %v8755, %v8759
      %v8761 = vshrl.u32 %v8423, 16
      %v8763 = vrot.slane %v8761, 4
      %v8764 = vor.u32 %v8763, %v8759
      %v8765 = vrot.slane %v8764, 4
      %v8767 = vshll.u32 %v8424, 16
      %v8769 = vrot.slane %v8767, 5
      %v8770 = vsel %vm2149, %v8765, %v8769
      %v8771 = vshrl.u32 %v8424, 16
      %v8773 = vrot.slane %v8771, 4
      %v8774 = vor.u32 %v8773, %v8769
      %v8775 = vrot.slane %v8774, 4
      %v8777 = vshll.u32 %v8425, 16
      %v8779 = vrot.slane %v8777, 5
      %v8780 = vsel %vm2149, %v8775, %v8779
      %v8781 = vshrl.u32 %v8425, 16
      %v8783 = vrot.slane %v8781, 4
      %v8784 = vor.u32 %v8783, %v8779
      %v8785 = vrot.slane %v8784, 4
      %v8787 = vshll.u32 %v8426, 16
      %v8789 = vrot.slane %v8787, 5
      %v8790 = vsel %vm2149, %v8785, %v8789
      %8827 = vst [vmem:[#allocation3 + $0x14] sm:$0xf] %v8440
      %8828 = vst [vmem:[#allocation3 + $0x38] sm:$0xf] %v8450
      %8829 = vst [vmem:[#allocation3 + $0x5c] sm:$0xf] %v8460
      %8830 = vst [vmem:[#allocation3 + $0x80] sm:$0xf] %v8470
      %8831 = vst [vmem:[#allocation3 + $0xa4] sm:$0xf] %v8480
      %8832 = vst [vmem:[#allocation3 + $0xc8] sm:$0xf] %v8490
      %8833 = vst [vmem:[#allocation3 + $0xec] sm:$0xf] %v8500
      %8834 = vst [vmem:[#allocation3 + $0x110] sm:$0xf] %v8510
      %8835 = vst [vmem:[#allocation3 + $0x134] sm:$0xf] %v8520
      %8836 = vst [vmem:[#allocation3 + $0x158] sm:$0xf] %v8530
      %8837 = vst [vmem:[#allocation3 + $0x17c] sm:$0xf] %v8540
      %8838 = vst [vmem:[#allocation3 + $0x1a0] sm:$0xf] %v8550
      %8839 = vst [vmem:[#allocation3 + $0x1c4] sm:$0xf] %v8560
      %8840 = vst [vmem:[#allocation3 + $0x1e8] sm:$0xf] %v8570
      %8841 = vst [vmem:[#allocation3 + $0x20c] sm:$0xf] %v8580
      %8842 = vst [vmem:[#allocation3 + $0x230] sm:$0xf] %v8590
      %8843 = vst [vmem:[#allocation3 + $0x254] sm:$0xf] %v8600
      %8844 = vst [vmem:[#allocation3 + $0x278] sm:$0xf] %v8610
      %8845 = vst [vmem:[#allocation3 + $0x29c] sm:$0xf] %v8620
      %8846 = vst [vmem:[#allocation3 + $0x2c0] sm:$0xf] %v8630
      %8847 = vst [vmem:[#allocation3 + $0x2e4] sm:$0xf] %v8640
      %8848 = vst [vmem:[#allocation3 + $0x308] sm:$0xf] %v8650
      %8849 = vst [vmem:[#allocation3 + $0x32c] sm:$0xf] %v8660
      %8850 = vst [vmem:[#allocation3 + $0x350] sm:$0xf] %v8670
      %8851 = vst [vmem:[#allocation3 + $0x374] sm:$0xf] %v8680
      %8852 = vst [vmem:[#allocation3 + $0x398] sm:$0xf] %v8690
      %8853 = vst [vmem:[#allocation3 + $0x3bc] sm:$0xf] %v8700
      %8854 = vst [vmem:[#allocation3 + $0x3e0] sm:$0xf] %v8710
      %8855 = vst [vmem:[#allocation3 + $0x404] sm:$0xf] %v8720
      %8856 = vst [vmem:[#allocation3 + $0x428] sm:$0xf] %v8730
      %8857 = vst [vmem:[#allocation3 + $0x44c] sm:$0xf] %v8740
      %8858 = vst [vmem:[#allocation3 + $0x470] sm:$0xf] %v8750
      %8859 = vst [vmem:[#allocation3 + $0x494] sm:$0xf] %v8760
      %8860 = vst [vmem:[#allocation3 + $0x4b8] sm:$0xf] %v8770
      %8861 = vst [vmem:[#allocation3 + $0x4dc] sm:$0xf] %v8780
      %8862 = vst [vmem:[#allocation3 + $0x500] sm:$0xf] %v8790
      %v8863 = vld [vmem:[#allocation2 + $0x18] sm:$0xf]
      %v8864 = vld [vmem:[#allocation2 + $0x1c] sm:$0xf]
      %v8865 = vld [vmem:[#allocation2 + $0x20] sm:$0xf]
      %v8866 = vld [vmem:[#allocation2 + $0x24] sm:$0xf]
      %v8867 = vld [vmem:[#allocation2 + $0x28] sm:$0xf]
      %v8868 = vld [vmem:[#allocation2 + $0x2c] sm:$0xf]
      %v8869 = vld [vmem:[#allocation2 + $0x30] sm:$0xf]
      %v8870 = vld [vmem:[#allocation2 + $0x34] sm:$0xf]
      %v8871 = vld [vmem:[#allocation2 + $0x38] sm:$0xf]
      %v8872 = vld [vmem:[#allocation2 + $0x3c] sm:$0xf]
      %v8873 = vld [vmem:[#allocation2 + $0x40] sm:$0xf]
      %v8874 = vld [vmem:[#allocation2 + $0x44] sm:$0xf]
      %v8875 = vld [vmem:[#allocation2 + $0x48] sm:$0xf]
      %v8876 = vld [vmem:[#allocation2 + $0x4c] sm:$0xf]
      %v8877 = vld [vmem:[#allocation2 + $0x50] sm:$0xf]
      %v8878 = vld [vmem:[#allocation2 + $0x54] sm:$0xf]
      %v8879 = vld [vmem:[#allocation2 + $0x58] sm:$0xf]
      %v8880 = vld [vmem:[#allocation2 + $0x5c] sm:$0xf]
      %v8881 = vld [vmem:[#allocation2 + $0x60] sm:$0xf]
      %v8882 = vld [vmem:[#allocation2 + $0x64] sm:$0xf]
      %v8883 = vld [vmem:[#allocation2 + $0x68] sm:$0xf]
      %v8884 = vld [vmem:[#allocation2 + $0x6c] sm:$0xf]
      %v8885 = vld [vmem:[#allocation2 + $0x70] sm:$0xf]
      %v8886 = vld [vmem:[#allocation2 + $0x74] sm:$0xf]
      %v8887 = vld [vmem:[#allocation2 + $0x78] sm:$0xf]
      %v8888 = vld [vmem:[#allocation2 + $0x7c] sm:$0xf]
      %v8889 = vld [vmem:[#allocation2 + $0x80] sm:$0xf]
      %v8890 = vld [vmem:[#allocation2 + $0x84] sm:$0xf]
      %v8891 = vld [vmem:[#allocation2 + $0x88] sm:$0xf]
      %v8892 = vld [vmem:[#allocation2 + $0x8c] sm:$0xf]
      %v8893 = vld [vmem:[#allocation2 + $0x90] sm:$0xf]
      %v8894 = vld [vmem:[#allocation2 + $0x94] sm:$0xf]
      %v8895 = vld [vmem:[#allocation2 + $0x98] sm:$0xf]
      %v8896 = vld [vmem:[#allocation2 + $0x9c] sm:$0xf]
      %v8897 = vld [vmem:[#allocation2 + $0xa0] sm:$0xf]
      %v8898 = vld [vmem:[#allocation2 + $0xa4] sm:$0xf]
      %v8899 = vld [vmem:[#allocation2 + $0xa8] sm:$0x1]
      %v8901 = vshrl.u32 %v8863, 16
      %v8903 = vrot.slane %v8901, 4
      %v8904 = vshll.u32 %v8863, 16
      %v8906 = vrot.slane %v8904, 5
      %v8907 = vor.u32 %v8903, %v8906
      %v8908 = vrot.slane %v8907, 4
      %v8910 = vshll.u32 %v8864, 16
      %v8912 = vrot.slane %v8910, 5
      %v8913 = vsel %vm2149, %v8908, %v8912
      %v8914 = vshrl.u32 %v8864, 16
      %v8916 = vrot.slane %v8914, 4
      %v8917 = vor.u32 %v8916, %v8912
      %v8918 = vrot.slane %v8917, 4
      %v8920 = vshll.u32 %v8865, 16
      %v8922 = vrot.slane %v8920, 5
      %v8923 = vsel %vm2149, %v8918, %v8922
      %v8924 = vshrl.u32 %v8865, 16
      %v8926 = vrot.slane %v8924, 4
      %v8927 = vor.u32 %v8926, %v8922
      %v8928 = vrot.slane %v8927, 4
      %v8930 = vshll.u32 %v8866, 16
      %v8932 = vrot.slane %v8930, 5
      %v8933 = vsel %vm2149, %v8928, %v8932
      %v8934 = vshrl.u32 %v8866, 16
      %v8936 = vrot.slane %v8934, 4
      %v8937 = vor.u32 %v8936, %v8932
      %v8938 = vrot.slane %v8937, 4
      %v8940 = vshll.u32 %v8867, 16
      %v8942 = vrot.slane %v8940, 5
      %v8943 = vsel %vm2149, %v8938, %v8942
      %v8944 = vshrl.u32 %v8867, 16
      %v8946 = vrot.slane %v8944, 4
      %v8947 = vor.u32 %v8946, %v8942
      %v8948 = vrot.slane %v8947, 4
      %v8950 = vshll.u32 %v8868, 16
      %v8952 = vrot.slane %v8950, 5
      %v8953 = vsel %vm2149, %v8948, %v8952
      %v8954 = vshrl.u32 %v8868, 16
      %v8956 = vrot.slane %v8954, 4
      %v8957 = vor.u32 %v8956, %v8952
      %v8958 = vrot.slane %v8957, 4
      %v8960 = vshll.u32 %v8869, 16
      %v8962 = vrot.slane %v8960, 5
      %v8963 = vsel %vm2149, %v8958, %v8962
      %v8964 = vshrl.u32 %v8869, 16
      %v8966 = vrot.slane %v8964, 4
      %v8967 = vor.u32 %v8966, %v8962
      %v8968 = vrot.slane %v8967, 4
      %v8970 = vshll.u32 %v8870, 16
      %v8972 = vrot.slane %v8970, 5
      %v8973 = vsel %vm2149, %v8968, %v8972
      %v8974 = vshrl.u32 %v8870, 16
      %v8976 = vrot.slane %v8974, 4
      %v8977 = vor.u32 %v8976, %v8972
      %v8978 = vrot.slane %v8977, 4
      %v8980 = vshll.u32 %v8871, 16
      %v8982 = vrot.slane %v8980, 5
      %v8983 = vsel %vm2149, %v8978, %v8982
      %v8984 = vshrl.u32 %v8871, 16
      %v8986 = vrot.slane %v8984, 4
      %v8987 = vor.u32 %v8986, %v8982
      %v8988 = vrot.slane %v8987, 4
      %v8990 = vshll.u32 %v8872, 16
      %v8992 = vrot.slane %v8990, 5
      %v8993 = vsel %vm2149, %v8988, %v8992
      %v8994 = vshrl.u32 %v8872, 16
      %v8996 = vrot.slane %v8994, 4
      %v8997 = vor.u32 %v8996, %v8992
      %v8998 = vrot.slane %v8997, 4
      %v9000 = vshll.u32 %v8873, 16
      %v9002 = vrot.slane %v9000, 5
      %v9003 = vsel %vm2149, %v8998, %v9002
      %v9004 = vshrl.u32 %v8873, 16
      %v9006 = vrot.slane %v9004, 4
      %v9007 = vor.u32 %v9006, %v9002
      %v9008 = vrot.slane %v9007, 4
      %v9010 = vshll.u32 %v8874, 16
      %v9012 = vrot.slane %v9010, 5
      %v9013 = vsel %vm2149, %v9008, %v9012
      %v9014 = vshrl.u32 %v8874, 16
      %v9016 = vrot.slane %v9014, 4
      %v9017 = vor.u32 %v9016, %v9012
      %v9018 = vrot.slane %v9017, 4
      %v9020 = vshll.u32 %v8875, 16
      %v9022 = vrot.slane %v9020, 5
      %v9023 = vsel %vm2149, %v9018, %v9022
      %v9024 = vshrl.u32 %v8875, 16
      %v9026 = vrot.slane %v9024, 4
      %v9027 = vor.u32 %v9026, %v9022
      %v9028 = vrot.slane %v9027, 4
      %v9030 = vshll.u32 %v8876, 16
      %v9032 = vrot.slane %v9030, 5
      %v9033 = vsel %vm2149, %v9028, %v9032
      %v9034 = vshrl.u32 %v8876, 16
      %v9036 = vrot.slane %v9034, 4
      %v9037 = vor.u32 %v9036, %v9032
      %v9038 = vrot.slane %v9037, 4
      %v9040 = vshll.u32 %v8877, 16
      %v9042 = vrot.slane %v9040, 5
      %v9043 = vsel %vm2149, %v9038, %v9042
      %v9044 = vshrl.u32 %v8877, 16
      %v9046 = vrot.slane %v9044, 4
      %v9047 = vor.u32 %v9046, %v9042
      %v9048 = vrot.slane %v9047, 4
      %v9050 = vshll.u32 %v8878, 16
      %v9052 = vrot.slane %v9050, 5
      %v9053 = vsel %vm2149, %v9048, %v9052
      %v9054 = vshrl.u32 %v8878, 16
      %v9056 = vrot.slane %v9054, 4
      %v9057 = vor.u32 %v9056, %v9052
      %v9058 = vrot.slane %v9057, 4
      %v9060 = vshll.u32 %v8879, 16
      %v9062 = vrot.slane %v9060, 5
      %v9063 = vsel %vm2149, %v9058, %v9062
      %v9064 = vshrl.u32 %v8879, 16
      %v9066 = vrot.slane %v9064, 4
      %v9067 = vor.u32 %v9066, %v9062
      %v9068 = vrot.slane %v9067, 4
      %v9070 = vshll.u32 %v8880, 16
      %v9072 = vrot.slane %v9070, 5
      %v9073 = vsel %vm2149, %v9068, %v9072
      %v9074 = vshrl.u32 %v8880, 16
      %v9076 = vrot.slane %v9074, 4
      %v9077 = vor.u32 %v9076, %v9072
      %v9078 = vrot.slane %v9077, 4
      %v9080 = vshll.u32 %v8881, 16
      %v9082 = vrot.slane %v9080, 5
      %v9083 = vsel %vm2149, %v9078, %v9082
      %v9084 = vshrl.u32 %v8881, 16
      %v9086 = vrot.slane %v9084, 4
      %v9087 = vor.u32 %v9086, %v9082
      %v9088 = vrot.slane %v9087, 4
      %v9090 = vshll.u32 %v8882, 16
      %v9092 = vrot.slane %v9090, 5
      %v9093 = vsel %vm2149, %v9088, %v9092
      %v9094 = vshrl.u32 %v8882, 16
      %v9096 = vrot.slane %v9094, 4
      %v9097 = vor.u32 %v9096, %v9092
      %v9098 = vrot.slane %v9097, 4
      %v9100 = vshll.u32 %v8883, 16
      %v9102 = vrot.slane %v9100, 5
      %v9103 = vsel %vm2149, %v9098, %v9102
      %v9104 = vshrl.u32 %v8883, 16
      %v9106 = vrot.slane %v9104, 4
      %v9107 = vor.u32 %v9106, %v9102
      %v9108 = vrot.slane %v9107, 4
      %v9110 = vshll.u32 %v8884, 16
      %v9112 = vrot.slane %v9110, 5
      %v9113 = vsel %vm2149, %v9108, %v9112
      %v9114 = vshrl.u32 %v8884, 16
      %v9116 = vrot.slane %v9114, 4
      %v9117 = vor.u32 %v9116, %v9112
      %v9118 = vrot.slane %v9117, 4
      %v9120 = vshll.u32 %v8885, 16
      %v9122 = vrot.slane %v9120, 5
      %v9123 = vsel %vm2149, %v9118, %v9122
      %v9124 = vshrl.u32 %v8885, 16
      %v9126 = vrot.slane %v9124, 4
      %v9127 = vor.u32 %v9126, %v9122
      %v9128 = vrot.slane %v9127, 4
      %v9130 = vshll.u32 %v8886, 16
      %v9132 = vrot.slane %v9130, 5
      %v9133 = vsel %vm2149, %v9128, %v9132
      %v9134 = vshrl.u32 %v8886, 16
      %v9136 = vrot.slane %v9134, 4
      %v9137 = vor.u32 %v9136, %v9132
      %v9138 = vrot.slane %v9137, 4
      %v9140 = vshll.u32 %v8887, 16
      %v9142 = vrot.slane %v9140, 5
      %v9143 = vsel %vm2149, %v9138, %v9142
      %v9144 = vshrl.u32 %v8887, 16
      %v9146 = vrot.slane %v9144, 4
      %v9147 = vor.u32 %v9146, %v9142
      %v9148 = vrot.slane %v9147, 4
      %v9150 = vshll.u32 %v8888, 16
      %v9152 = vrot.slane %v9150, 5
      %v9153 = vsel %vm2149, %v9148, %v9152
      %v9154 = vshrl.u32 %v8888, 16
      %v9156 = vrot.slane %v9154, 4
      %v9157 = vor.u32 %v9156, %v9152
      %v9158 = vrot.slane %v9157, 4
      %v9160 = vshll.u32 %v8889, 16
      %v9162 = vrot.slane %v9160, 5
      %v9163 = vsel %vm2149, %v9158, %v9162
      %v9164 = vshrl.u32 %v8889, 16
      %v9166 = vrot.slane %v9164, 4
      %v9167 = vor.u32 %v9166, %v9162
      %v9168 = vrot.slane %v9167, 4
      %v9170 = vshll.u32 %v8890, 16
      %v9172 = vrot.slane %v9170, 5
      %v9173 = vsel %vm2149, %v9168, %v9172
      %v9174 = vshrl.u32 %v8890, 16
      %v9176 = vrot.slane %v9174, 4
      %v9177 = vor.u32 %v9176, %v9172
      %v9178 = vrot.slane %v9177, 4
      %v9180 = vshll.u32 %v8891, 16
      %v9182 = vrot.slane %v9180, 5
      %v9183 = vsel %vm2149, %v9178, %v9182
      %v9184 = vshrl.u32 %v8891, 16
      %v9186 = vrot.slane %v9184, 4
      %v9187 = vor.u32 %v9186, %v9182
      %v9188 = vrot.slane %v9187, 4
      %v9190 = vshll.u32 %v8892, 16
      %v9192 = vrot.slane %v9190, 5
      %v9193 = vsel %vm2149, %v9188, %v9192
      %v9194 = vshrl.u32 %v8892, 16
      %v9196 = vrot.slane %v9194, 4
      %v9197 = vor.u32 %v9196, %v9192
      %v9198 = vrot.slane %v9197, 4
      %v9200 = vshll.u32 %v8893, 16
      %v9202 = vrot.slane %v9200, 5
      %v9203 = vsel %vm2149, %v9198, %v9202
      %v9204 = vshrl.u32 %v8893, 16
      %v9206 = vrot.slane %v9204, 4
      %v9207 = vor.u32 %v9206, %v9202
      %v9208 = vrot.slane %v9207, 4
      %v9210 = vshll.u32 %v8894, 16
      %v9212 = vrot.slane %v9210, 5
      %v9213 = vsel %vm2149, %v9208, %v9212
      %v9214 = vshrl.u32 %v8894, 16
      %v9216 = vrot.slane %v9214, 4
      %v9217 = vor.u32 %v9216, %v9212
      %v9218 = vrot.slane %v9217, 4
      %v9220 = vshll.u32 %v8895, 16
      %v9222 = vrot.slane %v9220, 5
      %v9223 = vsel %vm2149, %v9218, %v9222
      %v9224 = vshrl.u32 %v8895, 16
      %v9226 = vrot.slane %v9224, 4
      %v9227 = vor.u32 %v9226, %v9222
      %v9228 = vrot.slane %v9227, 4
      %v9230 = vshll.u32 %v8896, 16
      %v9232 = vrot.slane %v9230, 5
      %v9233 = vsel %vm2149, %v9228, %v9232
      %v9234 = vshrl.u32 %v8896, 16
      %v9236 = vrot.slane %v9234, 4
      %v9237 = vor.u32 %v9236, %v9232
      %v9238 = vrot.slane %v9237, 4
      %v9240 = vshll.u32 %v8897, 16
      %v9242 = vrot.slane %v9240, 5
      %v9243 = vsel %vm2149, %v9238, %v9242
      %v9244 = vshrl.u32 %v8897, 16
      %v9246 = vrot.slane %v9244, 4
      %v9247 = vor.u32 %v9246, %v9242
      %v9248 = vrot.slane %v9247, 4
      %v9250 = vshll.u32 %v8898, 16
      %v9252 = vrot.slane %v9250, 5
      %v9253 = vsel %vm2149, %v9248, %v9252
      %v9254 = vshrl.u32 %v8898, 16
      %v9256 = vrot.slane %v9254, 4
      %v9257 = vor.u32 %v9256, %v9252
      %v9258 = vrot.slane %v9257, 4
      %v9260 = vshll.u32 %v8899, 16
      %v9262 = vrot.slane %v9260, 5
      %v9263 = vsel %vm2149, %v9258, %v9262
      %9300 = vst [vmem:[#allocation3 + $0x18] sm:$0xf] %v8913
      %9301 = vst [vmem:[#allocation3 + $0x3c] sm:$0xf] %v8923
      %9302 = vst [vmem:[#allocation3 + $0x60] sm:$0xf] %v8933
      %9303 = vst [vmem:[#allocation3 + $0x84] sm:$0xf] %v8943
      %9304 = vst [vmem:[#allocation3 + $0xa8] sm:$0xf] %v8953
      %9305 = vst [vmem:[#allocation3 + $0xcc] sm:$0xf] %v8963
      %9306 = vst [vmem:[#allocation3 + $0xf0] sm:$0xf] %v8973
      %9307 = vst [vmem:[#allocation3 + $0x114] sm:$0xf] %v8983
      %9308 = vst [vmem:[#allocation3 + $0x138] sm:$0xf] %v8993
      %9309 = vst [vmem:[#allocation3 + $0x15c] sm:$0xf] %v9003
      %9310 = vst [vmem:[#allocation3 + $0x180] sm:$0xf] %v9013
      %9311 = vst [vmem:[#allocation3 + $0x1a4] sm:$0xf] %v9023
      %9312 = vst [vmem:[#allocation3 + $0x1c8] sm:$0xf] %v9033
      %9313 = vst [vmem:[#allocation3 + $0x1ec] sm:$0xf] %v9043
      %9314 = vst [vmem:[#allocation3 + $0x210] sm:$0xf] %v9053
      %9315 = vst [vmem:[#allocation3 + $0x234] sm:$0xf] %v9063
      %9316 = vst [vmem:[#allocation3 + $0x258] sm:$0xf] %v9073
      %9317 = vst [vmem:[#allocation3 + $0x27c] sm:$0xf] %v9083
      %9318 = vst [vmem:[#allocation3 + $0x2a0] sm:$0xf] %v9093
      %9319 = vst [vmem:[#allocation3 + $0x2c4] sm:$0xf] %v9103
      %9320 = vst [vmem:[#allocation3 + $0x2e8] sm:$0xf] %v9113
      %9321 = vst [vmem:[#allocation3 + $0x30c] sm:$0xf] %v9123
      %9322 = vst [vmem:[#allocation3 + $0x330] sm:$0xf] %v9133
      %9323 = vst [vmem:[#allocation3 + $0x354] sm:$0xf] %v9143
      %9324 = vst [vmem:[#allocation3 + $0x378] sm:$0xf] %v9153
      %9325 = vst [vmem:[#allocation3 + $0x39c] sm:$0xf] %v9163
      %9326 = vst [vmem:[#allocation3 + $0x3c0] sm:$0xf] %v9173
      %9327 = vst [vmem:[#allocation3 + $0x3e4] sm:$0xf] %v9183
      %9328 = vst [vmem:[#allocation3 + $0x408] sm:$0xf] %v9193
      %9329 = vst [vmem:[#allocation3 + $0x42c] sm:$0xf] %v9203
      %9330 = vst [vmem:[#allocation3 + $0x450] sm:$0xf] %v9213
      %9331 = vst [vmem:[#allocation3 + $0x474] sm:$0xf] %v9223
      %9332 = vst [vmem:[#allocation3 + $0x498] sm:$0xf] %v9233
      %9333 = vst [vmem:[#allocation3 + $0x4bc] sm:$0xf] %v9243
      %9334 = vst [vmem:[#allocation3 + $0x4e0] sm:$0xf] %v9253
      %9335 = vst [vmem:[#allocation3 + $0x504] sm:$0xf] %v9263
      %v9336 = vld [vmem:[#allocation2 + $0x18] sm:$0xe]
      %v9337 = vld [vmem:[#allocation2 + $0x1c] sm:$0xf]
      %v9338 = vld [vmem:[#allocation2 + $0x20] sm:$0xf]
      %v9339 = vld [vmem:[#allocation2 + $0x24] sm:$0xf]
      %v9340 = vld [vmem:[#allocation2 + $0x28] sm:$0xf]
      %v9341 = vld [vmem:[#allocation2 + $0x2c] sm:$0xf]
      %v9342 = vld [vmem:[#allocation2 + $0x30] sm:$0xf]
      %v9343 = vld [vmem:[#allocation2 + $0x34] sm:$0xf]
      %v9344 = vld [vmem:[#allocation2 + $0x38] sm:$0xf]
      %v9345 = vld [vmem:[#allocation2 + $0x3c] sm:$0xf]
      %v9346 = vld [vmem:[#allocation2 + $0x40] sm:$0xf]
      %v9347 = vld [vmem:[#allocation2 + $0x44] sm:$0xf]
      %v9348 = vld [vmem:[#allocation2 + $0x48] sm:$0xf]
      %v9349 = vld [vmem:[#allocation2 + $0x4c] sm:$0xf]
      %v9350 = vld [vmem:[#allocation2 + $0x50] sm:$0xf]
      %v9351 = vld [vmem:[#allocation2 + $0x54] sm:$0xf]
      %v9352 = vld [vmem:[#allocation2 + $0x58] sm:$0xf]
      %v9353 = vld [vmem:[#allocation2 + $0x5c] sm:$0xf]
      %v9354 = vld [vmem:[#allocation2 + $0x60] sm:$0xf]
      %v9355 = vld [vmem:[#allocation2 + $0x64] sm:$0xf]
      %v9356 = vld [vmem:[#allocation2 + $0x68] sm:$0xf]
      %v9357 = vld [vmem:[#allocation2 + $0x6c] sm:$0xf]
      %v9358 = vld [vmem:[#allocation2 + $0x70] sm:$0xf]
      %v9359 = vld [vmem:[#allocation2 + $0x74] sm:$0xf]
      %v9360 = vld [vmem:[#allocation2 + $0x78] sm:$0xf]
      %v9361 = vld [vmem:[#allocation2 + $0x7c] sm:$0xf]
      %v9362 = vld [vmem:[#allocation2 + $0x80] sm:$0xf]
      %v9363 = vld [vmem:[#allocation2 + $0x84] sm:$0xf]
      %v9364 = vld [vmem:[#allocation2 + $0x88] sm:$0xf]
      %v9365 = vld [vmem:[#allocation2 + $0x8c] sm:$0xf]
      %v9366 = vld [vmem:[#allocation2 + $0x90] sm:$0xf]
      %v9367 = vld [vmem:[#allocation2 + $0x94] sm:$0xf]
      %v9368 = vld [vmem:[#allocation2 + $0x98] sm:$0xf]
      %v9369 = vld [vmem:[#allocation2 + $0x9c] sm:$0xf]
      %v9370 = vld [vmem:[#allocation2 + $0xa0] sm:$0xf]
      %v9371 = vld [vmem:[#allocation2 + $0xa4] sm:$0xf]
      %v9372 = vld [vmem:[#allocation2 + $0xa8] sm:$0x1]
      %v9410 = vrot.slane %v9336, 5
      %v9411 = vrot.slane %v9410, 4
      %v9412 = vrot.slane %v9337, 5
      %v9413 = vsel %vm3135, %v9411, %v9412
      %v9414 = vrot.slane %v9412, 4
      %v9415 = vrot.slane %v9338, 5
      %v9416 = vsel %vm3135, %v9414, %v9415
      %v9417 = vrot.slane %v9415, 4
      %v9418 = vrot.slane %v9339, 5
      %v9419 = vsel %vm3135, %v9417, %v9418
      %v9420 = vrot.slane %v9418, 4
      %v9421 = vrot.slane %v9340, 5
      %v9422 = vsel %vm3135, %v9420, %v9421
      %v9423 = vrot.slane %v9421, 4
      %v9424 = vrot.slane %v9341, 5
      %v9425 = vsel %vm3135, %v9423, %v9424
      %v9426 = vrot.slane %v9424, 4
      %v9427 = vrot.slane %v9342, 5
      %v9428 = vsel %vm3135, %v9426, %v9427
      %v9429 = vrot.slane %v9427, 4
      %v9430 = vrot.slane %v9343, 5
      %v9431 = vsel %vm3135, %v9429, %v9430
      %v9432 = vrot.slane %v9430, 4
      %v9433 = vrot.slane %v9344, 5
      %v9434 = vsel %vm3135, %v9432, %v9433
      %v9435 = vrot.slane %v9433, 4
      %v9436 = vrot.slane %v9345, 5
      %v9437 = vsel %vm3135, %v9435, %v9436
      %v9438 = vrot.slane %v9436, 4
      %v9439 = vrot.slane %v9346, 5
      %v9440 = vsel %vm3135, %v9438, %v9439
      %v9441 = vrot.slane %v9439, 4
      %v9442 = vrot.slane %v9347, 5
      %v9443 = vsel %vm3135, %v9441, %v9442
      %v9444 = vrot.slane %v9442, 4
      %v9445 = vrot.slane %v9348, 5
      %v9446 = vsel %vm3135, %v9444, %v9445
      %v9447 = vrot.slane %v9445, 4
      %v9448 = vrot.slane %v9349, 5
      %v9449 = vsel %vm3135, %v9447, %v9448
      %v9450 = vrot.slane %v9448, 4
      %v9451 = vrot.slane %v9350, 5
      %v9452 = vsel %vm3135, %v9450, %v9451
      %v9453 = vrot.slane %v9451, 4
      %v9454 = vrot.slane %v9351, 5
      %v9455 = vsel %vm3135, %v9453, %v9454
      %v9456 = vrot.slane %v9454, 4
      %v9457 = vrot.slane %v9352, 5
      %v9458 = vsel %vm3135, %v9456, %v9457
      %v9459 = vrot.slane %v9457, 4
      %v9460 = vrot.slane %v9353, 5
      %v9461 = vsel %vm3135, %v9459, %v9460
      %v9462 = vrot.slane %v9460, 4
      %v9463 = vrot.slane %v9354, 5
      %v9464 = vsel %vm3135, %v9462, %v9463
      %v9465 = vrot.slane %v9463, 4
      %v9466 = vrot.slane %v9355, 5
      %v9467 = vsel %vm3135, %v9465, %v9466
      %v9468 = vrot.slane %v9466, 4
      %v9469 = vrot.slane %v9356, 5
      %v9470 = vsel %vm3135, %v9468, %v9469
      %v9471 = vrot.slane %v9469, 4
      %v9472 = vrot.slane %v9357, 5
      %v9473 = vsel %vm3135, %v9471, %v9472
      %v9474 = vrot.slane %v9472, 4
      %v9475 = vrot.slane %v9358, 5
      %v9476 = vsel %vm3135, %v9474, %v9475
      %v9477 = vrot.slane %v9475, 4
      %v9478 = vrot.slane %v9359, 5
      %v9479 = vsel %vm3135, %v9477, %v9478
      %v9480 = vrot.slane %v9478, 4
      %v9481 = vrot.slane %v9360, 5
      %v9482 = vsel %vm3135, %v9480, %v9481
      %v9483 = vrot.slane %v9481, 4
      %v9484 = vrot.slane %v9361, 5
      %v9485 = vsel %vm3135, %v9483, %v9484
      %v9486 = vrot.slane %v9484, 4
      %v9487 = vrot.slane %v9362, 5
      %v9488 = vsel %vm3135, %v9486, %v9487
      %v9489 = vrot.slane %v9487, 4
      %v9490 = vrot.slane %v9363, 5
      %v9491 = vsel %vm3135, %v9489, %v9490
      %v9492 = vrot.slane %v9490, 4
      %v9493 = vrot.slane %v9364, 5
      %v9494 = vsel %vm3135, %v9492, %v9493
      %v9495 = vrot.slane %v9493, 4
      %v9496 = vrot.slane %v9365, 5
      %v9497 = vsel %vm3135, %v9495, %v9496
      %v9498 = vrot.slane %v9496, 4
      %v9499 = vrot.slane %v9366, 5
      %v9500 = vsel %vm3135, %v9498, %v9499
      %v9501 = vrot.slane %v9499, 4
      %v9502 = vrot.slane %v9367, 5
      %v9503 = vsel %vm3135, %v9501, %v9502
      %v9504 = vrot.slane %v9502, 4
      %v9505 = vrot.slane %v9368, 5
      %v9506 = vsel %vm3135, %v9504, %v9505
      %v9507 = vrot.slane %v9505, 4
      %v9508 = vrot.slane %v9369, 5
      %v9509 = vsel %vm3135, %v9507, %v9508
      %v9510 = vrot.slane %v9508, 4
      %v9511 = vrot.slane %v9370, 5
      %v9512 = vsel %vm3135, %v9510, %v9511
      %v9513 = vrot.slane %v9511, 4
      %v9514 = vrot.slane %v9371, 5
      %v9515 = vsel %vm3135, %v9513, %v9514
      %v9516 = vrot.slane %v9514, 4
      %v9517 = vrot.slane %v9372, 5
      %v9518 = vsel %vm3135, %v9516, %v9517
      %9555 = vst [vmem:[#allocation3 + $0x1c] sm:$0xf] %v9413
      %9556 = vst [vmem:[#allocation3 + $0x40] sm:$0xf] %v9416
      %9557 = vst [vmem:[#allocation3 + $0x64] sm:$0xf] %v9419
      %9558 = vst [vmem:[#allocation3 + $0x88] sm:$0xf] %v9422
      %9559 = vst [vmem:[#allocation3 + $0xac] sm:$0xf] %v9425
      %9560 = vst [vmem:[#allocation3 + $0xd0] sm:$0xf] %v9428
      %9561 = vst [vmem:[#allocation3 + $0xf4] sm:$0xf] %v9431
      %9562 = vst [vmem:[#allocation3 + $0x118] sm:$0xf] %v9434
      %9563 = vst [vmem:[#allocation3 + $0x13c] sm:$0xf] %v9437
      %9564 = vst [vmem:[#allocation3 + $0x160] sm:$0xf] %v9440
      %9565 = vst [vmem:[#allocation3 + $0x184] sm:$0xf] %v9443
      %9566 = vst [vmem:[#allocation3 + $0x1a8] sm:$0xf] %v9446
      %9567 = vst [vmem:[#allocation3 + $0x1cc] sm:$0xf] %v9449
      %9568 = vst [vmem:[#allocation3 + $0x1f0] sm:$0xf] %v9452
      %9569 = vst [vmem:[#allocation3 + $0x214] sm:$0xf] %v9455
      %9570 = vst [vmem:[#allocation3 + $0x238] sm:$0xf] %v9458
      %9571 = vst [vmem:[#allocation3 + $0x25c] sm:$0xf] %v9461
      %9572 = vst [vmem:[#allocation3 + $0x280] sm:$0xf] %v9464
      %9573 = vst [vmem:[#allocation3 + $0x2a4] sm:$0xf] %v9467
      %9574 = vst [vmem:[#allocation3 + $0x2c8] sm:$0xf] %v9470
      %9575 = vst [vmem:[#allocation3 + $0x2ec] sm:$0xf] %v9473
      %9576 = vst [vmem:[#allocation3 + $0x310] sm:$0xf] %v9476
      %9577 = vst [vmem:[#allocation3 + $0x334] sm:$0xf] %v9479
      %9578 = vst [vmem:[#allocation3 + $0x358] sm:$0xf] %v9482
      %9579 = vst [vmem:[#allocation3 + $0x37c] sm:$0xf] %v9485
      %9580 = vst [vmem:[#allocation3 + $0x3a0] sm:$0xf] %v9488
      %9581 = vst [vmem:[#allocation3 + $0x3c4] sm:$0xf] %v9491
      %9582 = vst [vmem:[#allocation3 + $0x3e8] sm:$0xf] %v9494
      %9583 = vst [vmem:[#allocation3 + $0x40c] sm:$0xf] %v9497
      %9584 = vst [vmem:[#allocation3 + $0x430] sm:$0xf] %v9500
      %9585 = vst [vmem:[#allocation3 + $0x454] sm:$0xf] %v9503
      %9586 = vst [vmem:[#allocation3 + $0x478] sm:$0xf] %v9506
      %9587 = vst [vmem:[#allocation3 + $0x49c] sm:$0xf] %v9509
      %9588 = vst [vmem:[#allocation3 + $0x4c0] sm:$0xf] %v9512
      %9589 = vst [vmem:[#allocation3 + $0x4e4] sm:$0xf] %v9515
      %9590 = vst [vmem:[#allocation3 + $0x508] sm:$0xf] %v9518
      %v9591 = vld [vmem:[#allocation2 + $0x18] sm:$0xe]
      %v9592 = vld [vmem:[#allocation2 + $0x1c] sm:$0xf]
      %v9593 = vld [vmem:[#allocation2 + $0x20] sm:$0xf]
      %v9594 = vld [vmem:[#allocation2 + $0x24] sm:$0xf]
      %v9595 = vld [vmem:[#allocation2 + $0x28] sm:$0xf]
      %v9596 = vld [vmem:[#allocation2 + $0x2c] sm:$0xf]
      %v9597 = vld [vmem:[#allocation2 + $0x30] sm:$0xf]
      %v9598 = vld [vmem:[#allocation2 + $0x34] sm:$0xf]
      %v9599 = vld [vmem:[#allocation2 + $0x38] sm:$0xf]
      %v9600 = vld [vmem:[#allocation2 + $0x3c] sm:$0xf]
      %v9601 = vld [vmem:[#allocation2 + $0x40] sm:$0xf]
      %v9602 = vld [vmem:[#allocation2 + $0x44] sm:$0xf]
      %v9603 = vld [vmem:[#allocation2 + $0x48] sm:$0xf]
      %v9604 = vld [vmem:[#allocation2 + $0x4c] sm:$0xf]
      %v9605 = vld [vmem:[#allocation2 + $0x50] sm:$0xf]
      %v9606 = vld [vmem:[#allocation2 + $0x54] sm:$0xf]
      %v9607 = vld [vmem:[#allocation2 + $0x58] sm:$0xf]
      %v9608 = vld [vmem:[#allocation2 + $0x5c] sm:$0xf]
      %v9609 = vld [vmem:[#allocation2 + $0x60] sm:$0xf]
      %v9610 = vld [vmem:[#allocation2 + $0x64] sm:$0xf]
      %v9611 = vld [vmem:[#allocation2 + $0x68] sm:$0xf]
      %v9612 = vld [vmem:[#allocation2 + $0x6c] sm:$0xf]
      %v9613 = vld [vmem:[#allocation2 + $0x70] sm:$0xf]
      %v9614 = vld [vmem:[#allocation2 + $0x74] sm:$0xf]
      %v9615 = vld [vmem:[#allocation2 + $0x78] sm:$0xf]
      %v9616 = vld [vmem:[#allocation2 + $0x7c] sm:$0xf]
      %v9617 = vld [vmem:[#allocation2 + $0x80] sm:$0xf]
      %v9618 = vld [vmem:[#allocation2 + $0x84] sm:$0xf]
      %v9619 = vld [vmem:[#allocation2 + $0x88] sm:$0xf]
      %v9620 = vld [vmem:[#allocation2 + $0x8c] sm:$0xf]
      %v9621 = vld [vmem:[#allocation2 + $0x90] sm:$0xf]
      %v9622 = vld [vmem:[#allocation2 + $0x94] sm:$0xf]
      %v9623 = vld [vmem:[#allocation2 + $0x98] sm:$0xf]
      %v9624 = vld [vmem:[#allocation2 + $0x9c] sm:$0xf]
      %v9625 = vld [vmem:[#allocation2 + $0xa0] sm:$0xf]
      %v9626 = vld [vmem:[#allocation2 + $0xa4] sm:$0xf]
      %v9627 = vld [vmem:[#allocation2 + $0xa8] sm:$0x3]
      %v9629 = vshrl.u32 %v9591, 16
      %v9631 = vrot.slane %v9629, 5
      %v9632 = vshll.u32 %v9591, 16
      %v9634 = vrot.slane %v9632, 6
      %v9635 = vor.u32 %v9631, %v9634
      %v9636 = vrot.slane %v9635, 4
      %v9638 = vshrl.u32 %v9592, 16
      %v9640 = vrot.slane %v9638, 5
      %v9641 = vshll.u32 %v9592, 16
      %v9643 = vrot.slane %v9641, 6
      %v9644 = vor.u32 %v9640, %v9643
      %v9645 = vsel %vm3356, %v9636, %v9644
      %v9646 = vrot.slane %v9644, 4
      %v9648 = vshrl.u32 %v9593, 16
      %v9650 = vrot.slane %v9648, 5
      %v9651 = vshll.u32 %v9593, 16
      %v9653 = vrot.slane %v9651, 6
      %v9654 = vor.u32 %v9650, %v9653
      %v9655 = vsel %vm3356, %v9646, %v9654
      %v9656 = vrot.slane %v9654, 4
      %v9658 = vshrl.u32 %v9594, 16
      %v9660 = vrot.slane %v9658, 5
      %v9661 = vshll.u32 %v9594, 16
      %v9663 = vrot.slane %v9661, 6
      %v9664 = vor.u32 %v9660, %v9663
      %v9665 = vsel %vm3356, %v9656, %v9664
      %v9666 = vrot.slane %v9664, 4
      %v9668 = vshrl.u32 %v9595, 16
      %v9670 = vrot.slane %v9668, 5
      %v9671 = vshll.u32 %v9595, 16
      %v9673 = vrot.slane %v9671, 6
      %v9674 = vor.u32 %v9670, %v9673
      %v9675 = vsel %vm3356, %v9666, %v9674
      %v9676 = vrot.slane %v9674, 4
      %v9678 = vshrl.u32 %v9596, 16
      %v9680 = vrot.slane %v9678, 5
      %v9681 = vshll.u32 %v9596, 16
      %v9683 = vrot.slane %v9681, 6
      %v9684 = vor.u32 %v9680, %v9683
      %v9685 = vsel %vm3356, %v9676, %v9684
      %v9686 = vrot.slane %v9684, 4
      %v9688 = vshrl.u32 %v9597, 16
      %v9690 = vrot.slane %v9688, 5
      %v9691 = vshll.u32 %v9597, 16
      %v9693 = vrot.slane %v9691, 6
      %v9694 = vor.u32 %v9690, %v9693
      %v9695 = vsel %vm3356, %v9686, %v9694
      %v9696 = vrot.slane %v9694, 4
      %v9698 = vshrl.u32 %v9598, 16
      %v9700 = vrot.slane %v9698, 5
      %v9701 = vshll.u32 %v9598, 16
      %v9703 = vrot.slane %v9701, 6
      %v9704 = vor.u32 %v9700, %v9703
      %v9705 = vsel %vm3356, %v9696, %v9704
      %v9706 = vrot.slane %v9704, 4
      %v9708 = vshrl.u32 %v9599, 16
      %v9710 = vrot.slane %v9708, 5
      %v9711 = vshll.u32 %v9599, 16
      %v9713 = vrot.slane %v9711, 6
      %v9714 = vor.u32 %v9710, %v9713
      %v9715 = vsel %vm3356, %v9706, %v9714
      %v9716 = vrot.slane %v9714, 4
      %v9718 = vshrl.u32 %v9600, 16
      %v9720 = vrot.slane %v9718, 5
      %v9721 = vshll.u32 %v9600, 16
      %v9723 = vrot.slane %v9721, 6
      %v9724 = vor.u32 %v9720, %v9723
      %v9725 = vsel %vm3356, %v9716, %v9724
      %v9726 = vrot.slane %v9724, 4
      %v9728 = vshrl.u32 %v9601, 16
      %v9730 = vrot.slane %v9728, 5
      %v9731 = vshll.u32 %v9601, 16
      %v9733 = vrot.slane %v9731, 6
      %v9734 = vor.u32 %v9730, %v9733
      %v9735 = vsel %vm3356, %v9726, %v9734
      %v9736 = vrot.slane %v9734, 4
      %v9738 = vshrl.u32 %v9602, 16
      %v9740 = vrot.slane %v9738, 5
      %v9741 = vshll.u32 %v9602, 16
      %v9743 = vrot.slane %v9741, 6
      %v9744 = vor.u32 %v9740, %v9743
      %v9745 = vsel %vm3356, %v9736, %v9744
      %v9746 = vrot.slane %v9744, 4
      %v9748 = vshrl.u32 %v9603, 16
      %v9750 = vrot.slane %v9748, 5
      %v9751 = vshll.u32 %v9603, 16
      %v9753 = vrot.slane %v9751, 6
      %v9754 = vor.u32 %v9750, %v9753
      %v9755 = vsel %vm3356, %v9746, %v9754
      %v9756 = vrot.slane %v9754, 4
      %v9758 = vshrl.u32 %v9604, 16
      %v9760 = vrot.slane %v9758, 5
      %v9761 = vshll.u32 %v9604, 16
      %v9763 = vrot.slane %v9761, 6
      %v9764 = vor.u32 %v9760, %v9763
      %v9765 = vsel %vm3356, %v9756, %v9764
      %v9766 = vrot.slane %v9764, 4
      %v9768 = vshrl.u32 %v9605, 16
      %v9770 = vrot.slane %v9768, 5
      %v9771 = vshll.u32 %v9605, 16
      %v9773 = vrot.slane %v9771, 6
      %v9774 = vor.u32 %v9770, %v9773
      %v9775 = vsel %vm3356, %v9766, %v9774
      %v9776 = vrot.slane %v9774, 4
      %v9778 = vshrl.u32 %v9606, 16
      %v9780 = vrot.slane %v9778, 5
      %v9781 = vshll.u32 %v9606, 16
      %v9783 = vrot.slane %v9781, 6
      %v9784 = vor.u32 %v9780, %v9783
      %v9785 = vsel %vm3356, %v9776, %v9784
      %v9786 = vrot.slane %v9784, 4
      %v9788 = vshrl.u32 %v9607, 16
      %v9790 = vrot.slane %v9788, 5
      %v9791 = vshll.u32 %v9607, 16
      %v9793 = vrot.slane %v9791, 6
      %v9794 = vor.u32 %v9790, %v9793
      %v9795 = vsel %vm3356, %v9786, %v9794
      %v9796 = vrot.slane %v9794, 4
      %v9798 = vshrl.u32 %v9608, 16
      %v9800 = vrot.slane %v9798, 5
      %v9801 = vshll.u32 %v9608, 16
      %v9803 = vrot.slane %v9801, 6
      %v9804 = vor.u32 %v9800, %v9803
      %v9805 = vsel %vm3356, %v9796, %v9804
      %v9806 = vrot.slane %v9804, 4
      %v9808 = vshrl.u32 %v9609, 16
      %v9810 = vrot.slane %v9808, 5
      %v9811 = vshll.u32 %v9609, 16
      %v9813 = vrot.slane %v9811, 6
      %v9814 = vor.u32 %v9810, %v9813
      %v9815 = vsel %vm3356, %v9806, %v9814
      %v9816 = vrot.slane %v9814, 4
      %v9818 = vshrl.u32 %v9610, 16
      %v9820 = vrot.slane %v9818, 5
      %v9821 = vshll.u32 %v9610, 16
      %v9823 = vrot.slane %v9821, 6
      %v9824 = vor.u32 %v9820, %v9823
      %v9825 = vsel %vm3356, %v9816, %v9824
      %v9826 = vrot.slane %v9824, 4
      %v9828 = vshrl.u32 %v9611, 16
      %v9830 = vrot.slane %v9828, 5
      %v9831 = vshll.u32 %v9611, 16
      %v9833 = vrot.slane %v9831, 6
      %v9834 = vor.u32 %v9830, %v9833
      %v9835 = vsel %vm3356, %v9826, %v9834
      %v9836 = vrot.slane %v9834, 4
      %v9838 = vshrl.u32 %v9612, 16
      %v9840 = vrot.slane %v9838, 5
      %v9841 = vshll.u32 %v9612, 16
      %v9843 = vrot.slane %v9841, 6
      %v9844 = vor.u32 %v9840, %v9843
      %v9845 = vsel %vm3356, %v9836, %v9844
      %v9846 = vrot.slane %v9844, 4
      %v9848 = vshrl.u32 %v9613, 16
      %v9850 = vrot.slane %v9848, 5
      %v9851 = vshll.u32 %v9613, 16
      %v9853 = vrot.slane %v9851, 6
      %v9854 = vor.u32 %v9850, %v9853
      %v9855 = vsel %vm3356, %v9846, %v9854
      %v9856 = vrot.slane %v9854, 4
      %v9858 = vshrl.u32 %v9614, 16
      %v9860 = vrot.slane %v9858, 5
      %v9861 = vshll.u32 %v9614, 16
      %v9863 = vrot.slane %v9861, 6
      %v9864 = vor.u32 %v9860, %v9863
      %v9865 = vsel %vm3356, %v9856, %v9864
      %v9866 = vrot.slane %v9864, 4
      %v9868 = vshrl.u32 %v9615, 16
      %v9870 = vrot.slane %v9868, 5
      %v9871 = vshll.u32 %v9615, 16
      %v9873 = vrot.slane %v9871, 6
      %v9874 = vor.u32 %v9870, %v9873
      %v9875 = vsel %vm3356, %v9866, %v9874
      %v9876 = vrot.slane %v9874, 4
      %v9878 = vshrl.u32 %v9616, 16
      %v9880 = vrot.slane %v9878, 5
      %v9881 = vshll.u32 %v9616, 16
      %v9883 = vrot.slane %v9881, 6
      %v9884 = vor.u32 %v9880, %v9883
      %v9885 = vsel %vm3356, %v9876, %v9884
      %v9886 = vrot.slane %v9884, 4
      %v9888 = vshrl.u32 %v9617, 16
      %v9890 = vrot.slane %v9888, 5
      %v9891 = vshll.u32 %v9617, 16
      %v9893 = vrot.slane %v9891, 6
      %v9894 = vor.u32 %v9890, %v9893
      %v9895 = vsel %vm3356, %v9886, %v9894
      %v9896 = vrot.slane %v9894, 4
      %v9898 = vshrl.u32 %v9618, 16
      %v9900 = vrot.slane %v9898, 5
      %v9901 = vshll.u32 %v9618, 16
      %v9903 = vrot.slane %v9901, 6
      %v9904 = vor.u32 %v9900, %v9903
      %v9905 = vsel %vm3356, %v9896, %v9904
      %v9906 = vrot.slane %v9904, 4
      %v9908 = vshrl.u32 %v9619, 16
      %v9910 = vrot.slane %v9908, 5
      %v9911 = vshll.u32 %v9619, 16
      %v9913 = vrot.slane %v9911, 6
      %v9914 = vor.u32 %v9910, %v9913
      %v9915 = vsel %vm3356, %v9906, %v9914
      %v9916 = vrot.slane %v9914, 4
      %v9918 = vshrl.u32 %v9620, 16
      %v9920 = vrot.slane %v9918, 5
      %v9921 = vshll.u32 %v9620, 16
      %v9923 = vrot.slane %v9921, 6
      %v9924 = vor.u32 %v9920, %v9923
      %v9925 = vsel %vm3356, %v9916, %v9924
      %v9926 = vrot.slane %v9924, 4
      %v9928 = vshrl.u32 %v9621, 16
      %v9930 = vrot.slane %v9928, 5
      %v9931 = vshll.u32 %v9621, 16
      %v9933 = vrot.slane %v9931, 6
      %v9934 = vor.u32 %v9930, %v9933
      %v9935 = vsel %vm3356, %v9926, %v9934
      %v9936 = vrot.slane %v9934, 4
      %v9938 = vshrl.u32 %v9622, 16
      %v9940 = vrot.slane %v9938, 5
      %v9941 = vshll.u32 %v9622, 16
      %v9943 = vrot.slane %v9941, 6
      %v9944 = vor.u32 %v9940, %v9943
      %v9945 = vsel %vm3356, %v9936, %v9944
      %v9946 = vrot.slane %v9944, 4
      %v9948 = vshrl.u32 %v9623, 16
      %v9950 = vrot.slane %v9948, 5
      %v9951 = vshll.u32 %v9623, 16
      %v9953 = vrot.slane %v9951, 6
      %v9954 = vor.u32 %v9950, %v9953
      %v9955 = vsel %vm3356, %v9946, %v9954
      %v9956 = vrot.slane %v9954, 4
      %v9958 = vshrl.u32 %v9624, 16
      %v9960 = vrot.slane %v9958, 5
      %v9961 = vshll.u32 %v9624, 16
      %v9963 = vrot.slane %v9961, 6
      %v9964 = vor.u32 %v9960, %v9963
      %v9965 = vsel %vm3356, %v9956, %v9964
      %v9966 = vrot.slane %v9964, 4
      %v9968 = vshrl.u32 %v9625, 16
      %v9970 = vrot.slane %v9968, 5
      %v9971 = vshll.u32 %v9625, 16
      %v9973 = vrot.slane %v9971, 6
      %v9974 = vor.u32 %v9970, %v9973
      %v9975 = vsel %vm3356, %v9966, %v9974
      %v9976 = vrot.slane %v9974, 4
      %v9978 = vshrl.u32 %v9626, 16
      %v9980 = vrot.slane %v9978, 5
      %v9981 = vshll.u32 %v9626, 16
      %v9983 = vrot.slane %v9981, 6
      %v9984 = vor.u32 %v9980, %v9983
      %v9985 = vsel %vm3356, %v9976, %v9984
      %v9986 = vrot.slane %v9984, 4
      %v9988 = vshrl.u32 %v9627, 16
      %v9990 = vrot.slane %v9988, 5
      %v9991 = vshll.u32 %v9627, 16
      %v9993 = vrot.slane %v9991, 6
      %v9994 = vor.u32 %v9990, %v9993
      %v9995 = vsel %vm3356, %v9986, %v9994
      %10032 = vst [vmem:[#allocation3 + $0x20] sm:$0xf] %v9645
      %10033 = vst [vmem:[#allocation3 + $0x44] sm:$0xf] %v9655
      %10034 = vst [vmem:[#allocation3 + $0x68] sm:$0xf] %v9665
      %10035 = vst [vmem:[#allocation3 + $0x8c] sm:$0xf] %v9675
      %10036 = vst [vmem:[#allocation3 + $0xb0] sm:$0xf] %v9685
      %10037 = vst [vmem:[#allocation3 + $0xd4] sm:$0xf] %v9695
      %10038 = vst [vmem:[#allocation3 + $0xf8] sm:$0xf] %v9705
      %10039 = vst [vmem:[#allocation3 + $0x11c] sm:$0xf] %v9715
      %10040 = vst [vmem:[#allocation3 + $0x140] sm:$0xf] %v9725
      %10041 = vst [vmem:[#allocation3 + $0x164] sm:$0xf] %v9735
      %10042 = vst [vmem:[#allocation3 + $0x188] sm:$0xf] %v9745
      %10043 = vst [vmem:[#allocation3 + $0x1ac] sm:$0xf] %v9755
      %10044 = vst [vmem:[#allocation3 + $0x1d0] sm:$0xf] %v9765
      %10045 = vst [vmem:[#allocation3 + $0x1f4] sm:$0xf] %v9775
      %10046 = vst [vmem:[#allocation3 + $0x218] sm:$0xf] %v9785
      %10047 = vst [vmem:[#allocation3 + $0x23c] sm:$0xf] %v9795
      %10048 = vst [vmem:[#allocation3 + $0x260] sm:$0xf] %v9805
      %10049 = vst [vmem:[#allocation3 + $0x284] sm:$0xf] %v9815
      %10050 = vst [vmem:[#allocation3 + $0x2a8] sm:$0xf] %v9825
      %10051 = vst [vmem:[#allocation3 + $0x2cc] sm:$0xf] %v9835
      %10052 = vst [vmem:[#allocation3 + $0x2f0] sm:$0xf] %v9845
      %10053 = vst [vmem:[#allocation3 + $0x314] sm:$0xf] %v9855
      %10054 = vst [vmem:[#allocation3 + $0x338] sm:$0xf] %v9865
      %10055 = vst [vmem:[#allocation3 + $0x35c] sm:$0xf] %v9875
      %10056 = vst [vmem:[#allocation3 + $0x380] sm:$0xf] %v9885
      %10057 = vst [vmem:[#allocation3 + $0x3a4] sm:$0xf] %v9895
      %10058 = vst [vmem:[#allocation3 + $0x3c8] sm:$0xf] %v9905
      %10059 = vst [vmem:[#allocation3 + $0x3ec] sm:$0xf] %v9915
      %10060 = vst [vmem:[#allocation3 + $0x410] sm:$0xf] %v9925
      %10061 = vst [vmem:[#allocation3 + $0x434] sm:$0xf] %v9935
      %10062 = vst [vmem:[#allocation3 + $0x458] sm:$0xf] %v9945
      %10063 = vst [vmem:[#allocation3 + $0x47c] sm:$0xf] %v9955
      %10064 = vst [vmem:[#allocation3 + $0x4a0] sm:$0xf] %v9965
      %10065 = vst [vmem:[#allocation3 + $0x4c4] sm:$0xf] %v9975
      %10066 = vst [vmem:[#allocation3 + $0x4e8] sm:$0xf] %v9985
      %10067 = vst [vmem:[#allocation3 + $0x50c] sm:$0xf] %v9995
      %v10068 = vld [vmem:[#allocation3] sm:$0xff]
      %v10069 = vld [vmem:[#allocation3 + $0x8] sm:$0xff]
      %v10070 = vld [vmem:[#allocation3 + $0x10] sm:$0xff]
      %v10071 = vld [vmem:[#allocation3 + $0x18] sm:$0xff]
      %v10072 = vld [vmem:[#allocation3 + $0x20] sm:$0xf]
      %v10073 = vld [vmem:[#allocation3 + $0x24] sm:$0xff]
      %v10074 = vld [vmem:[#allocation3 + $0x2c] sm:$0xff]
      %v10075 = vld [vmem:[#allocation3 + $0x34] sm:$0xff]
      %v10076 = vld [vmem:[#allocation3 + $0x3c] sm:$0xff]
      %v10077 = vld [vmem:[#allocation3 + $0x44] sm:$0xf]
      %v10078 = vld [vmem:[#allocation3 + $0x48] sm:$0xff]
      %v10079 = vld [vmem:[#allocation3 + $0x50] sm:$0xff]
      %v10080 = vld [vmem:[#allocation3 + $0x58] sm:$0xff]
      %v10081 = vld [vmem:[#allocation3 + $0x60] sm:$0xff]
      %v10082 = vld [vmem:[#allocation3 + $0x68] sm:$0xf]
      %v10083 = vld [vmem:[#allocation3 + $0x6c] sm:$0xff]
      %v10084 = vld [vmem:[#allocation3 + $0x74] sm:$0xff]
      %v10085 = vld [vmem:[#allocation3 + $0x7c] sm:$0xff]
      %v10086 = vld [vmem:[#allocation3 + $0x84] sm:$0xff]
      %v10087 = vld [vmem:[#allocation3 + $0x8c] sm:$0xf]
      %v10088 = vld [vmem:[#allocation3 + $0x90] sm:$0xff]
      %v10089 = vld [vmem:[#allocation3 + $0x98] sm:$0xff]
      %v10090 = vld [vmem:[#allocation3 + $0xa0] sm:$0xff]
      %v10091 = vld [vmem:[#allocation3 + $0xa8] sm:$0xff]
      %v10092 = vld [vmem:[#allocation3 + $0xb0] sm:$0xf]
      %v10093 = vld [vmem:[#allocation3 + $0xb4] sm:$0xff]
      %v10094 = vld [vmem:[#allocation3 + $0xbc] sm:$0xff]
      %v10095 = vld [vmem:[#allocation3 + $0xc4] sm:$0xff]
      %v10096 = vld [vmem:[#allocation3 + $0xcc] sm:$0xff]
      %v10097 = vld [vmem:[#allocation3 + $0xd4] sm:$0xf]
      %v10098 = vld [vmem:[#allocation3 + $0xd8] sm:$0xff]
      %v10099 = vld [vmem:[#allocation3 + $0xe0] sm:$0xff]
      %v10100 = vld [vmem:[#allocation3 + $0xe8] sm:$0xff]
      %v10101 = vld [vmem:[#allocation3 + $0xf0] sm:$0xff]
      %v10102 = vld [vmem:[#allocation3 + $0xf8] sm:$0xf]
      %v10103 = vld [vmem:[#allocation3 + $0xfc] sm:$0xff]
      %v10104 = vld [vmem:[#allocation3 + $0x104] sm:$0xff]
      %v10105 = vld [vmem:[#allocation3 + $0x10c] sm:$0xff]
      %v10106 = vld [vmem:[#allocation3 + $0x114] sm:$0xff]
      %v10107 = vld [vmem:[#allocation3 + $0x11c] sm:$0xf]
      %v10108 = vld [vmem:[#allocation3 + $0x120] sm:$0xff]
      %v10109 = vld [vmem:[#allocation3 + $0x128] sm:$0xff]
      %v10110 = vld [vmem:[#allocation3 + $0x130] sm:$0xff]
      %v10111 = vld [vmem:[#allocation3 + $0x138] sm:$0xff]
      %v10112 = vld [vmem:[#allocation3 + $0x140] sm:$0xf]
      %v10113 = vld [vmem:[#allocation3 + $0x144] sm:$0xff]
      %v10114 = vld [vmem:[#allocation3 + $0x14c] sm:$0xff]
      %v10115 = vld [vmem:[#allocation3 + $0x154] sm:$0xff]
      %v10116 = vld [vmem:[#allocation3 + $0x15c] sm:$0xff]
      %v10117 = vld [vmem:[#allocation3 + $0x164] sm:$0xf]
      %v10118 = vld [vmem:[#allocation3 + $0x168] sm:$0xff]
      %v10119 = vld [vmem:[#allocation3 + $0x170] sm:$0xff]
      %v10120 = vld [vmem:[#allocation3 + $0x178] sm:$0xff]
      %v10121 = vld [vmem:[#allocation3 + $0x180] sm:$0xff]
      %v10122 = vld [vmem:[#allocation3 + $0x188] sm:$0xf]
      %v10123 = vld [vmem:[#allocation3 + $0x18c] sm:$0xff]
      %v10124 = vld [vmem:[#allocation3 + $0x194] sm:$0xff]
      %v10125 = vld [vmem:[#allocation3 + $0x19c] sm:$0xff]
      %v10126 = vld [vmem:[#allocation3 + $0x1a4] sm:$0xff]
      %v10127 = vld [vmem:[#allocation3 + $0x1ac] sm:$0xf]
      %v10128 = vld [vmem:[#allocation3 + $0x1b0] sm:$0xff]
      %v10129 = vld [vmem:[#allocation3 + $0x1b8] sm:$0xff]
      %v10130 = vld [vmem:[#allocation3 + $0x1c0] sm:$0xff]
      %v10131 = vld [vmem:[#allocation3 + $0x1c8] sm:$0xff]
      %v10132 = vld [vmem:[#allocation3 + $0x1d0] sm:$0xf]
      %v10133 = vld [vmem:[#allocation3 + $0x1d4] sm:$0xff]
      %v10134 = vld [vmem:[#allocation3 + $0x1dc] sm:$0xff]
      %v10135 = vld [vmem:[#allocation3 + $0x1e4] sm:$0xff]
      %v10136 = vld [vmem:[#allocation3 + $0x1ec] sm:$0xff]
      %v10137 = vld [vmem:[#allocation3 + $0x1f4] sm:$0xf]
      %v10138 = vld [vmem:[#allocation3 + $0x1f8] sm:$0xff]
      %v10139 = vld [vmem:[#allocation3 + $0x200] sm:$0xff]
      %v10140 = vld [vmem:[#allocation3 + $0x208] sm:$0xff]
      %v10141 = vld [vmem:[#allocation3 + $0x210] sm:$0xff]
      %v10142 = vld [vmem:[#allocation3 + $0x218] sm:$0xf]
      %v10143 = vld [vmem:[#allocation3 + $0x21c] sm:$0xff]
      %v10144 = vld [vmem:[#allocation3 + $0x224] sm:$0xff]
      %v10145 = vld [vmem:[#allocation3 + $0x22c] sm:$0xff]
      %v10146 = vld [vmem:[#allocation3 + $0x234] sm:$0xff]
      %v10147 = vld [vmem:[#allocation3 + $0x23c] sm:$0xf]
      %v10148 = vld [vmem:[#allocation3 + $0x240] sm:$0xff]
      %v10149 = vld [vmem:[#allocation3 + $0x248] sm:$0xff]
      %v10150 = vld [vmem:[#allocation3 + $0x250] sm:$0xff]
      %v10151 = vld [vmem:[#allocation3 + $0x258] sm:$0xff]
      %v10152 = vld [vmem:[#allocation3 + $0x260] sm:$0xf]
      %v10153 = vld [vmem:[#allocation3 + $0x264] sm:$0xff]
      %v10154 = vld [vmem:[#allocation3 + $0x26c] sm:$0xff]
      %v10155 = vld [vmem:[#allocation3 + $0x274] sm:$0xff]
      %v10156 = vld [vmem:[#allocation3 + $0x27c] sm:$0xff]
      %v10157 = vld [vmem:[#allocation3 + $0x284] sm:$0xf]
      %v10158 = vld [vmem:[#allocation3 + $0x288] sm:$0xff]
      %v10159 = vld [vmem:[#allocation3 + $0x290] sm:$0xff]
      %v10160 = vld [vmem:[#allocation3 + $0x298] sm:$0xff]
      %v10161 = vld [vmem:[#allocation3 + $0x2a0] sm:$0xff]
      %v10162 = vld [vmem:[#allocation3 + $0x2a8] sm:$0xf]
      %v10163 = vld [vmem:[#allocation3 + $0x2ac] sm:$0xff]
      %v10164 = vld [vmem:[#allocation3 + $0x2b4] sm:$0xff]
      %v10165 = vld [vmem:[#allocation3 + $0x2bc] sm:$0xff]
      %v10166 = vld [vmem:[#allocation3 + $0x2c4] sm:$0xff]
      %v10167 = vld [vmem:[#allocation3 + $0x2cc] sm:$0xf]
      %v10168 = vld [vmem:[#allocation3 + $0x2d0] sm:$0xff]
      %v10169 = vld [vmem:[#allocation3 + $0x2d8] sm:$0xff]
      %v10170 = vld [vmem:[#allocation3 + $0x2e0] sm:$0xff]
      %v10171 = vld [vmem:[#allocation3 + $0x2e8] sm:$0xff]
      %v10172 = vld [vmem:[#allocation3 + $0x2f0] sm:$0xf]
      %v10173 = vld [vmem:[#allocation3 + $0x2f4] sm:$0xff]
      %v10174 = vld [vmem:[#allocation3 + $0x2fc] sm:$0xff]
      %v10175 = vld [vmem:[#allocation3 + $0x304] sm:$0xff]
      %v10176 = vld [vmem:[#allocation3 + $0x30c] sm:$0xff]
      %v10177 = vld [vmem:[#allocation3 + $0x314] sm:$0xf]
      %v10178 = vld [vmem:[#allocation3 + $0x318] sm:$0xff]
      %v10179 = vld [vmem:[#allocation3 + $0x320] sm:$0xff]
      %v10180 = vld [vmem:[#allocation3 + $0x328] sm:$0xff]
      %v10181 = vld [vmem:[#allocation3 + $0x330] sm:$0xff]
      %v10182 = vld [vmem:[#allocation3 + $0x338] sm:$0xf]
      %v10183 = vld [vmem:[#allocation3 + $0x33c] sm:$0xff]
      %v10184 = vld [vmem:[#allocation3 + $0x344] sm:$0xff]
      %v10185 = vld [vmem:[#allocation3 + $0x34c] sm:$0xff]
      %v10186 = vld [vmem:[#allocation3 + $0x354] sm:$0xff]
      %v10187 = vld [vmem:[#allocation3 + $0x35c] sm:$0xf]
      %v10188 = vld [vmem:[#allocation3 + $0x360] sm:$0xff]
      %v10189 = vld [vmem:[#allocation3 + $0x368] sm:$0xff]
      %v10190 = vld [vmem:[#allocation3 + $0x370] sm:$0xff]
      %v10191 = vld [vmem:[#allocation3 + $0x378] sm:$0xff]
      %v10192 = vld [vmem:[#allocation3 + $0x380] sm:$0xf]
      %v10193 = vld [vmem:[#allocation3 + $0x384] sm:$0xff]
      %v10194 = vld [vmem:[#allocation3 + $0x38c] sm:$0xff]
      %v10195 = vld [vmem:[#allocation3 + $0x394] sm:$0xff]
      %v10196 = vld [vmem:[#allocation3 + $0x39c] sm:$0xff]
      %v10197 = vld [vmem:[#allocation3 + $0x3a4] sm:$0xf]
      %v10198 = vld [vmem:[#allocation3 + $0x3a8] sm:$0xff]
      %v10199 = vld [vmem:[#allocation3 + $0x3b0] sm:$0xff]
      %v10200 = vld [vmem:[#allocation3 + $0x3b8] sm:$0xff]
      %v10201 = vld [vmem:[#allocation3 + $0x3c0] sm:$0xff]
      %v10202 = vld [vmem:[#allocation3 + $0x3c8] sm:$0xf]
      %v10203 = vld [vmem:[#allocation3 + $0x3cc] sm:$0xff]
      %v10204 = vld [vmem:[#allocation3 + $0x3d4] sm:$0xff]
      %v10205 = vld [vmem:[#allocation3 + $0x3dc] sm:$0xff]
      %v10206 = vld [vmem:[#allocation3 + $0x3e4] sm:$0xff]
      %v10207 = vld [vmem:[#allocation3 + $0x3ec] sm:$0xf]
      %v10208 = vld [vmem:[#allocation3 + $0x3f0] sm:$0xff]
      %v10209 = vld [vmem:[#allocation3 + $0x3f8] sm:$0xff]
      %v10210 = vld [vmem:[#allocation3 + $0x400] sm:$0xff]
      %v10211 = vld [vmem:[#allocation3 + $0x408] sm:$0xff]
      %v10212 = vld [vmem:[#allocation3 + $0x410] sm:$0xf]
      %v10213 = vld [vmem:[#allocation3 + $0x414] sm:$0xff]
      %v10214 = vld [vmem:[#allocation3 + $0x41c] sm:$0xff]
      %v10215 = vld [vmem:[#allocation3 + $0x424] sm:$0xff]
      %v10216 = vld [vmem:[#allocation3 + $0x42c] sm:$0xff]
      %v10217 = vld [vmem:[#allocation3 + $0x434] sm:$0xf]
      %v10218 = vld [vmem:[#allocation3 + $0x438] sm:$0xff]
      %v10219 = vld [vmem:[#allocation3 + $0x440] sm:$0xff]
      %v10220 = vld [vmem:[#allocation3 + $0x448] sm:$0xff]
      %v10221 = vld [vmem:[#allocation3 + $0x450] sm:$0xff]
      %v10222 = vld [vmem:[#allocation3 + $0x458] sm:$0xf]
      %v10223 = vld [vmem:[#allocation3 + $0x45c] sm:$0xff]
      %v10224 = vld [vmem:[#allocation3 + $0x464] sm:$0xff]
      %v10225 = vld [vmem:[#allocation3 + $0x46c] sm:$0xff]
      %v10226 = vld [vmem:[#allocation3 + $0x474] sm:$0xff]
      %v10227 = vld [vmem:[#allocation3 + $0x47c] sm:$0xf]
      %v10228 = vld [vmem:[#allocation3 + $0x480] sm:$0xff]
      %v10229 = vld [vmem:[#allocation3 + $0x488] sm:$0xff]
      %v10230 = vld [vmem:[#allocation3 + $0x490] sm:$0xff]
      %v10231 = vld [vmem:[#allocation3 + $0x498] sm:$0xff]
      %v10232 = vld [vmem:[#allocation3 + $0x4a0] sm:$0xf]
      %v10233 = vld [vmem:[#allocation3 + $0x4a4] sm:$0xff]
      %v10234 = vld [vmem:[#allocation3 + $0x4ac] sm:$0xff]
      %v10235 = vld [vmem:[#allocation3 + $0x4b4] sm:$0xff]
      %v10236 = vld [vmem:[#allocation3 + $0x4bc] sm:$0xff]
      %v10237 = vld [vmem:[#allocation3 + $0x4c4] sm:$0xf]
      %v10238 = vld [vmem:[#allocation3 + $0x4c8] sm:$0xff]
      %v10239 = vld [vmem:[#allocation3 + $0x4d0] sm:$0xff]
      %v10240 = vld [vmem:[#allocation3 + $0x4d8] sm:$0xff]
      %v10241 = vld [vmem:[#allocation3 + $0x4e0] sm:$0xff]
      %v10242 = vld [vmem:[#allocation3 + $0x4e8] sm:$0xf]
      %v10243 = vld [vmem:[#allocation3 + $0x4ec] sm:$0xff]
      %v10244 = vld [vmem:[#allocation3 + $0x4f4] sm:$0xff]
      %v10245 = vld [vmem:[#allocation3 + $0x4fc] sm:$0xff]
      %v10246 = vld [vmem:[#allocation3 + $0x504] sm:$0xff]
      %v10247 = vld [vmem:[#allocation3 + $0x50c] sm:$0xf]
      %v10248 = vld [vmem:[%s4] sm:$0xf]
      %v10249 = vld [vmem:[%s4 + $0x4] sm:$0xf]
      %v10250 = vld [vmem:[%s4 + $0x8] sm:$0xf]
      %v10251 = vld [vmem:[%s4 + $0xc] sm:$0xf]
      %v10252 = vld [vmem:[%s4 + $0x10] sm:$0xf]
      %v10253 = vld [vmem:[%s4 + $0x14] sm:$0xf]
      %v10254 = vld [vmem:[%s4 + $0x18] sm:$0xf]
      %v10255 = vld [vmem:[%s4 + $0x1c] sm:$0xf]
      %v10256 = vld [vmem:[%s4 + $0x20] sm:$0xf]
      %v10257 = vld [vmem:[%s4 + $0x24] sm:$0xf]
      %v10258 = vld [vmem:[%s4 + $0x28] sm:$0xf]
      %v10259 = vld [vmem:[%s4 + $0x2c] sm:$0xf]
      %v10260 = vld [vmem:[%s4 + $0x30] sm:$0xf]
      %v10261 = vld [vmem:[%s4 + $0x34] sm:$0xf]
      %v10262 = vld [vmem:[%s4 + $0x38] sm:$0xf]
      %v10263 = vld [vmem:[%s4 + $0x3c] sm:$0xf]
      %v10264 = vld [vmem:[%s4 + $0x40] sm:$0xf]
      %v10265 = vld [vmem:[%s4 + $0x44] sm:$0xf]
      %v10266 = vld [vmem:[%s4 + $0x48] sm:$0xf]
      %v10267 = vld [vmem:[%s4 + $0x4c] sm:$0xf]
      %v10268 = vld [vmem:[%s4 + $0x50] sm:$0xf]
      %v10269 = vld [vmem:[%s4 + $0x54] sm:$0xf]
      %v10270 = vld [vmem:[%s4 + $0x58] sm:$0xf]
      %v10271 = vld [vmem:[%s4 + $0x5c] sm:$0xf]
      %v10272 = vld [vmem:[%s4 + $0x60] sm:$0xf]
      %v10273 = vld [vmem:[%s4 + $0x64] sm:$0xf]
      %v10274 = vld [vmem:[%s4 + $0x68] sm:$0xf]
      %v10275 = vld [vmem:[%s4 + $0x6c] sm:$0xf]
      %v10276 = vld [vmem:[%s4 + $0x70] sm:$0xf]
      %v10277 = vld [vmem:[%s4 + $0x74] sm:$0xf]
      %v10278 = vld [vmem:[%s4 + $0x78] sm:$0xf]
      %v10279 = vld [vmem:[%s4 + $0x7c] sm:$0xf]
      %v10280 = vld [vmem:[%s4 + $0x80] sm:$0xf]
      %v10281 = vld [vmem:[%s4 + $0x84] sm:$0xf]
      %v10282 = vld [vmem:[%s4 + $0x88] sm:$0xf]
      %v10283 = vld [vmem:[%s4 + $0x8c] sm:$0xf]
      %v10284 = vld [vmem:[%s4 + $0x90] sm:$0xf]
      %v10285 = vld [vmem:[%s4 + $0x94] sm:$0xf]
      %v10286 = vld [vmem:[%s4 + $0x98] sm:$0xf]
      %v10287 = vld [vmem:[%s4 + $0x9c] sm:$0xf]
      %v10288 = vld [vmem:[%s4 + $0xa0] sm:$0xf]
      %v10289 = vld [vmem:[%s4 + $0xa4] sm:$0xf]
      %v10290 = vld [vmem:[%s4 + $0xa8] sm:$0xf]
      %v10291 = vld [vmem:[%s4 + $0xac] sm:$0xf]
      %v10292 = vld [vmem:[%s4 + $0xb0] sm:$0xf]
      %v10293 = vld [vmem:[%s4 + $0xb4] sm:$0xf]
      %v10294 = vld [vmem:[%s4 + $0xb8] sm:$0xf]
      %v10295 = vld [vmem:[%s4 + $0xbc] sm:$0xf]
      %v10296 = vld [vmem:[%s4 + $0xc0] sm:$0xf]
      %v10297 = vld [vmem:[%s4 + $0xc4] sm:$0xf]
      %v10298 = vld [vmem:[%s4 + $0xc8] sm:$0xf]
      %v10299 = vld [vmem:[%s4 + $0xcc] sm:$0xf]
      %v10300 = vld [vmem:[%s4 + $0xd0] sm:$0xf]
      %v10301 = vld [vmem:[%s4 + $0xd4] sm:$0xf]
      %v10302 = vld [vmem:[%s4 + $0xd8] sm:$0xf]
      %v10303 = vld [vmem:[%s4 + $0xdc] sm:$0xf]
      %v10304 = vld [vmem:[%s4 + $0xe0] sm:$0xf]
      %v10305 = vld [vmem:[%s4 + $0xe4] sm:$0xf]
      %v10306 = vld [vmem:[%s4 + $0xe8] sm:$0xf]
      %v10307 = vld [vmem:[%s4 + $0xec] sm:$0xf]
      %v10308 = vld [vmem:[%s4 + $0xf0] sm:$0xf]
      %v10309 = vld [vmem:[%s4 + $0xf4] sm:$0xf]
      %v10310 = vld [vmem:[%s4 + $0xf8] sm:$0xf]
      %v10311 = vld [vmem:[%s4 + $0xfc] sm:$0xf]
      %v10312 = vld [vmem:[%s4 + $0x100] sm:$0xf]
      %v10313 = vld [vmem:[%s4 + $0x104] sm:$0xf]
      %v10314 = vld [vmem:[%s4 + $0x108] sm:$0xf]
      %v10315 = vld [vmem:[%s4 + $0x10c] sm:$0xf]
      %v10316 = vld [vmem:[%s4 + $0x110] sm:$0xf]
      %v10317 = vld [vmem:[%s4 + $0x114] sm:$0xf]
      %v10318 = vld [vmem:[%s4 + $0x118] sm:$0xf]
      %v10319 = vld [vmem:[%s4 + $0x11c] sm:$0xf]
      %v10320 = vld [vmem:[%s4 + $0x120] sm:$0xf]
      %v10321 = vld [vmem:[%s4 + $0x124] sm:$0xf]
      %v10322 = vld [vmem:[%s4 + $0x128] sm:$0xf]
      %v10323 = vld [vmem:[%s4 + $0x12c] sm:$0xf]
      %v10324 = vld [vmem:[%s4 + $0x130] sm:$0xf]
      %v10325 = vld [vmem:[%s4 + $0x134] sm:$0xf]
      %v10326 = vld [vmem:[%s4 + $0x138] sm:$0xf]
      %v10327 = vld [vmem:[%s4 + $0x13c] sm:$0xf]
      %v10328 = vld [vmem:[%s4 + $0x140] sm:$0xf]
      %v10329 = vld [vmem:[%s4 + $0x144] sm:$0xf]
      %v10330 = vld [vmem:[%s4 + $0x148] sm:$0xf]
      %v10331 = vld [vmem:[%s4 + $0x14c] sm:$0xf]
      %v10332 = vld [vmem:[%s4 + $0x150] sm:$0xf]
      %v10333 = vld [vmem:[%s4 + $0x154] sm:$0xf]
      %v10334 = vld [vmem:[%s4 + $0x158] sm:$0xf]
      %v10335 = vld [vmem:[%s4 + $0x15c] sm:$0xf]
      %v10336 = vld [vmem:[%s4 + $0x160] sm:$0xf]
      %v10337 = vld [vmem:[%s4 + $0x164] sm:$0xf]
      %v10338 = vld [vmem:[%s4 + $0x168] sm:$0xf]
      %v10339 = vld [vmem:[%s4 + $0x16c] sm:$0xf]
      %v10340 = vld [vmem:[%s4 + $0x170] sm:$0xf]
      %v10341 = vld [vmem:[%s4 + $0x174] sm:$0xf]
      %v10342 = vld [vmem:[%s4 + $0x178] sm:$0xf]
      %v10343 = vld [vmem:[%s4 + $0x17c] sm:$0xf]
      %v10344 = vld [vmem:[%s4 + $0x180] sm:$0xf]
      %v10345 = vld [vmem:[%s4 + $0x184] sm:$0xf]
      %v10346 = vld [vmem:[%s4 + $0x188] sm:$0xf]
      %v10347 = vld [vmem:[%s4 + $0x18c] sm:$0xf]
      %v10348 = vld [vmem:[%s4 + $0x190] sm:$0xf]
      %v10349 = vld [vmem:[%s4 + $0x194] sm:$0xf]
      %v10350 = vld [vmem:[%s4 + $0x198] sm:$0xf]
      %v10351 = vld [vmem:[%s4 + $0x19c] sm:$0xf]
      %v10352 = vld [vmem:[%s4 + $0x1a0] sm:$0xf]
      %v10353 = vld [vmem:[%s4 + $0x1a4] sm:$0xf]
      %v10354 = vld [vmem:[%s4 + $0x1a8] sm:$0xf]
      %v10355 = vld [vmem:[%s4 + $0x1ac] sm:$0xf]
      %v10356 = vld [vmem:[%s4 + $0x1b0] sm:$0xf]
      %v10357 = vld [vmem:[%s4 + $0x1b4] sm:$0xf]
      %v10358 = vld [vmem:[%s4 + $0x1b8] sm:$0xf]
      %v10359 = vld [vmem:[%s4 + $0x1bc] sm:$0xf]
      %v10360 = vld [vmem:[%s4 + $0x1c0] sm:$0xf]
      %v10361 = vld [vmem:[%s4 + $0x1c4] sm:$0xf]
      %v10362 = vld [vmem:[%s4 + $0x1c8] sm:$0xf]
      %v10363 = vld [vmem:[%s4 + $0x1cc] sm:$0xf]
      %v10364 = vld [vmem:[%s4 + $0x1d0] sm:$0xf]
      %v10365 = vld [vmem:[%s4 + $0x1d4] sm:$0xf]
      %v10366 = vld [vmem:[%s4 + $0x1d8] sm:$0xf]
      %v10367 = vld [vmem:[%s4 + $0x1dc] sm:$0xf]
      %v10368 = vld [vmem:[%s4 + $0x1e0] sm:$0xf]
      %v10369 = vld [vmem:[%s4 + $0x1e4] sm:$0xf]
      %v10370 = vld [vmem:[%s4 + $0x1e8] sm:$0xf]
      %v10371 = vld [vmem:[%s4 + $0x1ec] sm:$0xf]
      %v10372 = vld [vmem:[%s4 + $0x1f0] sm:$0xf]
      %v10373 = vld [vmem:[%s4 + $0x1f4] sm:$0xf]
      %v10374 = vld [vmem:[%s4 + $0x1f8] sm:$0xf]
      %v10375 = vld [vmem:[%s4 + $0x1fc] sm:$0xf]
      %v10376 = vld [vmem:[%s4 + $0x200] sm:$0xf]
      %v10377 = vld [vmem:[%s4 + $0x204] sm:$0xf]
      %v10378 = vld [vmem:[%s4 + $0x208] sm:$0xf]
      %v10379 = vld [vmem:[%s4 + $0x20c] sm:$0xf]
      %v10380 = vld [vmem:[%s4 + $0x210] sm:$0xf]
      %v10381 = vld [vmem:[%s4 + $0x214] sm:$0xf]
      %v10382 = vld [vmem:[%s4 + $0x218] sm:$0xf]
      %v10383 = vld [vmem:[%s4 + $0x21c] sm:$0xf]
      %v10384 = vld [vmem:[%s4 + $0x220] sm:$0xf]
      %v10385 = vld [vmem:[%s4 + $0x224] sm:$0xf]
      %v10386 = vld [vmem:[%s4 + $0x228] sm:$0xf]
      %v10387 = vld [vmem:[%s4 + $0x22c] sm:$0xf]
      %v10388 = vld [vmem:[%s4 + $0x230] sm:$0xf]
      %v10389 = vld [vmem:[%s4 + $0x234] sm:$0xf]
      %v10390 = vld [vmem:[%s4 + $0x238] sm:$0xf]
      %v10391 = vld [vmem:[%s4 + $0x23c] sm:$0xf]
      %v10572 = vunpack.c.l.b16 %v10068
      %v10573 = vunpack.c.h.b16 %v10068
      %v10574 = vunpack.c.l.b16 %v10069
      %v10575 = vunpack.c.h.b16 %v10069
      %v10576 = vunpack.c.l.b16 %v10070
      %v10577 = vunpack.c.h.b16 %v10070
      %v10578 = vunpack.c.l.b16 %v10071
      %v10579 = vunpack.c.h.b16 %v10071
      %v10580 = vunpack.c.l.b16 %v10072
      %v10581 = vunpack.c.l.b16 %v10073
      %v10582 = vunpack.c.h.b16 %v10073
      %v10583 = vunpack.c.l.b16 %v10074
      %v10584 = vunpack.c.h.b16 %v10074
      %v10585 = vunpack.c.l.b16 %v10075
      %v10586 = vunpack.c.h.b16 %v10075
      %v10587 = vunpack.c.l.b16 %v10076
      %v10588 = vunpack.c.h.b16 %v10076
      %v10589 = vunpack.c.l.b16 %v10077
      %v10590 = vunpack.c.l.b16 %v10078
      %v10591 = vunpack.c.h.b16 %v10078
      %v10592 = vunpack.c.l.b16 %v10079
      %v10593 = vunpack.c.h.b16 %v10079
      %v10594 = vunpack.c.l.b16 %v10080
      %v10595 = vunpack.c.h.b16 %v10080
      %v10596 = vunpack.c.l.b16 %v10081
      %v10597 = vunpack.c.h.b16 %v10081
      %v10598 = vunpack.c.l.b16 %v10082
      %v10599 = vunpack.c.l.b16 %v10083
      %v10600 = vunpack.c.h.b16 %v10083
      %v10601 = vunpack.c.l.b16 %v10084
      %v10602 = vunpack.c.h.b16 %v10084
      %v10603 = vunpack.c.l.b16 %v10085
      %v10604 = vunpack.c.h.b16 %v10085
      %v10605 = vunpack.c.l.b16 %v10086
      %v10606 = vunpack.c.h.b16 %v10086
      %v10607 = vunpack.c.l.b16 %v10087
      %v10608 = vunpack.c.l.b16 %v10088
      %v10609 = vunpack.c.h.b16 %v10088
      %v10610 = vunpack.c.l.b16 %v10089
      %v10611 = vunpack.c.h.b16 %v10089
      %v10612 = vunpack.c.l.b16 %v10090
      %v10613 = vunpack.c.h.b16 %v10090
      %v10614 = vunpack.c.l.b16 %v10091
      %v10615 = vunpack.c.h.b16 %v10091
      %v10616 = vunpack.c.l.b16 %v10092
      %v10617 = vunpack.c.l.b16 %v10093
      %v10618 = vunpack.c.h.b16 %v10093
      %v10619 = vunpack.c.l.b16 %v10094
      %v10620 = vunpack.c.h.b16 %v10094
      %v10621 = vunpack.c.l.b16 %v10095
      %v10622 = vunpack.c.h.b16 %v10095
      %v10623 = vunpack.c.l.b16 %v10096
      %v10624 = vunpack.c.h.b16 %v10096
      %v10625 = vunpack.c.l.b16 %v10097
      %v10626 = vunpack.c.l.b16 %v10098
      %v10627 = vunpack.c.h.b16 %v10098
      %v10628 = vunpack.c.l.b16 %v10099
      %v10629 = vunpack.c.h.b16 %v10099
      %v10630 = vunpack.c.l.b16 %v10100
      %v10631 = vunpack.c.h.b16 %v10100
      %v10632 = vunpack.c.l.b16 %v10101
      %v10633 = vunpack.c.h.b16 %v10101
      %v10634 = vunpack.c.l.b16 %v10102
      %v10635 = vunpack.c.l.b16 %v10103
      %v10636 = vunpack.c.h.b16 %v10103
      %v10637 = vunpack.c.l.b16 %v10104
      %v10638 = vunpack.c.h.b16 %v10104
      %v10639 = vunpack.c.l.b16 %v10105
      %v10640 = vunpack.c.h.b16 %v10105
      %v10641 = vunpack.c.l.b16 %v10106
      %v10642 = vunpack.c.h.b16 %v10106
      %v10643 = vunpack.c.l.b16 %v10107
      %v10644 = vunpack.c.l.b16 %v10108
      %v10645 = vunpack.c.h.b16 %v10108
      %v10646 = vunpack.c.l.b16 %v10109
      %v10647 = vunpack.c.h.b16 %v10109
      %v10648 = vunpack.c.l.b16 %v10110
      %v10649 = vunpack.c.h.b16 %v10110
      %v10650 = vunpack.c.l.b16 %v10111
      %v10651 = vunpack.c.h.b16 %v10111
      %v10652 = vunpack.c.l.b16 %v10112
      %v10653 = vunpack.c.l.b16 %v10113
      %v10654 = vunpack.c.h.b16 %v10113
      %v10655 = vunpack.c.l.b16 %v10114
      %v10656 = vunpack.c.h.b16 %v10114
      %v10657 = vunpack.c.l.b16 %v10115
      %v10658 = vunpack.c.h.b16 %v10115
      %v10659 = vunpack.c.l.b16 %v10116
      %v10660 = vunpack.c.h.b16 %v10116
      %v10661 = vunpack.c.l.b16 %v10117
      %v10662 = vunpack.c.l.b16 %v10118
      %v10663 = vunpack.c.h.b16 %v10118
      %v10664 = vunpack.c.l.b16 %v10119
      %v10665 = vunpack.c.h.b16 %v10119
      %v10666 = vunpack.c.l.b16 %v10120
      %v10667 = vunpack.c.h.b16 %v10120
      %v10668 = vunpack.c.l.b16 %v10121
      %v10669 = vunpack.c.h.b16 %v10121
      %v10670 = vunpack.c.l.b16 %v10122
      %v10671 = vunpack.c.l.b16 %v10123
      %v10672 = vunpack.c.h.b16 %v10123
      %v10673 = vunpack.c.l.b16 %v10124
      %v10674 = vunpack.c.h.b16 %v10124
      %v10675 = vunpack.c.l.b16 %v10125
      %v10676 = vunpack.c.h.b16 %v10125
      %v10677 = vunpack.c.l.b16 %v10126
      %v10678 = vunpack.c.h.b16 %v10126
      %v10679 = vunpack.c.l.b16 %v10127
      %v10680 = vunpack.c.l.b16 %v10128
      %v10681 = vunpack.c.h.b16 %v10128
      %v10682 = vunpack.c.l.b16 %v10129
      %v10683 = vunpack.c.h.b16 %v10129
      %v10684 = vunpack.c.l.b16 %v10130
      %v10685 = vunpack.c.h.b16 %v10130
      %v10686 = vunpack.c.l.b16 %v10131
      %v10687 = vunpack.c.h.b16 %v10131
      %v10688 = vunpack.c.l.b16 %v10132
      %v10689 = vunpack.c.l.b16 %v10133
      %v10690 = vunpack.c.h.b16 %v10133
      %v10691 = vunpack.c.l.b16 %v10134
      %v10692 = vunpack.c.h.b16 %v10134
      %v10693 = vunpack.c.l.b16 %v10135
      %v10694 = vunpack.c.h.b16 %v10135
      %v10695 = vunpack.c.l.b16 %v10136
      %v10696 = vunpack.c.h.b16 %v10136
      %v10697 = vunpack.c.l.b16 %v10137
      %v10698 = vunpack.c.l.b16 %v10138
      %v10699 = vunpack.c.h.b16 %v10138
      %v10700 = vunpack.c.l.b16 %v10139
      %v10701 = vunpack.c.h.b16 %v10139
      %v10702 = vunpack.c.l.b16 %v10140
      %v10703 = vunpack.c.h.b16 %v10140
      %v10704 = vunpack.c.l.b16 %v10141
      %v10705 = vunpack.c.h.b16 %v10141
      %v10706 = vunpack.c.l.b16 %v10142
      %v10707 = vunpack.c.l.b16 %v10143
      %v10708 = vunpack.c.h.b16 %v10143
      %v10709 = vunpack.c.l.b16 %v10144
      %v10710 = vunpack.c.h.b16 %v10144
      %v10711 = vunpack.c.l.b16 %v10145
      %v10712 = vunpack.c.h.b16 %v10145
      %v10713 = vunpack.c.l.b16 %v10146
      %v10714 = vunpack.c.h.b16 %v10146
      %v10715 = vunpack.c.l.b16 %v10147
      %v10716 = vunpack.c.l.b16 %v10148
      %v10717 = vunpack.c.h.b16 %v10148
      %v10718 = vunpack.c.l.b16 %v10149
      %v10719 = vunpack.c.h.b16 %v10149
      %v10720 = vunpack.c.l.b16 %v10150
      %v10721 = vunpack.c.h.b16 %v10150
      %v10722 = vunpack.c.l.b16 %v10151
      %v10723 = vunpack.c.h.b16 %v10151
      %v10724 = vunpack.c.l.b16 %v10152
      %v10725 = vunpack.c.l.b16 %v10153
      %v10726 = vunpack.c.h.b16 %v10153
      %v10727 = vunpack.c.l.b16 %v10154
      %v10728 = vunpack.c.h.b16 %v10154
      %v10729 = vunpack.c.l.b16 %v10155
      %v10730 = vunpack.c.h.b16 %v10155
      %v10731 = vunpack.c.l.b16 %v10156
      %v10732 = vunpack.c.h.b16 %v10156
      %v10733 = vunpack.c.l.b16 %v10157
      %v10734 = vunpack.c.l.b16 %v10158
      %v10735 = vunpack.c.h.b16 %v10158
      %v10736 = vunpack.c.l.b16 %v10159
      %v10737 = vunpack.c.h.b16 %v10159
      %v10738 = vunpack.c.l.b16 %v10160
      %v10739 = vunpack.c.h.b16 %v10160
      %v10740 = vunpack.c.l.b16 %v10161
      %v10741 = vunpack.c.h.b16 %v10161
      %v10742 = vunpack.c.l.b16 %v10162
      %v10743 = vunpack.c.l.b16 %v10163
      %v10744 = vunpack.c.h.b16 %v10163
      %v10745 = vunpack.c.l.b16 %v10164
      %v10746 = vunpack.c.h.b16 %v10164
      %v10747 = vunpack.c.l.b16 %v10165
      %v10748 = vunpack.c.h.b16 %v10165
      %v10749 = vunpack.c.l.b16 %v10166
      %v10750 = vunpack.c.h.b16 %v10166
      %v10751 = vunpack.c.l.b16 %v10167
      %v10752 = vunpack.c.l.b16 %v10168
      %v10753 = vunpack.c.h.b16 %v10168
      %v10754 = vunpack.c.l.b16 %v10169
      %v10755 = vunpack.c.h.b16 %v10169
      %v10756 = vunpack.c.l.b16 %v10170
      %v10757 = vunpack.c.h.b16 %v10170
      %v10758 = vunpack.c.l.b16 %v10171
      %v10759 = vunpack.c.h.b16 %v10171
      %v10760 = vunpack.c.l.b16 %v10172
      %v10761 = vunpack.c.l.b16 %v10173
      %v10762 = vunpack.c.h.b16 %v10173
      %v10763 = vunpack.c.l.b16 %v10174
      %v10764 = vunpack.c.h.b16 %v10174
      %v10765 = vunpack.c.l.b16 %v10175
      %v10766 = vunpack.c.h.b16 %v10175
      %v10767 = vunpack.c.l.b16 %v10176
      %v10768 = vunpack.c.h.b16 %v10176
      %v10769 = vunpack.c.l.b16 %v10177
      %v10770 = vunpack.c.l.b16 %v10178
      %v10771 = vunpack.c.h.b16 %v10178
      %v10772 = vunpack.c.l.b16 %v10179
      %v10773 = vunpack.c.h.b16 %v10179
      %v10774 = vunpack.c.l.b16 %v10180
      %v10775 = vunpack.c.h.b16 %v10180
      %v10776 = vunpack.c.l.b16 %v10181
      %v10777 = vunpack.c.h.b16 %v10181
      %v10778 = vunpack.c.l.b16 %v10182
      %v10779 = vunpack.c.l.b16 %v10183
      %v10780 = vunpack.c.h.b16 %v10183
      %v10781 = vunpack.c.l.b16 %v10184
      %v10782 = vunpack.c.h.b16 %v10184
      %v10783 = vunpack.c.l.b16 %v10185
      %v10784 = vunpack.c.h.b16 %v10185
      %v10785 = vunpack.c.l.b16 %v10186
      %v10786 = vunpack.c.h.b16 %v10186
      %v10787 = vunpack.c.l.b16 %v10187
      %v10788 = vunpack.c.l.b16 %v10188
      %v10789 = vunpack.c.h.b16 %v10188
      %v10790 = vunpack.c.l.b16 %v10189
      %v10791 = vunpack.c.h.b16 %v10189
      %v10792 = vunpack.c.l.b16 %v10190
      %v10793 = vunpack.c.h.b16 %v10190
      %v10794 = vunpack.c.l.b16 %v10191
      %v10795 = vunpack.c.h.b16 %v10191
      %v10796 = vunpack.c.l.b16 %v10192
      %v10797 = vunpack.c.l.b16 %v10193
      %v10798 = vunpack.c.h.b16 %v10193
      %v10799 = vunpack.c.l.b16 %v10194
      %v10800 = vunpack.c.h.b16 %v10194
      %v10801 = vunpack.c.l.b16 %v10195
      %v10802 = vunpack.c.h.b16 %v10195
      %v10803 = vunpack.c.l.b16 %v10196
      %v10804 = vunpack.c.h.b16 %v10196
      %v10805 = vunpack.c.l.b16 %v10197
      %v10806 = vunpack.c.l.b16 %v10198
      %v10807 = vunpack.c.h.b16 %v10198
      %v10808 = vunpack.c.l.b16 %v10199
      %v10809 = vunpack.c.h.b16 %v10199
      %v10810 = vunpack.c.l.b16 %v10200
      %v10811 = vunpack.c.h.b16 %v10200
      %v10812 = vunpack.c.l.b16 %v10201
      %v10813 = vunpack.c.h.b16 %v10201
      %v10814 = vunpack.c.l.b16 %v10202
      %v10815 = vunpack.c.l.b16 %v10203
      %v10816 = vunpack.c.h.b16 %v10203
      %v10817 = vunpack.c.l.b16 %v10204
      %v10818 = vunpack.c.h.b16 %v10204
      %v10819 = vunpack.c.l.b16 %v10205
      %v10820 = vunpack.c.h.b16 %v10205
      %v10821 = vunpack.c.l.b16 %v10206
      %v10822 = vunpack.c.h.b16 %v10206
      %v10823 = vunpack.c.l.b16 %v10207
      %v10824 = vunpack.c.l.b16 %v10208
      %v10825 = vunpack.c.h.b16 %v10208
      %v10826 = vunpack.c.l.b16 %v10209
      %v10827 = vunpack.c.h.b16 %v10209
      %v10828 = vunpack.c.l.b16 %v10210
      %v10829 = vunpack.c.h.b16 %v10210
      %v10830 = vunpack.c.l.b16 %v10211
      %v10831 = vunpack.c.h.b16 %v10211
      %v10832 = vunpack.c.l.b16 %v10212
      %v10833 = vunpack.c.l.b16 %v10213
      %v10834 = vunpack.c.h.b16 %v10213
      %v10835 = vunpack.c.l.b16 %v10214
      %v10836 = vunpack.c.h.b16 %v10214
      %v10837 = vunpack.c.l.b16 %v10215
      %v10838 = vunpack.c.h.b16 %v10215
      %v10839 = vunpack.c.l.b16 %v10216
      %v10840 = vunpack.c.h.b16 %v10216
      %v10841 = vunpack.c.l.b16 %v10217
      %v10842 = vunpack.c.l.b16 %v10218
      %v10843 = vunpack.c.h.b16 %v10218
      %v10844 = vunpack.c.l.b16 %v10219
      %v10845 = vunpack.c.h.b16 %v10219
      %v10846 = vunpack.c.l.b16 %v10220
      %v10847 = vunpack.c.h.b16 %v10220
      %v10848 = vunpack.c.l.b16 %v10221
      %v10849 = vunpack.c.h.b16 %v10221
      %v10850 = vunpack.c.l.b16 %v10222
      %v10851 = vunpack.c.l.b16 %v10223
      %v10852 = vunpack.c.h.b16 %v10223
      %v10853 = vunpack.c.l.b16 %v10224
      %v10854 = vunpack.c.h.b16 %v10224
      %v10855 = vunpack.c.l.b16 %v10225
      %v10856 = vunpack.c.h.b16 %v10225
      %v10857 = vunpack.c.l.b16 %v10226
      %v10858 = vunpack.c.h.b16 %v10226
      %v10859 = vunpack.c.l.b16 %v10227
      %v10860 = vunpack.c.l.b16 %v10228
      %v10861 = vunpack.c.h.b16 %v10228
      %v10862 = vunpack.c.l.b16 %v10229
      %v10863 = vunpack.c.h.b16 %v10229
      %v10864 = vunpack.c.l.b16 %v10230
      %v10865 = vunpack.c.h.b16 %v10230
      %v10866 = vunpack.c.l.b16 %v10231
      %v10867 = vunpack.c.h.b16 %v10231
      %v10868 = vunpack.c.l.b16 %v10232
      %v10869 = vunpack.c.l.b16 %v10233
      %v10870 = vunpack.c.h.b16 %v10233
      %v10871 = vunpack.c.l.b16 %v10234
      %v10872 = vunpack.c.h.b16 %v10234
      %v10873 = vunpack.c.l.b16 %v10235
      %v10874 = vunpack.c.h.b16 %v10235
      %v10875 = vunpack.c.l.b16 %v10236
      %v10876 = vunpack.c.h.b16 %v10236
      %v10877 = vunpack.c.l.b16 %v10237
      %v10878 = vunpack.c.l.b16 %v10238
      %v10879 = vunpack.c.h.b16 %v10238
      %v10880 = vunpack.c.l.b16 %v10239
      %v10881 = vunpack.c.h.b16 %v10239
      %v10882 = vunpack.c.l.b16 %v10240
      %v10883 = vunpack.c.h.b16 %v10240
      %v10884 = vunpack.c.l.b16 %v10241
      %v10885 = vunpack.c.h.b16 %v10241
      %v10886 = vunpack.c.l.b16 %v10242
      %v10887 = vunpack.c.l.b16 %v10243
      %v10888 = vunpack.c.h.b16 %v10243
      %v10889 = vunpack.c.l.b16 %v10244
      %v10890 = vunpack.c.h.b16 %v10244
      %v10891 = vunpack.c.l.b16 %v10245
      %v10892 = vunpack.c.h.b16 %v10245
      %v10893 = vunpack.c.l.b16 %v10246
      %v10894 = vunpack.c.h.b16 %v10246
      %v10895 = vunpack.c.l.b16 %v10247
      %v10896 = vpack.c.b16 %v10581, %v10572
      %v10897 = vpack.c.b16 %v10582, %v10573
      %v10898 = vpack.c.b16 %v10583, %v10574
      %v10899 = vpack.c.b16 %v10584, %v10575
      %v10900 = vpack.c.b16 %v10585, %v10576
      %v10901 = vpack.c.b16 %v10586, %v10577
      %v10902 = vpack.c.b16 %v10587, %v10578
      %v10903 = vpack.c.b16 %v10588, %v10579
      %v10904 = vpack.c.b16 %v10589, %v10580
      %v10905 = vpack.c.b16 %v10599, %v10590
      %v10906 = vpack.c.b16 %v10600, %v10591
      %v10907 = vpack.c.b16 %v10601, %v10592
      %v10908 = vpack.c.b16 %v10602, %v10593
      %v10909 = vpack.c.b16 %v10603, %v10594
      %v10910 = vpack.c.b16 %v10604, %v10595
      %v10911 = vpack.c.b16 %v10605, %v10596
      %v10912 = vpack.c.b16 %v10606, %v10597
      %v10913 = vpack.c.b16 %v10607, %v10598
      %v10914 = vpack.c.b16 %v10617, %v10608
      %v10915 = vpack.c.b16 %v10618, %v10609
      %v10916 = vpack.c.b16 %v10619, %v10610
      %v10917 = vpack.c.b16 %v10620, %v10611
      %v10918 = vpack.c.b16 %v10621, %v10612
      %v10919 = vpack.c.b16 %v10622, %v10613
      %v10920 = vpack.c.b16 %v10623, %v10614
      %v10921 = vpack.c.b16 %v10624, %v10615
      %v10922 = vpack.c.b16 %v10625, %v10616
      %v10923 = vpack.c.b16 %v10635, %v10626
      %v10924 = vpack.c.b16 %v10636, %v10627
      %v10925 = vpack.c.b16 %v10637, %v10628
      %v10926 = vpack.c.b16 %v10638, %v10629
      %v10927 = vpack.c.b16 %v10639, %v10630
      %v10928 = vpack.c.b16 %v10640, %v10631
      %v10929 = vpack.c.b16 %v10641, %v10632
      %v10930 = vpack.c.b16 %v10642, %v10633
      %v10931 = vpack.c.b16 %v10643, %v10634
      %v10932 = vpack.c.b16 %v10653, %v10644
      %v10933 = vpack.c.b16 %v10654, %v10645
      %v10934 = vpack.c.b16 %v10655, %v10646
      %v10935 = vpack.c.b16 %v10656, %v10647
      %v10936 = vpack.c.b16 %v10657, %v10648
      %v10937 = vpack.c.b16 %v10658, %v10649
      %v10938 = vpack.c.b16 %v10659, %v10650
      %v10939 = vpack.c.b16 %v10660, %v10651
      %v10940 = vpack.c.b16 %v10661, %v10652
      %v10941 = vpack.c.b16 %v10671, %v10662
      %v10942 = vpack.c.b16 %v10672, %v10663
      %v10943 = vpack.c.b16 %v10673, %v10664
      %v10944 = vpack.c.b16 %v10674, %v10665
      %v10945 = vpack.c.b16 %v10675, %v10666
      %v10946 = vpack.c.b16 %v10676, %v10667
      %v10947 = vpack.c.b16 %v10677, %v10668
      %v10948 = vpack.c.b16 %v10678, %v10669
      %v10949 = vpack.c.b16 %v10679, %v10670
      %v10950 = vpack.c.b16 %v10689, %v10680
      %v10951 = vpack.c.b16 %v10690, %v10681
      %v10952 = vpack.c.b16 %v10691, %v10682
      %v10953 = vpack.c.b16 %v10692, %v10683
      %v10954 = vpack.c.b16 %v10693, %v10684
      %v10955 = vpack.c.b16 %v10694, %v10685
      %v10956 = vpack.c.b16 %v10695, %v10686
      %v10957 = vpack.c.b16 %v10696, %v10687
      %v10958 = vpack.c.b16 %v10697, %v10688
      %v10959 = vpack.c.b16 %v10707, %v10698
      %v10960 = vpack.c.b16 %v10708, %v10699
      %v10961 = vpack.c.b16 %v10709, %v10700
      %v10962 = vpack.c.b16 %v10710, %v10701
      %v10963 = vpack.c.b16 %v10711, %v10702
      %v10964 = vpack.c.b16 %v10712, %v10703
      %v10965 = vpack.c.b16 %v10713, %v10704
      %v10966 = vpack.c.b16 %v10714, %v10705
      %v10967 = vpack.c.b16 %v10715, %v10706
      %v10968 = vpack.c.b16 %v10725, %v10716
      %v10969 = vpack.c.b16 %v10726, %v10717
      %v10970 = vpack.c.b16 %v10727, %v10718
      %v10971 = vpack.c.b16 %v10728, %v10719
      %v10972 = vpack.c.b16 %v10729, %v10720
      %v10973 = vpack.c.b16 %v10730, %v10721
      %v10974 = vpack.c.b16 %v10731, %v10722
      %v10975 = vpack.c.b16 %v10732, %v10723
      %v10976 = vpack.c.b16 %v10733, %v10724
      %v10977 = vpack.c.b16 %v10743, %v10734
      %v10978 = vpack.c.b16 %v10744, %v10735
      %v10979 = vpack.c.b16 %v10745, %v10736
      %v10980 = vpack.c.b16 %v10746, %v10737
      %v10981 = vpack.c.b16 %v10747, %v10738
      %v10982 = vpack.c.b16 %v10748, %v10739
      %v10983 = vpack.c.b16 %v10749, %v10740
      %v10984 = vpack.c.b16 %v10750, %v10741
      %v10985 = vpack.c.b16 %v10751, %v10742
      %v10986 = vpack.c.b16 %v10761, %v10752
      %v10987 = vpack.c.b16 %v10762, %v10753
      %v10988 = vpack.c.b16 %v10763, %v10754
      %v10989 = vpack.c.b16 %v10764, %v10755
      %v10990 = vpack.c.b16 %v10765, %v10756
      %v10991 = vpack.c.b16 %v10766, %v10757
      %v10992 = vpack.c.b16 %v10767, %v10758
      %v10993 = vpack.c.b16 %v10768, %v10759
      %v10994 = vpack.c.b16 %v10769, %v10760
      %v10995 = vpack.c.b16 %v10779, %v10770
      %v10996 = vpack.c.b16 %v10780, %v10771
      %v10997 = vpack.c.b16 %v10781, %v10772
      %v10998 = vpack.c.b16 %v10782, %v10773
      %v10999 = vpack.c.b16 %v10783, %v10774
      %v11000 = vpack.c.b16 %v10784, %v10775
      %v11001 = vpack.c.b16 %v10785, %v10776
      %v11002 = vpack.c.b16 %v10786, %v10777
      %v11003 = vpack.c.b16 %v10787, %v10778
      %v11004 = vpack.c.b16 %v10797, %v10788
      %v11005 = vpack.c.b16 %v10798, %v10789
      %v11006 = vpack.c.b16 %v10799, %v10790
      %v11007 = vpack.c.b16 %v10800, %v10791
      %v11008 = vpack.c.b16 %v10801, %v10792
      %v11009 = vpack.c.b16 %v10802, %v10793
      %v11010 = vpack.c.b16 %v10803, %v10794
      %v11011 = vpack.c.b16 %v10804, %v10795
      %v11012 = vpack.c.b16 %v10805, %v10796
      %v11013 = vpack.c.b16 %v10815, %v10806
      %v11014 = vpack.c.b16 %v10816, %v10807
      %v11015 = vpack.c.b16 %v10817, %v10808
      %v11016 = vpack.c.b16 %v10818, %v10809
      %v11017 = vpack.c.b16 %v10819, %v10810
      %v11018 = vpack.c.b16 %v10820, %v10811
      %v11019 = vpack.c.b16 %v10821, %v10812
      %v11020 = vpack.c.b16 %v10822, %v10813
      %v11021 = vpack.c.b16 %v10823, %v10814
      %v11022 = vpack.c.b16 %v10833, %v10824
      %v11023 = vpack.c.b16 %v10834, %v10825
      %v11024 = vpack.c.b16 %v10835, %v10826
      %v11025 = vpack.c.b16 %v10836, %v10827
      %v11026 = vpack.c.b16 %v10837, %v10828
      %v11027 = vpack.c.b16 %v10838, %v10829
      %v11028 = vpack.c.b16 %v10839, %v10830
      %v11029 = vpack.c.b16 %v10840, %v10831
      %v11030 = vpack.c.b16 %v10841, %v10832
      %v11031 = vpack.c.b16 %v10851, %v10842
      %v11032 = vpack.c.b16 %v10852, %v10843
      %v11033 = vpack.c.b16 %v10853, %v10844
      %v11034 = vpack.c.b16 %v10854, %v10845
      %v11035 = vpack.c.b16 %v10855, %v10846
      %v11036 = vpack.c.b16 %v10856, %v10847
      %v11037 = vpack.c.b16 %v10857, %v10848
      %v11038 = vpack.c.b16 %v10858, %v10849
      %v11039 = vpack.c.b16 %v10859, %v10850
      %v11040 = vpack.c.b16 %v10869, %v10860
      %v11041 = vpack.c.b16 %v10870, %v10861
      %v11042 = vpack.c.b16 %v10871, %v10862
      %v11043 = vpack.c.b16 %v10872, %v10863
      %v11044 = vpack.c.b16 %v10873, %v10864
      %v11045 = vpack.c.b16 %v10874, %v10865
      %v11046 = vpack.c.b16 %v10875, %v10866
      %v11047 = vpack.c.b16 %v10876, %v10867
      %v11048 = vpack.c.b16 %v10877, %v10868
      %v11049 = vpack.c.b16 %v10887, %v10878
      %v11050 = vpack.c.b16 %v10888, %v10879
      %v11051 = vpack.c.b16 %v10889, %v10880
      %v11052 = vpack.c.b16 %v10890, %v10881
      %v11053 = vpack.c.b16 %v10891, %v10882
      %v11054 = vpack.c.b16 %v10892, %v10883
      %v11055 = vpack.c.b16 %v10893, %v10884
      %v11056 = vpack.c.b16 %v10894, %v10885
      %v11057 = vpack.c.b16 %v10895, %v10886
      %v11364 = vunpack.c.l.b16 %v10248
      %v11365 = vunpack.c.l.b16 %v10249
      %v11366 = vunpack.c.l.b16 %v10250
      %v11367 = vunpack.c.l.b16 %v10251
      %v11368 = vunpack.c.l.b16 %v10252
      %v11369 = vunpack.c.l.b16 %v10253
      %v11370 = vunpack.c.l.b16 %v10254
      %v11371 = vunpack.c.l.b16 %v10255
      %v11372 = vunpack.c.l.b16 %v10256
      %v11373 = vunpack.c.l.b16 %v10257
      %v11374 = vunpack.c.l.b16 %v10258
      %v11375 = vunpack.c.l.b16 %v10259
      %v11376 = vunpack.c.l.b16 %v10260
      %v11377 = vunpack.c.l.b16 %v10261
      %v11378 = vunpack.c.l.b16 %v10262
      %v11379 = vunpack.c.l.b16 %v10263
      %v11380 = vunpack.c.l.b16 %v10264
      %v11381 = vunpack.c.l.b16 %v10265
      %v11382 = vunpack.c.l.b16 %v10266
      %v11383 = vunpack.c.l.b16 %v10267
      %v11384 = vunpack.c.l.b16 %v10268
      %v11385 = vunpack.c.l.b16 %v10269
      %v11386 = vunpack.c.l.b16 %v10270
      %v11387 = vunpack.c.l.b16 %v10271
      %v11388 = vunpack.c.l.b16 %v10272
      %v11389 = vunpack.c.l.b16 %v10273
      %v11390 = vunpack.c.l.b16 %v10274
      %v11391 = vunpack.c.l.b16 %v10275
      %v11392 = vunpack.c.l.b16 %v10276
      %v11393 = vunpack.c.l.b16 %v10277
      %v11394 = vunpack.c.l.b16 %v10278
      %v11395 = vunpack.c.l.b16 %v10279
      %v11396 = vunpack.c.l.b16 %v10280
      %v11397 = vunpack.c.l.b16 %v10281
      %v11398 = vunpack.c.l.b16 %v10282
      %v11399 = vunpack.c.l.b16 %v10283
      %v11400 = vunpack.c.l.b16 %v10284
      %v11401 = vunpack.c.l.b16 %v10285
      %v11402 = vunpack.c.l.b16 %v10286
      %v11403 = vunpack.c.l.b16 %v10287
      %v11404 = vunpack.c.l.b16 %v10288
      %v11405 = vunpack.c.l.b16 %v10289
      %v11406 = vunpack.c.l.b16 %v10290
      %v11407 = vunpack.c.l.b16 %v10291
      %v11408 = vunpack.c.l.b16 %v10292
      %v11409 = vunpack.c.l.b16 %v10293
      %v11410 = vunpack.c.l.b16 %v10294
      %v11411 = vunpack.c.l.b16 %v10295
      %v11412 = vunpack.c.l.b16 %v10296
      %v11413 = vunpack.c.l.b16 %v10297
      %v11414 = vunpack.c.l.b16 %v10298
      %v11415 = vunpack.c.l.b16 %v10299
      %v11416 = vunpack.c.l.b16 %v10300
      %v11417 = vunpack.c.l.b16 %v10301
      %v11418 = vunpack.c.l.b16 %v10302
      %v11419 = vunpack.c.l.b16 %v10303
      %v11420 = vunpack.c.l.b16 %v10304
      %v11421 = vunpack.c.l.b16 %v10305
      %v11422 = vunpack.c.l.b16 %v10306
      %v11423 = vunpack.c.l.b16 %v10307
      %v11424 = vunpack.c.l.b16 %v10308
      %v11425 = vunpack.c.l.b16 %v10309
      %v11426 = vunpack.c.l.b16 %v10310
      %v11427 = vunpack.c.l.b16 %v10311
      %v11428 = vunpack.c.l.b16 %v10312
      %v11429 = vunpack.c.l.b16 %v10313
      %v11430 = vunpack.c.l.b16 %v10314
      %v11431 = vunpack.c.l.b16 %v10315
      %v11432 = vunpack.c.l.b16 %v10316
      %v11433 = vunpack.c.l.b16 %v10317
      %v11434 = vunpack.c.l.b16 %v10318
      %v11435 = vunpack.c.l.b16 %v10319
      %v11436 = vunpack.c.l.b16 %v10320
      %v11437 = vunpack.c.l.b16 %v10321
      %v11438 = vunpack.c.l.b16 %v10322
      %v11439 = vunpack.c.l.b16 %v10323
      %v11440 = vunpack.c.l.b16 %v10324
      %v11441 = vunpack.c.l.b16 %v10325
      %v11442 = vunpack.c.l.b16 %v10326
      %v11443 = vunpack.c.l.b16 %v10327
      %v11444 = vunpack.c.l.b16 %v10328
      %v11445 = vunpack.c.l.b16 %v10329
      %v11446 = vunpack.c.l.b16 %v10330
      %v11447 = vunpack.c.l.b16 %v10331
      %v11448 = vunpack.c.l.b16 %v10332
      %v11449 = vunpack.c.l.b16 %v10333
      %v11450 = vunpack.c.l.b16 %v10334
      %v11451 = vunpack.c.l.b16 %v10335
      %v11452 = vunpack.c.l.b16 %v10336
      %v11453 = vunpack.c.l.b16 %v10337
      %v11454 = vunpack.c.l.b16 %v10338
      %v11455 = vunpack.c.l.b16 %v10339
      %v11456 = vunpack.c.l.b16 %v10340
      %v11457 = vunpack.c.l.b16 %v10341
      %v11458 = vunpack.c.l.b16 %v10342
      %v11459 = vunpack.c.l.b16 %v10343
      %v11460 = vunpack.c.l.b16 %v10344
      %v11461 = vunpack.c.l.b16 %v10345
      %v11462 = vunpack.c.l.b16 %v10346
      %v11463 = vunpack.c.l.b16 %v10347
      %v11464 = vunpack.c.l.b16 %v10348
      %v11465 = vunpack.c.l.b16 %v10349
      %v11466 = vunpack.c.l.b16 %v10350
      %v11467 = vunpack.c.l.b16 %v10351
      %v11468 = vunpack.c.l.b16 %v10352
      %v11469 = vunpack.c.l.b16 %v10353
      %v11470 = vunpack.c.l.b16 %v10354
      %v11471 = vunpack.c.l.b16 %v10355
      %v11472 = vunpack.c.l.b16 %v10356
      %v11473 = vunpack.c.l.b16 %v10357
      %v11474 = vunpack.c.l.b16 %v10358
      %v11475 = vunpack.c.l.b16 %v10359
      %v11476 = vunpack.c.l.b16 %v10360
      %v11477 = vunpack.c.l.b16 %v10361
      %v11478 = vunpack.c.l.b16 %v10362
      %v11479 = vunpack.c.l.b16 %v10363
      %v11480 = vunpack.c.l.b16 %v10364
      %v11481 = vunpack.c.l.b16 %v10365
      %v11482 = vunpack.c.l.b16 %v10366
      %v11483 = vunpack.c.l.b16 %v10367
      %v11484 = vunpack.c.l.b16 %v10368
      %v11485 = vunpack.c.l.b16 %v10369
      %v11486 = vunpack.c.l.b16 %v10370
      %v11487 = vunpack.c.l.b16 %v10371
      %v11488 = vunpack.c.l.b16 %v10372
      %v11489 = vunpack.c.l.b16 %v10373
      %v11490 = vunpack.c.l.b16 %v10374
      %v11491 = vunpack.c.l.b16 %v10375
      %v11492 = vunpack.c.l.b16 %v10376
      %v11493 = vunpack.c.l.b16 %v10377
      %v11494 = vunpack.c.l.b16 %v10378
      %v11495 = vunpack.c.l.b16 %v10379
      %v11496 = vunpack.c.l.b16 %v10380
      %v11497 = vunpack.c.l.b16 %v10381
      %v11498 = vunpack.c.l.b16 %v10382
      %v11499 = vunpack.c.l.b16 %v10383
      %v11500 = vunpack.c.l.b16 %v10384
      %v11501 = vunpack.c.l.b16 %v10385
      %v11502 = vunpack.c.l.b16 %v10386
      %v11503 = vunpack.c.l.b16 %v10387
      %v11504 = vunpack.c.l.b16 %v10388
      %v11505 = vunpack.c.l.b16 %v10389
      %v11506 = vunpack.c.l.b16 %v10390
      %v11507 = vunpack.c.l.b16 %v10391
      %v11508 = vpack.c.b16 %v11365, %v11364
      %v11509 = vpack.c.b16 %v11367, %v11366
      %v11510 = vpack.c.b16 %v11369, %v11368
      %v11511 = vpack.c.b16 %v11371, %v11370
      %v11512 = vpack.c.b16 %v11373, %v11372
      %v11513 = vpack.c.b16 %v11375, %v11374
      %v11514 = vpack.c.b16 %v11377, %v11376
      %v11515 = vpack.c.b16 %v11379, %v11378
      %v11516 = vpack.c.b16 %v11381, %v11380
      %v11517 = vpack.c.b16 %v11383, %v11382
      %v11518 = vpack.c.b16 %v11385, %v11384
      %v11519 = vpack.c.b16 %v11387, %v11386
      %v11520 = vpack.c.b16 %v11389, %v11388
      %v11521 = vpack.c.b16 %v11391, %v11390
      %v11522 = vpack.c.b16 %v11393, %v11392
      %v11523 = vpack.c.b16 %v11395, %v11394
      %v11524 = vpack.c.b16 %v11397, %v11396
      %v11525 = vpack.c.b16 %v11399, %v11398
      %v11526 = vpack.c.b16 %v11401, %v11400
      %v11527 = vpack.c.b16 %v11403, %v11402
      %v11528 = vpack.c.b16 %v11405, %v11404
      %v11529 = vpack.c.b16 %v11407, %v11406
      %v11530 = vpack.c.b16 %v11409, %v11408
      %v11531 = vpack.c.b16 %v11411, %v11410
      %v11532 = vpack.c.b16 %v11413, %v11412
      %v11533 = vpack.c.b16 %v11415, %v11414
      %v11534 = vpack.c.b16 %v11417, %v11416
      %v11535 = vpack.c.b16 %v11419, %v11418
      %v11536 = vpack.c.b16 %v11421, %v11420
      %v11537 = vpack.c.b16 %v11423, %v11422
      %v11538 = vpack.c.b16 %v11425, %v11424
      %v11539 = vpack.c.b16 %v11427, %v11426
      %v11540 = vpack.c.b16 %v11429, %v11428
      %v11541 = vpack.c.b16 %v11431, %v11430
      %v11542 = vpack.c.b16 %v11433, %v11432
      %v11543 = vpack.c.b16 %v11435, %v11434
      %v11544 = vpack.c.b16 %v11437, %v11436
      %v11545 = vpack.c.b16 %v11439, %v11438
      %v11546 = vpack.c.b16 %v11441, %v11440
      %v11547 = vpack.c.b16 %v11443, %v11442
      %v11548 = vpack.c.b16 %v11445, %v11444
      %v11549 = vpack.c.b16 %v11447, %v11446
      %v11550 = vpack.c.b16 %v11449, %v11448
      %v11551 = vpack.c.b16 %v11451, %v11450
      %v11552 = vpack.c.b16 %v11453, %v11452
      %v11553 = vpack.c.b16 %v11455, %v11454
      %v11554 = vpack.c.b16 %v11457, %v11456
      %v11555 = vpack.c.b16 %v11459, %v11458
      %v11556 = vpack.c.b16 %v11461, %v11460
      %v11557 = vpack.c.b16 %v11463, %v11462
      %v11558 = vpack.c.b16 %v11465, %v11464
      %v11559 = vpack.c.b16 %v11467, %v11466
      %v11560 = vpack.c.b16 %v11469, %v11468
      %v11561 = vpack.c.b16 %v11471, %v11470
      %v11562 = vpack.c.b16 %v11473, %v11472
      %v11563 = vpack.c.b16 %v11475, %v11474
      %v11564 = vpack.c.b16 %v11477, %v11476
      %v11565 = vpack.c.b16 %v11479, %v11478
      %v11566 = vpack.c.b16 %v11481, %v11480
      %v11567 = vpack.c.b16 %v11483, %v11482
      %v11568 = vpack.c.b16 %v11485, %v11484
      %v11569 = vpack.c.b16 %v11487, %v11486
      %v11570 = vpack.c.b16 %v11489, %v11488
      %v11571 = vpack.c.b16 %v11491, %v11490
      %v11572 = vpack.c.b16 %v11493, %v11492
      %v11573 = vpack.c.b16 %v11495, %v11494
      %v11574 = vpack.c.b16 %v11497, %v11496
      %v11575 = vpack.c.b16 %v11499, %v11498
      %v11576 = vpack.c.b16 %v11501, %v11500
      %v11577 = vpack.c.b16 %v11503, %v11502
      %v11578 = vpack.c.b16 %v11505, %v11504
      %v11579 = vpack.c.b16 %v11507, %v11506
      %11652 = vmatpush.bf16.msra.mxu0 %v11515
      %11653 = vmatpush.bf16.msra.mxu0 %v11514
      %11654 = vmatpush.bf16.msra.mxu0 %v11513
      %11655 = vmatpush.bf16.msra.mxu0 %v11512
      %11656 = vmatpush.bf16.msra.mxu0 %v11511
      %11657 = vmatpush.bf16.msra.mxu0 %v11510
      %11658 = vmatpush.bf16.msra.mxu0 %v11509
      %11659 = vmatpush.bf16.msra.mxu0 %v11508
      %11660 = vmatmul.bf16.gmra.mxu0 %v10896
      %v11661 = vpop.f32.mrf.mxu0
      %v11662 = vadd.f32 0.0, %v11661
      %v11663 = vpop.f32.mrf.mxu0
      %v11664 = vadd.f32 0.0, %v11663
      %11665 = vmatmul.bf16.gmra.mxu0 %v10905
      %v11666 = vpop.f32.mrf.mxu0
      %v11667 = vadd.f32 0.0, %v11666
      %v11668 = vpop.f32.mrf.mxu0
      %v11669 = vadd.f32 0.0, %v11668
      %11670 = vmatmul.bf16.gmra.mxu0 %v10914
      %v11671 = vpop.f32.mrf.mxu0
      %v11672 = vadd.f32 0.0, %v11671
      %v11673 = vpop.f32.mrf.mxu0
      %v11674 = vadd.f32 0.0, %v11673
      %11675 = vmatmul.bf16.gmra.mxu0 %v10923
      %v11676 = vpop.f32.mrf.mxu0
      %v11677 = vadd.f32 0.0, %v11676
      %v11678 = vpop.f32.mrf.mxu0
      %v11679 = vadd.f32 0.0, %v11678
      %11680 = vmatmul.bf16.gmra.mxu0 %v10932
      %v11681 = vpop.f32.mrf.mxu0
      %v11682 = vadd.f32 0.0, %v11681
      %v11683 = vpop.f32.mrf.mxu0
      %v11684 = vadd.f32 0.0, %v11683
      %11685 = vmatmul.bf16.gmra.mxu0 %v10941
      %v11686 = vpop.f32.mrf.mxu0
      %v11687 = vadd.f32 0.0, %v11686
      %v11688 = vpop.f32.mrf.mxu0
      %v11689 = vadd.f32 0.0, %v11688
      %11690 = vmatmul.bf16.gmra.mxu0 %v10950
      %v11691 = vpop.f32.mrf.mxu0
      %v11692 = vadd.f32 0.0, %v11691
      %v11693 = vpop.f32.mrf.mxu0
      %v11694 = vadd.f32 0.0, %v11693
      %11695 = vmatmul.bf16.gmra.mxu0 %v10959
      %v11696 = vpop.f32.mrf.mxu0
      %v11697 = vadd.f32 0.0, %v11696
      %v11698 = vpop.f32.mrf.mxu0
      %v11699 = vadd.f32 0.0, %v11698
      %11700 = vmatmul.bf16.gmra.mxu0 %v10968
      %v11701 = vpop.f32.mrf.mxu0
      %v11702 = vadd.f32 0.0, %v11701
      %v11703 = vpop.f32.mrf.mxu0
      %v11704 = vadd.f32 0.0, %v11703
      %11705 = vmatmul.bf16.gmra.mxu0 %v10977
      %v11706 = vpop.f32.mrf.mxu0
      %v11707 = vadd.f32 0.0, %v11706
      %v11708 = vpop.f32.mrf.mxu0
      %v11709 = vadd.f32 0.0, %v11708
      %11710 = vmatmul.bf16.gmra.mxu0 %v10986
      %v11711 = vpop.f32.mrf.mxu0
      %v11712 = vadd.f32 0.0, %v11711
      %v11713 = vpop.f32.mrf.mxu0
      %v11714 = vadd.f32 0.0, %v11713
      %11715 = vmatmul.bf16.gmra.mxu0 %v10995
      %v11716 = vpop.f32.mrf.mxu0
      %v11717 = vadd.f32 0.0, %v11716
      %v11718 = vpop.f32.mrf.mxu0
      %v11719 = vadd.f32 0.0, %v11718
      %11720 = vmatmul.bf16.gmra.mxu0 %v11004
      %v11721 = vpop.f32.mrf.mxu0
      %v11722 = vadd.f32 0.0, %v11721
      %v11723 = vpop.f32.mrf.mxu0
      %v11724 = vadd.f32 0.0, %v11723
      %11725 = vmatmul.bf16.gmra.mxu0 %v11013
      %v11726 = vpop.f32.mrf.mxu0
      %v11727 = vadd.f32 0.0, %v11726
      %v11728 = vpop.f32.mrf.mxu0
      %v11729 = vadd.f32 0.0, %v11728
      %11730 = vmatmul.bf16.gmra.mxu0 %v11022
      %v11731 = vpop.f32.mrf.mxu0
      %v11732 = vadd.f32 0.0, %v11731
      %v11733 = vpop.f32.mrf.mxu0
      %v11734 = vadd.f32 0.0, %v11733
      %11735 = vmatmul.bf16.gmra.mxu0 %v11031
      %v11736 = vpop.f32.mrf.mxu0
      %v11737 = vadd.f32 0.0, %v11736
      %v11738 = vpop.f32.mrf.mxu0
      %v11739 = vadd.f32 0.0, %v11738
      %11740 = vmatmul.bf16.gmra.mxu0 %v11040
      %v11741 = vpop.f32.mrf.mxu0
      %v11742 = vadd.f32 0.0, %v11741
      %v11743 = vpop.f32.mrf.mxu0
      %v11744 = vadd.f32 0.0, %v11743
      %11745 = vmatmul.bf16.gmra.mxu0 %v11049
      %v11746 = vpop.f32.mrf.mxu0
      %v11747 = vadd.f32 0.0, %v11746
      %v11748 = vpop.f32.mrf.mxu0
      %v11749 = vadd.f32 0.0, %v11748
      %11750 = vdwg.mxu0
      %11751 = vmatpush.bf16.msra.mxu0 %v11523
      %11752 = vmatpush.bf16.msra.mxu0 %v11522
      %11753 = vmatpush.bf16.msra.mxu0 %v11521
      %11754 = vmatpush.bf16.msra.mxu0 %v11520
      %11755 = vmatpush.bf16.msra.mxu0 %v11519
      %11756 = vmatpush.bf16.msra.mxu0 %v11518
      %11757 = vmatpush.bf16.msra.mxu0 %v11517
      %11758 = vmatpush.bf16.msra.mxu0 %v11516
      %11759 = vmatmul.bf16.gmra.mxu0 %v10897
      %v11760 = vpop.f32.mrf.mxu0
      %v11761 = vadd.f32 %v11662, %v11760
      %v11762 = vpop.f32.mrf.mxu0
      %v11763 = vadd.f32 %v11664, %v11762
      %11764 = vmatmul.bf16.gmra.mxu0 %v10906
      %v11765 = vpop.f32.mrf.mxu0
      %v11766 = vadd.f32 %v11667, %v11765
      %v11767 = vpop.f32.mrf.mxu0
      %v11768 = vadd.f32 %v11669, %v11767
      %11769 = vmatmul.bf16.gmra.mxu0 %v10915
      %v11770 = vpop.f32.mrf.mxu0
      %v11771 = vadd.f32 %v11672, %v11770
      %v11772 = vpop.f32.mrf.mxu0
      %v11773 = vadd.f32 %v11674, %v11772
      %11774 = vmatmul.bf16.gmra.mxu0 %v10924
      %v11775 = vpop.f32.mrf.mxu0
      %v11776 = vadd.f32 %v11677, %v11775
      %v11777 = vpop.f32.mrf.mxu0
      %v11778 = vadd.f32 %v11679, %v11777
      %11779 = vmatmul.bf16.gmra.mxu0 %v10933
      %v11780 = vpop.f32.mrf.mxu0
      %v11781 = vadd.f32 %v11682, %v11780
      %v11782 = vpop.f32.mrf.mxu0
      %v11783 = vadd.f32 %v11684, %v11782
      %11784 = vmatmul.bf16.gmra.mxu0 %v10942
      %v11785 = vpop.f32.mrf.mxu0
      %v11786 = vadd.f32 %v11687, %v11785
      %v11787 = vpop.f32.mrf.mxu0
      %v11788 = vadd.f32 %v11689, %v11787
      %11789 = vmatmul.bf16.gmra.mxu0 %v10951
      %v11790 = vpop.f32.mrf.mxu0
      %v11791 = vadd.f32 %v11692, %v11790
      %v11792 = vpop.f32.mrf.mxu0
      %v11793 = vadd.f32 %v11694, %v11792
      %11794 = vmatmul.bf16.gmra.mxu0 %v10960
      %v11795 = vpop.f32.mrf.mxu0
      %v11796 = vadd.f32 %v11697, %v11795
      %v11797 = vpop.f32.mrf.mxu0
      %v11798 = vadd.f32 %v11699, %v11797
      %11799 = vmatmul.bf16.gmra.mxu0 %v10969
      %v11800 = vpop.f32.mrf.mxu0
      %v11801 = vadd.f32 %v11702, %v11800
      %v11802 = vpop.f32.mrf.mxu0
      %v11803 = vadd.f32 %v11704, %v11802
      %11804 = vmatmul.bf16.gmra.mxu0 %v10978
      %v11805 = vpop.f32.mrf.mxu0
      %v11806 = vadd.f32 %v11707, %v11805
      %v11807 = vpop.f32.mrf.mxu0
      %v11808 = vadd.f32 %v11709, %v11807
      %11809 = vmatmul.bf16.gmra.mxu0 %v10987
      %v11810 = vpop.f32.mrf.mxu0
      %v11811 = vadd.f32 %v11712, %v11810
      %v11812 = vpop.f32.mrf.mxu0
      %v11813 = vadd.f32 %v11714, %v11812
      %11814 = vmatmul.bf16.gmra.mxu0 %v10996
      %v11815 = vpop.f32.mrf.mxu0
      %v11816 = vadd.f32 %v11717, %v11815
      %v11817 = vpop.f32.mrf.mxu0
      %v11818 = vadd.f32 %v11719, %v11817
      %11819 = vmatmul.bf16.gmra.mxu0 %v11005
      %v11820 = vpop.f32.mrf.mxu0
      %v11821 = vadd.f32 %v11722, %v11820
      %v11822 = vpop.f32.mrf.mxu0
      %v11823 = vadd.f32 %v11724, %v11822
      %11824 = vmatmul.bf16.gmra.mxu0 %v11014
      %v11825 = vpop.f32.mrf.mxu0
      %v11826 = vadd.f32 %v11727, %v11825
      %v11827 = vpop.f32.mrf.mxu0
      %v11828 = vadd.f32 %v11729, %v11827
      %11829 = vmatmul.bf16.gmra.mxu0 %v11023
      %v11830 = vpop.f32.mrf.mxu0
      %v11831 = vadd.f32 %v11732, %v11830
      %v11832 = vpop.f32.mrf.mxu0
      %v11833 = vadd.f32 %v11734, %v11832
      %11834 = vmatmul.bf16.gmra.mxu0 %v11032
      %v11835 = vpop.f32.mrf.mxu0
      %v11836 = vadd.f32 %v11737, %v11835
      %v11837 = vpop.f32.mrf.mxu0
      %v11838 = vadd.f32 %v11739, %v11837
      %11839 = vmatmul.bf16.gmra.mxu0 %v11041
      %v11840 = vpop.f32.mrf.mxu0
      %v11841 = vadd.f32 %v11742, %v11840
      %v11842 = vpop.f32.mrf.mxu0
      %v11843 = vadd.f32 %v11744, %v11842
      %11844 = vmatmul.bf16.gmra.mxu0 %v11050
      %v11845 = vpop.f32.mrf.mxu0
      %v11846 = vadd.f32 %v11747, %v11845
      %v11847 = vpop.f32.mrf.mxu0
      %v11848 = vadd.f32 %v11749, %v11847
      %11849 = vdwg.mxu0
      %11850 = vmatpush.bf16.msra.mxu0 %v11531
      %11851 = vmatpush.bf16.msra.mxu0 %v11530
      %11852 = vmatpush.bf16.msra.mxu0 %v11529
      %11853 = vmatpush.bf16.msra.mxu0 %v11528
      %11854 = vmatpush.bf16.msra.mxu0 %v11527
      %11855 = vmatpush.bf16.msra.mxu0 %v11526
      %11856 = vmatpush.bf16.msra.mxu0 %v11525
      %11857 = vmatpush.bf16.msra.mxu0 %v11524
      %11858 = vmatmul.bf16.gmra.mxu0 %v10898
      %v11859 = vpop.f32.mrf.mxu0
      %v11860 = vadd.f32 %v11761, %v11859
      %v11861 = vpop.f32.mrf.mxu0
      %v11862 = vadd.f32 %v11763, %v11861
      %11863 = vmatmul.bf16.gmra.mxu0 %v10907
      %v11864 = vpop.f32.mrf.mxu0
      %v11865 = vadd.f32 %v11766, %v11864
      %v11866 = vpop.f32.mrf.mxu0
      %v11867 = vadd.f32 %v11768, %v11866
      %11868 = vmatmul.bf16.gmra.mxu0 %v10916
      %v11869 = vpop.f32.mrf.mxu0
      %v11870 = vadd.f32 %v11771, %v11869
      %v11871 = vpop.f32.mrf.mxu0
      %v11872 = vadd.f32 %v11773, %v11871
      %11873 = vmatmul.bf16.gmra.mxu0 %v10925
      %v11874 = vpop.f32.mrf.mxu0
      %v11875 = vadd.f32 %v11776, %v11874
      %v11876 = vpop.f32.mrf.mxu0
      %v11877 = vadd.f32 %v11778, %v11876
      %11878 = vmatmul.bf16.gmra.mxu0 %v10934
      %v11879 = vpop.f32.mrf.mxu0
      %v11880 = vadd.f32 %v11781, %v11879
      %v11881 = vpop.f32.mrf.mxu0
      %v11882 = vadd.f32 %v11783, %v11881
      %11883 = vmatmul.bf16.gmra.mxu0 %v10943
      %v11884 = vpop.f32.mrf.mxu0
      %v11885 = vadd.f32 %v11786, %v11884
      %v11886 = vpop.f32.mrf.mxu0
      %v11887 = vadd.f32 %v11788, %v11886
      %11888 = vmatmul.bf16.gmra.mxu0 %v10952
      %v11889 = vpop.f32.mrf.mxu0
      %v11890 = vadd.f32 %v11791, %v11889
      %v11891 = vpop.f32.mrf.mxu0
      %v11892 = vadd.f32 %v11793, %v11891
      %11893 = vmatmul.bf16.gmra.mxu0 %v10961
      %v11894 = vpop.f32.mrf.mxu0
      %v11895 = vadd.f32 %v11796, %v11894
      %v11896 = vpop.f32.mrf.mxu0
      %v11897 = vadd.f32 %v11798, %v11896
      %11898 = vmatmul.bf16.gmra.mxu0 %v10970
      %v11899 = vpop.f32.mrf.mxu0
      %v11900 = vadd.f32 %v11801, %v11899
      %v11901 = vpop.f32.mrf.mxu0
      %v11902 = vadd.f32 %v11803, %v11901
      %11903 = vmatmul.bf16.gmra.mxu0 %v10979
      %v11904 = vpop.f32.mrf.mxu0
      %v11905 = vadd.f32 %v11806, %v11904
      %v11906 = vpop.f32.mrf.mxu0
      %v11907 = vadd.f32 %v11808, %v11906
      %11908 = vmatmul.bf16.gmra.mxu0 %v10988
      %v11909 = vpop.f32.mrf.mxu0
      %v11910 = vadd.f32 %v11811, %v11909
      %v11911 = vpop.f32.mrf.mxu0
      %v11912 = vadd.f32 %v11813, %v11911
      %11913 = vmatmul.bf16.gmra.mxu0 %v10997
      %v11914 = vpop.f32.mrf.mxu0
      %v11915 = vadd.f32 %v11816, %v11914
      %v11916 = vpop.f32.mrf.mxu0
      %v11917 = vadd.f32 %v11818, %v11916
      %11918 = vmatmul.bf16.gmra.mxu0 %v11006
      %v11919 = vpop.f32.mrf.mxu0
      %v11920 = vadd.f32 %v11821, %v11919
      %v11921 = vpop.f32.mrf.mxu0
      %v11922 = vadd.f32 %v11823, %v11921
      %11923 = vmatmul.bf16.gmra.mxu0 %v11015
      %v11924 = vpop.f32.mrf.mxu0
      %v11925 = vadd.f32 %v11826, %v11924
      %v11926 = vpop.f32.mrf.mxu0
      %v11927 = vadd.f32 %v11828, %v11926
      %11928 = vmatmul.bf16.gmra.mxu0 %v11024
      %v11929 = vpop.f32.mrf.mxu0
      %v11930 = vadd.f32 %v11831, %v11929
      %v11931 = vpop.f32.mrf.mxu0
      %v11932 = vadd.f32 %v11833, %v11931
      %11933 = vmatmul.bf16.gmra.mxu0 %v11033
      %v11934 = vpop.f32.mrf.mxu0
      %v11935 = vadd.f32 %v11836, %v11934
      %v11936 = vpop.f32.mrf.mxu0
      %v11937 = vadd.f32 %v11838, %v11936
      %11938 = vmatmul.bf16.gmra.mxu0 %v11042
      %v11939 = vpop.f32.mrf.mxu0
      %v11940 = vadd.f32 %v11841, %v11939
      %v11941 = vpop.f32.mrf.mxu0
      %v11942 = vadd.f32 %v11843, %v11941
      %11943 = vmatmul.bf16.gmra.mxu0 %v11051
      %v11944 = vpop.f32.mrf.mxu0
      %v11945 = vadd.f32 %v11846, %v11944
      %v11946 = vpop.f32.mrf.mxu0
      %v11947 = vadd.f32 %v11848, %v11946
      %11948 = vdwg.mxu0
      %11949 = vmatpush.bf16.msra.mxu0 %v11539
      %11950 = vmatpush.bf16.msra.mxu0 %v11538
      %11951 = vmatpush.bf16.msra.mxu0 %v11537
      %11952 = vmatpush.bf16.msra.mxu0 %v11536
      %11953 = vmatpush.bf16.msra.mxu0 %v11535
      %11954 = vmatpush.bf16.msra.mxu0 %v11534
      %11955 = vmatpush.bf16.msra.mxu0 %v11533
      %11956 = vmatpush.bf16.msra.mxu0 %v11532
      %11957 = vmatmul.bf16.gmra.mxu0 %v10899
      %v11958 = vpop.f32.mrf.mxu0
      %v11959 = vadd.f32 %v11860, %v11958
      %v11960 = vpop.f32.mrf.mxu0
      %v11961 = vadd.f32 %v11862, %v11960
      %11962 = vmatmul.bf16.gmra.mxu0 %v10908
      %v11963 = vpop.f32.mrf.mxu0
      %v11964 = vadd.f32 %v11865, %v11963
      %v11965 = vpop.f32.mrf.mxu0
      %v11966 = vadd.f32 %v11867, %v11965
      %11967 = vmatmul.bf16.gmra.mxu0 %v10917
      %v11968 = vpop.f32.mrf.mxu0
      %v11969 = vadd.f32 %v11870, %v11968
      %v11970 = vpop.f32.mrf.mxu0
      %v11971 = vadd.f32 %v11872, %v11970
      %11972 = vmatmul.bf16.gmra.mxu0 %v10926
      %v11973 = vpop.f32.mrf.mxu0
      %v11974 = vadd.f32 %v11875, %v11973
      %v11975 = vpop.f32.mrf.mxu0
      %v11976 = vadd.f32 %v11877, %v11975
      %11977 = vmatmul.bf16.gmra.mxu0 %v10935
      %v11978 = vpop.f32.mrf.mxu0
      %v11979 = vadd.f32 %v11880, %v11978
      %v11980 = vpop.f32.mrf.mxu0
      %v11981 = vadd.f32 %v11882, %v11980
      %11982 = vmatmul.bf16.gmra.mxu0 %v10944
      %v11983 = vpop.f32.mrf.mxu0
      %v11984 = vadd.f32 %v11885, %v11983
      %v11985 = vpop.f32.mrf.mxu0
      %v11986 = vadd.f32 %v11887, %v11985
      %11987 = vmatmul.bf16.gmra.mxu0 %v10953
      %v11988 = vpop.f32.mrf.mxu0
      %v11989 = vadd.f32 %v11890, %v11988
      %v11990 = vpop.f32.mrf.mxu0
      %v11991 = vadd.f32 %v11892, %v11990
      %11992 = vmatmul.bf16.gmra.mxu0 %v10962
      %v11993 = vpop.f32.mrf.mxu0
      %v11994 = vadd.f32 %v11895, %v11993
      %v11995 = vpop.f32.mrf.mxu0
      %v11996 = vadd.f32 %v11897, %v11995
      %11997 = vmatmul.bf16.gmra.mxu0 %v10971
      %v11998 = vpop.f32.mrf.mxu0
      %v11999 = vadd.f32 %v11900, %v11998
      %v12000 = vpop.f32.mrf.mxu0
      %v12001 = vadd.f32 %v11902, %v12000
      %12002 = vmatmul.bf16.gmra.mxu0 %v10980
      %v12003 = vpop.f32.mrf.mxu0
      %v12004 = vadd.f32 %v11905, %v12003
      %v12005 = vpop.f32.mrf.mxu0
      %v12006 = vadd.f32 %v11907, %v12005
      %12007 = vmatmul.bf16.gmra.mxu0 %v10989
      %v12008 = vpop.f32.mrf.mxu0
      %v12009 = vadd.f32 %v11910, %v12008
      %v12010 = vpop.f32.mrf.mxu0
      %v12011 = vadd.f32 %v11912, %v12010
      %12012 = vmatmul.bf16.gmra.mxu0 %v10998
      %v12013 = vpop.f32.mrf.mxu0
      %v12014 = vadd.f32 %v11915, %v12013
      %v12015 = vpop.f32.mrf.mxu0
      %v12016 = vadd.f32 %v11917, %v12015
      %12017 = vmatmul.bf16.gmra.mxu0 %v11007
      %v12018 = vpop.f32.mrf.mxu0
      %v12019 = vadd.f32 %v11920, %v12018
      %v12020 = vpop.f32.mrf.mxu0
      %v12021 = vadd.f32 %v11922, %v12020
      %12022 = vmatmul.bf16.gmra.mxu0 %v11016
      %v12023 = vpop.f32.mrf.mxu0
      %v12024 = vadd.f32 %v11925, %v12023
      %v12025 = vpop.f32.mrf.mxu0
      %v12026 = vadd.f32 %v11927, %v12025
      %12027 = vmatmul.bf16.gmra.mxu0 %v11025
      %v12028 = vpop.f32.mrf.mxu0
      %v12029 = vadd.f32 %v11930, %v12028
      %v12030 = vpop.f32.mrf.mxu0
      %v12031 = vadd.f32 %v11932, %v12030
      %12032 = vmatmul.bf16.gmra.mxu0 %v11034
      %v12033 = vpop.f32.mrf.mxu0
      %v12034 = vadd.f32 %v11935, %v12033
      %v12035 = vpop.f32.mrf.mxu0
      %v12036 = vadd.f32 %v11937, %v12035
      %12037 = vmatmul.bf16.gmra.mxu0 %v11043
      %v12038 = vpop.f32.mrf.mxu0
      %v12039 = vadd.f32 %v11940, %v12038
      %v12040 = vpop.f32.mrf.mxu0
      %v12041 = vadd.f32 %v11942, %v12040
      %12042 = vmatmul.bf16.gmra.mxu0 %v11052
      %v12043 = vpop.f32.mrf.mxu0
      %v12044 = vadd.f32 %v11945, %v12043
      %v12045 = vpop.f32.mrf.mxu0
      %v12046 = vadd.f32 %v11947, %v12045
      %12047 = vdwg.mxu0
      %12048 = vmatpush.bf16.msra.mxu0 %v11547
      %12049 = vmatpush.bf16.msra.mxu0 %v11546
      %12050 = vmatpush.bf16.msra.mxu0 %v11545
      %12051 = vmatpush.bf16.msra.mxu0 %v11544
      %12052 = vmatpush.bf16.msra.mxu0 %v11543
      %12053 = vmatpush.bf16.msra.mxu0 %v11542
      %12054 = vmatpush.bf16.msra.mxu0 %v11541
      %12055 = vmatpush.bf16.msra.mxu0 %v11540
      %12056 = vmatmul.bf16.gmra.mxu0 %v10900
      %v12057 = vpop.f32.mrf.mxu0
      %v12058 = vadd.f32 %v11959, %v12057
      %v12059 = vpop.f32.mrf.mxu0
      %v12060 = vadd.f32 %v11961, %v12059
      %12061 = vmatmul.bf16.gmra.mxu0 %v10909
      %v12062 = vpop.f32.mrf.mxu0
      %v12063 = vadd.f32 %v11964, %v12062
      %v12064 = vpop.f32.mrf.mxu0
      %v12065 = vadd.f32 %v11966, %v12064
      %12066 = vmatmul.bf16.gmra.mxu0 %v10918
      %v12067 = vpop.f32.mrf.mxu0
      %v12068 = vadd.f32 %v11969, %v12067
      %v12069 = vpop.f32.mrf.mxu0
      %v12070 = vadd.f32 %v11971, %v12069
      %12071 = vmatmul.bf16.gmra.mxu0 %v10927
      %v12072 = vpop.f32.mrf.mxu0
      %v12073 = vadd.f32 %v11974, %v12072
      %v12074 = vpop.f32.mrf.mxu0
      %v12075 = vadd.f32 %v11976, %v12074
      %12076 = vmatmul.bf16.gmra.mxu0 %v10936
      %v12077 = vpop.f32.mrf.mxu0
      %v12078 = vadd.f32 %v11979, %v12077
      %v12079 = vpop.f32.mrf.mxu0
      %v12080 = vadd.f32 %v11981, %v12079
      %12081 = vmatmul.bf16.gmra.mxu0 %v10945
      %v12082 = vpop.f32.mrf.mxu0
      %v12083 = vadd.f32 %v11984, %v12082
      %v12084 = vpop.f32.mrf.mxu0
      %v12085 = vadd.f32 %v11986, %v12084
      %12086 = vmatmul.bf16.gmra.mxu0 %v10954
      %v12087 = vpop.f32.mrf.mxu0
      %v12088 = vadd.f32 %v11989, %v12087
      %v12089 = vpop.f32.mrf.mxu0
      %v12090 = vadd.f32 %v11991, %v12089
      %12091 = vmatmul.bf16.gmra.mxu0 %v10963
      %v12092 = vpop.f32.mrf.mxu0
      %v12093 = vadd.f32 %v11994, %v12092
      %v12094 = vpop.f32.mrf.mxu0
      %v12095 = vadd.f32 %v11996, %v12094
      %12096 = vmatmul.bf16.gmra.mxu0 %v10972
      %v12097 = vpop.f32.mrf.mxu0
      %v12098 = vadd.f32 %v11999, %v12097
      %v12099 = vpop.f32.mrf.mxu0
      %v12100 = vadd.f32 %v12001, %v12099
      %12101 = vmatmul.bf16.gmra.mxu0 %v10981
      %v12102 = vpop.f32.mrf.mxu0
      %v12103 = vadd.f32 %v12004, %v12102
      %v12104 = vpop.f32.mrf.mxu0
      %v12105 = vadd.f32 %v12006, %v12104
      %12106 = vmatmul.bf16.gmra.mxu0 %v10990
      %v12107 = vpop.f32.mrf.mxu0
      %v12108 = vadd.f32 %v12009, %v12107
      %v12109 = vpop.f32.mrf.mxu0
      %v12110 = vadd.f32 %v12011, %v12109
      %12111 = vmatmul.bf16.gmra.mxu0 %v10999
      %v12112 = vpop.f32.mrf.mxu0
      %v12113 = vadd.f32 %v12014, %v12112
      %v12114 = vpop.f32.mrf.mxu0
      %v12115 = vadd.f32 %v12016, %v12114
      %12116 = vmatmul.bf16.gmra.mxu0 %v11008
      %v12117 = vpop.f32.mrf.mxu0
      %v12118 = vadd.f32 %v12019, %v12117
      %v12119 = vpop.f32.mrf.mxu0
      %v12120 = vadd.f32 %v12021, %v12119
      %12121 = vmatmul.bf16.gmra.mxu0 %v11017
      %v12122 = vpop.f32.mrf.mxu0
      %v12123 = vadd.f32 %v12024, %v12122
      %v12124 = vpop.f32.mrf.mxu0
      %v12125 = vadd.f32 %v12026, %v12124
      %12126 = vmatmul.bf16.gmra.mxu0 %v11026
      %v12127 = vpop.f32.mrf.mxu0
      %v12128 = vadd.f32 %v12029, %v12127
      %v12129 = vpop.f32.mrf.mxu0
      %v12130 = vadd.f32 %v12031, %v12129
      %12131 = vmatmul.bf16.gmra.mxu0 %v11035
      %v12132 = vpop.f32.mrf.mxu0
      %v12133 = vadd.f32 %v12034, %v12132
      %v12134 = vpop.f32.mrf.mxu0
      %v12135 = vadd.f32 %v12036, %v12134
      %12136 = vmatmul.bf16.gmra.mxu0 %v11044
      %v12137 = vpop.f32.mrf.mxu0
      %v12138 = vadd.f32 %v12039, %v12137
      %v12139 = vpop.f32.mrf.mxu0
      %v12140 = vadd.f32 %v12041, %v12139
      %12141 = vmatmul.bf16.gmra.mxu0 %v11053
      %v12142 = vpop.f32.mrf.mxu0
      %v12143 = vadd.f32 %v12044, %v12142
      %v12144 = vpop.f32.mrf.mxu0
      %v12145 = vadd.f32 %v12046, %v12144
      %12146 = vdwg.mxu0
      %12147 = vmatpush.bf16.msra.mxu0 %v11555
      %12148 = vmatpush.bf16.msra.mxu0 %v11554
      %12149 = vmatpush.bf16.msra.mxu0 %v11553
      %12150 = vmatpush.bf16.msra.mxu0 %v11552
      %12151 = vmatpush.bf16.msra.mxu0 %v11551
      %12152 = vmatpush.bf16.msra.mxu0 %v11550
      %12153 = vmatpush.bf16.msra.mxu0 %v11549
      %12154 = vmatpush.bf16.msra.mxu0 %v11548
      %12155 = vmatmul.bf16.gmra.mxu0 %v10901
      %v12156 = vpop.f32.mrf.mxu0
      %v12157 = vadd.f32 %v12058, %v12156
      %v12158 = vpop.f32.mrf.mxu0
      %v12159 = vadd.f32 %v12060, %v12158
      %12160 = vmatmul.bf16.gmra.mxu0 %v10910
      %v12161 = vpop.f32.mrf.mxu0
      %v12162 = vadd.f32 %v12063, %v12161
      %v12163 = vpop.f32.mrf.mxu0
      %v12164 = vadd.f32 %v12065, %v12163
      %12165 = vmatmul.bf16.gmra.mxu0 %v10919
      %v12166 = vpop.f32.mrf.mxu0
      %v12167 = vadd.f32 %v12068, %v12166
      %v12168 = vpop.f32.mrf.mxu0
      %v12169 = vadd.f32 %v12070, %v12168
      %12170 = vmatmul.bf16.gmra.mxu0 %v10928
      %v12171 = vpop.f32.mrf.mxu0
      %v12172 = vadd.f32 %v12073, %v12171
      %v12173 = vpop.f32.mrf.mxu0
      %v12174 = vadd.f32 %v12075, %v12173
      %12175 = vmatmul.bf16.gmra.mxu0 %v10937
      %v12176 = vpop.f32.mrf.mxu0
      %v12177 = vadd.f32 %v12078, %v12176
      %v12178 = vpop.f32.mrf.mxu0
      %v12179 = vadd.f32 %v12080, %v12178
      %12180 = vmatmul.bf16.gmra.mxu0 %v10946
      %v12181 = vpop.f32.mrf.mxu0
      %v12182 = vadd.f32 %v12083, %v12181
      %v12183 = vpop.f32.mrf.mxu0
      %v12184 = vadd.f32 %v12085, %v12183
      %12185 = vmatmul.bf16.gmra.mxu0 %v10955
      %v12186 = vpop.f32.mrf.mxu0
      %v12187 = vadd.f32 %v12088, %v12186
      %v12188 = vpop.f32.mrf.mxu0
      %v12189 = vadd.f32 %v12090, %v12188
      %12190 = vmatmul.bf16.gmra.mxu0 %v10964
      %v12191 = vpop.f32.mrf.mxu0
      %v12192 = vadd.f32 %v12093, %v12191
      %v12193 = vpop.f32.mrf.mxu0
      %v12194 = vadd.f32 %v12095, %v12193
      %12195 = vmatmul.bf16.gmra.mxu0 %v10973
      %v12196 = vpop.f32.mrf.mxu0
      %v12197 = vadd.f32 %v12098, %v12196
      %v12198 = vpop.f32.mrf.mxu0
      %v12199 = vadd.f32 %v12100, %v12198
      %12200 = vmatmul.bf16.gmra.mxu0 %v10982
      %v12201 = vpop.f32.mrf.mxu0
      %v12202 = vadd.f32 %v12103, %v12201
      %v12203 = vpop.f32.mrf.mxu0
      %v12204 = vadd.f32 %v12105, %v12203
      %12205 = vmatmul.bf16.gmra.mxu0 %v10991
      %v12206 = vpop.f32.mrf.mxu0
      %v12207 = vadd.f32 %v12108, %v12206
      %v12208 = vpop.f32.mrf.mxu0
      %v12209 = vadd.f32 %v12110, %v12208
      %12210 = vmatmul.bf16.gmra.mxu0 %v11000
      %v12211 = vpop.f32.mrf.mxu0
      %v12212 = vadd.f32 %v12113, %v12211
      %v12213 = vpop.f32.mrf.mxu0
      %v12214 = vadd.f32 %v12115, %v12213
      %12215 = vmatmul.bf16.gmra.mxu0 %v11009
      %v12216 = vpop.f32.mrf.mxu0
      %v12217 = vadd.f32 %v12118, %v12216
      %v12218 = vpop.f32.mrf.mxu0
      %v12219 = vadd.f32 %v12120, %v12218
      %12220 = vmatmul.bf16.gmra.mxu0 %v11018
      %v12221 = vpop.f32.mrf.mxu0
      %v12222 = vadd.f32 %v12123, %v12221
      %v12223 = vpop.f32.mrf.mxu0
      %v12224 = vadd.f32 %v12125, %v12223
      %12225 = vmatmul.bf16.gmra.mxu0 %v11027
      %v12226 = vpop.f32.mrf.mxu0
      %v12227 = vadd.f32 %v12128, %v12226
      %v12228 = vpop.f32.mrf.mxu0
      %v12229 = vadd.f32 %v12130, %v12228
      %12230 = vmatmul.bf16.gmra.mxu0 %v11036
      %v12231 = vpop.f32.mrf.mxu0
      %v12232 = vadd.f32 %v12133, %v12231
      %v12233 = vpop.f32.mrf.mxu0
      %v12234 = vadd.f32 %v12135, %v12233
      %12235 = vmatmul.bf16.gmra.mxu0 %v11045
      %v12236 = vpop.f32.mrf.mxu0
      %v12237 = vadd.f32 %v12138, %v12236
      %v12238 = vpop.f32.mrf.mxu0
      %v12239 = vadd.f32 %v12140, %v12238
      %12240 = vmatmul.bf16.gmra.mxu0 %v11054
      %v12241 = vpop.f32.mrf.mxu0
      %v12242 = vadd.f32 %v12143, %v12241
      %v12243 = vpop.f32.mrf.mxu0
      %v12244 = vadd.f32 %v12145, %v12243
      %12245 = vdwg.mxu0
      %12246 = vmatpush.bf16.msra.mxu0 %v11563
      %12247 = vmatpush.bf16.msra.mxu0 %v11562
      %12248 = vmatpush.bf16.msra.mxu0 %v11561
      %12249 = vmatpush.bf16.msra.mxu0 %v11560
      %12250 = vmatpush.bf16.msra.mxu0 %v11559
      %12251 = vmatpush.bf16.msra.mxu0 %v11558
      %12252 = vmatpush.bf16.msra.mxu0 %v11557
      %12253 = vmatpush.bf16.msra.mxu0 %v11556
      %12254 = vmatmul.bf16.gmra.mxu0 %v10902
      %v12255 = vpop.f32.mrf.mxu0
      %v12256 = vadd.f32 %v12157, %v12255
      %v12257 = vpop.f32.mrf.mxu0
      %v12258 = vadd.f32 %v12159, %v12257
      %12259 = vmatmul.bf16.gmra.mxu0 %v10911
      %v12260 = vpop.f32.mrf.mxu0
      %v12261 = vadd.f32 %v12162, %v12260
      %v12262 = vpop.f32.mrf.mxu0
      %v12263 = vadd.f32 %v12164, %v12262
      %12264 = vmatmul.bf16.gmra.mxu0 %v10920
      %v12265 = vpop.f32.mrf.mxu0
      %v12266 = vadd.f32 %v12167, %v12265
      %v12267 = vpop.f32.mrf.mxu0
      %v12268 = vadd.f32 %v12169, %v12267
      %12269 = vmatmul.bf16.gmra.mxu0 %v10929
      %v12270 = vpop.f32.mrf.mxu0
      %v12271 = vadd.f32 %v12172, %v12270
      %v12272 = vpop.f32.mrf.mxu0
      %v12273 = vadd.f32 %v12174, %v12272
      %12274 = vmatmul.bf16.gmra.mxu0 %v10938
      %v12275 = vpop.f32.mrf.mxu0
      %v12276 = vadd.f32 %v12177, %v12275
      %v12277 = vpop.f32.mrf.mxu0
      %v12278 = vadd.f32 %v12179, %v12277
      %12279 = vmatmul.bf16.gmra.mxu0 %v10947
      %v12280 = vpop.f32.mrf.mxu0
      %v12281 = vadd.f32 %v12182, %v12280
      %v12282 = vpop.f32.mrf.mxu0
      %v12283 = vadd.f32 %v12184, %v12282
      %12284 = vmatmul.bf16.gmra.mxu0 %v10956
      %v12285 = vpop.f32.mrf.mxu0
      %v12286 = vadd.f32 %v12187, %v12285
      %v12287 = vpop.f32.mrf.mxu0
      %v12288 = vadd.f32 %v12189, %v12287
      %12289 = vmatmul.bf16.gmra.mxu0 %v10965
      %v12290 = vpop.f32.mrf.mxu0
      %v12291 = vadd.f32 %v12192, %v12290
      %v12292 = vpop.f32.mrf.mxu0
      %v12293 = vadd.f32 %v12194, %v12292
      %12294 = vmatmul.bf16.gmra.mxu0 %v10974
      %v12295 = vpop.f32.mrf.mxu0
      %v12296 = vadd.f32 %v12197, %v12295
      %v12297 = vpop.f32.mrf.mxu0
      %v12298 = vadd.f32 %v12199, %v12297
      %12299 = vmatmul.bf16.gmra.mxu0 %v10983
      %v12300 = vpop.f32.mrf.mxu0
      %v12301 = vadd.f32 %v12202, %v12300
      %v12302 = vpop.f32.mrf.mxu0
      %v12303 = vadd.f32 %v12204, %v12302
      %12304 = vmatmul.bf16.gmra.mxu0 %v10992
      %v12305 = vpop.f32.mrf.mxu0
      %v12306 = vadd.f32 %v12207, %v12305
      %v12307 = vpop.f32.mrf.mxu0
      %v12308 = vadd.f32 %v12209, %v12307
      %12309 = vmatmul.bf16.gmra.mxu0 %v11001
      %v12310 = vpop.f32.mrf.mxu0
      %v12311 = vadd.f32 %v12212, %v12310
      %v12312 = vpop.f32.mrf.mxu0
      %v12313 = vadd.f32 %v12214, %v12312
      %12314 = vmatmul.bf16.gmra.mxu0 %v11010
      %v12315 = vpop.f32.mrf.mxu0
      %v12316 = vadd.f32 %v12217, %v12315
      %v12317 = vpop.f32.mrf.mxu0
      %v12318 = vadd.f32 %v12219, %v12317
      %12319 = vmatmul.bf16.gmra.mxu0 %v11019
      %v12320 = vpop.f32.mrf.mxu0
      %v12321 = vadd.f32 %v12222, %v12320
      %v12322 = vpop.f32.mrf.mxu0
      %v12323 = vadd.f32 %v12224, %v12322
      %12324 = vmatmul.bf16.gmra.mxu0 %v11028
      %v12325 = vpop.f32.mrf.mxu0
      %v12326 = vadd.f32 %v12227, %v12325
      %v12327 = vpop.f32.mrf.mxu0
      %v12328 = vadd.f32 %v12229, %v12327
      %12329 = vmatmul.bf16.gmra.mxu0 %v11037
      %v12330 = vpop.f32.mrf.mxu0
      %v12331 = vadd.f32 %v12232, %v12330
      %v12332 = vpop.f32.mrf.mxu0
      %v12333 = vadd.f32 %v12234, %v12332
      %12334 = vmatmul.bf16.gmra.mxu0 %v11046
      %v12335 = vpop.f32.mrf.mxu0
      %v12336 = vadd.f32 %v12237, %v12335
      %v12337 = vpop.f32.mrf.mxu0
      %v12338 = vadd.f32 %v12239, %v12337
      %12339 = vmatmul.bf16.gmra.mxu0 %v11055
      %v12340 = vpop.f32.mrf.mxu0
      %v12341 = vadd.f32 %v12242, %v12340
      %v12342 = vpop.f32.mrf.mxu0
      %v12343 = vadd.f32 %v12244, %v12342
      %12344 = vdwg.mxu0
      %12345 = vmatpush.bf16.msra.mxu0 %v11571
      %12346 = vmatpush.bf16.msra.mxu0 %v11570
      %12347 = vmatpush.bf16.msra.mxu0 %v11569
      %12348 = vmatpush.bf16.msra.mxu0 %v11568
      %12349 = vmatpush.bf16.msra.mxu0 %v11567
      %12350 = vmatpush.bf16.msra.mxu0 %v11566
      %12351 = vmatpush.bf16.msra.mxu0 %v11565
      %12352 = vmatpush.bf16.msra.mxu0 %v11564
      %12353 = vmatmul.bf16.gmra.mxu0 %v10903
      %v12354 = vpop.f32.mrf.mxu0
      %v12355 = vadd.f32 %v12256, %v12354
      %v12356 = vpop.f32.mrf.mxu0
      %v12357 = vadd.f32 %v12258, %v12356
      %12358 = vmatmul.bf16.gmra.mxu0 %v10912
      %v12359 = vpop.f32.mrf.mxu0
      %v12360 = vadd.f32 %v12261, %v12359
      %v12361 = vpop.f32.mrf.mxu0
      %v12362 = vadd.f32 %v12263, %v12361
      %12363 = vmatmul.bf16.gmra.mxu0 %v10921
      %v12364 = vpop.f32.mrf.mxu0
      %v12365 = vadd.f32 %v12266, %v12364
      %v12366 = vpop.f32.mrf.mxu0
      %v12367 = vadd.f32 %v12268, %v12366
      %12368 = vmatmul.bf16.gmra.mxu0 %v10930
      %v12369 = vpop.f32.mrf.mxu0
      %v12370 = vadd.f32 %v12271, %v12369
      %v12371 = vpop.f32.mrf.mxu0
      %v12372 = vadd.f32 %v12273, %v12371
      %12373 = vmatmul.bf16.gmra.mxu0 %v10939
      %v12374 = vpop.f32.mrf.mxu0
      %v12375 = vadd.f32 %v12276, %v12374
      %v12376 = vpop.f32.mrf.mxu0
      %v12377 = vadd.f32 %v12278, %v12376
      %12378 = vmatmul.bf16.gmra.mxu0 %v10948
      %v12379 = vpop.f32.mrf.mxu0
      %v12380 = vadd.f32 %v12281, %v12379
      %v12381 = vpop.f32.mrf.mxu0
      %v12382 = vadd.f32 %v12283, %v12381
      %12383 = vmatmul.bf16.gmra.mxu0 %v10957
      %v12384 = vpop.f32.mrf.mxu0
      %v12385 = vadd.f32 %v12286, %v12384
      %v12386 = vpop.f32.mrf.mxu0
      %v12387 = vadd.f32 %v12288, %v12386
      %12388 = vmatmul.bf16.gmra.mxu0 %v10966
      %v12389 = vpop.f32.mrf.mxu0
      %v12390 = vadd.f32 %v12291, %v12389
      %v12391 = vpop.f32.mrf.mxu0
      %v12392 = vadd.f32 %v12293, %v12391
      %12393 = vmatmul.bf16.gmra.mxu0 %v10975
      %v12394 = vpop.f32.mrf.mxu0
      %v12395 = vadd.f32 %v12296, %v12394
      %v12396 = vpop.f32.mrf.mxu0
      %v12397 = vadd.f32 %v12298, %v12396
      %12398 = vmatmul.bf16.gmra.mxu0 %v10984
      %v12399 = vpop.f32.mrf.mxu0
      %v12400 = vadd.f32 %v12301, %v12399
      %v12401 = vpop.f32.mrf.mxu0
      %v12402 = vadd.f32 %v12303, %v12401
      %12403 = vmatmul.bf16.gmra.mxu0 %v10993
      %v12404 = vpop.f32.mrf.mxu0
      %v12405 = vadd.f32 %v12306, %v12404
      %v12406 = vpop.f32.mrf.mxu0
      %v12407 = vadd.f32 %v12308, %v12406
      %12408 = vmatmul.bf16.gmra.mxu0 %v11002
      %v12409 = vpop.f32.mrf.mxu0
      %v12410 = vadd.f32 %v12311, %v12409
      %v12411 = vpop.f32.mrf.mxu0
      %v12412 = vadd.f32 %v12313, %v12411
      %12413 = vmatmul.bf16.gmra.mxu0 %v11011
      %v12414 = vpop.f32.mrf.mxu0
      %v12415 = vadd.f32 %v12316, %v12414
      %v12416 = vpop.f32.mrf.mxu0
      %v12417 = vadd.f32 %v12318, %v12416
      %12418 = vmatmul.bf16.gmra.mxu0 %v11020
      %v12419 = vpop.f32.mrf.mxu0
      %v12420 = vadd.f32 %v12321, %v12419
      %v12421 = vpop.f32.mrf.mxu0
      %v12422 = vadd.f32 %v12323, %v12421
      %12423 = vmatmul.bf16.gmra.mxu0 %v11029
      %v12424 = vpop.f32.mrf.mxu0
      %v12425 = vadd.f32 %v12326, %v12424
      %v12426 = vpop.f32.mrf.mxu0
      %v12427 = vadd.f32 %v12328, %v12426
      %12428 = vmatmul.bf16.gmra.mxu0 %v11038
      %v12429 = vpop.f32.mrf.mxu0
      %v12430 = vadd.f32 %v12331, %v12429
      %v12431 = vpop.f32.mrf.mxu0
      %v12432 = vadd.f32 %v12333, %v12431
      %12433 = vmatmul.bf16.gmra.mxu0 %v11047
      %v12434 = vpop.f32.mrf.mxu0
      %v12435 = vadd.f32 %v12336, %v12434
      %v12436 = vpop.f32.mrf.mxu0
      %v12437 = vadd.f32 %v12338, %v12436
      %12438 = vmatmul.bf16.gmra.mxu0 %v11056
      %v12439 = vpop.f32.mrf.mxu0
      %v12440 = vadd.f32 %v12341, %v12439
      %v12441 = vpop.f32.mrf.mxu0
      %v12442 = vadd.f32 %v12343, %v12441
      %12443 = vdwg.mxu0
      %12444 = vmatpush.bf16.msra.mxu0 %v11579
      %12445 = vmatpush.bf16.msra.mxu0 %v11578
      %12446 = vmatpush.bf16.msra.mxu0 %v11577
      %12447 = vmatpush.bf16.msra.mxu0 %v11576
      %12448 = vmatpush.bf16.msra.mxu0 %v11575
      %12449 = vmatpush.bf16.msra.mxu0 %v11574
      %12450 = vmatpush.bf16.msra.mxu0 %v11573
      %12451 = vmatpush.bf16.msra.mxu0 %v11572
      %12452 = vmatmul.bf16.gmra.mxu0 %v10904
      %v12453 = vpop.f32.mrf.mxu0
      %v12454 = vadd.f32 %v12355, %v12453
      %v12455 = vpop.f32.mrf.mxu0
      %v12456 = vadd.f32 %v12357, %v12455
      %12457 = vmatmul.bf16.gmra.mxu0 %v10913
      %v12458 = vpop.f32.mrf.mxu0
      %v12459 = vadd.f32 %v12360, %v12458
      %v12460 = vpop.f32.mrf.mxu0
      %v12461 = vadd.f32 %v12362, %v12460
      %12462 = vmatmul.bf16.gmra.mxu0 %v10922
      %v12463 = vpop.f32.mrf.mxu0
      %v12464 = vadd.f32 %v12365, %v12463
      %v12465 = vpop.f32.mrf.mxu0
      %v12466 = vadd.f32 %v12367, %v12465
      %12467 = vmatmul.bf16.gmra.mxu0 %v10931
      %v12468 = vpop.f32.mrf.mxu0
      %v12469 = vadd.f32 %v12370, %v12468
      %v12470 = vpop.f32.mrf.mxu0
      %v12471 = vadd.f32 %v12372, %v12470
      %12472 = vmatmul.bf16.gmra.mxu0 %v10940
      %v12473 = vpop.f32.mrf.mxu0
      %v12474 = vadd.f32 %v12375, %v12473
      %v12475 = vpop.f32.mrf.mxu0
      %v12476 = vadd.f32 %v12377, %v12475
      %12477 = vmatmul.bf16.gmra.mxu0 %v10949
      %v12478 = vpop.f32.mrf.mxu0
      %v12479 = vadd.f32 %v12380, %v12478
      %v12480 = vpop.f32.mrf.mxu0
      %v12481 = vadd.f32 %v12382, %v12480
      %12482 = vmatmul.bf16.gmra.mxu0 %v10958
      %v12483 = vpop.f32.mrf.mxu0
      %v12484 = vadd.f32 %v12385, %v12483
      %v12485 = vpop.f32.mrf.mxu0
      %v12486 = vadd.f32 %v12387, %v12485
      %12487 = vmatmul.bf16.gmra.mxu0 %v10967
      %v12488 = vpop.f32.mrf.mxu0
      %v12489 = vadd.f32 %v12390, %v12488
      %v12490 = vpop.f32.mrf.mxu0
      %v12491 = vadd.f32 %v12392, %v12490
      %12492 = vmatmul.bf16.gmra.mxu0 %v10976
      %v12493 = vpop.f32.mrf.mxu0
      %v12494 = vadd.f32 %v12395, %v12493
      %v12495 = vpop.f32.mrf.mxu0
      %v12496 = vadd.f32 %v12397, %v12495
      %12497 = vmatmul.bf16.gmra.mxu0 %v10985
      %v12498 = vpop.f32.mrf.mxu0
      %v12499 = vadd.f32 %v12400, %v12498
      %v12500 = vpop.f32.mrf.mxu0
      %v12501 = vadd.f32 %v12402, %v12500
      %12502 = vmatmul.bf16.gmra.mxu0 %v10994
      %v12503 = vpop.f32.mrf.mxu0
      %v12504 = vadd.f32 %v12405, %v12503
      %v12505 = vpop.f32.mrf.mxu0
      %v12506 = vadd.f32 %v12407, %v12505
      %12507 = vmatmul.bf16.gmra.mxu0 %v11003
      %v12508 = vpop.f32.mrf.mxu0
      %v12509 = vadd.f32 %v12410, %v12508
      %v12510 = vpop.f32.mrf.mxu0
      %v12511 = vadd.f32 %v12412, %v12510
      %12512 = vmatmul.bf16.gmra.mxu0 %v11012
      %v12513 = vpop.f32.mrf.mxu0
      %v12514 = vadd.f32 %v12415, %v12513
      %v12515 = vpop.f32.mrf.mxu0
      %v12516 = vadd.f32 %v12417, %v12515
      %12517 = vmatmul.bf16.gmra.mxu0 %v11021
      %v12518 = vpop.f32.mrf.mxu0
      %v12519 = vadd.f32 %v12420, %v12518
      %v12520 = vpop.f32.mrf.mxu0
      %v12521 = vadd.f32 %v12422, %v12520
      %12522 = vmatmul.bf16.gmra.mxu0 %v11030
      %v12523 = vpop.f32.mrf.mxu0
      %v12524 = vadd.f32 %v12425, %v12523
      %v12525 = vpop.f32.mrf.mxu0
      %v12526 = vadd.f32 %v12427, %v12525
      %12527 = vmatmul.bf16.gmra.mxu0 %v11039
      %v12528 = vpop.f32.mrf.mxu0
      %v12529 = vadd.f32 %v12430, %v12528
      %v12530 = vpop.f32.mrf.mxu0
      %v12531 = vadd.f32 %v12432, %v12530
      %12532 = vmatmul.bf16.gmra.mxu0 %v11048
      %v12533 = vpop.f32.mrf.mxu0
      %v12534 = vadd.f32 %v12435, %v12533
      %v12535 = vpop.f32.mrf.mxu0
      %v12536 = vadd.f32 %v12437, %v12535
      %12537 = vmatmul.bf16.gmra.mxu0 %v11057
      %v12538 = vpop.f32.mrf.mxu0
      %v12539 = vadd.f32 %v12440, %v12538
      %v12540 = vpop.f32.mrf.mxu0
      %v12541 = vadd.f32 %v12442, %v12540
      %12542 = vdwg.mxu0
      %v12543 = vld [vmem:[%s5] sm:$0x1]
      %v12545 = vperm.slane %v12543, 0
      %v12547 = vmul.f32 %v12454, %v12545
      %v12548 = vmul.f32 %v12456, %v12545
      %v12549 = vmul.f32 %v12459, %v12545
      %v12550 = vmul.f32 %v12461, %v12545
      %v12551 = vmul.f32 %v12464, %v12545
      %v12552 = vmul.f32 %v12466, %v12545
      %v12553 = vmul.f32 %v12469, %v12545
      %v12554 = vmul.f32 %v12471, %v12545
      %v12555 = vmul.f32 %v12474, %v12545
      %v12556 = vmul.f32 %v12476, %v12545
      %v12557 = vmul.f32 %v12479, %v12545
      %v12558 = vmul.f32 %v12481, %v12545
      %v12559 = vmul.f32 %v12484, %v12545
      %v12560 = vmul.f32 %v12486, %v12545
      %v12561 = vmul.f32 %v12489, %v12545
      %v12562 = vmul.f32 %v12491, %v12545
      %v12563 = vmul.f32 %v12494, %v12545
      %v12564 = vmul.f32 %v12496, %v12545
      %v12565 = vmul.f32 %v12499, %v12545
      %v12566 = vmul.f32 %v12501, %v12545
      %v12567 = vmul.f32 %v12504, %v12545
      %v12568 = vmul.f32 %v12506, %v12545
      %v12569 = vmul.f32 %v12509, %v12545
      %v12570 = vmul.f32 %v12511, %v12545
      %v12571 = vmul.f32 %v12514, %v12545
      %v12572 = vmul.f32 %v12516, %v12545
      %v12573 = vmul.f32 %v12519, %v12545
      %v12574 = vmul.f32 %v12521, %v12545
      %v12575 = vmul.f32 %v12524, %v12545
      %v12576 = vmul.f32 %v12526, %v12545
      %v12577 = vmul.f32 %v12529, %v12545
      %v12578 = vmul.f32 %v12531, %v12545
      %v12579 = vmul.f32 %v12534, %v12545
      %v12580 = vmul.f32 %v12536, %v12545
      %v12581 = vmul.f32 %v12539, %v12545
      %v12582 = vmul.f32 %v12541, %v12545
      %v12583 = vld [vmem:[%s6] sm:$0x1]
      %v12585 = vperm.slane %v12583, 0
      %v12587 = vadd.f32 %v12547, %v12585
      %v12588 = vadd.f32 %v12548, %v12585
      %v12589 = vadd.f32 %v12549, %v12585
      %v12590 = vadd.f32 %v12550, %v12585
      %v12591 = vadd.f32 %v12551, %v12585
      %v12592 = vadd.f32 %v12552, %v12585
      %v12593 = vadd.f32 %v12553, %v12585
      %v12594 = vadd.f32 %v12554, %v12585
      %v12595 = vadd.f32 %v12555, %v12585
      %v12596 = vadd.f32 %v12556, %v12585
      %v12597 = vadd.f32 %v12557, %v12585
      %v12598 = vadd.f32 %v12558, %v12585
      %v12599 = vadd.f32 %v12559, %v12585
      %v12600 = vadd.f32 %v12560, %v12585
      %v12601 = vadd.f32 %v12561, %v12585
      %v12602 = vadd.f32 %v12562, %v12585
      %v12603 = vadd.f32 %v12563, %v12585
      %v12604 = vadd.f32 %v12564, %v12585
      %v12605 = vadd.f32 %v12565, %v12585
      %v12606 = vadd.f32 %v12566, %v12585
      %v12607 = vadd.f32 %v12567, %v12585
      %v12608 = vadd.f32 %v12568, %v12585
      %v12609 = vadd.f32 %v12569, %v12585
      %v12610 = vadd.f32 %v12570, %v12585
      %v12611 = vadd.f32 %v12571, %v12585
      %v12612 = vadd.f32 %v12572, %v12585
      %v12613 = vadd.f32 %v12573, %v12585
      %v12614 = vadd.f32 %v12574, %v12585
      %v12615 = vadd.f32 %v12575, %v12585
      %v12616 = vadd.f32 %v12576, %v12585
      %v12617 = vadd.f32 %v12577, %v12585
      %v12618 = vadd.f32 %v12578, %v12585
      %v12619 = vadd.f32 %v12579, %v12585
      %v12620 = vadd.f32 %v12580, %v12585
      %v12621 = vadd.f32 %v12581, %v12585
      %v12622 = vadd.f32 %v12582, %v12585
      %v12623 = vld [vmem:[%s300] sm:$0xff]
      %v12624 = vld [vmem:[%s300 + $0x8] sm:$0xff]
      %v12625 = vld [vmem:[%s300 + $0x10] sm:$0xff]
      %v12626 = vld [vmem:[%s300 + $0x18] sm:$0xff]
      %v12627 = vld [vmem:[%s300 + $0x20] sm:$0xff]
      %v12628 = vld [vmem:[%s300 + $0x28] sm:$0xff]
      %v12629 = vld [vmem:[%s300 + $0x30] sm:$0xff]
      %v12630 = vld [vmem:[%s300 + $0x38] sm:$0xff]
      %v12631 = vld [vmem:[%s300 + $0x40] sm:$0xff]
      %v12632 = vld [vmem:[%s300 + $0x48] sm:$0xff]
      %v12633 = vld [vmem:[%s300 + $0x50] sm:$0xff]
      %v12634 = vld [vmem:[%s300 + $0x58] sm:$0xff]
      %v12635 = vld [vmem:[%s300 + $0x60] sm:$0xff]
      %v12636 = vld [vmem:[%s300 + $0x68] sm:$0xff]
      %v12637 = vld [vmem:[%s300 + $0x70] sm:$0xff]
      %v12638 = vld [vmem:[%s300 + $0x78] sm:$0xff]
      %v12639 = vld [vmem:[%s300 + $0x80] sm:$0xff]
      %v12640 = vld [vmem:[%s300 + $0x88] sm:$0xff]
      %v12641 = vld [vmem:[%s300 + $0x90] sm:$0xff]
      %v12642 = vld [vmem:[%s300 + $0x98] sm:$0xff]
      %v12643 = vld [vmem:[%s300 + $0xa0] sm:$0xff]
      %v12644 = vld [vmem:[%s300 + $0xa8] sm:$0xff]
      %v12645 = vld [vmem:[%s300 + $0xb0] sm:$0xff]
      %v12646 = vld [vmem:[%s300 + $0xb8] sm:$0xff]
      %v12647 = vld [vmem:[%s300 + $0xc0] sm:$0xff]
      %v12648 = vld [vmem:[%s300 + $0xc8] sm:$0xff]
      %v12649 = vld [vmem:[%s300 + $0xd0] sm:$0xff]
      %v12650 = vld [vmem:[%s300 + $0xd8] sm:$0xff]
      %v12651 = vld [vmem:[%s300 + $0xe0] sm:$0xff]
      %v12652 = vld [vmem:[%s300 + $0xe8] sm:$0xff]
      %v12653 = vld [vmem:[%s300 + $0xf0] sm:$0xff]
      %v12654 = vld [vmem:[%s300 + $0xf8] sm:$0xff]
      %v12655 = vld [vmem:[%s300 + $0x100] sm:$0xff]
      %v12656 = vld [vmem:[%s300 + $0x108] sm:$0xff]
      %v12657 = vld [vmem:[%s300 + $0x110] sm:$0xff]
      %v12658 = vld [vmem:[%s300 + $0x118] sm:$0xff]
      %v12659 = vadd.f32 %v12587, %v12623
      %v12660 = vadd.f32 %v12588, %v12624
      %v12661 = vadd.f32 %v12589, %v12625
      %v12662 = vadd.f32 %v12590, %v12626
      %v12663 = vadd.f32 %v12591, %v12627
      %v12664 = vadd.f32 %v12592, %v12628
      %v12665 = vadd.f32 %v12593, %v12629
      %v12666 = vadd.f32 %v12594, %v12630
      %v12667 = vadd.f32 %v12595, %v12631
      %v12668 = vadd.f32 %v12596, %v12632
      %v12669 = vadd.f32 %v12597, %v12633
      %v12670 = vadd.f32 %v12598, %v12634
      %v12671 = vadd.f32 %v12599, %v12635
      %v12672 = vadd.f32 %v12600, %v12636
      %v12673 = vadd.f32 %v12601, %v12637
      %v12674 = vadd.f32 %v12602, %v12638
      %v12675 = vadd.f32 %v12603, %v12639
      %v12676 = vadd.f32 %v12604, %v12640
      %v12677 = vadd.f32 %v12605, %v12641
      %v12678 = vadd.f32 %v12606, %v12642
      %v12679 = vadd.f32 %v12607, %v12643
      %v12680 = vadd.f32 %v12608, %v12644
      %v12681 = vadd.f32 %v12609, %v12645
      %v12682 = vadd.f32 %v12610, %v12646
      %v12683 = vadd.f32 %v12611, %v12647
      %v12684 = vadd.f32 %v12612, %v12648
      %v12685 = vadd.f32 %v12613, %v12649
      %v12686 = vadd.f32 %v12614, %v12650
      %v12687 = vadd.f32 %v12615, %v12651
      %v12688 = vadd.f32 %v12616, %v12652
      %v12689 = vadd.f32 %v12617, %v12653
      %v12690 = vadd.f32 %v12618, %v12654
      %v12691 = vadd.f32 %v12619, %v12655
      %v12692 = vadd.f32 %v12620, %v12656
      %v12693 = vadd.f32 %v12621, %v12657
      %v12694 = vadd.f32 %v12622, %v12658
      %v12695 = vmax.f32 %v12659, 0.0
      %v12696 = vmax.f32 %v12660, 0.0
      %v12697 = vmax.f32 %v12661, 0.0
      %v12698 = vmax.f32 %v12662, 0.0
      %v12699 = vmax.f32 %v12663, 0.0
      %v12700 = vmax.f32 %v12664, 0.0
      %v12701 = vmax.f32 %v12665, 0.0
      %v12702 = vmax.f32 %v12666, 0.0
      %v12703 = vmax.f32 %v12667, 0.0
      %v12704 = vmax.f32 %v12668, 0.0
      %v12705 = vmax.f32 %v12669, 0.0
      %v12706 = vmax.f32 %v12670, 0.0
      %v12707 = vmax.f32 %v12671, 0.0
      %v12708 = vmax.f32 %v12672, 0.0
      %v12709 = vmax.f32 %v12673, 0.0
      %v12710 = vmax.f32 %v12674, 0.0
      %v12711 = vmax.f32 %v12675, 0.0
      %v12712 = vmax.f32 %v12676, 0.0
      %v12713 = vmax.f32 %v12677, 0.0
      %v12714 = vmax.f32 %v12678, 0.0
      %v12715 = vmax.f32 %v12679, 0.0
      %v12716 = vmax.f32 %v12680, 0.0
      %v12717 = vmax.f32 %v12681, 0.0
      %v12718 = vmax.f32 %v12682, 0.0
      %v12719 = vmax.f32 %v12683, 0.0
      %v12720 = vmax.f32 %v12684, 0.0
      %v12721 = vmax.f32 %v12685, 0.0
      %v12722 = vmax.f32 %v12686, 0.0
      %v12723 = vmax.f32 %v12687, 0.0
      %v12724 = vmax.f32 %v12688, 0.0
      %v12725 = vmax.f32 %v12689, 0.0
      %v12726 = vmax.f32 %v12690, 0.0
      %v12727 = vmax.f32 %v12691, 0.0
      %v12728 = vmax.f32 %v12692, 0.0
      %v12729 = vmax.f32 %v12693, 0.0
      %v12730 = vmax.f32 %v12694, 0.0
      %12731 = vst [vmem:[%s305] sm:$0xff] %v12695
      %12732 = vst [vmem:[%s305 + $0x8] sm:$0xff] %v12696
      %12733 = vst [vmem:[%s305 + $0x10] sm:$0xff] %v12697
      %12734 = vst [vmem:[%s305 + $0x18] sm:$0xff] %v12698
      %12735 = vst [vmem:[%s305 + $0x20] sm:$0xff] %v12699
      %12736 = vst [vmem:[%s305 + $0x28] sm:$0xff] %v12700
      %12737 = vst [vmem:[%s305 + $0x30] sm:$0xff] %v12701
      %12738 = vst [vmem:[%s305 + $0x38] sm:$0xff] %v12702
      %12739 = vst [vmem:[%s305 + $0x40] sm:$0xff] %v12703
      %12740 = vst [vmem:[%s305 + $0x48] sm:$0xff] %v12704
      %12741 = vst [vmem:[%s305 + $0x50] sm:$0xff] %v12705
      %12742 = vst [vmem:[%s305 + $0x58] sm:$0xff] %v12706
      %12743 = vst [vmem:[%s305 + $0x60] sm:$0xff] %v12707
      %12744 = vst [vmem:[%s305 + $0x68] sm:$0xff] %v12708
      %12745 = vst [vmem:[%s305 + $0x70] sm:$0xff] %v12709
      %12746 = vst [vmem:[%s305 + $0x78] sm:$0xff] %v12710
      %12747 = vst [vmem:[%s305 + $0x80] sm:$0xff] %v12711
      %12748 = vst [vmem:[%s305 + $0x88] sm:$0xff] %v12712
      %12749 = vst [vmem:[%s305 + $0x90] sm:$0xff] %v12713
      %12750 = vst [vmem:[%s305 + $0x98] sm:$0xff] %v12714
      %12751 = vst [vmem:[%s305 + $0xa0] sm:$0xff] %v12715
      %12752 = vst [vmem:[%s305 + $0xa8] sm:$0xff] %v12716
      %12753 = vst [vmem:[%s305 + $0xb0] sm:$0xff] %v12717
      %12754 = vst [vmem:[%s305 + $0xb8] sm:$0xff] %v12718
      %12755 = vst [vmem:[%s305 + $0xc0] sm:$0xff] %v12719
      %12756 = vst [vmem:[%s305 + $0xc8] sm:$0xff] %v12720
      %12757 = vst [vmem:[%s305 + $0xd0] sm:$0xff] %v12721
      %12758 = vst [vmem:[%s305 + $0xd8] sm:$0xff] %v12722
      %12759 = vst [vmem:[%s305 + $0xe0] sm:$0xff] %v12723
      %12760 = vst [vmem:[%s305 + $0xe8] sm:$0xff] %v12724
      %12761 = vst [vmem:[%s305 + $0xf0] sm:$0xff] %v12725
      %12762 = vst [vmem:[%s305 + $0xf8] sm:$0xff] %v12726
      %12763 = vst [vmem:[%s305 + $0x100] sm:$0xff] %v12727
      %12764 = vst [vmem:[%s305 + $0x108] sm:$0xff] %v12728
      %12765 = vst [vmem:[%s305 + $0x110] sm:$0xff] %v12729
      %12766 = vst [vmem:[%s305 + $0x118] sm:$0xff] %v12730
      %p12767 = scmp.lt.s32.totalorder %s19, 1
      %s12768 = scalar_select %p12767, %s19, 1
      %s12769 = smul.addr %s12768, 36
      %s12770 = smul.addr %s12769, 8
      %s12771 = scalar_lea.vmem %s8, %s12770
      // Predicated region
      $region53: #{basic_block_forward.1} parent=51 // pred_check
        %p12772 = pneg %p210
      $region54: #{basic_block_forward.1} parent=51 // pred_check_branch
        %12774 = sbr.rel (%p12772) target = $region56
      $region55: #{basic_block_forward.1} parent=51 // pred_region
        _
      $region56: #{basic_block_forward.1} parent=51 // pred_fallthru
        _
    $region52: #{basic_block_forward.1} parent=5 // pred_fallthru
      _
    %p12775 = scmp.le.s32.totalorder 2, %s14
    // Predicated region
    $region57: #{basic_block_forward.1} parent=5 // pred_check
      %p12776 = pneg %p12775
    $region58: #{basic_block_forward.1} parent=5 // pred_check_branch
      %12778 = sbr.rel (%p12776) target = $region60
    $region59: #{basic_block_forward.1} parent=5 // pred_region
      %s12779 = ssub.s32 %s14, 2
      // Predicated region
      $region61: #{basic_block_forward.1} parent=59 // pred_check
        %p12780 = pneg %p216
      $region62: #{basic_block_forward.1} parent=59 // pred_check_branch
        %12782 = sbr.rel (%p12780) target = $region64
      $region63: #{basic_block_forward.1} parent=59 // pred_region
        %p12783 = scmp.lt.s32.totalorder %s20, 1
        %s12784 = scalar_select %p12783, %s20, 1
        %s12785 = smul.addr %s12784, 36
        %s12786 = smul.addr %s12785, 8
        %s12787 = scalar_lea.vmem %s8, %s12786
      $region64: #{basic_block_forward.1} parent=59 // pred_fallthru
        _
    $region60: #{basic_block_forward.1} parent=5 // pred_fallthru
      _
  $region6: #{basic_block_forward.1} parent=0 // loop_footer
    %s18 = sadd.s32 1, %s14
  $region7: #{basic_block_forward.1} parent=0 // loop_footer_branch
    %13 = sbr.rel target = $region3
  $region8: #{basic_block_forward.1} parent=0 // loop_exit
    _

</llo_original>
